<compile_context>
chip_gen: v6e
topology: v6e:2x2x1
jax: 0.10.0
libtpu: 0.0.40
codegen_flags: <defaults>
</compile_context>

<pallas_src>
import functools

import jax
import jax.numpy as jnp
from jax import lax
from jax.experimental import pallas as pl
from jax.experimental.pallas import tpu as pltpu


def _round_up(x, m):
    return ((x + m - 1) // m) * m


_VMEM_LIMIT = 48 * 1024 * 1024   # <= v7x 64 MiB physical, > v5e/v6e defaults


# ----------------------------------------------------------------------------
# Encoder kernel: grid (batch tiles [parallel], time chunks [arbitrary]).
# Per chunk: one batched input-projection matmul into VMEM scratch, then a
# serial fori_loop doing only h @ W_hh + gate math.  h/c are carried in the
# resident output blocks.  seq_len masking gives pack_padded_sequence
# semantics for the returned (h_n, c_n).
# ----------------------------------------------------------------------------
def _encoder_kernel(src_ref, seqlen_ref, wih_ref, b_ref, whh_ref,
                    h_out_ref, c_out_ref, gx_s, *, unroll):
    t_chunk = pl.program_id(1)
    K, Bt, Dp = src_ref.shape
    Hp = h_out_ref.shape[-1]
    G = 4 * Hp

    @pl.when(t_chunk == 0)
    def _():
        h_out_ref[...] = jnp.zeros_like(h_out_ref)
        c_out_ref[...] = jnp.zeros_like(c_out_ref)

    # Fused per-chunk input projection: one MXU matmul, off the serial path,
    # no gx HBM round trip.
    x = src_ref[...].reshape(K * Bt, Dp)
    gx = jnp.dot(x, wih_ref[...], preferred_element_type=jnp.float32)
    gx_s[...] = gx.reshape(K, Bt, G)

    seqlen = seqlen_ref[...]            # (Bt, 1) int32
    whh = whh_ref[...]                  # (Hp, 4Hp) compute dtype
    b = b_ref[...]                      # (1, 4Hp) f32

    def step(i, carry):
        h, c = carry
        t = t_chunk * K + i
        gates = gx_s[i] + b + jnp.dot(h.astype(whh.dtype), whh,
                                      preferred_element_type=jnp.float32)
        i_g = jax.nn.sigmoid(gates[:, 0 * Hp:1 * Hp])
        f_g = jax.nn.sigmoid(gates[:, 1 * Hp:2 * Hp])
        g_g = jnp.tanh(gates[:, 2 * Hp:3 * Hp])
        o_g = jax.nn.sigmoid(gates[:, 3 * Hp:4 * Hp])
        c_new = f_g * c + i_g * g_g
        h_new = o_g * jnp.tanh(c_new)
        valid = t < seqlen              # (Bt, 1) bool -> pack_padded semantics
        return (jnp.where(valid, h_new, h), jnp.where(valid, c_new, c))

    h, c = lax.fori_loop(0, K, step, (h_out_ref[...], c_out_ref[...]),
                         unroll=unroll)
    h_out_ref[...] = h
    c_out_ref[...] = c


def encoder_forward(src, seqlen_col, wih, b, whh, *, steps_per_block,
                    batch_tile, unroll):
    """src: (Tp, Bp, Dp) compute dtype; seqlen_col: (Bp, 1) int32;
    wih: (Dp, 4Hp); b: (1, 4Hp) f32; whh: (Hp, 4Hp).
    Returns (hidden, cell) each (Bp, Hp) f32."""
    Tp, Bp, Dp = src.shape
    Hp = whh.shape[0]
    G = 4 * Hp
    K = steps_per_block
    Bt = batch_tile

    itm = jnp.dtype(src.dtype).itemsize
    cost = pl.CostEstimate(
        flops=2 * Tp * Bp * (Dp + Hp) * G,
        transcendentals=5 * Tp * Bp * Hp,
        bytes_accessed=Tp * Bp * Dp * itm + (Dp + Hp) * G * itm
                       + 2 * Bp * Hp * 4)

    grid_spec = pltpu.PrefetchScalarGridSpec(
        num_scalar_prefetch=0,
        grid=(Bp // Bt, Tp // K),
        in_specs=[
            pl.BlockSpec((K, Bt, Dp), lambda bi, t: (t, bi, 0)),   # src chunk
            pl.BlockSpec((Bt, 1), lambda bi, t: (bi, 0)),          # seq_len
            pl.BlockSpec((Dp, G), lambda bi, t: (0, 0)),           # W_ih
            pl.BlockSpec((1, G), lambda bi, t: (0, 0)),            # bias
            pl.BlockSpec((Hp, G), lambda bi, t: (0, 0)),           # W_hh
        ],
        out_specs=[
            pl.BlockSpec((Bt, Hp), lambda bi, t: (bi, 0)),         # h carry
            pl.BlockSpec((Bt, Hp), lambda bi, t: (bi, 0)),         # c carry
        ],
        scratch_shapes=[pltpu.VMEM((K, Bt, G), jnp.float32)],      # gx chunk
    )

    return pl.pallas_call(
        functools.partial(_encoder_kernel, unroll=unroll),
        out_shape=(jax.ShapeDtypeStruct((Bp, Hp), jnp.float32),
                   jax.ShapeDtypeStruct((Bp, Hp), jnp.float32)),
        grid_spec=grid_spec,
        cost_estimate=cost,
        compiler_params=pltpu.CompilerParams(
            dimension_semantics=("parallel", "arbitrary"),
            vmem_limit_bytes=_VMEM_LIMIT),
    )(src, seqlen_col, wih, b, whh)


# ----------------------------------------------------------------------------
# Decoder kernel: grid (batch tiles [parallel], output chunks [arbitrary]).
# One MXU push per serial step: gates_wide = h @ [W_hh | W_hh + Wout@W_ih].
# Forced-x contributions and the output projection are batched per chunk.
# h/c carried in VMEM scratch across chunks.
# ----------------------------------------------------------------------------
def _decoder_kernel(tf_ref, h0_ref, c0_ref, xs_ref, wih_ref, wwide_ref,
                    b_ref, bfree_ref, wout_ref, bout_ref,
                    out_ref, h_s, c_s, gxt_s, hh_s, *, unroll):
    l_chunk = pl.program_id(1)
    K, Bt, Dp = xs_ref.shape
    Hp = h0_ref.shape[-1]
    G = 4 * Hp

    @pl.when(l_chunk == 0)
    def _():
        h_s[...] = h0_ref[...]
        c_s[...] = c0_ref[...]

    # Teacher-forced x-contribution for the whole chunk: one batched matmul.
    # xs[t] = init at global step 0, else target[t-1].
    xflat = xs_ref[...].reshape(K * Bt, Dp)
    gxt = jnp.dot(xflat, wih_ref[...], preferred_element_type=jnp.float32)
    gxt_s[...] = gxt.reshape(K, Bt, G)

    wwide = wwide_ref[...]      # (Hp, 8Hp) = [W_hh | W_hh + Wout@W_ih]
    b = b_ref[...]              # (1, 4Hp) gate bias
    bfree = bfree_ref[...]      # (1, 4Hp) = bout @ W_ih (free-running path)

    def step(i, carry):
        h, c = carry
        t = l_chunk * K + i
        gw = jnp.dot(h.astype(wwide.dtype), wwide,
                     preferred_element_type=jnp.float32)        # (Bt, 8Hp)
        forced = tf_ref[t] > 0                                  # SMEM scalar
        gates = jnp.where(forced,
                          gw[:, :G] + gxt_s[i],
                          gw[:, G:] + bfree) + b
        i_g = jax.nn.sigmoid(gates[:, 0 * Hp:1 * Hp])
        f_g = jax.nn.sigmoid(gates[:, 1 * Hp:2 * Hp])
        g_g = jnp.tanh(gates[:, 2 * Hp:3 * Hp])
        o_g = jax.nn.sigmoid(gates[:, 3 * Hp:4 * Hp])
        c_new = f_g * c + i_g * g_g
        h_new = o_g * jnp.tanh(c_new)
        hh_s[i] = h_new.astype(hh_s.dtype)                      # defer proj
        return (h_new, c_new)

    h, c = lax.fori_loop(0, K, step, (h_s[...], c_s[...]), unroll=unroll)
    h_s[...] = h
    c_s[...] = c

    # Deferred output projection: one (K*Bt, Hp) @ (Hp, Dp) matmul per chunk,
    # lane-dense full-width store.
    hh = hh_s[...].reshape(K * Bt, Hp)
    out = jnp.dot(hh, wout_ref[...], preferred_element_type=jnp.float32)
    out_ref[...] = (out + bout_ref[...]).reshape(K, Bt, Dp)


def decoder_forward(tf_shift, hidden, cell, x_shift, wih, w_wide, b, b_free,
                    wout, bout, *, steps_per_block, batch_tile, unroll):
    """tf_shift: (Lp,) int32 scalar-prefetched; hidden/cell: (Bp, Hp) f32;
    x_shift: (Lp, Bp, Dp) forced-input stream.  Returns (Lp, Bp, Dp) f32."""
    Lp, Bp, Dp = x_shift.shape
    Hp = hidden.shape[-1]
    G = 4 * Hp
    K = steps_per_block
    Bt = batch_tile

    itm = jnp.dtype(x_shift.dtype).itemsize
    cost = pl.CostEstimate(
        flops=2 * Lp * Bp * (Dp * G + Hp * 2 * G + Hp * Dp),
        transcendentals=5 * Lp * Bp * Hp,
        bytes_accessed=Lp * Bp * Dp * (itm + 4)
                       + (Dp * G + Hp * 2 * G + Hp * Dp) * itm)

    grid_spec = pltpu.PrefetchScalarGridSpec(
        num_scalar_prefetch=1,                           # tf_shift -> SMEM
        grid=(Bp // Bt, Lp // K),
        in_specs=[
            pl.BlockSpec((Bt, Hp), lambda bi, l, tf: (bi, 0)),          # h0
            pl.BlockSpec((Bt, Hp), lambda bi, l, tf: (bi, 0)),          # c0
            pl.BlockSpec((K, Bt, Dp), lambda bi, l, tf: (l, bi, 0)),    # x_shift
            pl.BlockSpec((Dp, G), lambda bi, l, tf: (0, 0)),            # W_ih
            pl.BlockSpec((Hp, 2 * G), lambda bi, l, tf: (0, 0)),        # W_wide
            pl.BlockSpec((1, G), lambda bi, l, tf: (0, 0)),             # b
            pl.BlockSpec((1, G), lambda bi, l, tf: (0, 0)),             # b_free
            pl.BlockSpec((Hp, Dp), lambda bi, l, tf: (0, 0)),           # W_out
            pl.BlockSpec((1, Dp), lambda bi, l, tf: (0, 0)),            # b_out
        ],
        out_specs=pl.BlockSpec((K, Bt, Dp), lambda bi, l, tf: (l, bi, 0)),
        scratch_shapes=[pltpu.VMEM((Bt, Hp), jnp.float32),       # h carry
                        pltpu.VMEM((Bt, Hp), jnp.float32),       # c carry
                        pltpu.VMEM((K, Bt, G), jnp.float32),     # forced gates
                        pltpu.VMEM((K, Bt, Hp), x_shift.dtype)], # h history
    )

    return pl.pallas_call(
        functools.partial(_decoder_kernel, unroll=unroll),
        out_shape=jax.ShapeDtypeStruct((Lp, Bp, Dp), jnp.float32),
        grid_spec=grid_spec,
        cost_estimate=cost,
        compiler_params=pltpu.CompilerParams(
            dimension_semantics=("parallel", "arbitrary"),
            vmem_limit_bytes=_VMEM_LIMIT),
    )(tf_shift, hidden, cell, x_shift, wih, w_wide, b, b_free, wout, bout)


# ----------------------------------------------------------------------------
# Padding helpers (gate-block-aware so gate k stays at [k*Hp:(k+1)*Hp]).
# ----------------------------------------------------------------------------
def _pad_gate_cols(w, h, hp):
    """Pad (..., 4*h) gate-concat array [i|f|g|o] to (..., 4*hp) per-gate."""
    lead = w.shape[:-1]
    w4 = w.reshape(lead + (4, h))
    pad = [(0, 0)] * len(lead) + [(0, 0), (0, hp - h)]
    return jnp.pad(w4, pad).reshape(lead + (4 * hp,))


def _pad_rows(w, rp):
    return jnp.pad(w, ((0, rp - w.shape[0]),) + ((0, 0),) * (w.ndim - 1))


# ----------------------------------------------------------------------------
# RNNAE forward wrapper: padding to lane-friendly shapes, layout transposes,
# weight folding for the single-matmul decoder step, teacher-forcing mask.
# For v7x megacore, pass batch_tile = Bp // 2 (multiple of 16) to split the
# batch across the two TensorCores.
# ----------------------------------------------------------------------------
@functools.partial(jax.jit, static_argnames=("target_len", "steps_per_block",
                                             "batch_tile", "compute_dtype"))
def rnnae_forward(params, src, seq_len, target=None, teaching=0.5,
                  init=None, target_len=None, tf_key=None,
                  steps_per_block=16, batch_tile=None,
                  compute_dtype=jnp.bfloat16):
    """src: (B, T, D) batch-first like PyTorch; returns (B, target_len, D)."""
    B, T, D = src.shape
    H = params["whh_e"].shape[0]
    if target_len is None:
        target_len = T
    if target is None:
        target = jnp.zeros((B, target_len, D), jnp.float32)
        teaching = 0.0
    if init is None:
        init = jnp.zeros((B, D), jnp.float32)
    if tf_key is None:
        tf_key = jax.random.PRNGKey(42)

    K = steps_per_block
    f32 = jnp.float32
    cdt = compute_dtype
    # sublane granularity of the streamed (compute-dtype) activation blocks
    sub = {4: 8, 2: 16}.get(jnp.dtype(cdt).itemsize, 32)
    Bp = _round_up(B, sub)
    Bt = Bp if batch_tile is None else _round_up(max(batch_tile, sub), sub)
    Bp = _round_up(Bp, Bt)
    Dp = _round_up(D, 128)
    Hp = _round_up(H, 128)
    Tp = _round_up(T, K)
    Lp = _round_up(target_len, K)

    # ---- zero-pad weights (real lanes stay numerically identical) ----
    wih_e = _pad_rows(_pad_gate_cols(params["wih_e"].astype(f32), H, Hp), Dp)
    whh_e = _pad_rows(_pad_gate_cols(params["whh_e"].astype(f32), H, Hp), Hp)
    b_e = _pad_gate_cols(params["b_e"].astype(f32), H, Hp)          # (1, 4Hp)
    wih_d = _pad_rows(_pad_gate_cols(params["wih_d"].astype(f32), H, Hp), Dp)
    whh_d = _pad_rows(_pad_gate_cols(params["whh_d"].astype(f32), H, Hp), Hp)
    b_d = _pad_gate_cols(params["b_d"].astype(f32), H, Hp)          # (1, 4Hp)
    wout = jnp.pad(params["wout"].astype(f32), ((0, Hp - H), (0, Dp - D)))
    bout = jnp.pad(params["bout"].astype(f32), ((0, 0), (0, Dp - D)))

    # Decoder fold: if the previous step was NOT teacher-forced, the next input
    # is pred = h@wout + bout, so its gate contribution is h@(wout@wih_d) +
    # bout@wih_d.  Putting wout@wih_d next to W_hh in one wide matrix keeps the
    # serial decoder step at exactly one MXU matmul.
    w_fold = wout @ wih_d                                     # (Hp, 4Hp)
    w_wide = jnp.concatenate([whh_d, whh_d + w_fold], axis=1)  # (Hp, 8Hp)
    b_free = bout @ wih_d                                     # (1, 4Hp)

    # ---- pad activations, time-major layout ----
    src_tbd = jnp.transpose(src.astype(f32), (1, 0, 2))               # (T,B,D)
    src_p = jnp.pad(src_tbd, ((0, Tp - T), (0, Bp - B), (0, Dp - D)))
    tgt_tbd = jnp.transpose(target.astype(f32), (1, 0, 2))            # (L,B,D)
    tgt_p = jnp.pad(tgt_tbd, ((0, Lp - target_len), (0, Bp - B), (0, Dp - D)))
    init_p = jnp.pad(init.astype(f32), ((0, Bp - B), (0, Dp - D)))
    # Decoder "forced" input stream: x_shift[t] = init at t == 0 else target[t-1].
    x_shift = jnp.concatenate([init_p[None], tgt_p[:-1]], axis=0)     # (Lp,B,D)
    seqlen_col = jnp.pad(seq_len.astype(jnp.int32),
                         (0, Bp - B)).reshape(Bp, 1)

    # TODO(synk): per-step python random.random() teacher-forcing coin flips
    # replaced by a deterministic precomputed mask from jax.random.PRNGKey.
    teach = jax.random.uniform(tf_key, (target_len,)) < teaching
    # Shifted so tf_shift[t] decides the input of step t (step 0 always init).
    tf_shift = jnp.concatenate([jnp.ones((1,), jnp.int32),
                                teach[:-1].astype(jnp.int32)])
    tf_shift = jnp.pad(tf_shift, (0, Lp - target_len))

    # Cap unrolling once the per-step gate tile gets vreg-heavy.
    unroll = True if Hp <= 256 else 4

    hidden, cell = encoder_forward(
        src_p.astype(cdt), seqlen_col, wih_e.astype(cdt), b_e,
        whh_e.astype(cdt), steps_per_block=K, batch_tile=Bt, unroll=unroll)

    out_p = decoder_forward(
        tf_shift, hidden, cell, x_shift.astype(cdt), wih_d.astype(cdt),
        w_wide.astype(cdt), b_d, b_free, wout.astype(cdt), bout,
        steps_per_block=K, batch_tile=Bt, unroll=unroll)

    out = out_p[:target_len, :B, :D]
    return jnp.transpose(out, (1, 0, 2))


def init_params(key, D, H):
    k = 1.0 / jnp.sqrt(H)
    keys = jax.random.split(key, 8)
    u = lambda kk, shape: jax.random.uniform(kk, shape, jnp.float32, -k, k)
    return {
        # encoder LSTM
        "wih_e": u(keys[0], (D, 4 * H)),
        "whh_e": u(keys[1], (H, 4 * H)),
        "b_e":   u(keys[2], (1, 4 * H)),
        # decoder LSTM
        "wih_d": u(keys[3], (D, 4 * H)),
        "whh_d": u(keys[4], (H, 4 * H)),
        "b_d":   u(keys[5], (1, 4 * H)),
        # decoder output projection
        "wout":  u(keys[6], (H, D)),
        "bout":  u(keys[7], (1, D)),
    }


if __name__ == "__main__":
    B, T, D, H = 2, 8, 4, 32
    L = 8  # target_len

    root = jax.random.PRNGKey(0)
    k_param, k_src, k_tgt, k_tf = jax.random.split(root, 4)

    params = init_params(k_param, D, H)
    src = jax.random.normal(k_src, (B, T, D), jnp.float32)
    target = jax.random.normal(k_tgt, (B, L, D), jnp.float32)
    seq_len = jnp.array([T, 5], jnp.int32)
    init = jnp.zeros((B, D), jnp.float32)

    # K=8 because the test sequence is only 8 steps; use 16-32 for real T/L.
    out = rnnae_forward(params, src, seq_len, target=target, teaching=0.5,
                        init=init, target_len=L, tf_key=k_tf,
                        steps_per_block=8)
    out = jax.block_until_ready(out)

    assert out.shape == (B, L, D), out.shape
    assert bool(jnp.all(jnp.isfinite(out)))
    print("KERNEL_OK")
</pallas_src>

<mosaic_0001>
module attributes {stable_mosaic.version = 11 : i64} {
  func.func @_encoder_kernel(%arg0: i32, %arg1: i32, %arg2: memref<8x16x128xbf16, #tpu.memory_space<vmem>>, %arg3: memref<16x1xi32, #tpu.memory_space<vmem>>, %arg4: memref<128x512xbf16, #tpu.memory_space<vmem>>, %arg5: memref<1x512xf32, #tpu.memory_space<vmem>>, %arg6: memref<128x512xbf16, #tpu.memory_space<vmem>>, %arg7: memref<16x128xf32, #tpu.memory_space<vmem>>, %arg8: memref<16x128xf32, #tpu.memory_space<vmem>>, %arg9: memref<8x16x512xf32, #tpu.memory_space<vmem>>) attributes {dimension_semantics = [#tpu.dimension_semantics<parallel>, #tpu.dimension_semantics<arbitrary>], iteration_bounds = array<i64: 1, 1>, scalar_prefetch = 0 : i64, scratch_operands = 1 : i64, tpu.core_type = #tpu.core_type<tc>, window_params = [{transform_indices = @transform_0, window_bounds = array<i64: 8, 16, 128>}, {transform_indices = @transform_1, window_bounds = array<i64: 16, 1>}, {pipeline_mode = #tpu.pipeline_mode<synchronous>, transform_indices = @transform_2, window_bounds = array<i64: 128, 512>}, {pipeline_mode = #tpu.pipeline_mode<synchronous>, transform_indices = @transform_3, window_bounds = array<i64: 1, 512>}, {pipeline_mode = #tpu.pipeline_mode<synchronous>, transform_indices = @transform_4, window_bounds = array<i64: 128, 512>}, {transform_indices = @transform_5, window_bounds = array<i64: 16, 128>}, {transform_indices = @transform_6, window_bounds = array<i64: 16, 128>}]} {
    %c0_i32 = arith.constant 0 : i32
    %0 = arith.cmpi eq, %arg1, %c0_i32 : i32
    %1 = arith.extui %0 : i1 to i32
    %c0_i32_0 = arith.constant 0 : i32
    %2 = arith.cmpi ne, %1, %c0_i32_0 : i32
    scf.if %2 {
      %cst_79 = arith.constant 0.000000e+00 : f32
      %360 = vector.broadcast %cst_79 : f32 to vector<16x128xf32>
      %c0_80 = arith.constant 0 : index
      %c0_81 = arith.constant 0 : index
      %361 = vector.load %arg7[%c0_80, %c0_81] : memref<16x128xf32, #tpu.memory_space<vmem>>, vector<16x128xf32>
      tpu.vector_store %arg7[%c0_80, %c0_81], %360 {strides = array<i32>} : memref<16x128xf32, #tpu.memory_space<vmem>>, vector<16x128xf32>,
      %cst_82 = arith.constant 0.000000e+00 : f32
      %362 = vector.broadcast %cst_82 : f32 to vector<16x128xf32>
      %c0_83 = arith.constant 0 : index
      %c0_84 = arith.constant 0 : index
      %363 = vector.load %arg8[%c0_83, %c0_84] : memref<16x128xf32, #tpu.memory_space<vmem>>, vector<16x128xf32>
      tpu.vector_store %arg8[%c0_83, %c0_84], %362 {strides = array<i32>} : memref<16x128xf32, #tpu.memory_space<vmem>>, vector<16x128xf32>,
    } else {
    }
    %c0 = arith.constant 0 : index
    %c0_1 = arith.constant 0 : index
    %c0_2 = arith.constant 0 : index
    %3 = vector.load %arg2[%c0, %c0_1, %c0_2] : memref<8x16x128xbf16, #tpu.memory_space<vmem>>, vector<8x16x128xbf16>
    %4 = vector.shape_cast %3 : vector<8x16x128xbf16> to vector<128x128xbf16>
    %c0_3 = arith.constant 0 : index
    %c0_4 = arith.constant 0 : index
    %5 = vector.load %arg4[%c0_3, %c0_4] : memref<128x512xbf16, #tpu.memory_space<vmem>>, vector<128x512xbf16>
    %cst = arith.constant dense<0.000000e+00> : vector<128x512xf32>
    %6 = tpu.matmul %4, %5, %cst {dimension_numbers = #tpu.dot_dimension_numbers<[1], [0], [0], [1], [0, 0, 1, 1], [], []>} : vector<128x128xbf16>, vector<128x512xbf16>, vector<128x512xf32> -> vector<128x512xf32>
    %7 = vector.shape_cast %6 : vector<128x512xf32> to vector<8x16x512xf32>
    %c0_5 = arith.constant 0 : index
    %c0_6 = arith.constant 0 : index
    %c0_7 = arith.constant 0 : index
    %8 = vector.load %arg9[%c0_5, %c0_6, %c0_7] : memref<8x16x512xf32, #tpu.memory_space<vmem>>, vector<8x16x512xf32>
    tpu.vector_store %arg9[%c0_5, %c0_6, %c0_7], %7 {strides = array<i32>} : memref<8x16x512xf32, #tpu.memory_space<vmem>>, vector<8x16x512xf32>,
    %c0_8 = arith.constant 0 : index
    %c0_9 = arith.constant 0 : index
    %9 = vector.load %arg3[%c0_8, %c0_9] : memref<16x1xi32, #tpu.memory_space<vmem>>, vector<16x1xi32>
    %c0_10 = arith.constant 0 : index
    %c0_11 = arith.constant 0 : index
    %10 = vector.load %arg6[%c0_10, %c0_11] : memref<128x512xbf16, #tpu.memory_space<vmem>>, vector<128x512xbf16>
    %c0_12 = arith.constant 0 : index
    %c0_13 = arith.constant 0 : index
    %11 = vector.load %arg5[%c0_12, %c0_13] : memref<1x512xf32, #tpu.memory_space<vmem>>, vector<1x512xf32>
    %c0_14 = arith.constant 0 : index
    %c0_15 = arith.constant 0 : index
    %12 = vector.load %arg7[%c0_14, %c0_15] : memref<16x128xf32, #tpu.memory_space<vmem>>, vector<16x128xf32>
    %c0_16 = arith.constant 0 : index
    %c0_17 = arith.constant 0 : index
    %13 = vector.load %arg8[%c0_16, %c0_17] : memref<16x128xf32, #tpu.memory_space<vmem>>, vector<16x128xf32>
    %c0_i32_18 = arith.constant 0 : i32
    %c8_i32 = arith.constant 8 : i32
    %14 = arith.muli %arg1, %c8_i32 : i32
    %15 = arith.addi %14, %c0_i32_18 : i32
    %16 = arith.index_cast %c0_i32_18 : i32 to index
    %c0_19 = arith.constant 0 : index
    %c0_20 = arith.constant 0 : index
    %17 = vector.load %arg9[%16, %c0_19, %c0_20] : memref<8x16x512xf32, #tpu.memory_space<vmem>>, vector<1x16x512xf32>
    %18 = vector.shape_cast %17 : vector<1x16x512xf32> to vector<16x512xf32>
    %19 = vector.broadcast %11 : vector<1x512xf32> to vector<16x512xf32>
    %20 = arith.addf %18, %19 : vector<16x512xf32>
    %21 = arith.truncf %12 : vector<16x128xf32> to vector<16x128xbf16>
    %cst_21 = arith.constant dense<0.000000e+00> : vector<16x512xf32>
    %22 = tpu.matmul %21, %10, %cst_21 {dimension_numbers = #tpu.dot_dimension_numbers<[1], [0], [0], [1], [0, 0, 1, 1], [], []>} : vector<16x128xbf16>, vector<128x512xbf16>, vector<16x512xf32> -> vector<16x512xf32>
    %23 = arith.addf %20, %22 : vector<16x512xf32>
    %24 = vector.extract_strided_slice %23 {offsets = [0, 0], sizes = [16, 128], strides = [1, 1]} : vector<16x512xf32> to vector<16x128xf32>
    %25 = arith.negf %24 : vector<16x128xf32>
    %26 = math.exp %25 : vector<16x128xf32>
    %cst_22 = arith.constant 1.000000e+00 : f32
    %27 = vector.broadcast %cst_22 : f32 to vector<16x128xf32>
    %28 = arith.addf %27, %26 : vector<16x128xf32>
    %29 = arith.divf %27, %28 : vector<16x128xf32>
    %30 = vector.extract_strided_slice %23 {offsets = [0, 128], sizes = [16, 128], strides = [1, 1]} : vector<16x512xf32> to vector<16x128xf32>
    %31 = arith.negf %30 : vector<16x128xf32>
    %32 = math.exp %31 : vector<16x128xf32>
    %cst_23 = arith.constant 1.000000e+00 : f32
    %33 = vector.broadcast %cst_23 : f32 to vector<16x128xf32>
    %34 = arith.addf %33, %32 : vector<16x128xf32>
    %35 = arith.divf %33, %34 : vector<16x128xf32>
    %36 = vector.extract_strided_slice %23 {offsets = [0, 256], sizes = [16, 128], strides = [1, 1]} : vector<16x512xf32> to vector<16x128xf32>
    %37 = math.tanh %36 : vector<16x128xf32>
    %38 = vector.extract_strided_slice %23 {offsets = [0, 384], sizes = [16, 128], strides = [1, 1]} : vector<16x512xf32> to vector<16x128xf32>
    %39 = arith.negf %38 : vector<16x128xf32>
    %40 = math.exp %39 : vector<16x128xf32>
    %cst_24 = arith.constant 1.000000e+00 : f32
    %41 = vector.broadcast %cst_24 : f32 to vector<16x128xf32>
    %42 = arith.addf %41, %40 : vector<16x128xf32>
    %43 = arith.divf %41, %42 : vector<16x128xf32>
    %44 = arith.mulf %35, %13 : vector<16x128xf32>
    %45 = arith.mulf %29, %37 : vector<16x128xf32>
    %46 = arith.addf %44, %45 : vector<16x128xf32>
    %47 = math.tanh %46 : vector<16x128xf32>
    %48 = arith.mulf %43, %47 : vector<16x128xf32>
    %49 = vector.broadcast %15 : i32 to vector<16x1xi32>
    %50 = arith.cmpi slt, %49, %9 : vector<16x1xi32>
    %51 = vector.shape_cast %50 : vector<16x1xi1> to vector<16x1xi1>
    %52 = vector.broadcast %51 : vector<16x1xi1> to vector<16x128xi1>
    %53 = arith.select %52, %48, %12 : vector<16x128xi1>, vector<16x128xf32>
    %54 = vector.shape_cast %50 : vector<16x1xi1> to vector<16x1xi1>
    %55 = vector.broadcast %54 : vector<16x1xi1> to vector<16x128xi1>
    %56 = arith.select %55, %46, %13 : vector<16x128xi1>, vector<16x128xf32>
    %c1_i32 = arith.constant 1 : i32
    %c8_i32_25 = arith.constant 8 : i32
    %57 = arith.muli %arg1, %c8_i32_25 : i32
    %58 = arith.addi %57, %c1_i32 : i32
    %59 = arith.index_cast %c1_i32 : i32 to index
    %c0_26 = arith.constant 0 : index
    %c0_27 = arith.constant 0 : index
    %60 = vector.load %arg9[%59, %c0_26, %c0_27] : memref<8x16x512xf32, #tpu.memory_space<vmem>>, vector<1x16x512xf32>
    %61 = vector.shape_cast %60 : vector<1x16x512xf32> to vector<16x512xf32>
    %62 = vector.broadcast %11 : vector<1x512xf32> to vector<16x512xf32>
    %63 = arith.addf %61, %62 : vector<16x512xf32>
    %64 = arith.truncf %53 : vector<16x128xf32> to vector<16x128xbf16>
    %cst_28 = arith.constant dense<0.000000e+00> : vector<16x512xf32>
    %65 = tpu.matmul %64, %10, %cst_28 {dimension_numbers = #tpu.dot_dimension_numbers<[1], [0], [0], [1], [0, 0, 1, 1], [], []>} : vector<16x128xbf16>, vector<128x512xbf16>, vector<16x512xf32> -> vector<16x512xf32>
    %66 = arith.addf %63, %65 : vector<16x512xf32>
    %67 = vector.extract_strided_slice %66 {offsets = [0, 0], sizes = [16, 128], strides = [1, 1]} : vector<16x512xf32> to vector<16x128xf32>
    %68 = arith.negf %67 : vector<16x128xf32>
    %69 = math.exp %68 : vector<16x128xf32>
    %cst_29 = arith.constant 1.000000e+00 : f32
    %70 = vector.broadcast %cst_29 : f32 to vector<16x128xf32>
    %71 = arith.addf %70, %69 : vector<16x128xf32>
    %72 = arith.divf %70, %71 : vector<16x128xf32>
    %73 = vector.extract_strided_slice %66 {offsets = [0, 128], sizes = [16, 128], strides = [1, 1]} : vector<16x512xf32> to vector<16x128xf32>
    %74 = arith.negf %73 : vector<16x128xf32>
    %75 = math.exp %74 : vector<16x128xf32>
    %cst_30 = arith.constant 1.000000e+00 : f32
    %76 = vector.broadcast %cst_30 : f32 to vector<16x128xf32>
    %77 = arith.addf %76, %75 : vector<16x128xf32>
    %78 = arith.divf %76, %77 : vector<16x128xf32>
    %79 = vector.extract_strided_slice %66 {offsets = [0, 256], sizes = [16, 128], strides = [1, 1]} : vector<16x512xf32> to vector<16x128xf32>
    %80 = math.tanh %79 : vector<16x128xf32>
    %81 = vector.extract_strided_slice %66 {offsets = [0, 384], sizes = [16, 128], strides = [1, 1]} : vector<16x512xf32> to vector<16x128xf32>
    %82 = arith.negf %81 : vector<16x128xf32>
    %83 = math.exp %82 : vector<16x128xf32>
    %cst_31 = arith.constant 1.000000e+00 : f32
    %84 = vector.broadcast %cst_31 : f32 to vector<16x128xf32>
    %85 = arith.addf %84, %83 : vector<16x128xf32>
    %86 = arith.divf %84, %85 : vector<16x128xf32>
    %87 = arith.mulf %78, %56 : vector<16x128xf32>
    %88 = arith.mulf %72, %80 : vector<16x128xf32>
    %89 = arith.addf %87, %88 : vector<16x128xf32>
    %90 = math.tanh %89 : vector<16x128xf32>
    %91 = arith.mulf %86, %90 : vector<16x128xf32>
    %92 = vector.broadcast %58 : i32 to vector<16x1xi32>
    %93 = arith.cmpi slt, %92, %9 : vector<16x1xi32>
    %94 = vector.shape_cast %93 : vector<16x1xi1> to vector<16x1xi1>
    %95 = vector.broadcast %94 : vector<16x1xi1> to vector<16x128xi1>
    %96 = arith.select %95, %91, %53 : vector<16x128xi1>, vector<16x128xf32>
    %97 = vector.shape_cast %93 : vector<16x1xi1> to vector<16x1xi1>
    %98 = vector.broadcast %97 : vector<16x1xi1> to vector<16x128xi1>
    %99 = arith.select %98, %89, %56 : vector<16x128xi1>, vector<16x128xf32>
    %c2_i32 = arith.constant 2 : i32
    %c8_i32_32 = arith.constant 8 : i32
    %100 = arith.muli %arg1, %c8_i32_32 : i32
    %101 = arith.addi %100, %c2_i32 : i32
    %102 = arith.index_cast %c2_i32 : i32 to index
    %c0_33 = arith.constant 0 : index
    %c0_34 = arith.constant 0 : index
    %103 = vector.load %arg9[%102, %c0_33, %c0_34] : memref<8x16x512xf32, #tpu.memory_space<vmem>>, vector<1x16x512xf32>
    %104 = vector.shape_cast %103 : vector<1x16x512xf32> to vector<16x512xf32>
    %105 = vector.broadcast %11 : vector<1x512xf32> to vector<16x512xf32>
    %106 = arith.addf %104, %105 : vector<16x512xf32>
    %107 = arith.truncf %96 : vector<16x128xf32> to vector<16x128xbf16>
    %cst_35 = arith.constant dense<0.000000e+00> : vector<16x512xf32>
    %108 = tpu.matmul %107, %10, %cst_35 {dimension_numbers = #tpu.dot_dimension_numbers<[1], [0], [0], [1], [0, 0, 1, 1], [], []>} : vector<16x128xbf16>, vector<128x512xbf16>, vector<16x512xf32> -> vector<16x512xf32>
    %109 = arith.addf %106, %108 : vector<16x512xf32>
    %110 = vector.extract_strided_slice %109 {offsets = [0, 0], sizes = [16, 128], strides = [1, 1]} : vector<16x512xf32> to vector<16x128xf32>
    %111 = arith.negf %110 : vector<16x128xf32>
    %112 = math.exp %111 : vector<16x128xf32>
    %cst_36 = arith.constant 1.000000e+00 : f32
    %113 = vector.broadcast %cst_36 : f32 to vector<16x128xf32>
    %114 = arith.addf %113, %112 : vector<16x128xf32>
    %115 = arith.divf %113, %114 : vector<16x128xf32>
    %116 = vector.extract_strided_slice %109 {offsets = [0, 128], sizes = [16, 128], strides = [1, 1]} : vector<16x512xf32> to vector<16x128xf32>
    %117 = arith.negf %116 : vector<16x128xf32>
    %118 = math.exp %117 : vector<16x128xf32>
    %cst_37 = arith.constant 1.000000e+00 : f32
    %119 = vector.broadcast %cst_37 : f32 to vector<16x128xf32>
    %120 = arith.addf %119, %118 : vector<16x128xf32>
    %121 = arith.divf %119, %120 : vector<16x128xf32>
    %122 = vector.extract_strided_slice %109 {offsets = [0, 256], sizes = [16, 128], strides = [1, 1]} : vector<16x512xf32> to vector<16x128xf32>
    %123 = math.tanh %122 : vector<16x128xf32>
    %124 = vector.extract_strided_slice %109 {offsets = [0, 384], sizes = [16, 128], strides = [1, 1]} : vector<16x512xf32> to vector<16x128xf32>
    %125 = arith.negf %124 : vector<16x128xf32>
    %126 = math.exp %125 : vector<16x128xf32>
    %cst_38 = arith.constant 1.000000e+00 : f32
    %127 = vector.broadcast %cst_38 : f32 to vector<16x128xf32>
    %128 = arith.addf %127, %126 : vector<16x128xf32>
    %129 = arith.divf %127, %128 : vector<16x128xf32>
    %130 = arith.mulf %121, %99 : vector<16x128xf32>
    %131 = arith.mulf %115, %123 : vector<16x128xf32>
    %132 = arith.addf %130, %131 : vector<16x128xf32>
    %133 = math.tanh %132 : vector<16x128xf32>
    %134 = arith.mulf %129, %133 : vector<16x128xf32>
    %135 = vector.broadcast %101 : i32 to vector<16x1xi32>
    %136 = arith.cmpi slt, %135, %9 : vector<16x1xi32>
    %137 = vector.shape_cast %136 : vector<16x1xi1> to vector<16x1xi1>
    %138 = vector.broadcast %137 : vector<16x1xi1> to vector<16x128xi1>
    %139 = arith.select %138, %134, %96 : vector<16x128xi1>, vector<16x128xf32>
    %140 = vector.shape_cast %136 : vector<16x1xi1> to vector<16x1xi1>
    %141 = vector.broadcast %140 : vector<16x1xi1> to vector<16x128xi1>
    %142 = arith.select %141, %132, %99 : vector<16x128xi1>, vector<16x128xf32>
    %c3_i32 = arith.constant 3 : i32
    %c8_i32_39 = arith.constant 8 : i32
    %143 = arith.muli %arg1, %c8_i32_39 : i32
    %144 = arith.addi %143, %c3_i32 : i32
    %145 = arith.index_cast %c3_i32 : i32 to index
    %c0_40 = arith.constant 0 : index
    %c0_41 = arith.constant 0 : index
    %146 = vector.load %arg9[%145, %c0_40, %c0_41] : memref<8x16x512xf32, #tpu.memory_space<vmem>>, vector<1x16x512xf32>
    %147 = vector.shape_cast %146 : vector<1x16x512xf32> to vector<16x512xf32>
    %148 = vector.broadcast %11 : vector<1x512xf32> to vector<16x512xf32>
    %149 = arith.addf %147, %148 : vector<16x512xf32>
    %150 = arith.truncf %139 : vector<16x128xf32> to vector<16x128xbf16>
    %cst_42 = arith.constant dense<0.000000e+00> : vector<16x512xf32>
    %151 = tpu.matmul %150, %10, %cst_42 {dimension_numbers = #tpu.dot_dimension_numbers<[1], [0], [0], [1], [0, 0, 1, 1], [], []>} : vector<16x128xbf16>, vector<128x512xbf16>, vector<16x512xf32> -> vector<16x512xf32>
    %152 = arith.addf %149, %151 : vector<16x512xf32>
    %153 = vector.extract_strided_slice %152 {offsets = [0, 0], sizes = [16, 128], strides = [1, 1]} : vector<16x512xf32> to vector<16x128xf32>
    %154 = arith.negf %153 : vector<16x128xf32>
    %155 = math.exp %154 : vector<16x128xf32>
    %cst_43 = arith.constant 1.000000e+00 : f32
    %156 = vector.broadcast %cst_43 : f32 to vector<16x128xf32>
    %157 = arith.addf %156, %155 : vector<16x128xf32>
    %158 = arith.divf %156, %157 : vector<16x128xf32>
    %159 = vector.extract_strided_slice %152 {offsets = [0, 128], sizes = [16, 128], strides = [1, 1]} : vector<16x512xf32> to vector<16x128xf32>
    %160 = arith.negf %159 : vector<16x128xf32>
    %161 = math.exp %160 : vector<16x128xf32>
    %cst_44 = arith.constant 1.000000e+00 : f32
    %162 = vector.broadcast %cst_44 : f32 to vector<16x128xf32>
    %163 = arith.addf %162, %161 : vector<16x128xf32>
    %164 = arith.divf %162, %163 : vector<16x128xf32>
    %165 = vector.extract_strided_slice %152 {offsets = [0, 256], sizes = [16, 128], strides = [1, 1]} : vector<16x512xf32> to vector<16x128xf32>
    %166 = math.tanh %165 : vector<16x128xf32>
    %167 = vector.extract_strided_slice %152 {offsets = [0, 384], sizes = [16, 128], strides = [1, 1]} : vector<16x512xf32> to vector<16x128xf32>
    %168 = arith.negf %167 : vector<16x128xf32>
    %169 = math.exp %168 : vector<16x128xf32>
    %cst_45 = arith.constant 1.000000e+00 : f32
    %170 = vector.broadcast %cst_45 : f32 to vector<16x128xf32>
    %171 = arith.addf %170, %169 : vector<16x128xf32>
    %172 = arith.divf %170, %171 : vector<16x128xf32>
    %173 = arith.mulf %164, %142 : vector<16x128xf32>
    %174 = arith.mulf %158, %166 : vector<16x128xf32>
    %175 = arith.addf %173, %174 : vector<16x128xf32>
    %176 = math.tanh %175 : vector<16x128xf32>
    %177 = arith.mulf %172, %176 : vector<16x128xf32>
    %178 = vector.broadcast %144 : i32 to vector<16x1xi32>
    %179 = arith.cmpi slt, %178, %9 : vector<16x1xi32>
    %180 = vector.shape_cast %179 : vector<16x1xi1> to vector<16x1xi1>
    %181 = vector.broadcast %180 : vector<16x1xi1> to vector<16x128xi1>
    %182 = arith.select %181, %177, %139 : vector<16x128xi1>, vector<16x128xf32>
    %183 = vector.shape_cast %179 : vector<16x1xi1> to vector<16x1xi1>
    %184 = vector.broadcast %183 : vector<16x1xi1> to vector<16x128xi1>
    %185 = arith.select %184, %175, %142 : vector<16x128xi1>, vector<16x128xf32>
    %c4_i32 = arith.constant 4 : i32
    %c8_i32_46 = arith.constant 8 : i32
    %186 = arith.muli %arg1, %c8_i32_46 : i32
    %187 = arith.addi %186, %c4_i32 : i32
    %188 = arith.index_cast %c4_i32 : i32 to index
    %c0_47 = arith.constant 0 : index
    %c0_48 = arith.constant 0 : index
    %189 = vector.load %arg9[%188, %c0_47, %c0_48] : memref<8x16x512xf32, #tpu.memory_space<vmem>>, vector<1x16x512xf32>
    %190 = vector.shape_cast %189 : vector<1x16x512xf32> to vector<16x512xf32>
    %191 = vector.broadcast %11 : vector<1x512xf32> to vector<16x512xf32>
    %192 = arith.addf %190, %191 : vector<16x512xf32>
    %193 = arith.truncf %182 : vector<16x128xf32> to vector<16x128xbf16>
    %cst_49 = arith.constant dense<0.000000e+00> : vector<16x512xf32>
    %194 = tpu.matmul %193, %10, %cst_49 {dimension_numbers = #tpu.dot_dimension_numbers<[1], [0], [0], [1], [0, 0, 1, 1], [], []>} : vector<16x128xbf16>, vector<128x512xbf16>, vector<16x512xf32> -> vector<16x512xf32>
    %195 = arith.addf %192, %194 : vector<16x512xf32>
    %196 = vector.extract_strided_slice %195 {offsets = [0, 0], sizes = [16, 128], strides = [1, 1]} : vector<16x512xf32> to vector<16x128xf32>
    %197 = arith.negf %196 : vector<16x128xf32>
    %198 = math.exp %197 : vector<16x128xf32>
    %cst_50 = arith.constant 1.000000e+00 : f32
    %199 = vector.broadcast %cst_50 : f32 to vector<16x128xf32>
    %200 = arith.addf %199, %198 : vector<16x128xf32>
    %201 = arith.divf %199, %200 : vector<16x128xf32>
    %202 = vector.extract_strided_slice %195 {offsets = [0, 128], sizes = [16, 128], strides = [1, 1]} : vector<16x512xf32> to vector<16x128xf32>
    %203 = arith.negf %202 : vector<16x128xf32>
    %204 = math.exp %203 : vector<16x128xf32>
    %cst_51 = arith.constant 1.000000e+00 : f32
    %205 = vector.broadcast %cst_51 : f32 to vector<16x128xf32>
    %206 = arith.addf %205, %204 : vector<16x128xf32>
    %207 = arith.divf %205, %206 : vector<16x128xf32>
    %208 = vector.extract_strided_slice %195 {offsets = [0, 256], sizes = [16, 128], strides = [1, 1]} : vector<16x512xf32> to vector<16x128xf32>
    %209 = math.tanh %208 : vector<16x128xf32>
    %210 = vector.extract_strided_slice %195 {offsets = [0, 384], sizes = [16, 128], strides = [1, 1]} : vector<16x512xf32> to vector<16x128xf32>
    %211 = arith.negf %210 : vector<16x128xf32>
    %212 = math.exp %211 : vector<16x128xf32>
    %cst_52 = arith.constant 1.000000e+00 : f32
    %213 = vector.broadcast %cst_52 : f32 to vector<16x128xf32>
    %214 = arith.addf %213, %212 : vector<16x128xf32>
    %215 = arith.divf %213, %214 : vector<16x128xf32>
    %216 = arith.mulf %207, %185 : vector<16x128xf32>
    %217 = arith.mulf %201, %209 : vector<16x128xf32>
    %218 = arith.addf %216, %217 : vector<16x128xf32>
    %219 = math.tanh %218 : vector<16x128xf32>
    %220 = arith.mulf %215, %219 : vector<16x128xf32>
    %221 = vector.broadcast %187 : i32 to vector<16x1xi32>
    %222 = arith.cmpi slt, %221, %9 : vector<16x1xi32>
    %223 = vector.shape_cast %222 : vector<16x1xi1> to vector<16x1xi1>
    %224 = vector.broadcast %223 : vector<16x1xi1> to vector<16x128xi1>
    %225 = arith.select %224, %220, %182 : vector<16x128xi1>, vector<16x128xf32>
    %226 = vector.shape_cast %222 : vector<16x1xi1> to vector<16x1xi1>
    %227 = vector.broadcast %226 : vector<16x1xi1> to vector<16x128xi1>
    %228 = arith.select %227, %218, %185 : vector<16x128xi1>, vector<16x128xf32>
    %c5_i32 = arith.constant 5 : i32
    %c8_i32_53 = arith.constant 8 : i32
    %229 = arith.muli %arg1, %c8_i32_53 : i32
    %230 = arith.addi %229, %c5_i32 : i32
    %231 = arith.index_cast %c5_i32 : i32 to index
    %c0_54 = arith.constant 0 : index
    %c0_55 = arith.constant 0 : index
    %232 = vector.load %arg9[%231, %c0_54, %c0_55] : memref<8x16x512xf32, #tpu.memory_space<vmem>>, vector<1x16x512xf32>
    %233 = vector.shape_cast %232 : vector<1x16x512xf32> to vector<16x512xf32>
    %234 = vector.broadcast %11 : vector<1x512xf32> to vector<16x512xf32>
    %235 = arith.addf %233, %234 : vector<16x512xf32>
    %236 = arith.truncf %225 : vector<16x128xf32> to vector<16x128xbf16>
    %cst_56 = arith.constant dense<0.000000e+00> : vector<16x512xf32>
    %237 = tpu.matmul %236, %10, %cst_56 {dimension_numbers = #tpu.dot_dimension_numbers<[1], [0], [0], [1], [0, 0, 1, 1], [], []>} : vector<16x128xbf16>, vector<128x512xbf16>, vector<16x512xf32> -> vector<16x512xf32>
    %238 = arith.addf %235, %237 : vector<16x512xf32>
    %239 = vector.extract_strided_slice %238 {offsets = [0, 0], sizes = [16, 128], strides = [1, 1]} : vector<16x512xf32> to vector<16x128xf32>
    %240 = arith.negf %239 : vector<16x128xf32>
    %241 = math.exp %240 : vector<16x128xf32>
    %cst_57 = arith.constant 1.000000e+00 : f32
    %242 = vector.broadcast %cst_57 : f32 to vector<16x128xf32>
    %243 = arith.addf %242, %241 : vector<16x128xf32>
    %244 = arith.divf %242, %243 : vector<16x128xf32>
    %245 = vector.extract_strided_slice %238 {offsets = [0, 128], sizes = [16, 128], strides = [1, 1]} : vector<16x512xf32> to vector<16x128xf32>
    %246 = arith.negf %245 : vector<16x128xf32>
    %247 = math.exp %246 : vector<16x128xf32>
    %cst_58 = arith.constant 1.000000e+00 : f32
    %248 = vector.broadcast %cst_58 : f32 to vector<16x128xf32>
    %249 = arith.addf %248, %247 : vector<16x128xf32>
    %250 = arith.divf %248, %249 : vector<16x128xf32>
    %251 = vector.extract_strided_slice %238 {offsets = [0, 256], sizes = [16, 128], strides = [1, 1]} : vector<16x512xf32> to vector<16x128xf32>
    %252 = math.tanh %251 : vector<16x128xf32>
    %253 = vector.extract_strided_slice %238 {offsets = [0, 384], sizes = [16, 128], strides = [1, 1]} : vector<16x512xf32> to vector<16x128xf32>
    %254 = arith.negf %253 : vector<16x128xf32>
    %255 = math.exp %254 : vector<16x128xf32>
    %cst_59 = arith.constant 1.000000e+00 : f32
    %256 = vector.broadcast %cst_59 : f32 to vector<16x128xf32>
    %257 = arith.addf %256, %255 : vector<16x128xf32>
    %258 = arith.divf %256, %257 : vector<16x128xf32>
    %259 = arith.mulf %250, %228 : vector<16x128xf32>
    %260 = arith.mulf %244, %252 : vector<16x128xf32>
    %261 = arith.addf %259, %260 : vector<16x128xf32>
    %262 = math.tanh %261 : vector<16x128xf32>
    %263 = arith.mulf %258, %262 : vector<16x128xf32>
    %264 = vector.broadcast %230 : i32 to vector<16x1xi32>
    %265 = arith.cmpi slt, %264, %9 : vector<16x1xi32>
    %266 = vector.shape_cast %265 : vector<16x1xi1> to vector<16x1xi1>
    %267 = vector.broadcast %266 : vector<16x1xi1> to vector<16x128xi1>
    %268 = arith.select %267, %263, %225 : vector<16x128xi1>, vector<16x128xf32>
    %269 = vector.shape_cast %265 : vector<16x1xi1> to vector<16x1xi1>
    %270 = vector.broadcast %269 : vector<16x1xi1> to vector<16x128xi1>
    %271 = arith.select %270, %261, %228 : vector<16x128xi1>, vector<16x128xf32>
    %c6_i32 = arith.constant 6 : i32
    %c8_i32_60 = arith.constant 8 : i32
    %272 = arith.muli %arg1, %c8_i32_60 : i32
    %273 = arith.addi %272, %c6_i32 : i32
    %274 = arith.index_cast %c6_i32 : i32 to index
    %c0_61 = arith.constant 0 : index
    %c0_62 = arith.constant 0 : index
    %275 = vector.load %arg9[%274, %c0_61, %c0_62] : memref<8x16x512xf32, #tpu.memory_space<vmem>>, vector<1x16x512xf32>
    %276 = vector.shape_cast %275 : vector<1x16x512xf32> to vector<16x512xf32>
    %277 = vector.broadcast %11 : vector<1x512xf32> to vector<16x512xf32>
    %278 = arith.addf %276, %277 : vector<16x512xf32>
    %279 = arith.truncf %268 : vector<16x128xf32> to vector<16x128xbf16>
    %cst_63 = arith.constant dense<0.000000e+00> : vector<16x512xf32>
    %280 = tpu.matmul %279, %10, %cst_63 {dimension_numbers = #tpu.dot_dimension_numbers<[1], [0], [0], [1], [0, 0, 1, 1], [], []>} : vector<16x128xbf16>, vector<128x512xbf16>, vector<16x512xf32> -> vector<16x512xf32>
    %281 = arith.addf %278, %280 : vector<16x512xf32>
    %282 = vector.extract_strided_slice %281 {offsets = [0, 0], sizes = [16, 128], strides = [1, 1]} : vector<16x512xf32> to vector<16x128xf32>
    %283 = arith.negf %282 : vector<16x128xf32>
    %284 = math.exp %283 : vector<16x128xf32>
    %cst_64 = arith.constant 1.000000e+00 : f32
    %285 = vector.broadcast %cst_64 : f32 to vector<16x128xf32>
    %286 = arith.addf %285, %284 : vector<16x128xf32>
    %287 = arith.divf %285, %286 : vector<16x128xf32>
    %288 = vector.extract_strided_slice %281 {offsets = [0, 128], sizes = [16, 128], strides = [1, 1]} : vector<16x512xf32> to vector<16x128xf32>
    %289 = arith.negf %288 : vector<16x128xf32>
    %290 = math.exp %289 : vector<16x128xf32>
    %cst_65 = arith.constant 1.000000e+00 : f32
    %291 = vector.broadcast %cst_65 : f32 to vector<16x128xf32>
    %292 = arith.addf %291, %290 : vector<16x128xf32>
    %293 = arith.divf %291, %292 : vector<16x128xf32>
    %294 = vector.extract_strided_slice %281 {offsets = [0, 256], sizes = [16, 128], strides = [1, 1]} : vector<16x512xf32> to vector<16x128xf32>
    %295 = math.tanh %294 : vector<16x128xf32>
    %296 = vector.extract_strided_slice %281 {offsets = [0, 384], sizes = [16, 128], strides = [1, 1]} : vector<16x512xf32> to vector<16x128xf32>
    %297 = arith.negf %296 : vector<16x128xf32>
    %298 = math.exp %297 : vector<16x128xf32>
    %cst_66 = arith.constant 1.000000e+00 : f32
    %299 = vector.broadcast %cst_66 : f32 to vector<16x128xf32>
    %300 = arith.addf %299, %298 : vector<16x128xf32>
    %301 = arith.divf %299, %300 : vector<16x128xf32>
    %302 = arith.mulf %293, %271 : vector<16x128xf32>
    %303 = arith.mulf %287, %295 : vector<16x128xf32>
    %304 = arith.addf %302, %303 : vector<16x128xf32>
    %305 = math.tanh %304 : vector<16x128xf32>
    %306 = arith.mulf %301, %305 : vector<16x128xf32>
    %307 = vector.broadcast %273 : i32 to vector<16x1xi32>
    %308 = arith.cmpi slt, %307, %9 : vector<16x1xi32>
    %309 = vector.shape_cast %308 : vector<16x1xi1> to vector<16x1xi1>
    %310 = vector.broadcast %309 : vector<16x1xi1> to vector<16x128xi1>
    %311 = arith.select %310, %306, %268 : vector<16x128xi1>, vector<16x128xf32>
    %312 = vector.shape_cast %308 : vector<16x1xi1> to vector<16x1xi1>
    %313 = vector.broadcast %312 : vector<16x1xi1> to vector<16x128xi1>
    %314 = arith.select %313, %304, %271 : vector<16x128xi1>, vector<16x128xf32>
    %c7_i32 = arith.constant 7 : i32
    %c8_i32_67 = arith.constant 8 : i32
    %315 = arith.muli %arg1, %c8_i32_67 : i32
    %316 = arith.addi %315, %c7_i32 : i32
    %317 = arith.index_cast %c7_i32 : i32 to index
    %c0_68 = arith.constant 0 : index
    %c0_69 = arith.constant 0 : index
    %318 = vector.load %arg9[%317, %c0_68, %c0_69] : memref<8x16x512xf32, #tpu.memory_space<vmem>>, vector<1x16x512xf32>
    %319 = vector.shape_cast %318 : vector<1x16x512xf32> to vector<16x512xf32>
    %320 = vector.broadcast %11 : vector<1x512xf32> to vector<16x512xf32>
    %321 = arith.addf %319, %320 : vector<16x512xf32>
    %322 = arith.truncf %311 : vector<16x128xf32> to vector<16x128xbf16>
    %cst_70 = arith.constant dense<0.000000e+00> : vector<16x512xf32>
    %323 = tpu.matmul %322, %10, %cst_70 {dimension_numbers = #tpu.dot_dimension_numbers<[1], [0], [0], [1], [0, 0, 1, 1], [], []>} : vector<16x128xbf16>, vector<128x512xbf16>, vector<16x512xf32> -> vector<16x512xf32>
    %324 = arith.addf %321, %323 : vector<16x512xf32>
    %325 = vector.extract_strided_slice %324 {offsets = [0, 0], sizes = [16, 128], strides = [1, 1]} : vector<16x512xf32> to vector<16x128xf32>
    %326 = arith.negf %325 : vector<16x128xf32>
    %327 = math.exp %326 : vector<16x128xf32>
    %cst_71 = arith.constant 1.000000e+00 : f32
    %328 = vector.broadcast %cst_71 : f32 to vector<16x128xf32>
    %329 = arith.addf %328, %327 : vector<16x128xf32>
    %330 = arith.divf %328, %329 : vector<16x128xf32>
    %331 = vector.extract_strided_slice %324 {offsets = [0, 128], sizes = [16, 128], strides = [1, 1]} : vector<16x512xf32> to vector<16x128xf32>
    %332 = arith.negf %331 : vector<16x128xf32>
    %333 = math.exp %332 : vector<16x128xf32>
    %cst_72 = arith.constant 1.000000e+00 : f32
    %334 = vector.broadcast %cst_72 : f32 to vector<16x128xf32>
    %335 = arith.addf %334, %333 : vector<16x128xf32>
    %336 = arith.divf %334, %335 : vector<16x128xf32>
    %337 = vector.extract_strided_slice %324 {offsets = [0, 256], sizes = [16, 128], strides = [1, 1]} : vector<16x512xf32> to vector<16x128xf32>
    %338 = math.tanh %337 : vector<16x128xf32>
    %339 = vector.extract_strided_slice %324 {offsets = [0, 384], sizes = [16, 128], strides = [1, 1]} : vector<16x512xf32> to vector<16x128xf32>
    %340 = arith.negf %339 : vector<16x128xf32>
    %341 = math.exp %340 : vector<16x128xf32>
    %cst_73 = arith.constant 1.000000e+00 : f32
    %342 = vector.broadcast %cst_73 : f32 to vector<16x128xf32>
    %343 = arith.addf %342, %341 : vector<16x128xf32>
    %344 = arith.divf %342, %343 : vector<16x128xf32>
    %345 = arith.mulf %336, %314 : vector<16x128xf32>
    %346 = arith.mulf %330, %338 : vector<16x128xf32>
    %347 = arith.addf %345, %346 : vector<16x128xf32>
    %348 = math.tanh %347 : vector<16x128xf32>
    %349 = arith.mulf %344, %348 : vector<16x128xf32>
    %350 = vector.broadcast %316 : i32 to vector<16x1xi32>
    %351 = arith.cmpi slt, %350, %9 : vector<16x1xi32>
    %352 = vector.shape_cast %351 : vector<16x1xi1> to vector<16x1xi1>
    %353 = vector.broadcast %352 : vector<16x1xi1> to vector<16x128xi1>
    %354 = arith.select %353, %349, %311 : vector<16x128xi1>, vector<16x128xf32>
    %355 = vector.shape_cast %351 : vector<16x1xi1> to vector<16x1xi1>
    %356 = vector.broadcast %355 : vector<16x1xi1> to vector<16x128xi1>
    %357 = arith.select %356, %347, %314 : vector<16x128xi1>, vector<16x128xf32>
    %c8_i32_74 = arith.constant 8 : i32
    %c0_75 = arith.constant 0 : index
    %c0_76 = arith.constant 0 : index
    %358 = vector.load %arg7[%c0_75, %c0_76] : memref<16x128xf32, #tpu.memory_space<vmem>>, vector<16x128xf32>
    tpu.vector_store %arg7[%c0_75, %c0_76], %354 {strides = array<i32>} : memref<16x128xf32, #tpu.memory_space<vmem>>, vector<16x128xf32>,
    %c0_77 = arith.constant 0 : index
    %c0_78 = arith.constant 0 : index
    %359 = vector.load %arg8[%c0_77, %c0_78] : memref<16x128xf32, #tpu.memory_space<vmem>>, vector<16x128xf32>
    tpu.vector_store %arg8[%c0_77, %c0_78], %357 {strides = array<i32>} : memref<16x128xf32, #tpu.memory_space<vmem>>, vector<16x128xf32>,
    return
  }
  func.func @transform_0(%arg0: i32, %arg1: i32) -> (i32, i32, i32) {
    %c0_i32 = arith.constant 0 : i32
    %c0_i32_0 = arith.constant 0 : i32
    return %arg1, %arg0, %c0_i32 : i32, i32, i32
  }
  func.func @transform_1(%arg0: i32, %arg1: i32) -> (i32, i32) {
    %c0_i32 = arith.constant 0 : i32
    %c0_i32_0 = arith.constant 0 : i32
    return %arg0, %c0_i32 : i32, i32
  }
  func.func @transform_2(%arg0: i32, %arg1: i32) -> (i32, i32) {
    %c0_i32 = arith.constant 0 : i32
    %c0_i32_0 = arith.constant 0 : i32
    %c0_i32_1 = arith.constant 0 : i32
    return %c0_i32, %c0_i32_0 : i32, i32
  }
  func.func @transform_3(%arg0: i32, %arg1: i32) -> (i32, i32) {
    %c0_i32 = arith.constant 0 : i32
    %c0_i32_0 = arith.constant 0 : i32
    %c0_i32_1 = arith.constant 0 : i32
    return %c0_i32, %c0_i32_0 : i32, i32
  }
  func.func @transform_4(%arg0: i32, %arg1: i32) -> (i32, i32) {
    %c0_i32 = arith.constant 0 : i32
    %c0_i32_0 = arith.constant 0 : i32
    %c0_i32_1 = arith.constant 0 : i32
    return %c0_i32, %c0_i32_0 : i32, i32
  }
  func.func @transform_5(%arg0: i32, %arg1: i32) -> (i32, i32) {
    %c0_i32 = arith.constant 0 : i32
    %c0_i32_0 = arith.constant 0 : i32
    return %arg0, %c0_i32 : i32, i32
  }
  func.func @transform_6(%arg0: i32, %arg1: i32) -> (i32, i32) {
    %c0_i32 = arith.constant 0 : i32
    %c0_i32_0 = arith.constant 0 : i32
    return %arg0, %c0_i32 : i32, i32
  }
}

module attributes {stable_mosaic.version = 11 : i64} {
  func.func @_decoder_kernel(%arg0: i32, %arg1: i32, %arg2: memref<8xi32, #tpu.memory_space<smem>>, %arg3: memref<16x128xf32, #tpu.memory_space<vmem>>, %arg4: memref<16x128xf32, #tpu.memory_space<vmem>>, %arg5: memref<8x16x128xbf16, #tpu.memory_space<vmem>>, %arg6: memref<128x512xbf16, #tpu.memory_space<vmem>>, %arg7: memref<128x1024xbf16, #tpu.memory_space<vmem>>, %arg8: memref<1x512xf32, #tpu.memory_space<vmem>>, %arg9: memref<1x512xf32, #tpu.memory_space<vmem>>, %arg10: memref<128x128xbf16, #tpu.memory_space<vmem>>, %arg11: memref<1x128xf32, #tpu.memory_space<vmem>>, %arg12: memref<8x16x128xf32, #tpu.memory_space<vmem>>, %arg13: memref<16x128xf32, #tpu.memory_space<vmem>>, %arg14: memref<16x128xf32, #tpu.memory_space<vmem>>, %arg15: memref<8x16x512xf32, #tpu.memory_space<vmem>>, %arg16: memref<8x16x128xbf16, #tpu.memory_space<vmem>>) attributes {dimension_semantics = [#tpu.dimension_semantics<parallel>, #tpu.dimension_semantics<arbitrary>], iteration_bounds = array<i64: 1, 1>, scalar_prefetch = 1 : i64, scratch_operands = 4 : i64, tpu.core_type = #tpu.core_type<tc>, window_params = [{transform_indices = @transform_0, window_bounds = array<i64: 16, 128>}, {transform_indices = @transform_1, window_bounds = array<i64: 16, 128>}, {transform_indices = @transform_2, window_bounds = array<i64: 8, 16, 128>}, {pipeline_mode = #tpu.pipeline_mode<synchronous>, transform_indices = @transform_3, window_bounds = array<i64: 128, 512>}, {pipeline_mode = #tpu.pipeline_mode<synchronous>, transform_indices = @transform_4, window_bounds = array<i64: 128, 1024>}, {pipeline_mode = #tpu.pipeline_mode<synchronous>, transform_indices = @transform_5, window_bounds = array<i64: 1, 512>}, {pipeline_mode = #tpu.pipeline_mode<synchronous>, transform_indices = @transform_6, window_bounds = array<i64: 1, 512>}, {pipeline_mode = #tpu.pipeline_mode<synchronous>, transform_indices = @transform_7, window_bounds = array<i64: 128, 128>}, {pipeline_mode = #tpu.pipeline_mode<synchronous>, transform_indices = @transform_8, window_bounds = array<i64: 1, 128>}, {transform_indices = @transform_9, window_bounds = array<i64: 8, 16, 128>}]} {
    %c0_i32 = arith.constant 0 : i32
    %0 = arith.cmpi eq, %arg1, %c0_i32 : i32
    %1 = arith.extui %0 : i1 to i32
    %c0_i32_0 = arith.constant 0 : i32
    %2 = arith.cmpi ne, %1, %c0_i32_0 : i32
    scf.if %2 {
      %c0_114 = arith.constant 0 : index
      %c0_115 = arith.constant 0 : index
      %409 = vector.load %arg3[%c0_114, %c0_115] : memref<16x128xf32, #tpu.memory_space<vmem>>, vector<16x128xf32>
      %c0_116 = arith.constant 0 : index
      %c0_117 = arith.constant 0 : index
      %410 = vector.load %arg13[%c0_116, %c0_117] : memref<16x128xf32, #tpu.memory_space<vmem>>, vector<16x128xf32>
      tpu.vector_store %arg13[%c0_116, %c0_117], %409 {strides = array<i32>} : memref<16x128xf32, #tpu.memory_space<vmem>>, vector<16x128xf32>,
      %c0_118 = arith.constant 0 : index
      %c0_119 = arith.constant 0 : index
      %411 = vector.load %arg4[%c0_118, %c0_119] : memref<16x128xf32, #tpu.memory_space<vmem>>, vector<16x128xf32>
      %c0_120 = arith.constant 0 : index
      %c0_121 = arith.constant 0 : index
      %412 = vector.load %arg14[%c0_120, %c0_121] : memref<16x128xf32, #tpu.memory_space<vmem>>, vector<16x128xf32>
      tpu.vector_store %arg14[%c0_120, %c0_121], %411 {strides = array<i32>} : memref<16x128xf32, #tpu.memory_space<vmem>>, vector<16x128xf32>,
    } else {
    }
    %c0 = arith.constant 0 : index
    %c0_1 = arith.constant 0 : index
    %c0_2 = arith.constant 0 : index
    %3 = vector.load %arg5[%c0, %c0_1, %c0_2] : memref<8x16x128xbf16, #tpu.memory_space<vmem>>, vector<8x16x128xbf16>
    %4 = vector.shape_cast %3 : vector<8x16x128xbf16> to vector<128x128xbf16>
    %c0_3 = arith.constant 0 : index
    %c0_4 = arith.constant 0 : index
    %5 = vector.load %arg6[%c0_3, %c0_4] : memref<128x512xbf16, #tpu.memory_space<vmem>>, vector<128x512xbf16>
    %cst = arith.constant dense<0.000000e+00> : vector<128x512xf32>
    %6 = tpu.matmul %4, %5, %cst {dimension_numbers = #tpu.dot_dimension_numbers<[1], [0], [0], [1], [0, 0, 1, 1], [], []>} : vector<128x128xbf16>, vector<128x512xbf16>, vector<128x512xf32> -> vector<128x512xf32>
    %7 = vector.shape_cast %6 : vector<128x512xf32> to vector<8x16x512xf32>
    %c0_5 = arith.constant 0 : index
    %c0_6 = arith.constant 0 : index
    %c0_7 = arith.constant 0 : index
    %8 = vector.load %arg15[%c0_5, %c0_6, %c0_7] : memref<8x16x512xf32, #tpu.memory_space<vmem>>, vector<8x16x512xf32>
    tpu.vector_store %arg15[%c0_5, %c0_6, %c0_7], %7 {strides = array<i32>} : memref<8x16x512xf32, #tpu.memory_space<vmem>>, vector<8x16x512xf32>,
    %c0_8 = arith.constant 0 : index
    %c0_9 = arith.constant 0 : index
    %9 = vector.load %arg7[%c0_8, %c0_9] : memref<128x1024xbf16, #tpu.memory_space<vmem>>, vector<128x1024xbf16>
    %c0_10 = arith.constant 0 : index
    %c0_11 = arith.constant 0 : index
    %10 = vector.load %arg8[%c0_10, %c0_11] : memref<1x512xf32, #tpu.memory_space<vmem>>, vector<1x512xf32>
    %c0_12 = arith.constant 0 : index
    %c0_13 = arith.constant 0 : index
    %11 = vector.load %arg9[%c0_12, %c0_13] : memref<1x512xf32, #tpu.memory_space<vmem>>, vector<1x512xf32>
    %c0_14 = arith.constant 0 : index
    %c0_15 = arith.constant 0 : index
    %12 = vector.load %arg13[%c0_14, %c0_15] : memref<16x128xf32, #tpu.memory_space<vmem>>, vector<16x128xf32>
    %c0_16 = arith.constant 0 : index
    %c0_17 = arith.constant 0 : index
    %13 = vector.load %arg14[%c0_16, %c0_17] : memref<16x128xf32, #tpu.memory_space<vmem>>, vector<16x128xf32>
    %c0_i32_18 = arith.constant 0 : i32
    %c8_i32 = arith.constant 8 : i32
    %14 = arith.muli %arg1, %c8_i32 : i32
    %15 = arith.addi %14, %c0_i32_18 : i32
    %16 = arith.truncf %12 : vector<16x128xf32> to vector<16x128xbf16>
    %cst_19 = arith.constant dense<0.000000e+00> : vector<16x1024xf32>
    %17 = tpu.matmul %16, %9, %cst_19 {dimension_numbers = #tpu.dot_dimension_numbers<[1], [0], [0], [1], [0, 0, 1, 1], [], []>} : vector<16x128xbf16>, vector<128x1024xbf16>, vector<16x1024xf32> -> vector<16x1024xf32>
    %18 = arith.index_cast %15 : i32 to index
    %19 = memref.load %arg2[%18] : memref<8xi32, #tpu.memory_space<smem>>
    %c0_i32_20 = arith.constant 0 : i32
    %20 = arith.cmpi sgt, %19, %c0_i32_20 : i32
    %21 = vector.extract_strided_slice %17 {offsets = [0, 0], sizes = [16, 512], strides = [1, 1]} : vector<16x1024xf32> to vector<16x512xf32>
    %22 = arith.index_cast %c0_i32_18 : i32 to index
    %c0_21 = arith.constant 0 : index
    %c0_22 = arith.constant 0 : index
    %23 = vector.load %arg15[%22, %c0_21, %c0_22] : memref<8x16x512xf32, #tpu.memory_space<vmem>>, vector<1x16x512xf32>
    %24 = vector.shape_cast %23 : vector<1x16x512xf32> to vector<16x512xf32>
    %25 = arith.addf %21, %24 : vector<16x512xf32>
    %26 = vector.extract_strided_slice %17 {offsets = [0, 512], sizes = [16, 512], strides = [1, 1]} : vector<16x1024xf32> to vector<16x512xf32>
    %27 = vector.broadcast %11 : vector<1x512xf32> to vector<16x512xf32>
    %28 = arith.addf %26, %27 : vector<16x512xf32>
    %29 = arith.select %20, %25, %28 : vector<16x512xf32>
    %30 = vector.broadcast %10 : vector<1x512xf32> to vector<16x512xf32>
    %31 = arith.addf %29, %30 : vector<16x512xf32>
    %32 = vector.extract_strided_slice %31 {offsets = [0, 0], sizes = [16, 128], strides = [1, 1]} : vector<16x512xf32> to vector<16x128xf32>
    %33 = arith.negf %32 : vector<16x128xf32>
    %34 = math.exp %33 : vector<16x128xf32>
    %cst_23 = arith.constant 1.000000e+00 : f32
    %35 = vector.broadcast %cst_23 : f32 to vector<16x128xf32>
    %36 = arith.addf %35, %34 : vector<16x128xf32>
    %37 = arith.divf %35, %36 : vector<16x128xf32>
    %38 = vector.extract_strided_slice %31 {offsets = [0, 128], sizes = [16, 128], strides = [1, 1]} : vector<16x512xf32> to vector<16x128xf32>
    %39 = arith.negf %38 : vector<16x128xf32>
    %40 = math.exp %39 : vector<16x128xf32>
    %cst_24 = arith.constant 1.000000e+00 : f32
    %41 = vector.broadcast %cst_24 : f32 to vector<16x128xf32>
    %42 = arith.addf %41, %40 : vector<16x128xf32>
    %43 = arith.divf %41, %42 : vector<16x128xf32>
    %44 = vector.extract_strided_slice %31 {offsets = [0, 256], sizes = [16, 128], strides = [1, 1]} : vector<16x512xf32> to vector<16x128xf32>
    %45 = math.tanh %44 : vector<16x128xf32>
    %46 = vector.extract_strided_slice %31 {offsets = [0, 384], sizes = [16, 128], strides = [1, 1]} : vector<16x512xf32> to vector<16x128xf32>
    %47 = arith.negf %46 : vector<16x128xf32>
    %48 = math.exp %47 : vector<16x128xf32>
    %cst_25 = arith.constant 1.000000e+00 : f32
    %49 = vector.broadcast %cst_25 : f32 to vector<16x128xf32>
    %50 = arith.addf %49, %48 : vector<16x128xf32>
    %51 = arith.divf %49, %50 : vector<16x128xf32>
    %52 = arith.mulf %43, %13 : vector<16x128xf32>
    %53 = arith.mulf %37, %45 : vector<16x128xf32>
    %54 = arith.addf %52, %53 : vector<16x128xf32>
    %55 = math.tanh %54 : vector<16x128xf32>
    %56 = arith.mulf %51, %55 : vector<16x128xf32>
    %57 = arith.truncf %56 : vector<16x128xf32> to vector<16x128xbf16>
    %58 = arith.index_cast %c0_i32_18 : i32 to index
    %c0_26 = arith.constant 0 : index
    %c0_27 = arith.constant 0 : index
    %59 = vector.load %arg16[%58, %c0_26, %c0_27] : memref<8x16x128xbf16, #tpu.memory_space<vmem>>, vector<1x16x128xbf16>
    %60 = vector.shape_cast %59 : vector<1x16x128xbf16> to vector<16x128xbf16>
    %61 = vector.shape_cast %57 : vector<16x128xbf16> to vector<1x16x128xbf16>
    tpu.vector_store %arg16[%58, %c0_26, %c0_27], %61 {strides = array<i32>} : memref<8x16x128xbf16, #tpu.memory_space<vmem>>, vector<1x16x128xbf16>,
    %c1_i32 = arith.constant 1 : i32
    %c8_i32_28 = arith.constant 8 : i32
    %62 = arith.muli %arg1, %c8_i32_28 : i32
    %63 = arith.addi %62, %c1_i32 : i32
    %64 = arith.truncf %56 : vector<16x128xf32> to vector<16x128xbf16>
    %cst_29 = arith.constant dense<0.000000e+00> : vector<16x1024xf32>
    %65 = tpu.matmul %64, %9, %cst_29 {dimension_numbers = #tpu.dot_dimension_numbers<[1], [0], [0], [1], [0, 0, 1, 1], [], []>} : vector<16x128xbf16>, vector<128x1024xbf16>, vector<16x1024xf32> -> vector<16x1024xf32>
    %66 = arith.index_cast %63 : i32 to index
    %67 = memref.load %arg2[%66] : memref<8xi32, #tpu.memory_space<smem>>
    %c0_i32_30 = arith.constant 0 : i32
    %68 = arith.cmpi sgt, %67, %c0_i32_30 : i32
    %69 = vector.extract_strided_slice %65 {offsets = [0, 0], sizes = [16, 512], strides = [1, 1]} : vector<16x1024xf32> to vector<16x512xf32>
    %70 = arith.index_cast %c1_i32 : i32 to index
    %c0_31 = arith.constant 0 : index
    %c0_32 = arith.constant 0 : index
    %71 = vector.load %arg15[%70, %c0_31, %c0_32] : memref<8x16x512xf32, #tpu.memory_space<vmem>>, vector<1x16x512xf32>
    %72 = vector.shape_cast %71 : vector<1x16x512xf32> to vector<16x512xf32>
    %73 = arith.addf %69, %72 : vector<16x512xf32>
    %74 = vector.extract_strided_slice %65 {offsets = [0, 512], sizes = [16, 512], strides = [1, 1]} : vector<16x1024xf32> to vector<16x512xf32>
    %75 = vector.broadcast %11 : vector<1x512xf32> to vector<16x512xf32>
    %76 = arith.addf %74, %75 : vector<16x512xf32>
    %77 = arith.select %68, %73, %76 : vector<16x512xf32>
    %78 = vector.broadcast %10 : vector<1x512xf32> to vector<16x512xf32>
    %79 = arith.addf %77, %78 : vector<16x512xf32>
    %80 = vector.extract_strided_slice %79 {offsets = [0, 0], sizes = [16, 128], strides = [1, 1]} : vector<16x512xf32> to vector<16x128xf32>
    %81 = arith.negf %80 : vector<16x128xf32>
    %82 = math.exp %81 : vector<16x128xf32>
    %cst_33 = arith.constant 1.000000e+00 : f32
    %83 = vector.broadcast %cst_33 : f32 to vector<16x128xf32>
    %84 = arith.addf %83, %82 : vector<16x128xf32>
    %85 = arith.divf %83, %84 : vector<16x128xf32>
    %86 = vector.extract_strided_slice %79 {offsets = [0, 128], sizes = [16, 128], strides = [1, 1]} : vector<16x512xf32> to vector<16x128xf32>
    %87 = arith.negf %86 : vector<16x128xf32>
    %88 = math.exp %87 : vector<16x128xf32>
    %cst_34 = arith.constant 1.000000e+00 : f32
    %89 = vector.broadcast %cst_34 : f32 to vector<16x128xf32>
    %90 = arith.addf %89, %88 : vector<16x128xf32>
    %91 = arith.divf %89, %90 : vector<16x128xf32>
    %92 = vector.extract_strided_slice %79 {offsets = [0, 256], sizes = [16, 128], strides = [1, 1]} : vector<16x512xf32> to vector<16x128xf32>
    %93 = math.tanh %92 : vector<16x128xf32>
    %94 = vector.extract_strided_slice %79 {offsets = [0, 384], sizes = [16, 128], strides = [1, 1]} : vector<16x512xf32> to vector<16x128xf32>
    %95 = arith.negf %94 : vector<16x128xf32>
    %96 = math.exp %95 : vector<16x128xf32>
    %cst_35 = arith.constant 1.000000e+00 : f32
    %97 = vector.broadcast %cst_35 : f32 to vector<16x128xf32>
    %98 = arith.addf %97, %96 : vector<16x128xf32>
    %99 = arith.divf %97, %98 : vector<16x128xf32>
    %100 = arith.mulf %91, %54 : vector<16x128xf32>
    %101 = arith.mulf %85, %93 : vector<16x128xf32>
    %102 = arith.addf %100, %101 : vector<16x128xf32>
    %103 = math.tanh %102 : vector<16x128xf32>
    %104 = arith.mulf %99, %103 : vector<16x128xf32>
    %105 = arith.truncf %104 : vector<16x128xf32> to vector<16x128xbf16>
    %106 = arith.index_cast %c1_i32 : i32 to index
    %c0_36 = arith.constant 0 : index
    %c0_37 = arith.constant 0 : index
    %107 = vector.load %arg16[%106, %c0_36, %c0_37] : memref<8x16x128xbf16, #tpu.memory_space<vmem>>, vector<1x16x128xbf16>
    %108 = vector.shape_cast %107 : vector<1x16x128xbf16> to vector<16x128xbf16>
    %109 = vector.shape_cast %105 : vector<16x128xbf16> to vector<1x16x128xbf16>
    tpu.vector_store %arg16[%106, %c0_36, %c0_37], %109 {strides = array<i32>} : memref<8x16x128xbf16, #tpu.memory_space<vmem>>, vector<1x16x128xbf16>,
    %c2_i32 = arith.constant 2 : i32
    %c8_i32_38 = arith.constant 8 : i32
    %110 = arith.muli %arg1, %c8_i32_38 : i32
    %111 = arith.addi %110, %c2_i32 : i32
    %112 = arith.truncf %104 : vector<16x128xf32> to vector<16x128xbf16>
    %cst_39 = arith.constant dense<0.000000e+00> : vector<16x1024xf32>
    %113 = tpu.matmul %112, %9, %cst_39 {dimension_numbers = #tpu.dot_dimension_numbers<[1], [0], [0], [1], [0, 0, 1, 1], [], []>} : vector<16x128xbf16>, vector<128x1024xbf16>, vector<16x1024xf32> -> vector<16x1024xf32>
    %114 = arith.index_cast %111 : i32 to index
    %115 = memref.load %arg2[%114] : memref<8xi32, #tpu.memory_space<smem>>
    %c0_i32_40 = arith.constant 0 : i32
    %116 = arith.cmpi sgt, %115, %c0_i32_40 : i32
    %117 = vector.extract_strided_slice %113 {offsets = [0, 0], sizes = [16, 512], strides = [1, 1]} : vector<16x1024xf32> to vector<16x512xf32>
    %118 = arith.index_cast %c2_i32 : i32 to index
    %c0_41 = arith.constant 0 : index
    %c0_42 = arith.constant 0 : index
    %119 = vector.load %arg15[%118, %c0_41, %c0_42] : memref<8x16x512xf32, #tpu.memory_space<vmem>>, vector<1x16x512xf32>
    %120 = vector.shape_cast %119 : vector<1x16x512xf32> to vector<16x512xf32>
    %121 = arith.addf %117, %120 : vector<16x512xf32>
    %122 = vector.extract_strided_slice %113 {offsets = [0, 512], sizes = [16, 512], strides = [1, 1]} : vector<16x1024xf32> to vector<16x512xf32>
    %123 = vector.broadcast %11 : vector<1x512xf32> to vector<16x512xf32>
    %124 = arith.addf %122, %123 : vector<16x512xf32>
    %125 = arith.select %116, %121, %124 : vector<16x512xf32>
    %126 = vector.broadcast %10 : vector<1x512xf32> to vector<16x512xf32>
    %127 = arith.addf %125, %126 : vector<16x512xf32>
    %128 = vector.extract_strided_slice %127 {offsets = [0, 0], sizes = [16, 128], strides = [1, 1]} : vector<16x512xf32> to vector<16x128xf32>
    %129 = arith.negf %128 : vector<16x128xf32>
    %130 = math.exp %129 : vector<16x128xf32>
    %cst_43 = arith.constant 1.000000e+00 : f32
    %131 = vector.broadcast %cst_43 : f32 to vector<16x128xf32>
    %132 = arith.addf %131, %130 : vector<16x128xf32>
    %133 = arith.divf %131, %132 : vector<16x128xf32>
    %134 = vector.extract_strided_slice %127 {offsets = [0, 128], sizes = [16, 128], strides = [1, 1]} : vector<16x512xf32> to vector<16x128xf32>
    %135 = arith.negf %134 : vector<16x128xf32>
    %136 = math.exp %135 : vector<16x128xf32>
    %cst_44 = arith.constant 1.000000e+00 : f32
    %137 = vector.broadcast %cst_44 : f32 to vector<16x128xf32>
    %138 = arith.addf %137, %136 : vector<16x128xf32>
    %139 = arith.divf %137, %138 : vector<16x128xf32>
    %140 = vector.extract_strided_slice %127 {offsets = [0, 256], sizes = [16, 128], strides = [1, 1]} : vector<16x512xf32> to vector<16x128xf32>
    %141 = math.tanh %140 : vector<16x128xf32>
    %142 = vector.extract_strided_slice %127 {offsets = [0, 384], sizes = [16, 128], strides = [1, 1]} : vector<16x512xf32> to vector<16x128xf32>
    %143 = arith.negf %142 : vector<16x128xf32>
    %144 = math.exp %143 : vector<16x128xf32>
    %cst_45 = arith.constant 1.000000e+00 : f32
    %145 = vector.broadcast %cst_45 : f32 to vector<16x128xf32>
    %146 = arith.addf %145, %144 : vector<16x128xf32>
    %147 = arith.divf %145, %146 : vector<16x128xf32>
    %148 = arith.mulf %139, %102 : vector<16x128xf32>
    %149 = arith.mulf %133, %141 : vector<16x128xf32>
    %150 = arith.addf %148, %149 : vector<16x128xf32>
    %151 = math.tanh %150 : vector<16x128xf32>
    %152 = arith.mulf %147, %151 : vector<16x128xf32>
    %153 = arith.truncf %152 : vector<16x128xf32> to vector<16x128xbf16>
    %154 = arith.index_cast %c2_i32 : i32 to index
    %c0_46 = arith.constant 0 : index
    %c0_47 = arith.constant 0 : index
    %155 = vector.load %arg16[%154, %c0_46, %c0_47] : memref<8x16x128xbf16, #tpu.memory_space<vmem>>, vector<1x16x128xbf16>
    %156 = vector.shape_cast %155 : vector<1x16x128xbf16> to vector<16x128xbf16>
    %157 = vector.shape_cast %153 : vector<16x128xbf16> to vector<1x16x128xbf16>
    tpu.vector_store %arg16[%154, %c0_46, %c0_47], %157 {strides = array<i32>} : memref<8x16x128xbf16, #tpu.memory_space<vmem>>, vector<1x16x128xbf16>,
    %c3_i32 = arith.constant 3 : i32
    %c8_i32_48 = arith.constant 8 : i32
    %158 = arith.muli %arg1, %c8_i32_48 : i32
    %159 = arith.addi %158, %c3_i32 : i32
    %160 = arith.truncf %152 : vector<16x128xf32> to vector<16x128xbf16>
    %cst_49 = arith.constant dense<0.000000e+00> : vector<16x1024xf32>
    %161 = tpu.matmul %160, %9, %cst_49 {dimension_numbers = #tpu.dot_dimension_numbers<[1], [0], [0], [1], [0, 0, 1, 1], [], []>} : vector<16x128xbf16>, vector<128x1024xbf16>, vector<16x1024xf32> -> vector<16x1024xf32>
    %162 = arith.index_cast %159 : i32 to index
    %163 = memref.load %arg2[%162] : memref<8xi32, #tpu.memory_space<smem>>
    %c0_i32_50 = arith.constant 0 : i32
    %164 = arith.cmpi sgt, %163, %c0_i32_50 : i32
    %165 = vector.extract_strided_slice %161 {offsets = [0, 0], sizes = [16, 512], strides = [1, 1]} : vector<16x1024xf32> to vector<16x512xf32>
    %166 = arith.index_cast %c3_i32 : i32 to index
    %c0_51 = arith.constant 0 : index
    %c0_52 = arith.constant 0 : index
    %167 = vector.load %arg15[%166, %c0_51, %c0_52] : memref<8x16x512xf32, #tpu.memory_space<vmem>>, vector<1x16x512xf32>
    %168 = vector.shape_cast %167 : vector<1x16x512xf32> to vector<16x512xf32>
    %169 = arith.addf %165, %168 : vector<16x512xf32>
    %170 = vector.extract_strided_slice %161 {offsets = [0, 512], sizes = [16, 512], strides = [1, 1]} : vector<16x1024xf32> to vector<16x512xf32>
    %171 = vector.broadcast %11 : vector<1x512xf32> to vector<16x512xf32>
    %172 = arith.addf %170, %171 : vector<16x512xf32>
    %173 = arith.select %164, %169, %172 : vector<16x512xf32>
    %174 = vector.broadcast %10 : vector<1x512xf32> to vector<16x512xf32>
    %175 = arith.addf %173, %174 : vector<16x512xf32>
    %176 = vector.extract_strided_slice %175 {offsets = [0, 0], sizes = [16, 128], strides = [1, 1]} : vector<16x512xf32> to vector<16x128xf32>
    %177 = arith.negf %176 : vector<16x128xf32>
    %178 = math.exp %177 : vector<16x128xf32>
    %cst_53 = arith.constant 1.000000e+00 : f32
    %179 = vector.broadcast %cst_53 : f32 to vector<16x128xf32>
    %180 = arith.addf %179, %178 : vector<16x128xf32>
    %181 = arith.divf %179, %180 : vector<16x128xf32>
    %182 = vector.extract_strided_slice %175 {offsets = [0, 128], sizes = [16, 128], strides = [1, 1]} : vector<16x512xf32> to vector<16x128xf32>
    %183 = arith.negf %182 : vector<16x128xf32>
    %184 = math.exp %183 : vector<16x128xf32>
    %cst_54 = arith.constant 1.000000e+00 : f32
    %185 = vector.broadcast %cst_54 : f32 to vector<16x128xf32>
    %186 = arith.addf %185, %184 : vector<16x128xf32>
    %187 = arith.divf %185, %186 : vector<16x128xf32>
    %188 = vector.extract_strided_slice %175 {offsets = [0, 256], sizes = [16, 128], strides = [1, 1]} : vector<16x512xf32> to vector<16x128xf32>
    %189 = math.tanh %188 : vector<16x128xf32>
    %190 = vector.extract_strided_slice %175 {offsets = [0, 384], sizes = [16, 128], strides = [1, 1]} : vector<16x512xf32> to vector<16x128xf32>
    %191 = arith.negf %190 : vector<16x128xf32>
    %192 = math.exp %191 : vector<16x128xf32>
    %cst_55 = arith.constant 1.000000e+00 : f32
    %193 = vector.broadcast %cst_55 : f32 to vector<16x128xf32>
    %194 = arith.addf %193, %192 : vector<16x128xf32>
    %195 = arith.divf %193, %194 : vector<16x128xf32>
    %196 = arith.mulf %187, %150 : vector<16x128xf32>
    %197 = arith.mulf %181, %189 : vector<16x128xf32>
    %198 = arith.addf %196, %197 : vector<16x128xf32>
    %199 = math.tanh %198 : vector<16x128xf32>
    %200 = arith.mulf %195, %199 : vector<16x128xf32>
    %201 = arith.truncf %200 : vector<16x128xf32> to vector<16x128xbf16>
    %202 = arith.index_cast %c3_i32 : i32 to index
    %c0_56 = arith.constant 0 : index
    %c0_57 = arith.constant 0 : index
    %203 = vector.load %arg16[%202, %c0_56, %c0_57] : memref<8x16x128xbf16, #tpu.memory_space<vmem>>, vector<1x16x128xbf16>
    %204 = vector.shape_cast %203 : vector<1x16x128xbf16> to vector<16x128xbf16>
    %205 = vector.shape_cast %201 : vector<16x128xbf16> to vector<1x16x128xbf16>
    tpu.vector_store %arg16[%202, %c0_56, %c0_57], %205 {strides = array<i32>} : memref<8x16x128xbf16, #tpu.memory_space<vmem>>, vector<1x16x128xbf16>,
    %c4_i32 = arith.constant 4 : i32
    %c8_i32_58 = arith.constant 8 : i32
    %206 = arith.muli %arg1, %c8_i32_58 : i32
    %207 = arith.addi %206, %c4_i32 : i32
    %208 = arith.truncf %200 : vector<16x128xf32> to vector<16x128xbf16>
    %cst_59 = arith.constant dense<0.000000e+00> : vector<16x1024xf32>
    %209 = tpu.matmul %208, %9, %cst_59 {dimension_numbers = #tpu.dot_dimension_numbers<[1], [0], [0], [1], [0, 0, 1, 1], [], []>} : vector<16x128xbf16>, vector<128x1024xbf16>, vector<16x1024xf32> -> vector<16x1024xf32>
    %210 = arith.index_cast %207 : i32 to index
    %211 = memref.load %arg2[%210] : memref<8xi32, #tpu.memory_space<smem>>
    %c0_i32_60 = arith.constant 0 : i32
    %212 = arith.cmpi sgt, %211, %c0_i32_60 : i32
    %213 = vector.extract_strided_slice %209 {offsets = [0, 0], sizes = [16, 512], strides = [1, 1]} : vector<16x1024xf32> to vector<16x512xf32>
    %214 = arith.index_cast %c4_i32 : i32 to index
    %c0_61 = arith.constant 0 : index
    %c0_62 = arith.constant 0 : index
    %215 = vector.load %arg15[%214, %c0_61, %c0_62] : memref<8x16x512xf32, #tpu.memory_space<vmem>>, vector<1x16x512xf32>
    %216 = vector.shape_cast %215 : vector<1x16x512xf32> to vector<16x512xf32>
    %217 = arith.addf %213, %216 : vector<16x512xf32>
    %218 = vector.extract_strided_slice %209 {offsets = [0, 512], sizes = [16, 512], strides = [1, 1]} : vector<16x1024xf32> to vector<16x512xf32>
    %219 = vector.broadcast %11 : vector<1x512xf32> to vector<16x512xf32>
    %220 = arith.addf %218, %219 : vector<16x512xf32>
    %221 = arith.select %212, %217, %220 : vector<16x512xf32>
    %222 = vector.broadcast %10 : vector<1x512xf32> to vector<16x512xf32>
    %223 = arith.addf %221, %222 : vector<16x512xf32>
    %224 = vector.extract_strided_slice %223 {offsets = [0, 0], sizes = [16, 128], strides = [1, 1]} : vector<16x512xf32> to vector<16x128xf32>
    %225 = arith.negf %224 : vector<16x128xf32>
    %226 = math.exp %225 : vector<16x128xf32>
    %cst_63 = arith.constant 1.000000e+00 : f32
    %227 = vector.broadcast %cst_63 : f32 to vector<16x128xf32>
    %228 = arith.addf %227, %226 : vector<16x128xf32>
    %229 = arith.divf %227, %228 : vector<16x128xf32>
    %230 = vector.extract_strided_slice %223 {offsets = [0, 128], sizes = [16, 128], strides = [1, 1]} : vector<16x512xf32> to vector<16x128xf32>
    %231 = arith.negf %230 : vector<16x128xf32>
    %232 = math.exp %231 : vector<16x128xf32>
    %cst_64 = arith.constant 1.000000e+00 : f32
    %233 = vector.broadcast %cst_64 : f32 to vector<16x128xf32>
    %234 = arith.addf %233, %232 : vector<16x128xf32>
    %235 = arith.divf %233, %234 : vector<16x128xf32>
    %236 = vector.extract_strided_slice %223 {offsets = [0, 256], sizes = [16, 128], strides = [1, 1]} : vector<16x512xf32> to vector<16x128xf32>
    %237 = math.tanh %236 : vector<16x128xf32>
    %238 = vector.extract_strided_slice %223 {offsets = [0, 384], sizes = [16, 128], strides = [1, 1]} : vector<16x512xf32> to vector<16x128xf32>
    %239 = arith.negf %238 : vector<16x128xf32>
    %240 = math.exp %239 : vector<16x128xf32>
    %cst_65 = arith.constant 1.000000e+00 : f32
    %241 = vector.broadcast %cst_65 : f32 to vector<16x128xf32>
    %242 = arith.addf %241, %240 : vector<16x128xf32>
    %243 = arith.divf %241, %242 : vector<16x128xf32>
    %244 = arith.mulf %235, %198 : vector<16x128xf32>
    %245 = arith.mulf %229, %237 : vector<16x128xf32>
    %246 = arith.addf %244, %245 : vector<16x128xf32>
    %247 = math.tanh %246 : vector<16x128xf32>
    %248 = arith.mulf %243, %247 : vector<16x128xf32>
    %249 = arith.truncf %248 : vector<16x128xf32> to vector<16x128xbf16>
    %250 = arith.index_cast %c4_i32 : i32 to index
    %c0_66 = arith.constant 0 : index
    %c0_67 = arith.constant 0 : index
    %251 = vector.load %arg16[%250, %c0_66, %c0_67] : memref<8x16x128xbf16, #tpu.memory_space<vmem>>, vector<1x16x128xbf16>
    %252 = vector.shape_cast %251 : vector<1x16x128xbf16> to vector<16x128xbf16>
    %253 = vector.shape_cast %249 : vector<16x128xbf16> to vector<1x16x128xbf16>
    tpu.vector_store %arg16[%250, %c0_66, %c0_67], %253 {strides = array<i32>} : memref<8x16x128xbf16, #tpu.memory_space<vmem>>, vector<1x16x128xbf16>,
    %c5_i32 = arith.constant 5 : i32
    %c8_i32_68 = arith.constant 8 : i32
    %254 = arith.muli %arg1, %c8_i32_68 : i32
    %255 = arith.addi %254, %c5_i32 : i32
    %256 = arith.truncf %248 : vector<16x128xf32> to vector<16x128xbf16>
    %cst_69 = arith.constant dense<0.000000e+00> : vector<16x1024xf32>
    %257 = tpu.matmul %256, %9, %cst_69 {dimension_numbers = #tpu.dot_dimension_numbers<[1], [0], [0], [1], [0, 0, 1, 1], [], []>} : vector<16x128xbf16>, vector<128x1024xbf16>, vector<16x1024xf32> -> vector<16x1024xf32>
    %258 = arith.index_cast %255 : i32 to index
    %259 = memref.load %arg2[%258] : memref<8xi32, #tpu.memory_space<smem>>
    %c0_i32_70 = arith.constant 0 : i32
    %260 = arith.cmpi sgt, %259, %c0_i32_70 : i32
    %261 = vector.extract_strided_slice %257 {offsets = [0, 0], sizes = [16, 512], strides = [1, 1]} : vector<16x1024xf32> to vector<16x512xf32>
    %262 = arith.index_cast %c5_i32 : i32 to index
    %c0_71 = arith.constant 0 : index
    %c0_72 = arith.constant 0 : index
    %263 = vector.load %arg15[%262, %c0_71, %c0_72] : memref<8x16x512xf32, #tpu.memory_space<vmem>>, vector<1x16x512xf32>
    %264 = vector.shape_cast %263 : vector<1x16x512xf32> to vector<16x512xf32>
    %265 = arith.addf %261, %264 : vector<16x512xf32>
    %266 = vector.extract_strided_slice %257 {offsets = [0, 512], sizes = [16, 512], strides = [1, 1]} : vector<16x1024xf32> to vector<16x512xf32>
    %267 = vector.broadcast %11 : vector<1x512xf32> to vector<16x512xf32>
    %268 = arith.addf %266, %267 : vector<16x512xf32>
    %269 = arith.select %260, %265, %268 : vector<16x512xf32>
    %270 = vector.broadcast %10 : vector<1x512xf32> to vector<16x512xf32>
    %271 = arith.addf %269, %270 : vector<16x512xf32>
    %272 = vector.extract_strided_slice %271 {offsets = [0, 0], sizes = [16, 128], strides = [1, 1]} : vector<16x512xf32> to vector<16x128xf32>
    %273 = arith.negf %272 : vector<16x128xf32>
    %274 = math.exp %273 : vector<16x128xf32>
    %cst_73 = arith.constant 1.000000e+00 : f32
    %275 = vector.broadcast %cst_73 : f32 to vector<16x128xf32>
    %276 = arith.addf %275, %274 : vector<16x128xf32>
    %277 = arith.divf %275, %276 : vector<16x128xf32>
    %278 = vector.extract_strided_slice %271 {offsets = [0, 128], sizes = [16, 128], strides = [1, 1]} : vector<16x512xf32> to vector<16x128xf32>
    %279 = arith.negf %278 : vector<16x128xf32>
    %280 = math.exp %279 : vector<16x128xf32>
    %cst_74 = arith.constant 1.000000e+00 : f32
    %281 = vector.broadcast %cst_74 : f32 to vector<16x128xf32>
    %282 = arith.addf %281, %280 : vector<16x128xf32>
    %283 = arith.divf %281, %282 : vector<16x128xf32>
    %284 = vector.extract_strided_slice %271 {offsets = [0, 256], sizes = [16, 128], strides = [1, 1]} : vector<16x512xf32> to vector<16x128xf32>
    %285 = math.tanh %284 : vector<16x128xf32>
    %286 = vector.extract_strided_slice %271 {offsets = [0, 384], sizes = [16, 128], strides = [1, 1]} : vector<16x512xf32> to vector<16x128xf32>
    %287 = arith.negf %286 : vector<16x128xf32>
    %288 = math.exp %287 : vector<16x128xf32>
    %cst_75 = arith.constant 1.000000e+00 : f32
    %289 = vector.broadcast %cst_75 : f32 to vector<16x128xf32>
    %290 = arith.addf %289, %288 : vector<16x128xf32>
    %291 = arith.divf %289, %290 : vector<16x128xf32>
    %292 = arith.mulf %283, %246 : vector<16x128xf32>
    %293 = arith.mulf %277, %285 : vector<16x128xf32>
    %294 = arith.addf %292, %293 : vector<16x128xf32>
    %295 = math.tanh %294 : vector<16x128xf32>
    %296 = arith.mulf %291, %295 : vector<16x128xf32>
    %297 = arith.truncf %296 : vector<16x128xf32> to vector<16x128xbf16>
    %298 = arith.index_cast %c5_i32 : i32 to index
    %c0_76 = arith.constant 0 : index
    %c0_77 = arith.constant 0 : index
    %299 = vector.load %arg16[%298, %c0_76, %c0_77] : memref<8x16x128xbf16, #tpu.memory_space<vmem>>, vector<1x16x128xbf16>
    %300 = vector.shape_cast %299 : vector<1x16x128xbf16> to vector<16x128xbf16>
    %301 = vector.shape_cast %297 : vector<16x128xbf16> to vector<1x16x128xbf16>
    tpu.vector_store %arg16[%298, %c0_76, %c0_77], %301 {strides = array<i32>} : memref<8x16x128xbf16, #tpu.memory_space<vmem>>, vector<1x16x128xbf16>,
    %c6_i32 = arith.constant 6 : i32
    %c8_i32_78 = arith.constant 8 : i32
    %302 = arith.muli %arg1, %c8_i32_78 : i32
    %303 = arith.addi %302, %c6_i32 : i32
    %304 = arith.truncf %296 : vector<16x128xf32> to vector<16x128xbf16>
    %cst_79 = arith.constant dense<0.000000e+00> : vector<16x1024xf32>
    %305 = tpu.matmul %304, %9, %cst_79 {dimension_numbers = #tpu.dot_dimension_numbers<[1], [0], [0], [1], [0, 0, 1, 1], [], []>} : vector<16x128xbf16>, vector<128x1024xbf16>, vector<16x1024xf32> -> vector<16x1024xf32>
    %306 = arith.index_cast %303 : i32 to index
    %307 = memref.load %arg2[%306] : memref<8xi32, #tpu.memory_space<smem>>
    %c0_i32_80 = arith.constant 0 : i32
    %308 = arith.cmpi sgt, %307, %c0_i32_80 : i32
    %309 = vector.extract_strided_slice %305 {offsets = [0, 0], sizes = [16, 512], strides = [1, 1]} : vector<16x1024xf32> to vector<16x512xf32>
    %310 = arith.index_cast %c6_i32 : i32 to index
    %c0_81 = arith.constant 0 : index
    %c0_82 = arith.constant 0 : index
    %311 = vector.load %arg15[%310, %c0_81, %c0_82] : memref<8x16x512xf32, #tpu.memory_space<vmem>>, vector<1x16x512xf32>
    %312 = vector.shape_cast %311 : vector<1x16x512xf32> to vector<16x512xf32>
    %313 = arith.addf %309, %312 : vector<16x512xf32>
    %314 = vector.extract_strided_slice %305 {offsets = [0, 512], sizes = [16, 512], strides = [1, 1]} : vector<16x1024xf32> to vector<16x512xf32>
    %315 = vector.broadcast %11 : vector<1x512xf32> to vector<16x512xf32>
    %316 = arith.addf %314, %315 : vector<16x512xf32>
    %317 = arith.select %308, %313, %316 : vector<16x512xf32>
    %318 = vector.broadcast %10 : vector<1x512xf32> to vector<16x512xf32>
    %319 = arith.addf %317, %318 : vector<16x512xf32>
    %320 = vector.extract_strided_slice %319 {offsets = [0, 0], sizes = [16, 128], strides = [1, 1]} : vector<16x512xf32> to vector<16x128xf32>
    %321 = arith.negf %320 : vector<16x128xf32>
    %322 = math.exp %321 : vector<16x128xf32>
    %cst_83 = arith.constant 1.000000e+00 : f32
    %323 = vector.broadcast %cst_83 : f32 to vector<16x128xf32>
    %324 = arith.addf %323, %322 : vector<16x128xf32>
    %325 = arith.divf %323, %324 : vector<16x128xf32>
    %326 = vector.extract_strided_slice %319 {offsets = [0, 128], sizes = [16, 128], strides = [1, 1]} : vector<16x512xf32> to vector<16x128xf32>
    %327 = arith.negf %326 : vector<16x128xf32>
    %328 = math.exp %327 : vector<16x128xf32>
    %cst_84 = arith.constant 1.000000e+00 : f32
    %329 = vector.broadcast %cst_84 : f32 to vector<16x128xf32>
    %330 = arith.addf %329, %328 : vector<16x128xf32>
    %331 = arith.divf %329, %330 : vector<16x128xf32>
    %332 = vector.extract_strided_slice %319 {offsets = [0, 256], sizes = [16, 128], strides = [1, 1]} : vector<16x512xf32> to vector<16x128xf32>
    %333 = math.tanh %332 : vector<16x128xf32>
    %334 = vector.extract_strided_slice %319 {offsets = [0, 384], sizes = [16, 128], strides = [1, 1]} : vector<16x512xf32> to vector<16x128xf32>
    %335 = arith.negf %334 : vector<16x128xf32>
    %336 = math.exp %335 : vector<16x128xf32>
    %cst_85 = arith.constant 1.000000e+00 : f32
    %337 = vector.broadcast %cst_85 : f32 to vector<16x128xf32>
    %338 = arith.addf %337, %336 : vector<16x128xf32>
    %339 = arith.divf %337, %338 : vector<16x128xf32>
    %340 = arith.mulf %331, %294 : vector<16x128xf32>
    %341 = arith.mulf %325, %333 : vector<16x128xf32>
    %342 = arith.addf %340, %341 : vector<16x128xf32>
    %343 = math.tanh %342 : vector<16x128xf32>
    %344 = arith.mulf %339, %343 : vector<16x128xf32>
    %345 = arith.truncf %344 : vector<16x128xf32> to vector<16x128xbf16>
    %346 = arith.index_cast %c6_i32 : i32 to index
    %c0_86 = arith.constant 0 : index
    %c0_87 = arith.constant 0 : index
    %347 = vector.load %arg16[%346, %c0_86, %c0_87] : memref<8x16x128xbf16, #tpu.memory_space<vmem>>, vector<1x16x128xbf16>
    %348 = vector.shape_cast %347 : vector<1x16x128xbf16> to vector<16x128xbf16>
    %349 = vector.shape_cast %345 : vector<16x128xbf16> to vector<1x16x128xbf16>
    tpu.vector_store %arg16[%346, %c0_86, %c0_87], %349 {strides = array<i32>} : memref<8x16x128xbf16, #tpu.memory_space<vmem>>, vector<1x16x128xbf16>,
    %c7_i32 = arith.constant 7 : i32
    %c8_i32_88 = arith.constant 8 : i32
    %350 = arith.muli %arg1, %c8_i32_88 : i32
    %351 = arith.addi %350, %c7_i32 : i32
    %352 = arith.truncf %344 : vector<16x128xf32> to vector<16x128xbf16>
    %cst_89 = arith.constant dense<0.000000e+00> : vector<16x1024xf32>
    %353 = tpu.matmul %352, %9, %cst_89 {dimension_numbers = #tpu.dot_dimension_numbers<[1], [0], [0], [1], [0, 0, 1, 1], [], []>} : vector<16x128xbf16>, vector<128x1024xbf16>, vector<16x1024xf32> -> vector<16x1024xf32>
    %354 = arith.index_cast %351 : i32 to index
    %355 = memref.load %arg2[%354] : memref<8xi32, #tpu.memory_space<smem>>
    %c0_i32_90 = arith.constant 0 : i32
    %356 = arith.cmpi sgt, %355, %c0_i32_90 : i32
    %357 = vector.extract_strided_slice %353 {offsets = [0, 0], sizes = [16, 512], strides = [1, 1]} : vector<16x1024xf32> to vector<16x512xf32>
    %358 = arith.index_cast %c7_i32 : i32 to index
    %c0_91 = arith.constant 0 : index
    %c0_92 = arith.constant 0 : index
    %359 = vector.load %arg15[%358, %c0_91, %c0_92] : memref<8x16x512xf32, #tpu.memory_space<vmem>>, vector<1x16x512xf32>
    %360 = vector.shape_cast %359 : vector<1x16x512xf32> to vector<16x512xf32>
    %361 = arith.addf %357, %360 : vector<16x512xf32>
    %362 = vector.extract_strided_slice %353 {offsets = [0, 512], sizes = [16, 512], strides = [1, 1]} : vector<16x1024xf32> to vector<16x512xf32>
    %363 = vector.broadcast %11 : vector<1x512xf32> to vector<16x512xf32>
    %364 = arith.addf %362, %363 : vector<16x512xf32>
    %365 = arith.select %356, %361, %364 : vector<16x512xf32>
    %366 = vector.broadcast %10 : vector<1x512xf32> to vector<16x512xf32>
    %367 = arith.addf %365, %366 : vector<16x512xf32>
    %368 = vector.extract_strided_slice %367 {offsets = [0, 0], sizes = [16, 128], strides = [1, 1]} : vector<16x512xf32> to vector<16x128xf32>
    %369 = arith.negf %368 : vector<16x128xf32>
    %370 = math.exp %369 : vector<16x128xf32>
    %cst_93 = arith.constant 1.000000e+00 : f32
    %371 = vector.broadcast %cst_93 : f32 to vector<16x128xf32>
    %372 = arith.addf %371, %370 : vector<16x128xf32>
    %373 = arith.divf %371, %372 : vector<16x128xf32>
    %374 = vector.extract_strided_slice %367 {offsets = [0, 128], sizes = [16, 128], strides = [1, 1]} : vector<16x512xf32> to vector<16x128xf32>
    %375 = arith.negf %374 : vector<16x128xf32>
    %376 = math.exp %375 : vector<16x128xf32>
    %cst_94 = arith.constant 1.000000e+00 : f32
    %377 = vector.broadcast %cst_94 : f32 to vector<16x128xf32>
    %378 = arith.addf %377, %376 : vector<16x128xf32>
    %379 = arith.divf %377, %378 : vector<16x128xf32>
    %380 = vector.extract_strided_slice %367 {offsets = [0, 256], sizes = [16, 128], strides = [1, 1]} : vector<16x512xf32> to vector<16x128xf32>
    %381 = math.tanh %380 : vector<16x128xf32>
    %382 = vector.extract_strided_slice %367 {offsets = [0, 384], sizes = [16, 128], strides = [1, 1]} : vector<16x512xf32> to vector<16x128xf32>
    %383 = arith.negf %382 : vector<16x128xf32>
    %384 = math.exp %383 : vector<16x128xf32>
    %cst_95 = arith.constant 1.000000e+00 : f32
    %385 = vector.broadcast %cst_95 : f32 to vector<16x128xf32>
    %386 = arith.addf %385, %384 : vector<16x128xf32>
    %387 = arith.divf %385, %386 : vector<16x128xf32>
    %388 = arith.mulf %379, %342 : vector<16x128xf32>
    %389 = arith.mulf %373, %381 : vector<16x128xf32>
    %390 = arith.addf %388, %389 : vector<16x128xf32>
    %391 = math.tanh %390 : vector<16x128xf32>
    %392 = arith.mulf %387, %391 : vector<16x128xf32>
    %393 = arith.truncf %392 : vector<16x128xf32> to vector<16x128xbf16>
    %394 = arith.index_cast %c7_i32 : i32 to index
    %c0_96 = arith.constant 0 : index
    %c0_97 = arith.constant 0 : index
    %395 = vector.load %arg16[%394, %c0_96, %c0_97] : memref<8x16x128xbf16, #tpu.memory_space<vmem>>, vector<1x16x128xbf16>
    %396 = vector.shape_cast %395 : vector<1x16x128xbf16> to vector<16x128xbf16>
    %397 = vector.shape_cast %393 : vector<16x128xbf16> to vector<1x16x128xbf16>
    tpu.vector_store %arg16[%394, %c0_96, %c0_97], %397 {strides = array<i32>} : memref<8x16x128xbf16, #tpu.memory_space<vmem>>, vector<1x16x128xbf16>,
    %c8_i32_98 = arith.constant 8 : i32
    %c0_99 = arith.constant 0 : index
    %c0_100 = arith.constant 0 : index
    %398 = vector.load %arg13[%c0_99, %c0_100] : memref<16x128xf32, #tpu.memory_space<vmem>>, vector<16x128xf32>
    tpu.vector_store %arg13[%c0_99, %c0_100], %392 {strides = array<i32>} : memref<16x128xf32, #tpu.memory_space<vmem>>, vector<16x128xf32>,
    %c0_101 = arith.constant 0 : index
    %c0_102 = arith.constant 0 : index
    %399 = vector.load %arg14[%c0_101, %c0_102] : memref<16x128xf32, #tpu.memory_space<vmem>>, vector<16x128xf32>
    tpu.vector_store %arg14[%c0_101, %c0_102], %390 {strides = array<i32>} : memref<16x128xf32, #tpu.memory_space<vmem>>, vector<16x128xf32>,
    %c0_103 = arith.constant 0 : index
    %c0_104 = arith.constant 0 : index
    %c0_105 = arith.constant 0 : index
    %400 = vector.load %arg16[%c0_103, %c0_104, %c0_105] : memref<8x16x128xbf16, #tpu.memory_space<vmem>>, vector<8x16x128xbf16>
    %401 = vector.shape_cast %400 : vector<8x16x128xbf16> to vector<128x128xbf16>
    %c0_106 = arith.constant 0 : index
    %c0_107 = arith.constant 0 : index
    %402 = vector.load %arg10[%c0_106, %c0_107] : memref<128x128xbf16, #tpu.memory_space<vmem>>, vector<128x128xbf16>
    %cst_108 = arith.constant dense<0.000000e+00> : vector<128x128xf32>
    %403 = tpu.matmul %401, %402, %cst_108 {dimension_numbers = #tpu.dot_dimension_numbers<[1], [0], [0], [1], [0, 0, 1, 1], [], []>} : vector<128x128xbf16>, vector<128x128xbf16>, vector<128x128xf32> -> vector<128x128xf32>
    %c0_109 = arith.constant 0 : index
    %c0_110 = arith.constant 0 : index
    %404 = vector.load %arg11[%c0_109, %c0_110] : memref<1x128xf32, #tpu.memory_space<vmem>>, vector<1x128xf32>
    %405 = vector.broadcast %404 : vector<1x128xf32> to vector<128x128xf32>
    %406 = arith.addf %403, %405 : vector<128x128xf32>
    %407 = vector.shape_cast %406 : vector<128x128xf32> to vector<8x16x128xf32>
    %c0_111 = arith.constant 0 : index
    %c0_112 = arith.constant 0 : index
    %c0_113 = arith.constant 0 : index
    %408 = vector.load %arg12[%c0_111, %c0_112, %c0_113] : memref<8x16x128xf32, #tpu.memory_space<vmem>>, vector<8x16x128xf32>
    tpu.vector_store %arg12[%c0_111, %c0_112, %c0_113], %407 {strides = array<i32>} : memref<8x16x128xf32, #tpu.memory_space<vmem>>, vector<8x16x128xf32>,
    return
  }
  func.func @transform_0(%arg0: i32, %arg1: i32, %arg2: memref<8xi32, #tpu.memory_space<smem>>) -> (i32, i32) {
    %c0_i32 = arith.constant 0 : i32
    %c0_i32_0 = arith.constant 0 : i32
    return %arg0, %c0_i32 : i32, i32
  }
  func.func @transform_1(%arg0: i32, %arg1: i32, %arg2: memref<8xi32, #tpu.memory_space<smem>>) -> (i32, i32) {
    %c0_i32 = arith.constant 0 : i32
    %c0_i32_0 = arith.constant 0 : i32
    return %arg0, %c0_i32 : i32, i32
  }
  func.func @transform_2(%arg0: i32, %arg1: i32, %arg2: memref<8xi32, #tpu.memory_space<smem>>) -> (i32, i32, i32) {
    %c0_i32 = arith.constant 0 : i32
    %c0_i32_0 = arith.constant 0 : i32
    return %arg1, %arg0, %c0_i32 : i32, i32, i32
  }
  func.func @transform_3(%arg0: i32, %arg1: i32, %arg2: memref<8xi32, #tpu.memory_space<smem>>) -> (i32, i32) {
    %c0_i32 = arith.constant 0 : i32
    %c0_i32_0 = arith.constant 0 : i32
    %c0_i32_1 = arith.constant 0 : i32
    return %c0_i32, %c0_i32_0 : i32, i32
  }
  func.func @transform_4(%arg0: i32, %arg1: i32, %arg2: memref<8xi32, #tpu.memory_space<smem>>) -> (i32, i32) {
    %c0_i32 = arith.constant 0 : i32
    %c0_i32_0 = arith.constant 0 : i32
    %c0_i32_1 = arith.constant 0 : i32
    return %c0_i32, %c0_i32_0 : i32, i32
  }
  func.func @transform_5(%arg0: i32, %arg1: i32, %arg2: memref<8xi32, #tpu.memory_space<smem>>) -> (i32, i32) {
    %c0_i32 = arith.constant 0 : i32
    %c0_i32_0 = arith.constant 0 : i32
    %c0_i32_1 = arith.constant 0 : i32
    return %c0_i32, %c0_i32_0 : i32, i32
  }
  func.func @transform_6(%arg0: i32, %arg1: i32, %arg2: memref<8xi32, #tpu.memory_space<smem>>) -> (i32, i32) {
    %c0_i32 = arith.constant 0 : i32
    %c0_i32_0 = arith.constant 0 : i32
    %c0_i32_1 = arith.constant 0 : i32
    return %c0_i32, %c0_i32_0 : i32, i32
  }
  func.func @transform_7(%arg0: i32, %arg1: i32, %arg2: memref<8xi32, #tpu.memory_space<smem>>) -> (i32, i32) {
    %c0_i32 = arith.constant 0 : i32
    %c0_i32_0 = arith.constant 0 : i32
    %c0_i32_1 = arith.constant 0 : i32
    return %c0_i32, %c0_i32_0 : i32, i32
  }
  func.func @transform_8(%arg0: i32, %arg1: i32, %arg2: memref<8xi32, #tpu.memory_space<smem>>) -> (i32, i32) {
    %c0_i32 = arith.constant 0 : i32
    %c0_i32_0 = arith.constant 0 : i32
    %c0_i32_1 = arith.constant 0 : i32
    return %c0_i32, %c0_i32_0 : i32, i32
  }
  func.func @transform_9(%arg0: i32, %arg1: i32, %arg2: memref<8xi32, #tpu.memory_space<smem>>) -> (i32, i32, i32) {
    %c0_i32 = arith.constant 0 : i32
    %c0_i32_0 = arith.constant 0 : i32
    return %arg1, %arg0, %c0_i32 : i32, i32, i32
  }
}

</mosaic_0001>

<llo_original>
// kernel: rnnae_forward.2
$region0: #{rnnae_forward.2}
  #allocation0 [shape = 'u32[]', space=smem, size = 0x4, offset = 0x4, fixed_abs, tag = 'smem constant byte address 0x4 - core index']
  #allocation1 [shape = 'u32[144,128]{1,0:T(1,128)}', space=vmem, size = 0x12000, scoped, tag = 'internal scratch']
  #allocation2 [shape = 'f32[8,16,512]{2,1,0:T(8,128)}', space=vmem, size = 0x40000, scoped, tag = 'scratch operand']
  %s0 = inlined_call_operand.vmem [shape: bf16[8,16,128], index: 0, kind: input, shape index: {}]
  %s1 = inlined_call_operand.vmem [shape: s32[16,1], index: 1, kind: input, shape index: {}]
  %s2 = inlined_call_operand.vmem [shape: bf16[128,512], index: 2, kind: input, shape index: {}]
  %s3 = inlined_call_operand.vmem [shape: f32[1,512], index: 3, kind: input, shape index: {}]
  %s4 = inlined_call_operand.vmem [shape: bf16[128,512], index: 4, kind: input, shape index: {}]
  %s5 = inlined_call_operand.vmem [shape: f32[16,128], index: 5, kind: output, shape index: {0}]
  %s6 = inlined_call_operand.vmem [shape: f32[16,128], index: 6, kind: output, shape index: {1}]
  %7 = xla_tuple %s5, %s6
  %s8 = sld [smem:[#allocation0]]
  $region42: #{rnnae_forward.2} parent=0
    _
  %s10 = ssub.s32 1, %s8
  %s11 = scalar_select 0, %s10, %s8
  // Predicated region
  $region2: #{rnnae_forward.2} parent=0 // pred_check
    _
  $region3: #{rnnae_forward.2} parent=0 // pred_check_branch
    %13 = sbr.rel (0) target = $region5
  $region4: #{rnnae_forward.2} parent=0 // pred_region
    _
  $region5: #{rnnae_forward.2} parent=0 // pred_fallthru
    _
  // Predicated region
  $region6: #{rnnae_forward.2} parent=0 // pred_check
    _
  $region7: #{rnnae_forward.2} parent=0 // pred_check_branch
    %15 = sbr.rel (0) target = $region9
  $region8: #{rnnae_forward.2} parent=0 // pred_region
    _
  $region9: #{rnnae_forward.2} parent=0 // pred_fallthru
    _
  // Predicated region
  $region10: #{rnnae_forward.2} parent=0 // pred_check
    _
  $region11: #{rnnae_forward.2} parent=0 // pred_check_branch
    %17 = sbr.rel (0) target = $region13
  $region12: #{rnnae_forward.2} parent=0 // pred_region
    _
  $region13: #{rnnae_forward.2} parent=0 // pred_fallthru
    _
  // Predicated region
  $region14: #{rnnae_forward.2} parent=0 // pred_check
    _
  $region15: #{rnnae_forward.2} parent=0 // pred_check_branch
    %19 = sbr.rel (0) target = $region17
  $region16: #{rnnae_forward.2} parent=0 // pred_region
    _
  $region17: #{rnnae_forward.2} parent=0 // pred_fallthru
    _
  // Predicated region
  $region18: #{rnnae_forward.2} parent=0 // pred_check
    _
  $region19: #{rnnae_forward.2} parent=0 // pred_check_branch
    %21 = sbr.rel (0) target = $region21
  $region20: #{rnnae_forward.2} parent=0 // pred_region
    _
  $region21: #{rnnae_forward.2} parent=0 // pred_fallthru
    _
  %p23 = scmp.eq.s32.totalorder 0, 0
  // Predicated region
  $region22: #{rnnae_forward.2} parent=0 // pred_check
    %p24 = pneg %p23
  $region23: #{rnnae_forward.2} parent=0 // pred_check_branch
    %26 = sbr.rel (%p24) target = $region25
  $region24: #{rnnae_forward.2} parent=0 // pred_region
    %27 = vst [vmem:[%s5] sm:$0xff] 0.0
    %28 = vst [vmem:[%s5 + $0x8] sm:$0xff] 0.0
    %29 = vst [vmem:[%s6] sm:$0xff] 0.0
    %30 = vst [vmem:[%s6 + $0x8] sm:$0xff] 0.0
  $region25: #{rnnae_forward.2} parent=0 // pred_fallthru
    _
  %v31 = vld [vmem:[%s0] sm:$0xf]
  %v32 = vld [vmem:[%s0 + $0x4] sm:$0xf]
  %v33 = vld [vmem:[%s0 + $0x8] sm:$0xf]
  %v34 = vld [vmem:[%s0 + $0xc] sm:$0xf]
  %v35 = vld [vmem:[%s0 + $0x10] sm:$0xf]
  %v36 = vld [vmem:[%s0 + $0x14] sm:$0xf]
  %v37 = vld [vmem:[%s0 + $0x18] sm:$0xf]
  %v38 = vld [vmem:[%s0 + $0x1c] sm:$0xf]
  %v39 = vld [vmem:[%s0 + $0x20] sm:$0xf]
  %v40 = vld [vmem:[%s0 + $0x24] sm:$0xf]
  %v41 = vld [vmem:[%s0 + $0x28] sm:$0xf]
  %v42 = vld [vmem:[%s0 + $0x2c] sm:$0xf]
  %v43 = vld [vmem:[%s0 + $0x30] sm:$0xf]
  %v44 = vld [vmem:[%s0 + $0x34] sm:$0xf]
  %v45 = vld [vmem:[%s0 + $0x38] sm:$0xf]
  %v46 = vld [vmem:[%s0 + $0x3c] sm:$0xf]
  %v47 = vld [vmem:[%s2] sm:$0xff]
  %v48 = vld [vmem:[%s2 + $0x8] sm:$0xff]
  %v49 = vld [vmem:[%s2 + $0x10] sm:$0xff]
  %v50 = vld [vmem:[%s2 + $0x18] sm:$0xff]
  %v51 = vld [vmem:[%s2 + $0x20] sm:$0xff]
  %v52 = vld [vmem:[%s2 + $0x28] sm:$0xff]
  %v53 = vld [vmem:[%s2 + $0x30] sm:$0xff]
  %v54 = vld [vmem:[%s2 + $0x38] sm:$0xff]
  %v55 = vld [vmem:[%s2 + $0x40] sm:$0xff]
  %v56 = vld [vmem:[%s2 + $0x48] sm:$0xff]
  %v57 = vld [vmem:[%s2 + $0x50] sm:$0xff]
  %v58 = vld [vmem:[%s2 + $0x58] sm:$0xff]
  %v59 = vld [vmem:[%s2 + $0x60] sm:$0xff]
  %v60 = vld [vmem:[%s2 + $0x68] sm:$0xff]
  %v61 = vld [vmem:[%s2 + $0x70] sm:$0xff]
  %v62 = vld [vmem:[%s2 + $0x78] sm:$0xff]
  %v63 = vld [vmem:[%s2 + $0x80] sm:$0xff]
  %v64 = vld [vmem:[%s2 + $0x88] sm:$0xff]
  %v65 = vld [vmem:[%s2 + $0x90] sm:$0xff]
  %v66 = vld [vmem:[%s2 + $0x98] sm:$0xff]
  %v67 = vld [vmem:[%s2 + $0xa0] sm:$0xff]
  %v68 = vld [vmem:[%s2 + $0xa8] sm:$0xff]
  %v69 = vld [vmem:[%s2 + $0xb0] sm:$0xff]
  %v70 = vld [vmem:[%s2 + $0xb8] sm:$0xff]
  %v71 = vld [vmem:[%s2 + $0xc0] sm:$0xff]
  %v72 = vld [vmem:[%s2 + $0xc8] sm:$0xff]
  %v73 = vld [vmem:[%s2 + $0xd0] sm:$0xff]
  %v74 = vld [vmem:[%s2 + $0xd8] sm:$0xff]
  %v75 = vld [vmem:[%s2 + $0xe0] sm:$0xff]
  %v76 = vld [vmem:[%s2 + $0xe8] sm:$0xff]
  %v77 = vld [vmem:[%s2 + $0xf0] sm:$0xff]
  %v78 = vld [vmem:[%s2 + $0xf8] sm:$0xff]
  %v95 = vunpack.c.l.b16 %v31
  %v96 = vunpack.c.l.b16 %v32
  %v97 = vunpack.c.l.b16 %v33
  %v98 = vunpack.c.l.b16 %v34
  %v99 = vunpack.c.l.b16 %v35
  %v100 = vunpack.c.l.b16 %v36
  %v101 = vunpack.c.l.b16 %v37
  %v102 = vunpack.c.l.b16 %v38
  %v103 = vunpack.c.l.b16 %v39
  %v104 = vunpack.c.l.b16 %v40
  %v105 = vunpack.c.l.b16 %v41
  %v106 = vunpack.c.l.b16 %v42
  %v107 = vunpack.c.l.b16 %v43
  %v108 = vunpack.c.l.b16 %v44
  %v109 = vunpack.c.l.b16 %v45
  %v110 = vunpack.c.l.b16 %v46
  %v111 = vpack.c.b16 %v96, %v95
  %v112 = vpack.c.b16 %v98, %v97
  %v113 = vpack.c.b16 %v100, %v99
  %v114 = vpack.c.b16 %v102, %v101
  %v115 = vpack.c.b16 %v104, %v103
  %v116 = vpack.c.b16 %v106, %v105
  %v117 = vpack.c.b16 %v108, %v107
  %v118 = vpack.c.b16 %v110, %v109
  %v159 = vunpack.c.l.b16 %v47
  %v160 = vunpack.c.h.b16 %v47
  %v161 = vunpack.c.l.b16 %v48
  %v162 = vunpack.c.h.b16 %v48
  %v163 = vunpack.c.l.b16 %v49
  %v164 = vunpack.c.h.b16 %v49
  %v165 = vunpack.c.l.b16 %v50
  %v166 = vunpack.c.h.b16 %v50
  %v167 = vunpack.c.l.b16 %v51
  %v168 = vunpack.c.h.b16 %v51
  %v169 = vunpack.c.l.b16 %v52
  %v170 = vunpack.c.h.b16 %v52
  %v171 = vunpack.c.l.b16 %v53
  %v172 = vunpack.c.h.b16 %v53
  %v173 = vunpack.c.l.b16 %v54
  %v174 = vunpack.c.h.b16 %v54
  %v175 = vunpack.c.l.b16 %v55
  %v176 = vunpack.c.h.b16 %v55
  %v177 = vunpack.c.l.b16 %v56
  %v178 = vunpack.c.h.b16 %v56
  %v179 = vunpack.c.l.b16 %v57
  %v180 = vunpack.c.h.b16 %v57
  %v181 = vunpack.c.l.b16 %v58
  %v182 = vunpack.c.h.b16 %v58
  %v183 = vunpack.c.l.b16 %v59
  %v184 = vunpack.c.h.b16 %v59
  %v185 = vunpack.c.l.b16 %v60
  %v186 = vunpack.c.h.b16 %v60
  %v187 = vunpack.c.l.b16 %v61
  %v188 = vunpack.c.h.b16 %v61
  %v189 = vunpack.c.l.b16 %v62
  %v190 = vunpack.c.h.b16 %v62
  %v191 = vunpack.c.l.b16 %v63
  %v192 = vunpack.c.h.b16 %v63
  %v193 = vunpack.c.l.b16 %v64
  %v194 = vunpack.c.h.b16 %v64
  %v195 = vunpack.c.l.b16 %v65
  %v196 = vunpack.c.h.b16 %v65
  %v197 = vunpack.c.l.b16 %v66
  %v198 = vunpack.c.h.b16 %v66
  %v199 = vunpack.c.l.b16 %v67
  %v200 = vunpack.c.h.b16 %v67
  %v201 = vunpack.c.l.b16 %v68
  %v202 = vunpack.c.h.b16 %v68
  %v203 = vunpack.c.l.b16 %v69
  %v204 = vunpack.c.h.b16 %v69
  %v205 = vunpack.c.l.b16 %v70
  %v206 = vunpack.c.h.b16 %v70
  %v207 = vunpack.c.l.b16 %v71
  %v208 = vunpack.c.h.b16 %v71
  %v209 = vunpack.c.l.b16 %v72
  %v210 = vunpack.c.h.b16 %v72
  %v211 = vunpack.c.l.b16 %v73
  %v212 = vunpack.c.h.b16 %v73
  %v213 = vunpack.c.l.b16 %v74
  %v214 = vunpack.c.h.b16 %v74
  %v215 = vunpack.c.l.b16 %v75
  %v216 = vunpack.c.h.b16 %v75
  %v217 = vunpack.c.l.b16 %v76
  %v218 = vunpack.c.h.b16 %v76
  %v219 = vunpack.c.l.b16 %v77
  %v220 = vunpack.c.h.b16 %v77
  %v221 = vunpack.c.l.b16 %v78
  %v222 = vunpack.c.h.b16 %v78
  %v223 = vpack.c.b16 %v163, %v159
  %v224 = vpack.c.b16 %v164, %v160
  %v225 = vpack.c.b16 %v165, %v161
  %v226 = vpack.c.b16 %v166, %v162
  %v227 = vpack.c.b16 %v171, %v167
  %v228 = vpack.c.b16 %v172, %v168
  %v229 = vpack.c.b16 %v173, %v169
  %v230 = vpack.c.b16 %v174, %v170
  %v231 = vpack.c.b16 %v179, %v175
  %v232 = vpack.c.b16 %v180, %v176
  %v233 = vpack.c.b16 %v181, %v177
  %v234 = vpack.c.b16 %v182, %v178
  %v235 = vpack.c.b16 %v187, %v183
  %v236 = vpack.c.b16 %v188, %v184
  %v237 = vpack.c.b16 %v189, %v185
  %v238 = vpack.c.b16 %v190, %v186
  %v239 = vpack.c.b16 %v195, %v191
  %v240 = vpack.c.b16 %v196, %v192
  %v241 = vpack.c.b16 %v197, %v193
  %v242 = vpack.c.b16 %v198, %v194
  %v243 = vpack.c.b16 %v203, %v199
  %v244 = vpack.c.b16 %v204, %v200
  %v245 = vpack.c.b16 %v205, %v201
  %v246 = vpack.c.b16 %v206, %v202
  %v247 = vpack.c.b16 %v211, %v207
  %v248 = vpack.c.b16 %v212, %v208
  %v249 = vpack.c.b16 %v213, %v209
  %v250 = vpack.c.b16 %v214, %v210
  %v251 = vpack.c.b16 %v219, %v215
  %v252 = vpack.c.b16 %v220, %v216
  %v253 = vpack.c.b16 %v221, %v217
  %v254 = vpack.c.b16 %v222, %v218
  %287 = vmatprep.subr.bf16.mxu0 %v252
  %288 = vmatpush1.bf16.msra.mxu0 %v251
  %289 = vmatprep.subr.bf16.mxu0 %v248
  %290 = vmatpush1.bf16.msra.mxu0 %v247
  %291 = vmatprep.subr.bf16.mxu0 %v244
  %292 = vmatpush1.bf16.msra.mxu0 %v243
  %293 = vmatprep.subr.bf16.mxu0 %v240
  %294 = vmatpush1.bf16.msra.mxu0 %v239
  %295 = vmatprep.subr.bf16.mxu0 %v236
  %296 = vmatpush1.bf16.msra.mxu0 %v235
  %297 = vmatprep.subr.bf16.mxu0 %v232
  %298 = vmatpush1.bf16.msra.mxu0 %v231
  %299 = vmatprep.subr.bf16.mxu0 %v228
  %300 = vmatpush1.bf16.msra.mxu0 %v227
  %301 = vmatprep.subr.bf16.mxu0 %v224
  %302 = vmatpush1.bf16.msra.mxu0 %v223
  %303 = vmatprep.subr.bf16.mxu0 0
  %304 = vmatpush2.bf16.msra.mxu0 0
  %305 = vmatprep.subr.bf16.mxu0 0
  %306 = vmatpush2.bf16.msra.mxu0 0
  %307 = vmatprep.subr.bf16.mxu0 0
  %308 = vmatpush2.bf16.msra.mxu0 0
  %309 = vmatprep.subr.bf16.mxu0 0
  %310 = vmatpush2.bf16.msra.mxu0 0
  %311 = vmatprep.subr.bf16.mxu0 0
  %312 = vmatpush2.bf16.msra.mxu0 0
  %313 = vmatprep.subr.bf16.mxu0 0
  %314 = vmatpush2.bf16.msra.mxu0 0
  %315 = vmatprep.subr.bf16.mxu0 0
  %316 = vmatpush2.bf16.msra.mxu0 0
  %317 = vmatprep.subr.bf16.mxu0 0
  %318 = vmatpush2.bf16.msra.mxu0 0
  %319 = vmatprep.mubr.bf16.mxu0 0
  %320 = vmatmul.mubr.bf16.gmra.mxu0 %v111
  %v321 = vpop.f32.mrf.mxu0
  %v322 = vadd.f32 0.0, %v321
  %v323 = vpop.f32.mrf.mxu0
  %v324 = vadd.f32 0.0, %v323
  %v325 = vpop.f32.mrf.mxu0
  %v326 = vadd.f32 0.0, %v325
  %v327 = vpop.f32.mrf.mxu0
  %v328 = vadd.f32 0.0, %v327
  %329 = vmatprep.mubr.bf16.mxu0 0
  %330 = vmatmul.mubr.bf16.gmra.mxu0 %v112
  %v331 = vpop.f32.mrf.mxu0
  %v332 = vadd.f32 0.0, %v331
  %v333 = vpop.f32.mrf.mxu0
  %v334 = vadd.f32 0.0, %v333
  %v335 = vpop.f32.mrf.mxu0
  %v336 = vadd.f32 0.0, %v335
  %v337 = vpop.f32.mrf.mxu0
  %v338 = vadd.f32 0.0, %v337
  %339 = vmatprep.mubr.bf16.mxu0 0
  %340 = vmatmul.mubr.bf16.gmra.mxu0 %v113
  %v341 = vpop.f32.mrf.mxu0
  %v342 = vadd.f32 0.0, %v341
  %v343 = vpop.f32.mrf.mxu0
  %v344 = vadd.f32 0.0, %v343
  %v345 = vpop.f32.mrf.mxu0
  %v346 = vadd.f32 0.0, %v345
  %v347 = vpop.f32.mrf.mxu0
  %v348 = vadd.f32 0.0, %v347
  %349 = vmatprep.mubr.bf16.mxu0 0
  %350 = vmatmul.mubr.bf16.gmra.mxu0 %v114
  %v351 = vpop.f32.mrf.mxu0
  %v352 = vadd.f32 0.0, %v351
  %v353 = vpop.f32.mrf.mxu0
  %v354 = vadd.f32 0.0, %v353
  %v355 = vpop.f32.mrf.mxu0
  %v356 = vadd.f32 0.0, %v355
  %v357 = vpop.f32.mrf.mxu0
  %v358 = vadd.f32 0.0, %v357
  %359 = vmatprep.mubr.bf16.mxu0 0
  %360 = vmatmul.mubr.bf16.gmra.mxu0 %v115
  %v361 = vpop.f32.mrf.mxu0
  %v362 = vadd.f32 0.0, %v361
  %v363 = vpop.f32.mrf.mxu0
  %v364 = vadd.f32 0.0, %v363
  %v365 = vpop.f32.mrf.mxu0
  %v366 = vadd.f32 0.0, %v365
  %v367 = vpop.f32.mrf.mxu0
  %v368 = vadd.f32 0.0, %v367
  %369 = vmatprep.mubr.bf16.mxu0 0
  %370 = vmatmul.mubr.bf16.gmra.mxu0 %v116
  %v371 = vpop.f32.mrf.mxu0
  %v372 = vadd.f32 0.0, %v371
  %v373 = vpop.f32.mrf.mxu0
  %v374 = vadd.f32 0.0, %v373
  %v375 = vpop.f32.mrf.mxu0
  %v376 = vadd.f32 0.0, %v375
  %v377 = vpop.f32.mrf.mxu0
  %v378 = vadd.f32 0.0, %v377
  %379 = vmatprep.mubr.bf16.mxu0 0
  %380 = vmatmul.mubr.bf16.gmra.mxu0 %v117
  %v381 = vpop.f32.mrf.mxu0
  %v382 = vadd.f32 0.0, %v381
  %v383 = vpop.f32.mrf.mxu0
  %v384 = vadd.f32 0.0, %v383
  %v385 = vpop.f32.mrf.mxu0
  %v386 = vadd.f32 0.0, %v385
  %v387 = vpop.f32.mrf.mxu0
  %v388 = vadd.f32 0.0, %v387
  %389 = vmatprep.mubr.bf16.mxu0 0
  %390 = vmatmul.mubr.bf16.gmra.mxu0 %v118
  %v391 = vpop.f32.mrf.mxu0
  %v392 = vadd.f32 0.0, %v391
  %v393 = vpop.f32.mrf.mxu0
  %v394 = vadd.f32 0.0, %v393
  %v395 = vpop.f32.mrf.mxu0
  %v396 = vadd.f32 0.0, %v395
  %v397 = vpop.f32.mrf.mxu0
  %v398 = vadd.f32 0.0, %v397
  %399 = vdwg.mxu0
  %400 = vmatprep.subr.bf16.mxu0 %v254
  %401 = vmatpush1.bf16.msra.mxu0 %v253
  %402 = vmatprep.subr.bf16.mxu0 %v250
  %403 = vmatpush1.bf16.msra.mxu0 %v249
  %404 = vmatprep.subr.bf16.mxu0 %v246
  %405 = vmatpush1.bf16.msra.mxu0 %v245
  %406 = vmatprep.subr.bf16.mxu0 %v242
  %407 = vmatpush1.bf16.msra.mxu0 %v241
  %408 = vmatprep.subr.bf16.mxu0 %v238
  %409 = vmatpush1.bf16.msra.mxu0 %v237
  %410 = vmatprep.subr.bf16.mxu0 %v234
  %411 = vmatpush1.bf16.msra.mxu0 %v233
  %412 = vmatprep.subr.bf16.mxu0 %v230
  %413 = vmatpush1.bf16.msra.mxu0 %v229
  %414 = vmatprep.subr.bf16.mxu0 %v226
  %415 = vmatpush1.bf16.msra.mxu0 %v225
  %416 = vmatprep.subr.bf16.mxu0 0
  %417 = vmatpush2.bf16.msra.mxu0 0
  %418 = vmatprep.subr.bf16.mxu0 0
  %419 = vmatpush2.bf16.msra.mxu0 0
  %420 = vmatprep.subr.bf16.mxu0 0
  %421 = vmatpush2.bf16.msra.mxu0 0
  %422 = vmatprep.subr.bf16.mxu0 0
  %423 = vmatpush2.bf16.msra.mxu0 0
  %424 = vmatprep.subr.bf16.mxu0 0
  %425 = vmatpush2.bf16.msra.mxu0 0
  %426 = vmatprep.subr.bf16.mxu0 0
  %427 = vmatpush2.bf16.msra.mxu0 0
  %428 = vmatprep.subr.bf16.mxu0 0
  %429 = vmatpush2.bf16.msra.mxu0 0
  %430 = vmatprep.subr.bf16.mxu0 0
  %431 = vmatpush2.bf16.msra.mxu0 0
  %432 = vmatprep.mubr.bf16.mxu0 0
  %433 = vmatmul.mubr.bf16.gmra.mxu0 %v111
  %v434 = vpop.f32.mrf.mxu0
  %v435 = vadd.f32 0.0, %v434
  %v436 = vpop.f32.mrf.mxu0
  %v437 = vadd.f32 0.0, %v436
  %v438 = vpop.f32.mrf.mxu0
  %v439 = vadd.f32 0.0, %v438
  %v440 = vpop.f32.mrf.mxu0
  %v441 = vadd.f32 0.0, %v440
  %442 = vmatprep.mubr.bf16.mxu0 0
  %443 = vmatmul.mubr.bf16.gmra.mxu0 %v112
  %v444 = vpop.f32.mrf.mxu0
  %v445 = vadd.f32 0.0, %v444
  %v446 = vpop.f32.mrf.mxu0
  %v447 = vadd.f32 0.0, %v446
  %v448 = vpop.f32.mrf.mxu0
  %v449 = vadd.f32 0.0, %v448
  %v450 = vpop.f32.mrf.mxu0
  %v451 = vadd.f32 0.0, %v450
  %452 = vmatprep.mubr.bf16.mxu0 0
  %453 = vmatmul.mubr.bf16.gmra.mxu0 %v113
  %v454 = vpop.f32.mrf.mxu0
  %v455 = vadd.f32 0.0, %v454
  %v456 = vpop.f32.mrf.mxu0
  %v457 = vadd.f32 0.0, %v456
  %v458 = vpop.f32.mrf.mxu0
  %v459 = vadd.f32 0.0, %v458
  %v460 = vpop.f32.mrf.mxu0
  %v461 = vadd.f32 0.0, %v460
  %462 = vmatprep.mubr.bf16.mxu0 0
  %463 = vmatmul.mubr.bf16.gmra.mxu0 %v114
  %v464 = vpop.f32.mrf.mxu0
  %v465 = vadd.f32 0.0, %v464
  %v466 = vpop.f32.mrf.mxu0
  %v467 = vadd.f32 0.0, %v466
  %v468 = vpop.f32.mrf.mxu0
  %v469 = vadd.f32 0.0, %v468
  %v470 = vpop.f32.mrf.mxu0
  %v471 = vadd.f32 0.0, %v470
  %472 = vmatprep.mubr.bf16.mxu0 0
  %473 = vmatmul.mubr.bf16.gmra.mxu0 %v115
  %v474 = vpop.f32.mrf.mxu0
  %v475 = vadd.f32 0.0, %v474
  %v476 = vpop.f32.mrf.mxu0
  %v477 = vadd.f32 0.0, %v476
  %v478 = vpop.f32.mrf.mxu0
  %v479 = vadd.f32 0.0, %v478
  %v480 = vpop.f32.mrf.mxu0
  %v481 = vadd.f32 0.0, %v480
  %482 = vmatprep.mubr.bf16.mxu0 0
  %483 = vmatmul.mubr.bf16.gmra.mxu0 %v116
  %v484 = vpop.f32.mrf.mxu0
  %v485 = vadd.f32 0.0, %v484
  %v486 = vpop.f32.mrf.mxu0
  %v487 = vadd.f32 0.0, %v486
  %v488 = vpop.f32.mrf.mxu0
  %v489 = vadd.f32 0.0, %v488
  %v490 = vpop.f32.mrf.mxu0
  %v491 = vadd.f32 0.0, %v490
  %492 = vmatprep.mubr.bf16.mxu0 0
  %493 = vmatmul.mubr.bf16.gmra.mxu0 %v117
  %v494 = vpop.f32.mrf.mxu0
  %v495 = vadd.f32 0.0, %v494
  %v496 = vpop.f32.mrf.mxu0
  %v497 = vadd.f32 0.0, %v496
  %v498 = vpop.f32.mrf.mxu0
  %v499 = vadd.f32 0.0, %v498
  %v500 = vpop.f32.mrf.mxu0
  %v501 = vadd.f32 0.0, %v500
  %502 = vmatprep.mubr.bf16.mxu0 0
  %503 = vmatmul.mubr.bf16.gmra.mxu0 %v118
  %v504 = vpop.f32.mrf.mxu0
  %v505 = vadd.f32 0.0, %v504
  %v506 = vpop.f32.mrf.mxu0
  %v507 = vadd.f32 0.0, %v506
  %v508 = vpop.f32.mrf.mxu0
  %v509 = vadd.f32 0.0, %v508
  %v510 = vpop.f32.mrf.mxu0
  %v511 = vadd.f32 0.0, %v510
  %512 = vdwg.mxu0
  %513 = vst [vmem:[#allocation2] sm:$0xff] %v322
  %514 = vst [vmem:[#allocation2 + $0x8] sm:$0xff] %v324
  %515 = vst [vmem:[#allocation2 + $0x10] sm:$0xff] %v435
  %516 = vst [vmem:[#allocation2 + $0x18] sm:$0xff] %v437
  %517 = vst [vmem:[#allocation2 + $0x20] sm:$0xff] %v326
  %518 = vst [vmem:[#allocation2 + $0x28] sm:$0xff] %v328
  %519 = vst [vmem:[#allocation2 + $0x30] sm:$0xff] %v439
  %520 = vst [vmem:[#allocation2 + $0x38] sm:$0xff] %v441
  %521 = vst [vmem:[#allocation2 + $0x40] sm:$0xff] %v332
  %522 = vst [vmem:[#allocation2 + $0x48] sm:$0xff] %v334
  %523 = vst [vmem:[#allocation2 + $0x50] sm:$0xff] %v445
  %524 = vst [vmem:[#allocation2 + $0x58] sm:$0xff] %v447
  %525 = vst [vmem:[#allocation2 + $0x60] sm:$0xff] %v336
  %526 = vst [vmem:[#allocation2 + $0x68] sm:$0xff] %v338
  %527 = vst [vmem:[#allocation2 + $0x70] sm:$0xff] %v449
  %528 = vst [vmem:[#allocation2 + $0x78] sm:$0xff] %v451
  %529 = vst [vmem:[#allocation2 + $0x80] sm:$0xff] %v342
  %530 = vst [vmem:[#allocation2 + $0x88] sm:$0xff] %v344
  %531 = vst [vmem:[#allocation2 + $0x90] sm:$0xff] %v455
  %532 = vst [vmem:[#allocation2 + $0x98] sm:$0xff] %v457
  %533 = vst [vmem:[#allocation2 + $0xa0] sm:$0xff] %v346
  %534 = vst [vmem:[#allocation2 + $0xa8] sm:$0xff] %v348
  %535 = vst [vmem:[#allocation2 + $0xb0] sm:$0xff] %v459
  %536 = vst [vmem:[#allocation2 + $0xb8] sm:$0xff] %v461
  %537 = vst [vmem:[#allocation2 + $0xc0] sm:$0xff] %v352
  %538 = vst [vmem:[#allocation2 + $0xc8] sm:$0xff] %v354
  %539 = vst [vmem:[#allocation2 + $0xd0] sm:$0xff] %v465
  %540 = vst [vmem:[#allocation2 + $0xd8] sm:$0xff] %v467
  %541 = vst [vmem:[#allocation2 + $0xe0] sm:$0xff] %v356
  %542 = vst [vmem:[#allocation2 + $0xe8] sm:$0xff] %v358
  %543 = vst [vmem:[#allocation2 + $0xf0] sm:$0xff] %v469
  %544 = vst [vmem:[#allocation2 + $0xf8] sm:$0xff] %v471
  %545 = vst [vmem:[#allocation2 + $0x100] sm:$0xff] %v362
  %546 = vst [vmem:[#allocation2 + $0x108] sm:$0xff] %v364
  %547 = vst [vmem:[#allocation2 + $0x110] sm:$0xff] %v475
  %548 = vst [vmem:[#allocation2 + $0x118] sm:$0xff] %v477
  %549 = vst [vmem:[#allocation2 + $0x120] sm:$0xff] %v366
  %550 = vst [vmem:[#allocation2 + $0x128] sm:$0xff] %v368
  %551 = vst [vmem:[#allocation2 + $0x130] sm:$0xff] %v479
  %552 = vst [vmem:[#allocation2 + $0x138] sm:$0xff] %v481
  %553 = vst [vmem:[#allocation2 + $0x140] sm:$0xff] %v372
  %554 = vst [vmem:[#allocation2 + $0x148] sm:$0xff] %v374
  %555 = vst [vmem:[#allocation2 + $0x150] sm:$0xff] %v485
  %556 = vst [vmem:[#allocation2 + $0x158] sm:$0xff] %v487
  %557 = vst [vmem:[#allocation2 + $0x160] sm:$0xff] %v376
  %558 = vst [vmem:[#allocation2 + $0x168] sm:$0xff] %v378
  %559 = vst [vmem:[#allocation2 + $0x170] sm:$0xff] %v489
  %560 = vst [vmem:[#allocation2 + $0x178] sm:$0xff] %v491
  %561 = vst [vmem:[#allocation2 + $0x180] sm:$0xff] %v382
  %562 = vst [vmem:[#allocation2 + $0x188] sm:$0xff] %v384
  %563 = vst [vmem:[#allocation2 + $0x190] sm:$0xff] %v495
  %564 = vst [vmem:[#allocation2 + $0x198] sm:$0xff] %v497
  %565 = vst [vmem:[#allocation2 + $0x1a0] sm:$0xff] %v386
  %566 = vst [vmem:[#allocation2 + $0x1a8] sm:$0xff] %v388
  %567 = vst [vmem:[#allocation2 + $0x1b0] sm:$0xff] %v499
  %568 = vst [vmem:[#allocation2 + $0x1b8] sm:$0xff] %v501
  %569 = vst [vmem:[#allocation2 + $0x1c0] sm:$0xff] %v392
  %570 = vst [vmem:[#allocation2 + $0x1c8] sm:$0xff] %v394
  %571 = vst [vmem:[#allocation2 + $0x1d0] sm:$0xff] %v505
  %572 = vst [vmem:[#allocation2 + $0x1d8] sm:$0xff] %v507
  %573 = vst [vmem:[#allocation2 + $0x1e0] sm:$0xff] %v396
  %574 = vst [vmem:[#allocation2 + $0x1e8] sm:$0xff] %v398
  %575 = vst [vmem:[#allocation2 + $0x1f0] sm:$0xff] %v509
  %576 = vst [vmem:[#allocation2 + $0x1f8] sm:$0xff] %v511
  %v577 = vld [vmem:[%s1] sm:$0xff]
  %v578 = vld [vmem:[%s1 + $0x8] sm:$0xff]
  %v579 = vld [vmem:[%s4] sm:$0xff]
  %v580 = vld [vmem:[%s4 + $0x8] sm:$0xff]
  %v581 = vld [vmem:[%s4 + $0x10] sm:$0xff]
  %v582 = vld [vmem:[%s4 + $0x18] sm:$0xff]
  %v583 = vld [vmem:[%s4 + $0x20] sm:$0xff]
  %v584 = vld [vmem:[%s4 + $0x28] sm:$0xff]
  %v585 = vld [vmem:[%s4 + $0x30] sm:$0xff]
  %v586 = vld [vmem:[%s4 + $0x38] sm:$0xff]
  %v587 = vld [vmem:[%s4 + $0x40] sm:$0xff]
  %v588 = vld [vmem:[%s4 + $0x48] sm:$0xff]
  %v589 = vld [vmem:[%s4 + $0x50] sm:$0xff]
  %v590 = vld [vmem:[%s4 + $0x58] sm:$0xff]
  %v591 = vld [vmem:[%s4 + $0x60] sm:$0xff]
  %v592 = vld [vmem:[%s4 + $0x68] sm:$0xff]
  %v593 = vld [vmem:[%s4 + $0x70] sm:$0xff]
  %v594 = vld [vmem:[%s4 + $0x78] sm:$0xff]
  %v595 = vld [vmem:[%s4 + $0x80] sm:$0xff]
  %v596 = vld [vmem:[%s4 + $0x88] sm:$0xff]
  %v597 = vld [vmem:[%s4 + $0x90] sm:$0xff]
  %v598 = vld [vmem:[%s4 + $0x98] sm:$0xff]
  %v599 = vld [vmem:[%s4 + $0xa0] sm:$0xff]
  %v600 = vld [vmem:[%s4 + $0xa8] sm:$0xff]
  %v601 = vld [vmem:[%s4 + $0xb0] sm:$0xff]
  %v602 = vld [vmem:[%s4 + $0xb8] sm:$0xff]
  %v603 = vld [vmem:[%s4 + $0xc0] sm:$0xff]
  %v604 = vld [vmem:[%s4 + $0xc8] sm:$0xff]
  %v605 = vld [vmem:[%s4 + $0xd0] sm:$0xff]
  %v606 = vld [vmem:[%s4 + $0xd8] sm:$0xff]
  %v607 = vld [vmem:[%s4 + $0xe0] sm:$0xff]
  %v608 = vld [vmem:[%s4 + $0xe8] sm:$0xff]
  %v609 = vld [vmem:[%s4 + $0xf0] sm:$0xff]
  %v610 = vld [vmem:[%s4 + $0xf8] sm:$0xff]
  %v611 = vld [vmem:[%s3] sm:$0xf]
  %v612 = vld [vmem:[%s5] sm:$0xff]
  %v613 = vld [vmem:[%s5 + $0x8] sm:$0xff]
  %v614 = vld [vmem:[%s6] sm:$0xff]
  %v615 = vld [vmem:[%s6 + $0x8] sm:$0xff]
  %s616 = smul.u32 0, 8
  %v617 = vld [vmem:[#allocation2] sm:$0xff]
  %v618 = vld [vmem:[#allocation2 + $0x8] sm:$0xff]
  %v619 = vld [vmem:[#allocation2 + $0x10] sm:$0xff]
  %v620 = vld [vmem:[#allocation2 + $0x18] sm:$0xff]
  %v621 = vld [vmem:[#allocation2 + $0x20] sm:$0xff]
  %v622 = vld [vmem:[#allocation2 + $0x28] sm:$0xff]
  %v623 = vld [vmem:[#allocation2 + $0x30] sm:$0xff]
  %v624 = vld [vmem:[#allocation2 + $0x38] sm:$0xff]
  %v626 = vlaneseq
  %v627 = vshrl.u32 %v626, 7
  %v628 = vsub.s32 0, %v627
  %v629 = vrot.slane %v611, %v628
  %v630 = vlaneseq
  %v631 = vshrl.u32 %v630, 7
  %v632 = vsub.s32 1, %v631
  %v633 = vrot.slane %v611, %v632
  %v634 = vlaneseq
  %v635 = vshrl.u32 %v634, 7
  %v636 = vsub.s32 2, %v635
  %v637 = vrot.slane %v611, %v636
  %v638 = vlaneseq
  %v639 = vshrl.u32 %v638, 7
  %v640 = vsub.s32 3, %v639
  %v641 = vrot.slane %v611, %v640
  %v646 = vadd.f32 %v617, %v629
  %v647 = vadd.f32 %v618, %v633
  %v648 = vadd.f32 %v619, %v637
  %v649 = vadd.f32 %v620, %v641
  %v650 = vadd.f32 %v621, %v629
  %v651 = vadd.f32 %v622, %v633
  %v652 = vadd.f32 %v623, %v637
  %v653 = vadd.f32 %v624, %v641
  %v654 = vpack.c.bf16 %v613, %v612
  %v687 = vunpack.c.l.b16 %v579
  %v688 = vunpack.c.h.b16 %v579
  %v689 = vunpack.c.l.b16 %v580
  %v690 = vunpack.c.h.b16 %v580
  %v691 = vunpack.c.l.b16 %v581
  %v692 = vunpack.c.h.b16 %v581
  %v693 = vunpack.c.l.b16 %v582
  %v694 = vunpack.c.h.b16 %v582
  %v695 = vunpack.c.l.b16 %v583
  %v696 = vunpack.c.h.b16 %v583
  %v697 = vunpack.c.l.b16 %v584
  %v698 = vunpack.c.h.b16 %v584
  %v699 = vunpack.c.l.b16 %v585
  %v700 = vunpack.c.h.b16 %v585
  %v701 = vunpack.c.l.b16 %v586
  %v702 = vunpack.c.h.b16 %v586
  %v703 = vunpack.c.l.b16 %v587
  %v704 = vunpack.c.h.b16 %v587
  %v705 = vunpack.c.l.b16 %v588
  %v706 = vunpack.c.h.b16 %v588
  %v707 = vunpack.c.l.b16 %v589
  %v708 = vunpack.c.h.b16 %v589
  %v709 = vunpack.c.l.b16 %v590
  %v710 = vunpack.c.h.b16 %v590
  %v711 = vunpack.c.l.b16 %v591
  %v712 = vunpack.c.h.b16 %v591
  %v713 = vunpack.c.l.b16 %v592
  %v714 = vunpack.c.h.b16 %v592
  %v715 = vunpack.c.l.b16 %v593
  %v716 = vunpack.c.h.b16 %v593
  %v717 = vunpack.c.l.b16 %v594
  %v718 = vunpack.c.h.b16 %v594
  %v719 = vunpack.c.l.b16 %v595
  %v720 = vunpack.c.h.b16 %v595
  %v721 = vunpack.c.l.b16 %v596
  %v722 = vunpack.c.h.b16 %v596
  %v723 = vunpack.c.l.b16 %v597
  %v724 = vunpack.c.h.b16 %v597
  %v725 = vunpack.c.l.b16 %v598
  %v726 = vunpack.c.h.b16 %v598
  %v727 = vunpack.c.l.b16 %v599
  %v728 = vunpack.c.h.b16 %v599
  %v729 = vunpack.c.l.b16 %v600
  %v730 = vunpack.c.h.b16 %v600
  %v731 = vunpack.c.l.b16 %v601
  %v732 = vunpack.c.h.b16 %v601
  %v733 = vunpack.c.l.b16 %v602
  %v734 = vunpack.c.h.b16 %v602
  %v735 = vunpack.c.l.b16 %v603
  %v736 = vunpack.c.h.b16 %v603
  %v737 = vunpack.c.l.b16 %v604
  %v738 = vunpack.c.h.b16 %v604
  %v739 = vunpack.c.l.b16 %v605
  %v740 = vunpack.c.h.b16 %v605
  %v741 = vunpack.c.l.b16 %v606
  %v742 = vunpack.c.h.b16 %v606
  %v743 = vunpack.c.l.b16 %v607
  %v744 = vunpack.c.h.b16 %v607
  %v745 = vunpack.c.l.b16 %v608
  %v746 = vunpack.c.h.b16 %v608
  %v747 = vunpack.c.l.b16 %v609
  %v748 = vunpack.c.h.b16 %v609
  %v749 = vunpack.c.l.b16 %v610
  %v750 = vunpack.c.h.b16 %v610
  %v751 = vpack.c.b16 %v691, %v687
  %v752 = vpack.c.b16 %v692, %v688
  %v753 = vpack.c.b16 %v693, %v689
  %v754 = vpack.c.b16 %v694, %v690
  %v755 = vpack.c.b16 %v699, %v695
  %v756 = vpack.c.b16 %v700, %v696
  %v757 = vpack.c.b16 %v701, %v697
  %v758 = vpack.c.b16 %v702, %v698
  %v759 = vpack.c.b16 %v707, %v703
  %v760 = vpack.c.b16 %v708, %v704
  %v761 = vpack.c.b16 %v709, %v705
  %v762 = vpack.c.b16 %v710, %v706
  %v763 = vpack.c.b16 %v715, %v711
  %v764 = vpack.c.b16 %v716, %v712
  %v765 = vpack.c.b16 %v717, %v713
  %v766 = vpack.c.b16 %v718, %v714
  %v767 = vpack.c.b16 %v723, %v719
  %v768 = vpack.c.b16 %v724, %v720
  %v769 = vpack.c.b16 %v725, %v721
  %v770 = vpack.c.b16 %v726, %v722
  %v771 = vpack.c.b16 %v731, %v727
  %v772 = vpack.c.b16 %v732, %v728
  %v773 = vpack.c.b16 %v733, %v729
  %v774 = vpack.c.b16 %v734, %v730
  %v775 = vpack.c.b16 %v739, %v735
  %v776 = vpack.c.b16 %v740, %v736
  %v777 = vpack.c.b16 %v741, %v737
  %v778 = vpack.c.b16 %v742, %v738
  %v779 = vpack.c.b16 %v747, %v743
  %v780 = vpack.c.b16 %v748, %v744
  %v781 = vpack.c.b16 %v749, %v745
  %v782 = vpack.c.b16 %v750, %v746
  %815 = vmatprep.subr.bf16.mxu0 %v780
  %816 = vmatpush1.bf16.msra.mxu0 %v779
  %817 = vmatprep.subr.bf16.mxu0 %v776
  %818 = vmatpush1.bf16.msra.mxu0 %v775
  %819 = vmatprep.subr.bf16.mxu0 %v772
  %820 = vmatpush1.bf16.msra.mxu0 %v771
  %821 = vmatprep.subr.bf16.mxu0 %v768
  %822 = vmatpush1.bf16.msra.mxu0 %v767
  %823 = vmatprep.subr.bf16.mxu0 %v764
  %824 = vmatpush1.bf16.msra.mxu0 %v763
  %825 = vmatprep.subr.bf16.mxu0 %v760
  %826 = vmatpush1.bf16.msra.mxu0 %v759
  %827 = vmatprep.subr.bf16.mxu0 %v756
  %828 = vmatpush1.bf16.msra.mxu0 %v755
  %829 = vmatprep.subr.bf16.mxu0 %v752
  %830 = vmatpush1.bf16.msra.mxu0 %v751
  %831 = vmatprep.subr.bf16.mxu0 0
  %832 = vmatpush2.bf16.msra.mxu0 0
  %833 = vmatprep.subr.bf16.mxu0 0
  %834 = vmatpush2.bf16.msra.mxu0 0
  %835 = vmatprep.subr.bf16.mxu0 0
  %836 = vmatpush2.bf16.msra.mxu0 0
  %837 = vmatprep.subr.bf16.mxu0 0
  %838 = vmatpush2.bf16.msra.mxu0 0
  %839 = vmatprep.subr.bf16.mxu0 0
  %840 = vmatpush2.bf16.msra.mxu0 0
  %841 = vmatprep.subr.bf16.mxu0 0
  %842 = vmatpush2.bf16.msra.mxu0 0
  %843 = vmatprep.subr.bf16.mxu0 0
  %844 = vmatpush2.bf16.msra.mxu0 0
  %845 = vmatprep.subr.bf16.mxu0 0
  %846 = vmatpush2.bf16.msra.mxu0 0
  %847 = vmatprep.mubr.bf16.mxu0 0
  %848 = vmatmul.mubr.bf16.gmra.mxu0 %v654
  %v849 = vpop.f32.mrf.mxu0
  %v850 = vadd.f32 0.0, %v849
  %v851 = vpop.f32.mrf.mxu0
  %v852 = vadd.f32 0.0, %v851
  %v853 = vpop.f32.mrf.mxu0
  %v854 = vadd.f32 0.0, %v853
  %v855 = vpop.f32.mrf.mxu0
  %v856 = vadd.f32 0.0, %v855
  %857 = vdwg.mxu0
  %858 = vmatprep.subr.bf16.mxu0 %v782
  %859 = vmatpush1.bf16.msra.mxu0 %v781
  %860 = vmatprep.subr.bf16.mxu0 %v778
  %861 = vmatpush1.bf16.msra.mxu0 %v777
  %862 = vmatprep.subr.bf16.mxu0 %v774
  %863 = vmatpush1.bf16.msra.mxu0 %v773
  %864 = vmatprep.subr.bf16.mxu0 %v770
  %865 = vmatpush1.bf16.msra.mxu0 %v769
  %866 = vmatprep.subr.bf16.mxu0 %v766
  %867 = vmatpush1.bf16.msra.mxu0 %v765
  %868 = vmatprep.subr.bf16.mxu0 %v762
  %869 = vmatpush1.bf16.msra.mxu0 %v761
  %870 = vmatprep.subr.bf16.mxu0 %v758
  %871 = vmatpush1.bf16.msra.mxu0 %v757
  %872 = vmatprep.subr.bf16.mxu0 %v754
  %873 = vmatpush1.bf16.msra.mxu0 %v753
  %874 = vmatprep.subr.bf16.mxu0 0
  %875 = vmatpush2.bf16.msra.mxu0 0
  %876 = vmatprep.subr.bf16.mxu0 0
  %877 = vmatpush2.bf16.msra.mxu0 0
  %878 = vmatprep.subr.bf16.mxu0 0
  %879 = vmatpush2.bf16.msra.mxu0 0
  %880 = vmatprep.subr.bf16.mxu0 0
  %881 = vmatpush2.bf16.msra.mxu0 0
  %882 = vmatprep.subr.bf16.mxu0 0
  %883 = vmatpush2.bf16.msra.mxu0 0
  %884 = vmatprep.subr.bf16.mxu0 0
  %885 = vmatpush2.bf16.msra.mxu0 0
  %886 = vmatprep.subr.bf16.mxu0 0
  %887 = vmatpush2.bf16.msra.mxu0 0
  %888 = vmatprep.subr.bf16.mxu0 0
  %889 = vmatpush2.bf16.msra.mxu0 0
  %890 = vmatprep.mubr.bf16.mxu0 0
  %891 = vmatmul.mubr.bf16.gmra.mxu0 %v654
  %v892 = vpop.f32.mrf.mxu0
  %v893 = vadd.f32 0.0, %v892
  %v894 = vpop.f32.mrf.mxu0
  %v895 = vadd.f32 0.0, %v894
  %v896 = vpop.f32.mrf.mxu0
  %v897 = vadd.f32 0.0, %v896
  %v898 = vpop.f32.mrf.mxu0
  %v899 = vadd.f32 0.0, %v898
  %900 = vdwg.mxu0
  %v901 = vadd.f32 %v646, %v850
  %v902 = vadd.f32 %v647, %v852
  %v903 = vadd.f32 %v648, %v893
  %v904 = vadd.f32 %v649, %v895
  %v905 = vadd.f32 %v650, %v854
  %v906 = vadd.f32 %v651, %v856
  %v907 = vadd.f32 %v652, %v897
  %v908 = vadd.f32 %v653, %v899
  %v909 = vxor.u32 %v901, 2147483648
  %v910 = vxor.u32 %v905, 2147483648
  %v911 = vmul.f32 %v909, 1.442695
  %v912 = vpow.pop %v911
  %v913 = vmul.f32 %v910, 1.442695
  %v914 = vpow.pop %v913
  %v915 = vadd.f32 %v912, 1.0
  %v916 = vadd.f32 %v914, 1.0
  %v917 = vrcp.pop %v915
  %v918 = vmul.f32 1.0, %v917
  %v919 = vrcp.pop %v916
  %v920 = vmul.f32 1.0, %v919
  %v921 = vxor.u32 %v902, 2147483648
  %v922 = vxor.u32 %v906, 2147483648
  %v923 = vmul.f32 %v921, 1.442695
  %v924 = vpow.pop %v923
  %v925 = vmul.f32 %v922, 1.442695
  %v926 = vpow.pop %v925
  %v927 = vadd.f32 %v924, 1.0
  %v928 = vadd.f32 %v926, 1.0
  %v929 = vrcp.pop %v927
  %v930 = vmul.f32 1.0, %v929
  %v931 = vrcp.pop %v928
  %v932 = vmul.f32 1.0, %v931
  %v933 = vtanh.pop %v903
  %v934 = vtanh.pop %v907
  %v935 = vxor.u32 %v904, 2147483648
  %v936 = vxor.u32 %v908, 2147483648
  %v937 = vmul.f32 %v935, 1.442695
  %v938 = vpow.pop %v937
  %v939 = vmul.f32 %v936, 1.442695
  %v940 = vpow.pop %v939
  %v941 = vadd.f32 %v938, 1.0
  %v942 = vadd.f32 %v940, 1.0
  %v943 = vrcp.pop %v941
  %v944 = vmul.f32 1.0, %v943
  %v945 = vrcp.pop %v942
  %v946 = vmul.f32 1.0, %v945
  %v947 = vmul.f32 %v930, %v614
  %v948 = vmul.f32 %v932, %v615
  %v949 = vmul.f32 %v918, %v933
  %v950 = vmul.f32 %v920, %v934
  %v951 = vadd.f32 %v947, %v949
  %v952 = vadd.f32 %v948, %v950
  %v953 = vtanh.pop %v951
  %v954 = vtanh.pop %v952
  %v955 = vmul.f32 %v944, %v953
  %v956 = vmul.f32 %v946, %v954
  %v957 = vstv %s616
  %vm958 = vcmp.lt.s32.totalorder %v957, %v577
  %vm959 = vcmp.lt.s32.totalorder %v957, %v578
  %v960 = vsel %vm958, 1, 0
  %v961 = vsel %vm959, 1, 0
  %962 = vset.pattern.permute.xlu0 0
  %963 = vperm.xlu0 %962, %v960
  %v964 = vpop.permute.xlu0 %963
  %965 = vset.pattern.permute.xlu0 0
  %966 = vperm.xlu0 %965, %v961
  %v967 = vpop.permute.xlu0 %966
  %vm968 = vcmp.eq.s32.totalorder %v964, 1
  %vm969 = vcmp.eq.s32.totalorder %v967, 1
  %v970 = vsel %vm968, %v955, %v612
  %v971 = vsel %vm969, %v956, %v613
  %v972 = vsel %vm968, %v951, %v614
  %v973 = vsel %vm969, %v952, %v615
  %s974 = sadd.s32 %s616, 1
  %s975 = scalar_lea.vmem [#allocation2], 64
  %v976 = vld [vmem:[%s975] sm:$0xff]
  %v977 = vld [vmem:[%s975 + $0x8] sm:$0xff]
  %v978 = vld [vmem:[%s975 + $0x10] sm:$0xff]
  %v979 = vld [vmem:[%s975 + $0x18] sm:$0xff]
  %v980 = vld [vmem:[%s975 + $0x20] sm:$0xff]
  %v981 = vld [vmem:[%s975 + $0x28] sm:$0xff]
  %v982 = vld [vmem:[%s975 + $0x30] sm:$0xff]
  %v983 = vld [vmem:[%s975 + $0x38] sm:$0xff]
  %v984 = vadd.f32 %v976, %v629
  %v985 = vadd.f32 %v977, %v633
  %v986 = vadd.f32 %v978, %v637
  %v987 = vadd.f32 %v979, %v641
  %v988 = vadd.f32 %v980, %v629
  %v989 = vadd.f32 %v981, %v633
  %v990 = vadd.f32 %v982, %v637
  %v991 = vadd.f32 %v983, %v641
  %v992 = vpack.c.bf16 %v971, %v970
  %993 = vmatprep.subr.bf16.mxu0 %v780
  %994 = vmatpush1.bf16.msra.mxu0 %v779
  %995 = vmatprep.subr.bf16.mxu0 %v776
  %996 = vmatpush1.bf16.msra.mxu0 %v775
  %997 = vmatprep.subr.bf16.mxu0 %v772
  %998 = vmatpush1.bf16.msra.mxu0 %v771
  %999 = vmatprep.subr.bf16.mxu0 %v768
  %1000 = vmatpush1.bf16.msra.mxu0 %v767
  %1001 = vmatprep.subr.bf16.mxu0 %v764
  %1002 = vmatpush1.bf16.msra.mxu0 %v763
  %1003 = vmatprep.subr.bf16.mxu0 %v760
  %1004 = vmatpush1.bf16.msra.mxu0 %v759
  %1005 = vmatprep.subr.bf16.mxu0 %v756
  %1006 = vmatpush1.bf16.msra.mxu0 %v755
  %1007 = vmatprep.subr.bf16.mxu0 %v752
  %1008 = vmatpush1.bf16.msra.mxu0 %v751
  %1009 = vmatprep.subr.bf16.mxu0 0
  %1010 = vmatpush2.bf16.msra.mxu0 0
  %1011 = vmatprep.subr.bf16.mxu0 0
  %1012 = vmatpush2.bf16.msra.mxu0 0
  %1013 = vmatprep.subr.bf16.mxu0 0
  %1014 = vmatpush2.bf16.msra.mxu0 0
  %1015 = vmatprep.subr.bf16.mxu0 0
  %1016 = vmatpush2.bf16.msra.mxu0 0
  %1017 = vmatprep.subr.bf16.mxu0 0
  %1018 = vmatpush2.bf16.msra.mxu0 0
  %1019 = vmatprep.subr.bf16.mxu0 0
  %1020 = vmatpush2.bf16.msra.mxu0 0
  %1021 = vmatprep.subr.bf16.mxu0 0
  %1022 = vmatpush2.bf16.msra.mxu0 0
  %1023 = vmatprep.subr.bf16.mxu0 0
  %1024 = vmatpush2.bf16.msra.mxu0 0
  %1025 = vmatprep.mubr.bf16.mxu0 0
  %1026 = vmatmul.mubr.bf16.gmra.mxu0 %v992
  %v1027 = vpop.f32.mrf.mxu0
  %v1028 = vadd.f32 0.0, %v1027
  %v1029 = vpop.f32.mrf.mxu0
  %v1030 = vadd.f32 0.0, %v1029
  %v1031 = vpop.f32.mrf.mxu0
  %v1032 = vadd.f32 0.0, %v1031
  %v1033 = vpop.f32.mrf.mxu0
  %v1034 = vadd.f32 0.0, %v1033
  %1035 = vdwg.mxu0
  %1036 = vmatprep.subr.bf16.mxu0 %v782
  %1037 = vmatpush1.bf16.msra.mxu0 %v781
  %1038 = vmatprep.subr.bf16.mxu0 %v778
  %1039 = vmatpush1.bf16.msra.mxu0 %v777
  %1040 = vmatprep.subr.bf16.mxu0 %v774
  %1041 = vmatpush1.bf16.msra.mxu0 %v773
  %1042 = vmatprep.subr.bf16.mxu0 %v770
  %1043 = vmatpush1.bf16.msra.mxu0 %v769
  %1044 = vmatprep.subr.bf16.mxu0 %v766
  %1045 = vmatpush1.bf16.msra.mxu0 %v765
  %1046 = vmatprep.subr.bf16.mxu0 %v762
  %1047 = vmatpush1.bf16.msra.mxu0 %v761
  %1048 = vmatprep.subr.bf16.mxu0 %v758
  %1049 = vmatpush1.bf16.msra.mxu0 %v757
  %1050 = vmatprep.subr.bf16.mxu0 %v754
  %1051 = vmatpush1.bf16.msra.mxu0 %v753
  %1052 = vmatprep.subr.bf16.mxu0 0
  %1053 = vmatpush2.bf16.msra.mxu0 0
  %1054 = vmatprep.subr.bf16.mxu0 0
  %1055 = vmatpush2.bf16.msra.mxu0 0
  %1056 = vmatprep.subr.bf16.mxu0 0
  %1057 = vmatpush2.bf16.msra.mxu0 0
  %1058 = vmatprep.subr.bf16.mxu0 0
  %1059 = vmatpush2.bf16.msra.mxu0 0
  %1060 = vmatprep.subr.bf16.mxu0 0
  %1061 = vmatpush2.bf16.msra.mxu0 0
  %1062 = vmatprep.subr.bf16.mxu0 0
  %1063 = vmatpush2.bf16.msra.mxu0 0
  %1064 = vmatprep.subr.bf16.mxu0 0
  %1065 = vmatpush2.bf16.msra.mxu0 0
  %1066 = vmatprep.subr.bf16.mxu0 0
  %1067 = vmatpush2.bf16.msra.mxu0 0
  %1068 = vmatprep.mubr.bf16.mxu0 0
  %1069 = vmatmul.mubr.bf16.gmra.mxu0 %v992
  %v1070 = vpop.f32.mrf.mxu0
  %v1071 = vadd.f32 0.0, %v1070
  %v1072 = vpop.f32.mrf.mxu0
  %v1073 = vadd.f32 0.0, %v1072
  %v1074 = vpop.f32.mrf.mxu0
  %v1075 = vadd.f32 0.0, %v1074
  %v1076 = vpop.f32.mrf.mxu0
  %v1077 = vadd.f32 0.0, %v1076
  %1078 = vdwg.mxu0
  %v1079 = vadd.f32 %v984, %v1028
  %v1080 = vadd.f32 %v985, %v1030
  %v1081 = vadd.f32 %v986, %v1071
  %v1082 = vadd.f32 %v987, %v1073
  %v1083 = vadd.f32 %v988, %v1032
  %v1084 = vadd.f32 %v989, %v1034
  %v1085 = vadd.f32 %v990, %v1075
  %v1086 = vadd.f32 %v991, %v1077
  %v1087 = vxor.u32 %v1079, 2147483648
  %v1088 = vxor.u32 %v1083, 2147483648
  %v1089 = vmul.f32 %v1087, 1.442695
  %v1090 = vpow.pop %v1089
  %v1091 = vmul.f32 %v1088, 1.442695
  %v1092 = vpow.pop %v1091
  %v1093 = vadd.f32 %v1090, 1.0
  %v1094 = vadd.f32 %v1092, 1.0
  %v1095 = vrcp.pop %v1093
  %v1096 = vmul.f32 1.0, %v1095
  %v1097 = vrcp.pop %v1094
  %v1098 = vmul.f32 1.0, %v1097
  %v1099 = vxor.u32 %v1080, 2147483648
  %v1100 = vxor.u32 %v1084, 2147483648
  %v1101 = vmul.f32 %v1099, 1.442695
  %v1102 = vpow.pop %v1101
  %v1103 = vmul.f32 %v1100, 1.442695
  %v1104 = vpow.pop %v1103
  %v1105 = vadd.f32 %v1102, 1.0
  %v1106 = vadd.f32 %v1104, 1.0
  %v1107 = vrcp.pop %v1105
  %v1108 = vmul.f32 1.0, %v1107
  %v1109 = vrcp.pop %v1106
  %v1110 = vmul.f32 1.0, %v1109
  %v1111 = vtanh.pop %v1081
  %v1112 = vtanh.pop %v1085
  %v1113 = vxor.u32 %v1082, 2147483648
  %v1114 = vxor.u32 %v1086, 2147483648
  %v1115 = vmul.f32 %v1113, 1.442695
  %v1116 = vpow.pop %v1115
  %v1117 = vmul.f32 %v1114, 1.442695
  %v1118 = vpow.pop %v1117
  %v1119 = vadd.f32 %v1116, 1.0
  %v1120 = vadd.f32 %v1118, 1.0
  %v1121 = vrcp.pop %v1119
  %v1122 = vmul.f32 1.0, %v1121
  %v1123 = vrcp.pop %v1120
  %v1124 = vmul.f32 1.0, %v1123
  %v1125 = vmul.f32 %v1108, %v972
  %v1126 = vmul.f32 %v1110, %v973
  %v1127 = vmul.f32 %v1096, %v1111
  %v1128 = vmul.f32 %v1098, %v1112
  %v1129 = vadd.f32 %v1125, %v1127
  %v1130 = vadd.f32 %v1126, %v1128
  %v1131 = vtanh.pop %v1129
  %v1132 = vtanh.pop %v1130
  %v1133 = vmul.f32 %v1122, %v1131
  %v1134 = vmul.f32 %v1124, %v1132
  %v1135 = vstv %s974
  %vm1136 = vcmp.lt.s32.totalorder %v1135, %v577
  %vm1137 = vcmp.lt.s32.totalorder %v1135, %v578
  %v1138 = vsel %vm1136, 1, 0
  %v1139 = vsel %vm1137, 1, 0
  %1140 = vset.pattern.permute.xlu0 0
  %1141 = vperm.xlu0 %1140, %v1138
  %v1142 = vpop.permute.xlu0 %1141
  %1143 = vset.pattern.permute.xlu0 0
  %1144 = vperm.xlu0 %1143, %v1139
  %v1145 = vpop.permute.xlu0 %1144
  %vm1146 = vcmp.eq.s32.totalorder %v1142, 1
  %vm1147 = vcmp.eq.s32.totalorder %v1145, 1
  %v1148 = vsel %vm1146, %v1133, %v970
  %v1149 = vsel %vm1147, %v1134, %v971
  %v1150 = vsel %vm1146, %v1129, %v972
  %v1151 = vsel %vm1147, %v1130, %v973
  %s1152 = sadd.s32 %s616, 2
  %s1153 = scalar_lea.vmem [#allocation2], 128
  %v1154 = vld [vmem:[%s1153] sm:$0xff]
  %v1155 = vld [vmem:[%s1153 + $0x8] sm:$0xff]
  %v1156 = vld [vmem:[%s1153 + $0x10] sm:$0xff]
  %v1157 = vld [vmem:[%s1153 + $0x18] sm:$0xff]
  %v1158 = vld [vmem:[%s1153 + $0x20] sm:$0xff]
  %v1159 = vld [vmem:[%s1153 + $0x28] sm:$0xff]
  %v1160 = vld [vmem:[%s1153 + $0x30] sm:$0xff]
  %v1161 = vld [vmem:[%s1153 + $0x38] sm:$0xff]
  %v1162 = vadd.f32 %v1154, %v629
  %v1163 = vadd.f32 %v1155, %v633
  %v1164 = vadd.f32 %v1156, %v637
  %v1165 = vadd.f32 %v1157, %v641
  %v1166 = vadd.f32 %v1158, %v629
  %v1167 = vadd.f32 %v1159, %v633
  %v1168 = vadd.f32 %v1160, %v637
  %v1169 = vadd.f32 %v1161, %v641
  %v1170 = vpack.c.bf16 %v1149, %v1148
  %1171 = vmatprep.subr.bf16.mxu0 %v780
  %1172 = vmatpush1.bf16.msra.mxu0 %v779
  %1173 = vmatprep.subr.bf16.mxu0 %v776
  %1174 = vmatpush1.bf16.msra.mxu0 %v775
  %1175 = vmatprep.subr.bf16.mxu0 %v772
  %1176 = vmatpush1.bf16.msra.mxu0 %v771
  %1177 = vmatprep.subr.bf16.mxu0 %v768
  %1178 = vmatpush1.bf16.msra.mxu0 %v767
  %1179 = vmatprep.subr.bf16.mxu0 %v764
  %1180 = vmatpush1.bf16.msra.mxu0 %v763
  %1181 = vmatprep.subr.bf16.mxu0 %v760
  %1182 = vmatpush1.bf16.msra.mxu0 %v759
  %1183 = vmatprep.subr.bf16.mxu0 %v756
  %1184 = vmatpush1.bf16.msra.mxu0 %v755
  %1185 = vmatprep.subr.bf16.mxu0 %v752
  %1186 = vmatpush1.bf16.msra.mxu0 %v751
  %1187 = vmatprep.subr.bf16.mxu0 0
  %1188 = vmatpush2.bf16.msra.mxu0 0
  %1189 = vmatprep.subr.bf16.mxu0 0
  %1190 = vmatpush2.bf16.msra.mxu0 0
  %1191 = vmatprep.subr.bf16.mxu0 0
  %1192 = vmatpush2.bf16.msra.mxu0 0
  %1193 = vmatprep.subr.bf16.mxu0 0
  %1194 = vmatpush2.bf16.msra.mxu0 0
  %1195 = vmatprep.subr.bf16.mxu0 0
  %1196 = vmatpush2.bf16.msra.mxu0 0
  %1197 = vmatprep.subr.bf16.mxu0 0
  %1198 = vmatpush2.bf16.msra.mxu0 0
  %1199 = vmatprep.subr.bf16.mxu0 0
  %1200 = vmatpush2.bf16.msra.mxu0 0
  %1201 = vmatprep.subr.bf16.mxu0 0
  %1202 = vmatpush2.bf16.msra.mxu0 0
  %1203 = vmatprep.mubr.bf16.mxu0 0
  %1204 = vmatmul.mubr.bf16.gmra.mxu0 %v1170
  %v1205 = vpop.f32.mrf.mxu0
  %v1206 = vadd.f32 0.0, %v1205
  %v1207 = vpop.f32.mrf.mxu0
  %v1208 = vadd.f32 0.0, %v1207
  %v1209 = vpop.f32.mrf.mxu0
  %v1210 = vadd.f32 0.0, %v1209
  %v1211 = vpop.f32.mrf.mxu0
  %v1212 = vadd.f32 0.0, %v1211
  %1213 = vdwg.mxu0
  %1214 = vmatprep.subr.bf16.mxu0 %v782
  %1215 = vmatpush1.bf16.msra.mxu0 %v781
  %1216 = vmatprep.subr.bf16.mxu0 %v778
  %1217 = vmatpush1.bf16.msra.mxu0 %v777
  %1218 = vmatprep.subr.bf16.mxu0 %v774
  %1219 = vmatpush1.bf16.msra.mxu0 %v773
  %1220 = vmatprep.subr.bf16.mxu0 %v770
  %1221 = vmatpush1.bf16.msra.mxu0 %v769
  %1222 = vmatprep.subr.bf16.mxu0 %v766
  %1223 = vmatpush1.bf16.msra.mxu0 %v765
  %1224 = vmatprep.subr.bf16.mxu0 %v762
  %1225 = vmatpush1.bf16.msra.mxu0 %v761
  %1226 = vmatprep.subr.bf16.mxu0 %v758
  %1227 = vmatpush1.bf16.msra.mxu0 %v757
  %1228 = vmatprep.subr.bf16.mxu0 %v754
  %1229 = vmatpush1.bf16.msra.mxu0 %v753
  %1230 = vmatprep.subr.bf16.mxu0 0
  %1231 = vmatpush2.bf16.msra.mxu0 0
  %1232 = vmatprep.subr.bf16.mxu0 0
  %1233 = vmatpush2.bf16.msra.mxu0 0
  %1234 = vmatprep.subr.bf16.mxu0 0
  %1235 = vmatpush2.bf16.msra.mxu0 0
  %1236 = vmatprep.subr.bf16.mxu0 0
  %1237 = vmatpush2.bf16.msra.mxu0 0
  %1238 = vmatprep.subr.bf16.mxu0 0
  %1239 = vmatpush2.bf16.msra.mxu0 0
  %1240 = vmatprep.subr.bf16.mxu0 0
  %1241 = vmatpush2.bf16.msra.mxu0 0
  %1242 = vmatprep.subr.bf16.mxu0 0
  %1243 = vmatpush2.bf16.msra.mxu0 0
  %1244 = vmatprep.subr.bf16.mxu0 0
  %1245 = vmatpush2.bf16.msra.mxu0 0
  %1246 = vmatprep.mubr.bf16.mxu0 0
  %1247 = vmatmul.mubr.bf16.gmra.mxu0 %v1170
  %v1248 = vpop.f32.mrf.mxu0
  %v1249 = vadd.f32 0.0, %v1248
  %v1250 = vpop.f32.mrf.mxu0
  %v1251 = vadd.f32 0.0, %v1250
  %v1252 = vpop.f32.mrf.mxu0
  %v1253 = vadd.f32 0.0, %v1252
  %v1254 = vpop.f32.mrf.mxu0
  %v1255 = vadd.f32 0.0, %v1254
  %1256 = vdwg.mxu0
  %v1257 = vadd.f32 %v1162, %v1206
  %v1258 = vadd.f32 %v1163, %v1208
  %v1259 = vadd.f32 %v1164, %v1249
  %v1260 = vadd.f32 %v1165, %v1251
  %v1261 = vadd.f32 %v1166, %v1210
  %v1262 = vadd.f32 %v1167, %v1212
  %v1263 = vadd.f32 %v1168, %v1253
  %v1264 = vadd.f32 %v1169, %v1255
  %v1265 = vxor.u32 %v1257, 2147483648
  %v1266 = vxor.u32 %v1261, 2147483648
  %v1267 = vmul.f32 %v1265, 1.442695
  %v1268 = vpow.pop %v1267
  %v1269 = vmul.f32 %v1266, 1.442695
  %v1270 = vpow.pop %v1269
  %v1271 = vadd.f32 %v1268, 1.0
  %v1272 = vadd.f32 %v1270, 1.0
  %v1273 = vrcp.pop %v1271
  %v1274 = vmul.f32 1.0, %v1273
  %v1275 = vrcp.pop %v1272
  %v1276 = vmul.f32 1.0, %v1275
  %v1277 = vxor.u32 %v1258, 2147483648
  %v1278 = vxor.u32 %v1262, 2147483648
  %v1279 = vmul.f32 %v1277, 1.442695
  %v1280 = vpow.pop %v1279
  %v1281 = vmul.f32 %v1278, 1.442695
  %v1282 = vpow.pop %v1281
  %v1283 = vadd.f32 %v1280, 1.0
  %v1284 = vadd.f32 %v1282, 1.0
  %v1285 = vrcp.pop %v1283
  %v1286 = vmul.f32 1.0, %v1285
  %v1287 = vrcp.pop %v1284
  %v1288 = vmul.f32 1.0, %v1287
  %v1289 = vtanh.pop %v1259
  %v1290 = vtanh.pop %v1263
  %v1291 = vxor.u32 %v1260, 2147483648
  %v1292 = vxor.u32 %v1264, 2147483648
  %v1293 = vmul.f32 %v1291, 1.442695
  %v1294 = vpow.pop %v1293
  %v1295 = vmul.f32 %v1292, 1.442695
  %v1296 = vpow.pop %v1295
  %v1297 = vadd.f32 %v1294, 1.0
  %v1298 = vadd.f32 %v1296, 1.0
  %v1299 = vrcp.pop %v1297
  %v1300 = vmul.f32 1.0, %v1299
  %v1301 = vrcp.pop %v1298
  %v1302 = vmul.f32 1.0, %v1301
  %v1303 = vmul.f32 %v1286, %v1150
  %v1304 = vmul.f32 %v1288, %v1151
  %v1305 = vmul.f32 %v1274, %v1289
  %v1306 = vmul.f32 %v1276, %v1290
  %v1307 = vadd.f32 %v1303, %v1305
  %v1308 = vadd.f32 %v1304, %v1306
  %v1309 = vtanh.pop %v1307
  %v1310 = vtanh.pop %v1308
  %v1311 = vmul.f32 %v1300, %v1309
  %v1312 = vmul.f32 %v1302, %v1310
  %v1313 = vstv %s1152
  %vm1314 = vcmp.lt.s32.totalorder %v1313, %v577
  %vm1315 = vcmp.lt.s32.totalorder %v1313, %v578
  %v1316 = vsel %vm1314, 1, 0
  %v1317 = vsel %vm1315, 1, 0
  %1318 = vset.pattern.permute.xlu0 0
  %1319 = vperm.xlu0 %1318, %v1316
  %v1320 = vpop.permute.xlu0 %1319
  %1321 = vset.pattern.permute.xlu0 0
  %1322 = vperm.xlu0 %1321, %v1317
  %v1323 = vpop.permute.xlu0 %1322
  %vm1324 = vcmp.eq.s32.totalorder %v1320, 1
  %vm1325 = vcmp.eq.s32.totalorder %v1323, 1
  %v1326 = vsel %vm1324, %v1311, %v1148
  %v1327 = vsel %vm1325, %v1312, %v1149
  %v1328 = vsel %vm1324, %v1307, %v1150
  %v1329 = vsel %vm1325, %v1308, %v1151
  %s1330 = sadd.s32 %s616, 3
  %s1331 = scalar_lea.vmem [#allocation2], 192
  %v1332 = vld [vmem:[%s1331] sm:$0xff]
  %v1333 = vld [vmem:[%s1331 + $0x8] sm:$0xff]
  %v1334 = vld [vmem:[%s1331 + $0x10] sm:$0xff]
  %v1335 = vld [vmem:[%s1331 + $0x18] sm:$0xff]
  %v1336 = vld [vmem:[%s1331 + $0x20] sm:$0xff]
  %v1337 = vld [vmem:[%s1331 + $0x28] sm:$0xff]
  %v1338 = vld [vmem:[%s1331 + $0x30] sm:$0xff]
  %v1339 = vld [vmem:[%s1331 + $0x38] sm:$0xff]
  %v1340 = vadd.f32 %v1332, %v629
  %v1341 = vadd.f32 %v1333, %v633
  %v1342 = vadd.f32 %v1334, %v637
  %v1343 = vadd.f32 %v1335, %v641
  %v1344 = vadd.f32 %v1336, %v629
  %v1345 = vadd.f32 %v1337, %v633
  %v1346 = vadd.f32 %v1338, %v637
  %v1347 = vadd.f32 %v1339, %v641
  %v1348 = vpack.c.bf16 %v1327, %v1326
  %1349 = vmatprep.subr.bf16.mxu0 %v780
  %1350 = vmatpush1.bf16.msra.mxu0 %v779
  %1351 = vmatprep.subr.bf16.mxu0 %v776
  %1352 = vmatpush1.bf16.msra.mxu0 %v775
  %1353 = vmatprep.subr.bf16.mxu0 %v772
  %1354 = vmatpush1.bf16.msra.mxu0 %v771
  %1355 = vmatprep.subr.bf16.mxu0 %v768
  %1356 = vmatpush1.bf16.msra.mxu0 %v767
  %1357 = vmatprep.subr.bf16.mxu0 %v764
  %1358 = vmatpush1.bf16.msra.mxu0 %v763
  %1359 = vmatprep.subr.bf16.mxu0 %v760
  %1360 = vmatpush1.bf16.msra.mxu0 %v759
  %1361 = vmatprep.subr.bf16.mxu0 %v756
  %1362 = vmatpush1.bf16.msra.mxu0 %v755
  %1363 = vmatprep.subr.bf16.mxu0 %v752
  %1364 = vmatpush1.bf16.msra.mxu0 %v751
  %1365 = vmatprep.subr.bf16.mxu0 0
  %1366 = vmatpush2.bf16.msra.mxu0 0
  %1367 = vmatprep.subr.bf16.mxu0 0
  %1368 = vmatpush2.bf16.msra.mxu0 0
  %1369 = vmatprep.subr.bf16.mxu0 0
  %1370 = vmatpush2.bf16.msra.mxu0 0
  %1371 = vmatprep.subr.bf16.mxu0 0
  %1372 = vmatpush2.bf16.msra.mxu0 0
  %1373 = vmatprep.subr.bf16.mxu0 0
  %1374 = vmatpush2.bf16.msra.mxu0 0
  %1375 = vmatprep.subr.bf16.mxu0 0
  %1376 = vmatpush2.bf16.msra.mxu0 0
  %1377 = vmatprep.subr.bf16.mxu0 0
  %1378 = vmatpush2.bf16.msra.mxu0 0
  %1379 = vmatprep.subr.bf16.mxu0 0
  %1380 = vmatpush2.bf16.msra.mxu0 0
  %1381 = vmatprep.mubr.bf16.mxu0 0
  %1382 = vmatmul.mubr.bf16.gmra.mxu0 %v1348
  %v1383 = vpop.f32.mrf.mxu0
  %v1384 = vadd.f32 0.0, %v1383
  %v1385 = vpop.f32.mrf.mxu0
  %v1386 = vadd.f32 0.0, %v1385
  %v1387 = vpop.f32.mrf.mxu0
  %v1388 = vadd.f32 0.0, %v1387
  %v1389 = vpop.f32.mrf.mxu0
  %v1390 = vadd.f32 0.0, %v1389
  %1391 = vdwg.mxu0
  %1392 = vmatprep.subr.bf16.mxu0 %v782
  %1393 = vmatpush1.bf16.msra.mxu0 %v781
  %1394 = vmatprep.subr.bf16.mxu0 %v778
  %1395 = vmatpush1.bf16.msra.mxu0 %v777
  %1396 = vmatprep.subr.bf16.mxu0 %v774
  %1397 = vmatpush1.bf16.msra.mxu0 %v773
  %1398 = vmatprep.subr.bf16.mxu0 %v770
  %1399 = vmatpush1.bf16.msra.mxu0 %v769
  %1400 = vmatprep.subr.bf16.mxu0 %v766
  %1401 = vmatpush1.bf16.msra.mxu0 %v765
  %1402 = vmatprep.subr.bf16.mxu0 %v762
  %1403 = vmatpush1.bf16.msra.mxu0 %v761
  %1404 = vmatprep.subr.bf16.mxu0 %v758
  %1405 = vmatpush1.bf16.msra.mxu0 %v757
  %1406 = vmatprep.subr.bf16.mxu0 %v754
  %1407 = vmatpush1.bf16.msra.mxu0 %v753
  %1408 = vmatprep.subr.bf16.mxu0 0
  %1409 = vmatpush2.bf16.msra.mxu0 0
  %1410 = vmatprep.subr.bf16.mxu0 0
  %1411 = vmatpush2.bf16.msra.mxu0 0
  %1412 = vmatprep.subr.bf16.mxu0 0
  %1413 = vmatpush2.bf16.msra.mxu0 0
  %1414 = vmatprep.subr.bf16.mxu0 0
  %1415 = vmatpush2.bf16.msra.mxu0 0
  %1416 = vmatprep.subr.bf16.mxu0 0
  %1417 = vmatpush2.bf16.msra.mxu0 0
  %1418 = vmatprep.subr.bf16.mxu0 0
  %1419 = vmatpush2.bf16.msra.mxu0 0
  %1420 = vmatprep.subr.bf16.mxu0 0
  %1421 = vmatpush2.bf16.msra.mxu0 0
  %1422 = vmatprep.subr.bf16.mxu0 0
  %1423 = vmatpush2.bf16.msra.mxu0 0
  %1424 = vmatprep.mubr.bf16.mxu0 0
  %1425 = vmatmul.mubr.bf16.gmra.mxu0 %v1348
  %v1426 = vpop.f32.mrf.mxu0
  %v1427 = vadd.f32 0.0, %v1426
  %v1428 = vpop.f32.mrf.mxu0
  %v1429 = vadd.f32 0.0, %v1428
  %v1430 = vpop.f32.mrf.mxu0
  %v1431 = vadd.f32 0.0, %v1430
  %v1432 = vpop.f32.mrf.mxu0
  %v1433 = vadd.f32 0.0, %v1432
  %1434 = vdwg.mxu0
  %v1435 = vadd.f32 %v1340, %v1384
  %v1436 = vadd.f32 %v1341, %v1386
  %v1437 = vadd.f32 %v1342, %v1427
  %v1438 = vadd.f32 %v1343, %v1429
  %v1439 = vadd.f32 %v1344, %v1388
  %v1440 = vadd.f32 %v1345, %v1390
  %v1441 = vadd.f32 %v1346, %v1431
  %v1442 = vadd.f32 %v1347, %v1433
  %v1443 = vxor.u32 %v1435, 2147483648
  %v1444 = vxor.u32 %v1439, 2147483648
  %v1445 = vmul.f32 %v1443, 1.442695
  %v1446 = vpow.pop %v1445
  %v1447 = vmul.f32 %v1444, 1.442695
  %v1448 = vpow.pop %v1447
  %v1449 = vadd.f32 %v1446, 1.0
  %v1450 = vadd.f32 %v1448, 1.0
  %v1451 = vrcp.pop %v1449
  %v1452 = vmul.f32 1.0, %v1451
  %v1453 = vrcp.pop %v1450
  %v1454 = vmul.f32 1.0, %v1453
  %v1455 = vxor.u32 %v1436, 2147483648
  %v1456 = vxor.u32 %v1440, 2147483648
  %v1457 = vmul.f32 %v1455, 1.442695
  %v1458 = vpow.pop %v1457
  %v1459 = vmul.f32 %v1456, 1.442695
  %v1460 = vpow.pop %v1459
  %v1461 = vadd.f32 %v1458, 1.0
  %v1462 = vadd.f32 %v1460, 1.0
  %v1463 = vrcp.pop %v1461
  %v1464 = vmul.f32 1.0, %v1463
  %v1465 = vrcp.pop %v1462
  %v1466 = vmul.f32 1.0, %v1465
  %v1467 = vtanh.pop %v1437
  %v1468 = vtanh.pop %v1441
  %v1469 = vxor.u32 %v1438, 2147483648
  %v1470 = vxor.u32 %v1442, 2147483648
  %v1471 = vmul.f32 %v1469, 1.442695
  %v1472 = vpow.pop %v1471
  %v1473 = vmul.f32 %v1470, 1.442695
  %v1474 = vpow.pop %v1473
  %v1475 = vadd.f32 %v1472, 1.0
  %v1476 = vadd.f32 %v1474, 1.0
  %v1477 = vrcp.pop %v1475
  %v1478 = vmul.f32 1.0, %v1477
  %v1479 = vrcp.pop %v1476
  %v1480 = vmul.f32 1.0, %v1479
  %v1481 = vmul.f32 %v1464, %v1328
  %v1482 = vmul.f32 %v1466, %v1329
  %v1483 = vmul.f32 %v1452, %v1467
  %v1484 = vmul.f32 %v1454, %v1468
  %v1485 = vadd.f32 %v1481, %v1483
  %v1486 = vadd.f32 %v1482, %v1484
  %v1487 = vtanh.pop %v1485
  %v1488 = vtanh.pop %v1486
  %v1489 = vmul.f32 %v1478, %v1487
  %v1490 = vmul.f32 %v1480, %v1488
  %v1491 = vstv %s1330
  %vm1492 = vcmp.lt.s32.totalorder %v1491, %v577
  %vm1493 = vcmp.lt.s32.totalorder %v1491, %v578
  %v1494 = vsel %vm1492, 1, 0
  %v1495 = vsel %vm1493, 1, 0
  %1496 = vset.pattern.permute.xlu0 0
  %1497 = vperm.xlu0 %1496, %v1494
  %v1498 = vpop.permute.xlu0 %1497
  %1499 = vset.pattern.permute.xlu0 0
  %1500 = vperm.xlu0 %1499, %v1495
  %v1501 = vpop.permute.xlu0 %1500
  %vm1502 = vcmp.eq.s32.totalorder %v1498, 1
  %vm1503 = vcmp.eq.s32.totalorder %v1501, 1
  %v1504 = vsel %vm1502, %v1489, %v1326
  %v1505 = vsel %vm1503, %v1490, %v1327
  %v1506 = vsel %vm1502, %v1485, %v1328
  %v1507 = vsel %vm1503, %v1486, %v1329
  %s1508 = sadd.s32 %s616, 4
  %s1509 = scalar_lea.vmem [#allocation2], 256
  %v1510 = vld [vmem:[%s1509] sm:$0xff]
  %v1511 = vld [vmem:[%s1509 + $0x8] sm:$0xff]
  %v1512 = vld [vmem:[%s1509 + $0x10] sm:$0xff]
  %v1513 = vld [vmem:[%s1509 + $0x18] sm:$0xff]
  %v1514 = vld [vmem:[%s1509 + $0x20] sm:$0xff]
  %v1515 = vld [vmem:[%s1509 + $0x28] sm:$0xff]
  %v1516 = vld [vmem:[%s1509 + $0x30] sm:$0xff]
  %v1517 = vld [vmem:[%s1509 + $0x38] sm:$0xff]
  %v1518 = vadd.f32 %v1510, %v629
  %v1519 = vadd.f32 %v1511, %v633
  %v1520 = vadd.f32 %v1512, %v637
  %v1521 = vadd.f32 %v1513, %v641
  %v1522 = vadd.f32 %v1514, %v629
  %v1523 = vadd.f32 %v1515, %v633
  %v1524 = vadd.f32 %v1516, %v637
  %v1525 = vadd.f32 %v1517, %v641
  %v1526 = vpack.c.bf16 %v1505, %v1504
  %1527 = vmatprep.subr.bf16.mxu0 %v780
  %1528 = vmatpush1.bf16.msra.mxu0 %v779
  %1529 = vmatprep.subr.bf16.mxu0 %v776
  %1530 = vmatpush1.bf16.msra.mxu0 %v775
  %1531 = vmatprep.subr.bf16.mxu0 %v772
  %1532 = vmatpush1.bf16.msra.mxu0 %v771
  %1533 = vmatprep.subr.bf16.mxu0 %v768
  %1534 = vmatpush1.bf16.msra.mxu0 %v767
  %1535 = vmatprep.subr.bf16.mxu0 %v764
  %1536 = vmatpush1.bf16.msra.mxu0 %v763
  %1537 = vmatprep.subr.bf16.mxu0 %v760
  %1538 = vmatpush1.bf16.msra.mxu0 %v759
  %1539 = vmatprep.subr.bf16.mxu0 %v756
  %1540 = vmatpush1.bf16.msra.mxu0 %v755
  %1541 = vmatprep.subr.bf16.mxu0 %v752
  %1542 = vmatpush1.bf16.msra.mxu0 %v751
  %1543 = vmatprep.subr.bf16.mxu0 0
  %1544 = vmatpush2.bf16.msra.mxu0 0
  %1545 = vmatprep.subr.bf16.mxu0 0
  %1546 = vmatpush2.bf16.msra.mxu0 0
  %1547 = vmatprep.subr.bf16.mxu0 0
  %1548 = vmatpush2.bf16.msra.mxu0 0
  %1549 = vmatprep.subr.bf16.mxu0 0
  %1550 = vmatpush2.bf16.msra.mxu0 0
  %1551 = vmatprep.subr.bf16.mxu0 0
  %1552 = vmatpush2.bf16.msra.mxu0 0
  %1553 = vmatprep.subr.bf16.mxu0 0
  %1554 = vmatpush2.bf16.msra.mxu0 0
  %1555 = vmatprep.subr.bf16.mxu0 0
  %1556 = vmatpush2.bf16.msra.mxu0 0
  %1557 = vmatprep.subr.bf16.mxu0 0
  %1558 = vmatpush2.bf16.msra.mxu0 0
  %1559 = vmatprep.mubr.bf16.mxu0 0
  %1560 = vmatmul.mubr.bf16.gmra.mxu0 %v1526
  %v1561 = vpop.f32.mrf.mxu0
  %v1562 = vadd.f32 0.0, %v1561
  %v1563 = vpop.f32.mrf.mxu0
  %v1564 = vadd.f32 0.0, %v1563
  %v1565 = vpop.f32.mrf.mxu0
  %v1566 = vadd.f32 0.0, %v1565
  %v1567 = vpop.f32.mrf.mxu0
  %v1568 = vadd.f32 0.0, %v1567
  %1569 = vdwg.mxu0
  %1570 = vmatprep.subr.bf16.mxu0 %v782
  %1571 = vmatpush1.bf16.msra.mxu0 %v781
  %1572 = vmatprep.subr.bf16.mxu0 %v778
  %1573 = vmatpush1.bf16.msra.mxu0 %v777
  %1574 = vmatprep.subr.bf16.mxu0 %v774
  %1575 = vmatpush1.bf16.msra.mxu0 %v773
  %1576 = vmatprep.subr.bf16.mxu0 %v770
  %1577 = vmatpush1.bf16.msra.mxu0 %v769
  %1578 = vmatprep.subr.bf16.mxu0 %v766
  %1579 = vmatpush1.bf16.msra.mxu0 %v765
  %1580 = vmatprep.subr.bf16.mxu0 %v762
  %1581 = vmatpush1.bf16.msra.mxu0 %v761
  %1582 = vmatprep.subr.bf16.mxu0 %v758
  %1583 = vmatpush1.bf16.msra.mxu0 %v757
  %1584 = vmatprep.subr.bf16.mxu0 %v754
  %1585 = vmatpush1.bf16.msra.mxu0 %v753
  %1586 = vmatprep.subr.bf16.mxu0 0
  %1587 = vmatpush2.bf16.msra.mxu0 0
  %1588 = vmatprep.subr.bf16.mxu0 0
  %1589 = vmatpush2.bf16.msra.mxu0 0
  %1590 = vmatprep.subr.bf16.mxu0 0
  %1591 = vmatpush2.bf16.msra.mxu0 0
  %1592 = vmatprep.subr.bf16.mxu0 0
  %1593 = vmatpush2.bf16.msra.mxu0 0
  %1594 = vmatprep.subr.bf16.mxu0 0
  %1595 = vmatpush2.bf16.msra.mxu0 0
  %1596 = vmatprep.subr.bf16.mxu0 0
  %1597 = vmatpush2.bf16.msra.mxu0 0
  %1598 = vmatprep.subr.bf16.mxu0 0
  %1599 = vmatpush2.bf16.msra.mxu0 0
  %1600 = vmatprep.subr.bf16.mxu0 0
  %1601 = vmatpush2.bf16.msra.mxu0 0
  %1602 = vmatprep.mubr.bf16.mxu0 0
  %1603 = vmatmul.mubr.bf16.gmra.mxu0 %v1526
  %v1604 = vpop.f32.mrf.mxu0
  %v1605 = vadd.f32 0.0, %v1604
  %v1606 = vpop.f32.mrf.mxu0
  %v1607 = vadd.f32 0.0, %v1606
  %v1608 = vpop.f32.mrf.mxu0
  %v1609 = vadd.f32 0.0, %v1608
  %v1610 = vpop.f32.mrf.mxu0
  %v1611 = vadd.f32 0.0, %v1610
  %1612 = vdwg.mxu0
  %v1613 = vadd.f32 %v1518, %v1562
  %v1614 = vadd.f32 %v1519, %v1564
  %v1615 = vadd.f32 %v1520, %v1605
  %v1616 = vadd.f32 %v1521, %v1607
  %v1617 = vadd.f32 %v1522, %v1566
  %v1618 = vadd.f32 %v1523, %v1568
  %v1619 = vadd.f32 %v1524, %v1609
  %v1620 = vadd.f32 %v1525, %v1611
  %v1621 = vxor.u32 %v1613, 2147483648
  %v1622 = vxor.u32 %v1617, 2147483648
  %v1623 = vmul.f32 %v1621, 1.442695
  %v1624 = vpow.pop %v1623
  %v1625 = vmul.f32 %v1622, 1.442695
  %v1626 = vpow.pop %v1625
  %v1627 = vadd.f32 %v1624, 1.0
  %v1628 = vadd.f32 %v1626, 1.0
  %v1629 = vrcp.pop %v1627
  %v1630 = vmul.f32 1.0, %v1629
  %v1631 = vrcp.pop %v1628
  %v1632 = vmul.f32 1.0, %v1631
  %v1633 = vxor.u32 %v1614, 2147483648
  %v1634 = vxor.u32 %v1618, 2147483648
  %v1635 = vmul.f32 %v1633, 1.442695
  %v1636 = vpow.pop %v1635
  %v1637 = vmul.f32 %v1634, 1.442695
  %v1638 = vpow.pop %v1637
  %v1639 = vadd.f32 %v1636, 1.0
  %v1640 = vadd.f32 %v1638, 1.0
  %v1641 = vrcp.pop %v1639
  %v1642 = vmul.f32 1.0, %v1641
  %v1643 = vrcp.pop %v1640
  %v1644 = vmul.f32 1.0, %v1643
  %v1645 = vtanh.pop %v1615
  %v1646 = vtanh.pop %v1619
  %v1647 = vxor.u32 %v1616, 2147483648
  %v1648 = vxor.u32 %v1620, 2147483648
  %v1649 = vmul.f32 %v1647, 1.442695
  %v1650 = vpow.pop %v1649
  %v1651 = vmul.f32 %v1648, 1.442695
  %v1652 = vpow.pop %v1651
  %v1653 = vadd.f32 %v1650, 1.0
  %v1654 = vadd.f32 %v1652, 1.0
  %v1655 = vrcp.pop %v1653
  %v1656 = vmul.f32 1.0, %v1655
  %v1657 = vrcp.pop %v1654
  %v1658 = vmul.f32 1.0, %v1657
  %v1659 = vmul.f32 %v1642, %v1506
  %v1660 = vmul.f32 %v1644, %v1507
  %v1661 = vmul.f32 %v1630, %v1645
  %v1662 = vmul.f32 %v1632, %v1646
  %v1663 = vadd.f32 %v1659, %v1661
  %v1664 = vadd.f32 %v1660, %v1662
  %v1665 = vtanh.pop %v1663
  %v1666 = vtanh.pop %v1664
  %v1667 = vmul.f32 %v1656, %v1665
  %v1668 = vmul.f32 %v1658, %v1666
  %v1669 = vstv %s1508
  %vm1670 = vcmp.lt.s32.totalorder %v1669, %v577
  %vm1671 = vcmp.lt.s32.totalorder %v1669, %v578
  %v1672 = vsel %vm1670, 1, 0
  %v1673 = vsel %vm1671, 1, 0
  %1674 = vset.pattern.permute.xlu0 0
  %1675 = vperm.xlu0 %1674, %v1672
  %v1676 = vpop.permute.xlu0 %1675
  %1677 = vset.pattern.permute.xlu0 0
  %1678 = vperm.xlu0 %1677, %v1673
  %v1679 = vpop.permute.xlu0 %1678
  %vm1680 = vcmp.eq.s32.totalorder %v1676, 1
  %vm1681 = vcmp.eq.s32.totalorder %v1679, 1
  %v1682 = vsel %vm1680, %v1667, %v1504
  %v1683 = vsel %vm1681, %v1668, %v1505
  %v1684 = vsel %vm1680, %v1663, %v1506
  %v1685 = vsel %vm1681, %v1664, %v1507
  %s1686 = sadd.s32 %s616, 5
  %s1687 = scalar_lea.vmem [#allocation2], 320
  %v1688 = vld [vmem:[%s1687] sm:$0xff]
  %v1689 = vld [vmem:[%s1687 + $0x8] sm:$0xff]
  %v1690 = vld [vmem:[%s1687 + $0x10] sm:$0xff]
  %v1691 = vld [vmem:[%s1687 + $0x18] sm:$0xff]
  %v1692 = vld [vmem:[%s1687 + $0x20] sm:$0xff]
  %v1693 = vld [vmem:[%s1687 + $0x28] sm:$0xff]
  %v1694 = vld [vmem:[%s1687 + $0x30] sm:$0xff]
  %v1695 = vld [vmem:[%s1687 + $0x38] sm:$0xff]
  %v1696 = vadd.f32 %v1688, %v629
  %v1697 = vadd.f32 %v1689, %v633
  %v1698 = vadd.f32 %v1690, %v637
  %v1699 = vadd.f32 %v1691, %v641
  %v1700 = vadd.f32 %v1692, %v629
  %v1701 = vadd.f32 %v1693, %v633
  %v1702 = vadd.f32 %v1694, %v637
  %v1703 = vadd.f32 %v1695, %v641
  %v1704 = vpack.c.bf16 %v1683, %v1682
  %1705 = vmatprep.subr.bf16.mxu0 %v780
  %1706 = vmatpush1.bf16.msra.mxu0 %v779
  %1707 = vmatprep.subr.bf16.mxu0 %v776
  %1708 = vmatpush1.bf16.msra.mxu0 %v775
  %1709 = vmatprep.subr.bf16.mxu0 %v772
  %1710 = vmatpush1.bf16.msra.mxu0 %v771
  %1711 = vmatprep.subr.bf16.mxu0 %v768
  %1712 = vmatpush1.bf16.msra.mxu0 %v767
  %1713 = vmatprep.subr.bf16.mxu0 %v764
  %1714 = vmatpush1.bf16.msra.mxu0 %v763
  %1715 = vmatprep.subr.bf16.mxu0 %v760
  %1716 = vmatpush1.bf16.msra.mxu0 %v759
  %1717 = vmatprep.subr.bf16.mxu0 %v756
  %1718 = vmatpush1.bf16.msra.mxu0 %v755
  %1719 = vmatprep.subr.bf16.mxu0 %v752
  %1720 = vmatpush1.bf16.msra.mxu0 %v751
  %1721 = vmatprep.subr.bf16.mxu0 0
  %1722 = vmatpush2.bf16.msra.mxu0 0
  %1723 = vmatprep.subr.bf16.mxu0 0
  %1724 = vmatpush2.bf16.msra.mxu0 0
  %1725 = vmatprep.subr.bf16.mxu0 0
  %1726 = vmatpush2.bf16.msra.mxu0 0
  %1727 = vmatprep.subr.bf16.mxu0 0
  %1728 = vmatpush2.bf16.msra.mxu0 0
  %1729 = vmatprep.subr.bf16.mxu0 0
  %1730 = vmatpush2.bf16.msra.mxu0 0
  %1731 = vmatprep.subr.bf16.mxu0 0
  %1732 = vmatpush2.bf16.msra.mxu0 0
  %1733 = vmatprep.subr.bf16.mxu0 0
  %1734 = vmatpush2.bf16.msra.mxu0 0
  %1735 = vmatprep.subr.bf16.mxu0 0
  %1736 = vmatpush2.bf16.msra.mxu0 0
  %1737 = vmatprep.mubr.bf16.mxu0 0
  %1738 = vmatmul.mubr.bf16.gmra.mxu0 %v1704
  %v1739 = vpop.f32.mrf.mxu0
  %v1740 = vadd.f32 0.0, %v1739
  %v1741 = vpop.f32.mrf.mxu0
  %v1742 = vadd.f32 0.0, %v1741
  %v1743 = vpop.f32.mrf.mxu0
  %v1744 = vadd.f32 0.0, %v1743
  %v1745 = vpop.f32.mrf.mxu0
  %v1746 = vadd.f32 0.0, %v1745
  %1747 = vdwg.mxu0
  %1748 = vmatprep.subr.bf16.mxu0 %v782
  %1749 = vmatpush1.bf16.msra.mxu0 %v781
  %1750 = vmatprep.subr.bf16.mxu0 %v778
  %1751 = vmatpush1.bf16.msra.mxu0 %v777
  %1752 = vmatprep.subr.bf16.mxu0 %v774
  %1753 = vmatpush1.bf16.msra.mxu0 %v773
  %1754 = vmatprep.subr.bf16.mxu0 %v770
  %1755 = vmatpush1.bf16.msra.mxu0 %v769
  %1756 = vmatprep.subr.bf16.mxu0 %v766
  %1757 = vmatpush1.bf16.msra.mxu0 %v765
  %1758 = vmatprep.subr.bf16.mxu0 %v762
  %1759 = vmatpush1.bf16.msra.mxu0 %v761
  %1760 = vmatprep.subr.bf16.mxu0 %v758
  %1761 = vmatpush1.bf16.msra.mxu0 %v757
  %1762 = vmatprep.subr.bf16.mxu0 %v754
  %1763 = vmatpush1.bf16.msra.mxu0 %v753
  %1764 = vmatprep.subr.bf16.mxu0 0
  %1765 = vmatpush2.bf16.msra.mxu0 0
  %1766 = vmatprep.subr.bf16.mxu0 0
  %1767 = vmatpush2.bf16.msra.mxu0 0
  %1768 = vmatprep.subr.bf16.mxu0 0
  %1769 = vmatpush2.bf16.msra.mxu0 0
  %1770 = vmatprep.subr.bf16.mxu0 0
  %1771 = vmatpush2.bf16.msra.mxu0 0
  %1772 = vmatprep.subr.bf16.mxu0 0
  %1773 = vmatpush2.bf16.msra.mxu0 0
  %1774 = vmatprep.subr.bf16.mxu0 0
  %1775 = vmatpush2.bf16.msra.mxu0 0
  %1776 = vmatprep.subr.bf16.mxu0 0
  %1777 = vmatpush2.bf16.msra.mxu0 0
  %1778 = vmatprep.subr.bf16.mxu0 0
  %1779 = vmatpush2.bf16.msra.mxu0 0
  %1780 = vmatprep.mubr.bf16.mxu0 0
  %1781 = vmatmul.mubr.bf16.gmra.mxu0 %v1704
  %v1782 = vpop.f32.mrf.mxu0
  %v1783 = vadd.f32 0.0, %v1782
  %v1784 = vpop.f32.mrf.mxu0
  %v1785 = vadd.f32 0.0, %v1784
  %v1786 = vpop.f32.mrf.mxu0
  %v1787 = vadd.f32 0.0, %v1786
  %v1788 = vpop.f32.mrf.mxu0
  %v1789 = vadd.f32 0.0, %v1788
  %1790 = vdwg.mxu0
  %v1791 = vadd.f32 %v1696, %v1740
  %v1792 = vadd.f32 %v1697, %v1742
  %v1793 = vadd.f32 %v1698, %v1783
  %v1794 = vadd.f32 %v1699, %v1785
  %v1795 = vadd.f32 %v1700, %v1744
  %v1796 = vadd.f32 %v1701, %v1746
  %v1797 = vadd.f32 %v1702, %v1787
  %v1798 = vadd.f32 %v1703, %v1789
  %v1799 = vxor.u32 %v1791, 2147483648
  %v1800 = vxor.u32 %v1795, 2147483648
  %v1801 = vmul.f32 %v1799, 1.442695
  %v1802 = vpow.pop %v1801
  %v1803 = vmul.f32 %v1800, 1.442695
  %v1804 = vpow.pop %v1803
  %v1805 = vadd.f32 %v1802, 1.0
  %v1806 = vadd.f32 %v1804, 1.0
  %v1807 = vrcp.pop %v1805
  %v1808 = vmul.f32 1.0, %v1807
  %v1809 = vrcp.pop %v1806
  %v1810 = vmul.f32 1.0, %v1809
  %v1811 = vxor.u32 %v1792, 2147483648
  %v1812 = vxor.u32 %v1796, 2147483648
  %v1813 = vmul.f32 %v1811, 1.442695
  %v1814 = vpow.pop %v1813
  %v1815 = vmul.f32 %v1812, 1.442695
  %v1816 = vpow.pop %v1815
  %v1817 = vadd.f32 %v1814, 1.0
  %v1818 = vadd.f32 %v1816, 1.0
  %v1819 = vrcp.pop %v1817
  %v1820 = vmul.f32 1.0, %v1819
  %v1821 = vrcp.pop %v1818
  %v1822 = vmul.f32 1.0, %v1821
  %v1823 = vtanh.pop %v1793
  %v1824 = vtanh.pop %v1797
  %v1825 = vxor.u32 %v1794, 2147483648
  %v1826 = vxor.u32 %v1798, 2147483648
  %v1827 = vmul.f32 %v1825, 1.442695
  %v1828 = vpow.pop %v1827
  %v1829 = vmul.f32 %v1826, 1.442695
  %v1830 = vpow.pop %v1829
  %v1831 = vadd.f32 %v1828, 1.0
  %v1832 = vadd.f32 %v1830, 1.0
  %v1833 = vrcp.pop %v1831
  %v1834 = vmul.f32 1.0, %v1833
  %v1835 = vrcp.pop %v1832
  %v1836 = vmul.f32 1.0, %v1835
  %v1837 = vmul.f32 %v1820, %v1684
  %v1838 = vmul.f32 %v1822, %v1685
  %v1839 = vmul.f32 %v1808, %v1823
  %v1840 = vmul.f32 %v1810, %v1824
  %v1841 = vadd.f32 %v1837, %v1839
  %v1842 = vadd.f32 %v1838, %v1840
  %v1843 = vtanh.pop %v1841
  %v1844 = vtanh.pop %v1842
  %v1845 = vmul.f32 %v1834, %v1843
  %v1846 = vmul.f32 %v1836, %v1844
  %v1847 = vstv %s1686
  %vm1848 = vcmp.lt.s32.totalorder %v1847, %v577
  %vm1849 = vcmp.lt.s32.totalorder %v1847, %v578
  %v1850 = vsel %vm1848, 1, 0
  %v1851 = vsel %vm1849, 1, 0
  %1852 = vset.pattern.permute.xlu0 0
  %1853 = vperm.xlu0 %1852, %v1850
  %v1854 = vpop.permute.xlu0 %1853
  %1855 = vset.pattern.permute.xlu0 0
  %1856 = vperm.xlu0 %1855, %v1851
  %v1857 = vpop.permute.xlu0 %1856
  %vm1858 = vcmp.eq.s32.totalorder %v1854, 1
  %vm1859 = vcmp.eq.s32.totalorder %v1857, 1
  %v1860 = vsel %vm1858, %v1845, %v1682
  %v1861 = vsel %vm1859, %v1846, %v1683
  %v1862 = vsel %vm1858, %v1841, %v1684
  %v1863 = vsel %vm1859, %v1842, %v1685
  %s1864 = sadd.s32 %s616, 6
  %s1865 = scalar_lea.vmem [#allocation2], 384
  %v1866 = vld [vmem:[%s1865] sm:$0xff]
  %v1867 = vld [vmem:[%s1865 + $0x8] sm:$0xff]
  %v1868 = vld [vmem:[%s1865 + $0x10] sm:$0xff]
  %v1869 = vld [vmem:[%s1865 + $0x18] sm:$0xff]
  %v1870 = vld [vmem:[%s1865 + $0x20] sm:$0xff]
  %v1871 = vld [vmem:[%s1865 + $0x28] sm:$0xff]
  %v1872 = vld [vmem:[%s1865 + $0x30] sm:$0xff]
  %v1873 = vld [vmem:[%s1865 + $0x38] sm:$0xff]
  %v1874 = vadd.f32 %v1866, %v629
  %v1875 = vadd.f32 %v1867, %v633
  %v1876 = vadd.f32 %v1868, %v637
  %v1877 = vadd.f32 %v1869, %v641
  %v1878 = vadd.f32 %v1870, %v629
  %v1879 = vadd.f32 %v1871, %v633
  %v1880 = vadd.f32 %v1872, %v637
  %v1881 = vadd.f32 %v1873, %v641
  %v1882 = vpack.c.bf16 %v1861, %v1860
  %1883 = vmatprep.subr.bf16.mxu0 %v780
  %1884 = vmatpush1.bf16.msra.mxu0 %v779
  %1885 = vmatprep.subr.bf16.mxu0 %v776
  %1886 = vmatpush1.bf16.msra.mxu0 %v775
  %1887 = vmatprep.subr.bf16.mxu0 %v772
  %1888 = vmatpush1.bf16.msra.mxu0 %v771
  %1889 = vmatprep.subr.bf16.mxu0 %v768
  %1890 = vmatpush1.bf16.msra.mxu0 %v767
  %1891 = vmatprep.subr.bf16.mxu0 %v764
  %1892 = vmatpush1.bf16.msra.mxu0 %v763
  %1893 = vmatprep.subr.bf16.mxu0 %v760
  %1894 = vmatpush1.bf16.msra.mxu0 %v759
  %1895 = vmatprep.subr.bf16.mxu0 %v756
  %1896 = vmatpush1.bf16.msra.mxu0 %v755
  %1897 = vmatprep.subr.bf16.mxu0 %v752
  %1898 = vmatpush1.bf16.msra.mxu0 %v751
  %1899 = vmatprep.subr.bf16.mxu0 0
  %1900 = vmatpush2.bf16.msra.mxu0 0
  %1901 = vmatprep.subr.bf16.mxu0 0
  %1902 = vmatpush2.bf16.msra.mxu0 0
  %1903 = vmatprep.subr.bf16.mxu0 0
  %1904 = vmatpush2.bf16.msra.mxu0 0
  %1905 = vmatprep.subr.bf16.mxu0 0
  %1906 = vmatpush2.bf16.msra.mxu0 0
  %1907 = vmatprep.subr.bf16.mxu0 0
  %1908 = vmatpush2.bf16.msra.mxu0 0
  %1909 = vmatprep.subr.bf16.mxu0 0
  %1910 = vmatpush2.bf16.msra.mxu0 0
  %1911 = vmatprep.subr.bf16.mxu0 0
  %1912 = vmatpush2.bf16.msra.mxu0 0
  %1913 = vmatprep.subr.bf16.mxu0 0
  %1914 = vmatpush2.bf16.msra.mxu0 0
  %1915 = vmatprep.mubr.bf16.mxu0 0
  %1916 = vmatmul.mubr.bf16.gmra.mxu0 %v1882
  %v1917 = vpop.f32.mrf.mxu0
  %v1918 = vadd.f32 0.0, %v1917
  %v1919 = vpop.f32.mrf.mxu0
  %v1920 = vadd.f32 0.0, %v1919
  %v1921 = vpop.f32.mrf.mxu0
  %v1922 = vadd.f32 0.0, %v1921
  %v1923 = vpop.f32.mrf.mxu0
  %v1924 = vadd.f32 0.0, %v1923
  %1925 = vdwg.mxu0
  %1926 = vmatprep.subr.bf16.mxu0 %v782
  %1927 = vmatpush1.bf16.msra.mxu0 %v781
  %1928 = vmatprep.subr.bf16.mxu0 %v778
  %1929 = vmatpush1.bf16.msra.mxu0 %v777
  %1930 = vmatprep.subr.bf16.mxu0 %v774
  %1931 = vmatpush1.bf16.msra.mxu0 %v773
  %1932 = vmatprep.subr.bf16.mxu0 %v770
  %1933 = vmatpush1.bf16.msra.mxu0 %v769
  %1934 = vmatprep.subr.bf16.mxu0 %v766
  %1935 = vmatpush1.bf16.msra.mxu0 %v765
  %1936 = vmatprep.subr.bf16.mxu0 %v762
  %1937 = vmatpush1.bf16.msra.mxu0 %v761
  %1938 = vmatprep.subr.bf16.mxu0 %v758
  %1939 = vmatpush1.bf16.msra.mxu0 %v757
  %1940 = vmatprep.subr.bf16.mxu0 %v754
  %1941 = vmatpush1.bf16.msra.mxu0 %v753
  %1942 = vmatprep.subr.bf16.mxu0 0
  %1943 = vmatpush2.bf16.msra.mxu0 0
  %1944 = vmatprep.subr.bf16.mxu0 0
  %1945 = vmatpush2.bf16.msra.mxu0 0
  %1946 = vmatprep.subr.bf16.mxu0 0
  %1947 = vmatpush2.bf16.msra.mxu0 0
  %1948 = vmatprep.subr.bf16.mxu0 0
  %1949 = vmatpush2.bf16.msra.mxu0 0
  %1950 = vmatprep.subr.bf16.mxu0 0
  %1951 = vmatpush2.bf16.msra.mxu0 0
  %1952 = vmatprep.subr.bf16.mxu0 0
  %1953 = vmatpush2.bf16.msra.mxu0 0
  %1954 = vmatprep.subr.bf16.mxu0 0
  %1955 = vmatpush2.bf16.msra.mxu0 0
  %1956 = vmatprep.subr.bf16.mxu0 0
  %1957 = vmatpush2.bf16.msra.mxu0 0
  %1958 = vmatprep.mubr.bf16.mxu0 0
  %1959 = vmatmul.mubr.bf16.gmra.mxu0 %v1882
  %v1960 = vpop.f32.mrf.mxu0
  %v1961 = vadd.f32 0.0, %v1960
  %v1962 = vpop.f32.mrf.mxu0
  %v1963 = vadd.f32 0.0, %v1962
  %v1964 = vpop.f32.mrf.mxu0
  %v1965 = vadd.f32 0.0, %v1964
  %v1966 = vpop.f32.mrf.mxu0
  %v1967 = vadd.f32 0.0, %v1966
  %1968 = vdwg.mxu0
  %v1969 = vadd.f32 %v1874, %v1918
  %v1970 = vadd.f32 %v1875, %v1920
  %v1971 = vadd.f32 %v1876, %v1961
  %v1972 = vadd.f32 %v1877, %v1963
  %v1973 = vadd.f32 %v1878, %v1922
  %v1974 = vadd.f32 %v1879, %v1924
  %v1975 = vadd.f32 %v1880, %v1965
  %v1976 = vadd.f32 %v1881, %v1967
  %v1977 = vxor.u32 %v1969, 2147483648
  %v1978 = vxor.u32 %v1973, 2147483648
  %v1979 = vmul.f32 %v1977, 1.442695
  %v1980 = vpow.pop %v1979
  %v1981 = vmul.f32 %v1978, 1.442695
  %v1982 = vpow.pop %v1981
  %v1983 = vadd.f32 %v1980, 1.0
  %v1984 = vadd.f32 %v1982, 1.0
  %v1985 = vrcp.pop %v1983
  %v1986 = vmul.f32 1.0, %v1985
  %v1987 = vrcp.pop %v1984
  %v1988 = vmul.f32 1.0, %v1987
  %v1989 = vxor.u32 %v1970, 2147483648
  %v1990 = vxor.u32 %v1974, 2147483648
  %v1991 = vmul.f32 %v1989, 1.442695
  %v1992 = vpow.pop %v1991
  %v1993 = vmul.f32 %v1990, 1.442695
  %v1994 = vpow.pop %v1993
  %v1995 = vadd.f32 %v1992, 1.0
  %v1996 = vadd.f32 %v1994, 1.0
  %v1997 = vrcp.pop %v1995
  %v1998 = vmul.f32 1.0, %v1997
  %v1999 = vrcp.pop %v1996
  %v2000 = vmul.f32 1.0, %v1999
  %v2001 = vtanh.pop %v1971
  %v2002 = vtanh.pop %v1975
  %v2003 = vxor.u32 %v1972, 2147483648
  %v2004 = vxor.u32 %v1976, 2147483648
  %v2005 = vmul.f32 %v2003, 1.442695
  %v2006 = vpow.pop %v2005
  %v2007 = vmul.f32 %v2004, 1.442695
  %v2008 = vpow.pop %v2007
  %v2009 = vadd.f32 %v2006, 1.0
  %v2010 = vadd.f32 %v2008, 1.0
  %v2011 = vrcp.pop %v2009
  %v2012 = vmul.f32 1.0, %v2011
  %v2013 = vrcp.pop %v2010
  %v2014 = vmul.f32 1.0, %v2013
  %v2015 = vmul.f32 %v1998, %v1862
  %v2016 = vmul.f32 %v2000, %v1863
  %v2017 = vmul.f32 %v1986, %v2001
  %v2018 = vmul.f32 %v1988, %v2002
  %v2019 = vadd.f32 %v2015, %v2017
  %v2020 = vadd.f32 %v2016, %v2018
  %v2021 = vtanh.pop %v2019
  %v2022 = vtanh.pop %v2020
  %v2023 = vmul.f32 %v2012, %v2021
  %v2024 = vmul.f32 %v2014, %v2022
  %v2025 = vstv %s1864
  %vm2026 = vcmp.lt.s32.totalorder %v2025, %v577
  %vm2027 = vcmp.lt.s32.totalorder %v2025, %v578
  %v2028 = vsel %vm2026, 1, 0
  %v2029 = vsel %vm2027, 1, 0
  %2030 = vset.pattern.permute.xlu0 0
  %2031 = vperm.xlu0 %2030, %v2028
  %v2032 = vpop.permute.xlu0 %2031
  %2033 = vset.pattern.permute.xlu0 0
  %2034 = vperm.xlu0 %2033, %v2029
  %v2035 = vpop.permute.xlu0 %2034
  %vm2036 = vcmp.eq.s32.totalorder %v2032, 1
  %vm2037 = vcmp.eq.s32.totalorder %v2035, 1
  %v2038 = vsel %vm2036, %v2023, %v1860
  %v2039 = vsel %vm2037, %v2024, %v1861
  %v2040 = vsel %vm2036, %v2019, %v1862
  %v2041 = vsel %vm2037, %v2020, %v1863
  %s2042 = sadd.s32 %s616, 7
  %s2043 = scalar_lea.vmem [#allocation2], 448
  %v2044 = vld [vmem:[%s2043] sm:$0xff]
  %v2045 = vld [vmem:[%s2043 + $0x8] sm:$0xff]
  %v2046 = vld [vmem:[%s2043 + $0x10] sm:$0xff]
  %v2047 = vld [vmem:[%s2043 + $0x18] sm:$0xff]
  %v2048 = vld [vmem:[%s2043 + $0x20] sm:$0xff]
  %v2049 = vld [vmem:[%s2043 + $0x28] sm:$0xff]
  %v2050 = vld [vmem:[%s2043 + $0x30] sm:$0xff]
  %v2051 = vld [vmem:[%s2043 + $0x38] sm:$0xff]
  %v2052 = vadd.f32 %v2044, %v629
  %v2053 = vadd.f32 %v2045, %v633
  %v2054 = vadd.f32 %v2046, %v637
  %v2055 = vadd.f32 %v2047, %v641
  %v2056 = vadd.f32 %v2048, %v629
  %v2057 = vadd.f32 %v2049, %v633
  %v2058 = vadd.f32 %v2050, %v637
  %v2059 = vadd.f32 %v2051, %v641
  %v2060 = vpack.c.bf16 %v2039, %v2038
  %2061 = vmatprep.subr.bf16.mxu0 %v780
  %2062 = vmatpush1.bf16.msra.mxu0 %v779
  %2063 = vmatprep.subr.bf16.mxu0 %v776
  %2064 = vmatpush1.bf16.msra.mxu0 %v775
  %2065 = vmatprep.subr.bf16.mxu0 %v772
  %2066 = vmatpush1.bf16.msra.mxu0 %v771
  %2067 = vmatprep.subr.bf16.mxu0 %v768
  %2068 = vmatpush1.bf16.msra.mxu0 %v767
  %2069 = vmatprep.subr.bf16.mxu0 %v764
  %2070 = vmatpush1.bf16.msra.mxu0 %v763
  %2071 = vmatprep.subr.bf16.mxu0 %v760
  %2072 = vmatpush1.bf16.msra.mxu0 %v759
  %2073 = vmatprep.subr.bf16.mxu0 %v756
  %2074 = vmatpush1.bf16.msra.mxu0 %v755
  %2075 = vmatprep.subr.bf16.mxu0 %v752
  %2076 = vmatpush1.bf16.msra.mxu0 %v751
  %2077 = vmatprep.subr.bf16.mxu0 0
  %2078 = vmatpush2.bf16.msra.mxu0 0
  %2079 = vmatprep.subr.bf16.mxu0 0
  %2080 = vmatpush2.bf16.msra.mxu0 0
  %2081 = vmatprep.subr.bf16.mxu0 0
  %2082 = vmatpush2.bf16.msra.mxu0 0
  %2083 = vmatprep.subr.bf16.mxu0 0
  %2084 = vmatpush2.bf16.msra.mxu0 0
  %2085 = vmatprep.subr.bf16.mxu0 0
  %2086 = vmatpush2.bf16.msra.mxu0 0
  %2087 = vmatprep.subr.bf16.mxu0 0
  %2088 = vmatpush2.bf16.msra.mxu0 0
  %2089 = vmatprep.subr.bf16.mxu0 0
  %2090 = vmatpush2.bf16.msra.mxu0 0
  %2091 = vmatprep.subr.bf16.mxu0 0
  %2092 = vmatpush2.bf16.msra.mxu0 0
  %2093 = vmatprep.mubr.bf16.mxu0 0
  %2094 = vmatmul.mubr.bf16.gmra.mxu0 %v2060
  %v2095 = vpop.f32.mrf.mxu0
  %v2096 = vadd.f32 0.0, %v2095
  %v2097 = vpop.f32.mrf.mxu0
  %v2098 = vadd.f32 0.0, %v2097
  %v2099 = vpop.f32.mrf.mxu0
  %v2100 = vadd.f32 0.0, %v2099
  %v2101 = vpop.f32.mrf.mxu0
  %v2102 = vadd.f32 0.0, %v2101
  %2103 = vdwg.mxu0
  %2104 = vmatprep.subr.bf16.mxu0 %v782
  %2105 = vmatpush1.bf16.msra.mxu0 %v781
  %2106 = vmatprep.subr.bf16.mxu0 %v778
  %2107 = vmatpush1.bf16.msra.mxu0 %v777
  %2108 = vmatprep.subr.bf16.mxu0 %v774
  %2109 = vmatpush1.bf16.msra.mxu0 %v773
  %2110 = vmatprep.subr.bf16.mxu0 %v770
  %2111 = vmatpush1.bf16.msra.mxu0 %v769
  %2112 = vmatprep.subr.bf16.mxu0 %v766
  %2113 = vmatpush1.bf16.msra.mxu0 %v765
  %2114 = vmatprep.subr.bf16.mxu0 %v762
  %2115 = vmatpush1.bf16.msra.mxu0 %v761
  %2116 = vmatprep.subr.bf16.mxu0 %v758
  %2117 = vmatpush1.bf16.msra.mxu0 %v757
  %2118 = vmatprep.subr.bf16.mxu0 %v754
  %2119 = vmatpush1.bf16.msra.mxu0 %v753
  %2120 = vmatprep.subr.bf16.mxu0 0
  %2121 = vmatpush2.bf16.msra.mxu0 0
  %2122 = vmatprep.subr.bf16.mxu0 0
  %2123 = vmatpush2.bf16.msra.mxu0 0
  %2124 = vmatprep.subr.bf16.mxu0 0
  %2125 = vmatpush2.bf16.msra.mxu0 0
  %2126 = vmatprep.subr.bf16.mxu0 0
  %2127 = vmatpush2.bf16.msra.mxu0 0
  %2128 = vmatprep.subr.bf16.mxu0 0
  %2129 = vmatpush2.bf16.msra.mxu0 0
  %2130 = vmatprep.subr.bf16.mxu0 0
  %2131 = vmatpush2.bf16.msra.mxu0 0
  %2132 = vmatprep.subr.bf16.mxu0 0
  %2133 = vmatpush2.bf16.msra.mxu0 0
  %2134 = vmatprep.subr.bf16.mxu0 0
  %2135 = vmatpush2.bf16.msra.mxu0 0
  %2136 = vmatprep.mubr.bf16.mxu0 0
  %2137 = vmatmul.mubr.bf16.gmra.mxu0 %v2060
  %v2138 = vpop.f32.mrf.mxu0
  %v2139 = vadd.f32 0.0, %v2138
  %v2140 = vpop.f32.mrf.mxu0
  %v2141 = vadd.f32 0.0, %v2140
  %v2142 = vpop.f32.mrf.mxu0
  %v2143 = vadd.f32 0.0, %v2142
  %v2144 = vpop.f32.mrf.mxu0
  %v2145 = vadd.f32 0.0, %v2144
  %2146 = vdwg.mxu0
  %v2147 = vadd.f32 %v2052, %v2096
  %v2148 = vadd.f32 %v2053, %v2098
  %v2149 = vadd.f32 %v2054, %v2139
  %v2150 = vadd.f32 %v2055, %v2141
  %v2151 = vadd.f32 %v2056, %v2100
  %v2152 = vadd.f32 %v2057, %v2102
  %v2153 = vadd.f32 %v2058, %v2143
  %v2154 = vadd.f32 %v2059, %v2145
  %v2155 = vxor.u32 %v2147, 2147483648
  %v2156 = vxor.u32 %v2151, 2147483648
  %v2157 = vmul.f32 %v2155, 1.442695
  %v2158 = vpow.pop %v2157
  %v2159 = vmul.f32 %v2156, 1.442695
  %v2160 = vpow.pop %v2159
  %v2161 = vadd.f32 %v2158, 1.0
  %v2162 = vadd.f32 %v2160, 1.0
  %v2163 = vrcp.pop %v2161
  %v2164 = vmul.f32 1.0, %v2163
  %v2165 = vrcp.pop %v2162
  %v2166 = vmul.f32 1.0, %v2165
  %v2167 = vxor.u32 %v2148, 2147483648
  %v2168 = vxor.u32 %v2152, 2147483648
  %v2169 = vmul.f32 %v2167, 1.442695
  %v2170 = vpow.pop %v2169
  %v2171 = vmul.f32 %v2168, 1.442695
  %v2172 = vpow.pop %v2171
  %v2173 = vadd.f32 %v2170, 1.0
  %v2174 = vadd.f32 %v2172, 1.0
  %v2175 = vrcp.pop %v2173
  %v2176 = vmul.f32 1.0, %v2175
  %v2177 = vrcp.pop %v2174
  %v2178 = vmul.f32 1.0, %v2177
  %v2179 = vtanh.pop %v2149
  %v2180 = vtanh.pop %v2153
  %v2181 = vxor.u32 %v2150, 2147483648
  %v2182 = vxor.u32 %v2154, 2147483648
  %v2183 = vmul.f32 %v2181, 1.442695
  %v2184 = vpow.pop %v2183
  %v2185 = vmul.f32 %v2182, 1.442695
  %v2186 = vpow.pop %v2185
  %v2187 = vadd.f32 %v2184, 1.0
  %v2188 = vadd.f32 %v2186, 1.0
  %v2189 = vrcp.pop %v2187
  %v2190 = vmul.f32 1.0, %v2189
  %v2191 = vrcp.pop %v2188
  %v2192 = vmul.f32 1.0, %v2191
  %v2193 = vmul.f32 %v2176, %v2040
  %v2194 = vmul.f32 %v2178, %v2041
  %v2195 = vmul.f32 %v2164, %v2179
  %v2196 = vmul.f32 %v2166, %v2180
  %v2197 = vadd.f32 %v2193, %v2195
  %v2198 = vadd.f32 %v2194, %v2196
  %v2199 = vtanh.pop %v2197
  %v2200 = vtanh.pop %v2198
  %v2201 = vmul.f32 %v2190, %v2199
  %v2202 = vmul.f32 %v2192, %v2200
  %v2203 = vstv %s2042
  %vm2204 = vcmp.lt.s32.totalorder %v2203, %v577
  %vm2205 = vcmp.lt.s32.totalorder %v2203, %v578
  %v2206 = vsel %vm2204, 1, 0
  %v2207 = vsel %vm2205, 1, 0
  %2208 = vset.pattern.permute.xlu0 0
  %2209 = vperm.xlu0 %2208, %v2206
  %v2210 = vpop.permute.xlu0 %2209
  %2211 = vset.pattern.permute.xlu0 0
  %2212 = vperm.xlu0 %2211, %v2207
  %v2213 = vpop.permute.xlu0 %2212
  %vm2214 = vcmp.eq.s32.totalorder %v2210, 1
  %vm2215 = vcmp.eq.s32.totalorder %v2213, 1
  %v2216 = vsel %vm2214, %v2201, %v2038
  %v2217 = vsel %vm2215, %v2202, %v2039
  %v2218 = vsel %vm2214, %v2197, %v2040
  %v2219 = vsel %vm2215, %v2198, %v2041
  %2220 = vst [vmem:[%s5] sm:$0xff] %v2216
  %2221 = vst [vmem:[%s5 + $0x8] sm:$0xff] %v2217
  %2222 = vst [vmem:[%s6] sm:$0xff] %v2218
  %2223 = vst [vmem:[%s6 + $0x8] sm:$0xff] %v2219
  // Predicated region
  $region26: #{rnnae_forward.2} parent=0 // pred_check
    _
  $region27: #{rnnae_forward.2} parent=0 // pred_check_branch
    %2225 = sbr.rel (0) target = $region29
  $region28: #{rnnae_forward.2} parent=0 // pred_region
    _
  $region29: #{rnnae_forward.2} parent=0 // pred_fallthru
    _
  // Predicated region
  $region30: #{rnnae_forward.2} parent=0 // pred_check
    _
  $region31: #{rnnae_forward.2} parent=0 // pred_check_branch
    %2227 = sbr.rel (0) target = $region33
  $region32: #{rnnae_forward.2} parent=0 // pred_region
    _
  $region33: #{rnnae_forward.2} parent=0 // pred_fallthru
    _
  // Predicated region
  $region34: #{rnnae_forward.2} parent=0 // pred_check
    _
  $region35: #{rnnae_forward.2} parent=0 // pred_check_branch
    %2229 = sbr.rel (0) target = $region37
  $region36: #{rnnae_forward.2} parent=0 // pred_region
    _
  $region37: #{rnnae_forward.2} parent=0 // pred_fallthru
    _
  // Predicated region
  $region38: #{rnnae_forward.2} parent=0 // pred_check
    _
  $region39: #{rnnae_forward.2} parent=0 // pred_check_branch
    %2231 = sbr.rel (0) target = $region41
  $region40: #{rnnae_forward.2} parent=0 // pred_region
    _
  $region41: #{rnnae_forward.2} parent=0 // pred_fallthru
    _

// kernel: rnnae_forward.3
$region0: #{rnnae_forward.3}
  #allocation0 [shape = 'u32[]', space=smem, size = 0x4, offset = 0x4, fixed_abs, tag = 'smem constant byte address 0x4 - core index']
  #allocation1 [shape = 'u32[144,128]{1,0:T(1,128)}', space=vmem, size = 0x12000, scoped, tag = 'internal scratch']
  #allocation2 [shape = 'f32[16,128]{1,0:T(8,128)}', space=vmem, size = 0x2000, scoped, tag = 'scratch operand']
  #allocation3 [shape = 'f32[16,128]{1,0:T(8,128)}', space=vmem, size = 0x2000, scoped, tag = 'scratch operand']
  #allocation4 [shape = 'f32[8,16,512]{2,1,0:T(8,128)}', space=vmem, size = 0x40000, scoped, tag = 'scratch operand']
  #allocation5 [shape = 'bf16[8,16,128]{2,1,0:T(8,128)(2,1)}', space=vmem, size = 0x8000, scoped, tag = 'scratch operand']
  #allocation6 [shape = 's32[1]{0}', space=sflag, size = 0x4, scoped, tag = 'scoped memory for rnnae_forward.3']
  #allocation7 [shape = 'u8[512]{0}', space=smem, size = 0x200, scoped, tag = 'prefetched SMEM operand 0']
  %s0 = inlined_call_operand.vmem [shape: s32[8], index: 0, kind: input, shape index: {}]
  %s1 = inlined_call_operand.vmem [shape: f32[16,128], index: 1, kind: input, shape index: {}]
  %s2 = inlined_call_operand.vmem [shape: f32[16,128], index: 2, kind: input, shape index: {}]
  %s3 = inlined_call_operand.vmem [shape: bf16[8,16,128], index: 3, kind: input, shape index: {}]
  %s4 = inlined_call_operand.vmem [shape: bf16[128,512], index: 4, kind: input, shape index: {}]
  %s5 = inlined_call_operand.vmem [shape: bf16[128,1024], index: 5, kind: input, shape index: {}]
  %s6 = inlined_call_operand.vmem [shape: f32[1,512], index: 6, kind: input, shape index: {}]
  %s7 = inlined_call_operand.vmem [shape: f32[1,512], index: 7, kind: input, shape index: {}]
  %s8 = inlined_call_operand.vmem [shape: bf16[128,128], index: 8, kind: input, shape index: {}]
  %s9 = inlined_call_operand.vmem [shape: f32[1,128], index: 9, kind: input, shape index: {}]
  %s10 = inlined_call_operand.vmem [shape: f32[8,16,128], index: 10, kind: output, shape index: {}]
  %s11 = sld [smem:[#allocation0]]
  $region50: #{rnnae_forward.3} parent=0
    _
  %s13 = ssub.s32 1, %s11
  %s14 = scalar_select 0, %s13, %s11
  %s15 = sshll.u32 %s0, 4
  %s16 = int_to_ptr.vmem [resolvable:$true] %s15
  %18 = dma.vmem_to_smem %s16, 16, [#allocation7], [#allocation6]
  %19 = dma.done [#allocation6], 16
  %20 = sfence
  // Predicated region
  $region2: #{rnnae_forward.3} parent=0 // pred_check
    _
  $region3: #{rnnae_forward.3} parent=0 // pred_check_branch
    %22 = sbr.rel (0) target = $region5
  $region4: #{rnnae_forward.3} parent=0 // pred_region
    _
  $region5: #{rnnae_forward.3} parent=0 // pred_fallthru
    _
  // Predicated region
  $region6: #{rnnae_forward.3} parent=0 // pred_check
    _
  $region7: #{rnnae_forward.3} parent=0 // pred_check_branch
    %24 = sbr.rel (0) target = $region9
  $region8: #{rnnae_forward.3} parent=0 // pred_region
    _
  $region9: #{rnnae_forward.3} parent=0 // pred_fallthru
    _
  // Predicated region
  $region10: #{rnnae_forward.3} parent=0 // pred_check
    _
  $region11: #{rnnae_forward.3} parent=0 // pred_check_branch
    %26 = sbr.rel (0) target = $region13
  $region12: #{rnnae_forward.3} parent=0 // pred_region
    _
  $region13: #{rnnae_forward.3} parent=0 // pred_fallthru
    _
  // Predicated region
  $region14: #{rnnae_forward.3} parent=0 // pred_check
    _
  $region15: #{rnnae_forward.3} parent=0 // pred_check_branch
    %28 = sbr.rel (0) target = $region17
  $region16: #{rnnae_forward.3} parent=0 // pred_region
    _
  $region17: #{rnnae_forward.3} parent=0 // pred_fallthru
    _
  // Predicated region
  $region18: #{rnnae_forward.3} parent=0 // pred_check
    _
  $region19: #{rnnae_forward.3} parent=0 // pred_check_branch
    %30 = sbr.rel (0) target = $region21
  $region20: #{rnnae_forward.3} parent=0 // pred_region
    _
  $region21: #{rnnae_forward.3} parent=0 // pred_fallthru
    _
  // Predicated region
  $region22: #{rnnae_forward.3} parent=0 // pred_check
    _
  $region23: #{rnnae_forward.3} parent=0 // pred_check_branch
    %32 = sbr.rel (0) target = $region25
  $region24: #{rnnae_forward.3} parent=0 // pred_region
    _
  $region25: #{rnnae_forward.3} parent=0 // pred_fallthru
    _
  // Predicated region
  $region26: #{rnnae_forward.3} parent=0 // pred_check
    _
  $region27: #{rnnae_forward.3} parent=0 // pred_check_branch
    %34 = sbr.rel (0) target = $region29
  $region28: #{rnnae_forward.3} parent=0 // pred_region
    _
  $region29: #{rnnae_forward.3} parent=0 // pred_fallthru
    _
  // Predicated region
  $region30: #{rnnae_forward.3} parent=0 // pred_check
    _
  $region31: #{rnnae_forward.3} parent=0 // pred_check_branch
    %36 = sbr.rel (0) target = $region33
  $region32: #{rnnae_forward.3} parent=0 // pred_region
    _
  $region33: #{rnnae_forward.3} parent=0 // pred_fallthru
    _
  // Predicated region
  $region34: #{rnnae_forward.3} parent=0 // pred_check
    _
  $region35: #{rnnae_forward.3} parent=0 // pred_check_branch
    %38 = sbr.rel (0) target = $region37
  $region36: #{rnnae_forward.3} parent=0 // pred_region
    _
  $region37: #{rnnae_forward.3} parent=0 // pred_fallthru
    _
  %p40 = scmp.eq.s32.totalorder 0, 0
  // Predicated region
  $region38: #{rnnae_forward.3} parent=0 // pred_check
    %p41 = pneg %p40
  $region39: #{rnnae_forward.3} parent=0 // pred_check_branch
    %43 = sbr.rel (%p41) target = $region41
  $region40: #{rnnae_forward.3} parent=0 // pred_region
    %v44 = vld [vmem:[%s1] sm:$0xff]
    %v45 = vld [vmem:[%s1 + $0x8] sm:$0xff]
    %46 = vst [vmem:[#allocation2] sm:$0xff] %v44
    %47 = vst [vmem:[#allocation2 + $0x8] sm:$0xff] %v45
    %v48 = vld [vmem:[%s2] sm:$0xff]
    %v49 = vld [vmem:[%s2 + $0x8] sm:$0xff]
    %50 = vst [vmem:[#allocation3] sm:$0xff] %v48
    %51 = vst [vmem:[#allocation3 + $0x8] sm:$0xff] %v49
  $region41: #{rnnae_forward.3} parent=0 // pred_fallthru
    _
  %v52 = vld [vmem:[%s3] sm:$0xf]
  %v53 = vld [vmem:[%s3 + $0x4] sm:$0xf]
  %v54 = vld [vmem:[%s3 + $0x8] sm:$0xf]
  %v55 = vld [vmem:[%s3 + $0xc] sm:$0xf]
  %v56 = vld [vmem:[%s3 + $0x10] sm:$0xf]
  %v57 = vld [vmem:[%s3 + $0x14] sm:$0xf]
  %v58 = vld [vmem:[%s3 + $0x18] sm:$0xf]
  %v59 = vld [vmem:[%s3 + $0x1c] sm:$0xf]
  %v60 = vld [vmem:[%s3 + $0x20] sm:$0xf]
  %v61 = vld [vmem:[%s3 + $0x24] sm:$0xf]
  %v62 = vld [vmem:[%s3 + $0x28] sm:$0xf]
  %v63 = vld [vmem:[%s3 + $0x2c] sm:$0xf]
  %v64 = vld [vmem:[%s3 + $0x30] sm:$0xf]
  %v65 = vld [vmem:[%s3 + $0x34] sm:$0xf]
  %v66 = vld [vmem:[%s3 + $0x38] sm:$0xf]
  %v67 = vld [vmem:[%s3 + $0x3c] sm:$0xf]
  %v68 = vld [vmem:[%s4] sm:$0xff]
  %v69 = vld [vmem:[%s4 + $0x8] sm:$0xff]
  %v70 = vld [vmem:[%s4 + $0x10] sm:$0xff]
  %v71 = vld [vmem:[%s4 + $0x18] sm:$0xff]
  %v72 = vld [vmem:[%s4 + $0x20] sm:$0xff]
  %v73 = vld [vmem:[%s4 + $0x28] sm:$0xff]
  %v74 = vld [vmem:[%s4 + $0x30] sm:$0xff]
  %v75 = vld [vmem:[%s4 + $0x38] sm:$0xff]
  %v76 = vld [vmem:[%s4 + $0x40] sm:$0xff]
  %v77 = vld [vmem:[%s4 + $0x48] sm:$0xff]
  %v78 = vld [vmem:[%s4 + $0x50] sm:$0xff]
  %v79 = vld [vmem:[%s4 + $0x58] sm:$0xff]
  %v80 = vld [vmem:[%s4 + $0x60] sm:$0xff]
  %v81 = vld [vmem:[%s4 + $0x68] sm:$0xff]
  %v82 = vld [vmem:[%s4 + $0x70] sm:$0xff]
  %v83 = vld [vmem:[%s4 + $0x78] sm:$0xff]
  %v84 = vld [vmem:[%s4 + $0x80] sm:$0xff]
  %v85 = vld [vmem:[%s4 + $0x88] sm:$0xff]
  %v86 = vld [vmem:[%s4 + $0x90] sm:$0xff]
  %v87 = vld [vmem:[%s4 + $0x98] sm:$0xff]
  %v88 = vld [vmem:[%s4 + $0xa0] sm:$0xff]
  %v89 = vld [vmem:[%s4 + $0xa8] sm:$0xff]
  %v90 = vld [vmem:[%s4 + $0xb0] sm:$0xff]
  %v91 = vld [vmem:[%s4 + $0xb8] sm:$0xff]
  %v92 = vld [vmem:[%s4 + $0xc0] sm:$0xff]
  %v93 = vld [vmem:[%s4 + $0xc8] sm:$0xff]
  %v94 = vld [vmem:[%s4 + $0xd0] sm:$0xff]
  %v95 = vld [vmem:[%s4 + $0xd8] sm:$0xff]
  %v96 = vld [vmem:[%s4 + $0xe0] sm:$0xff]
  %v97 = vld [vmem:[%s4 + $0xe8] sm:$0xff]
  %v98 = vld [vmem:[%s4 + $0xf0] sm:$0xff]
  %v99 = vld [vmem:[%s4 + $0xf8] sm:$0xff]
  %v116 = vunpack.c.l.b16 %v52
  %v117 = vunpack.c.l.b16 %v53
  %v118 = vunpack.c.l.b16 %v54
  %v119 = vunpack.c.l.b16 %v55
  %v120 = vunpack.c.l.b16 %v56
  %v121 = vunpack.c.l.b16 %v57
  %v122 = vunpack.c.l.b16 %v58
  %v123 = vunpack.c.l.b16 %v59
  %v124 = vunpack.c.l.b16 %v60
  %v125 = vunpack.c.l.b16 %v61
  %v126 = vunpack.c.l.b16 %v62
  %v127 = vunpack.c.l.b16 %v63
  %v128 = vunpack.c.l.b16 %v64
  %v129 = vunpack.c.l.b16 %v65
  %v130 = vunpack.c.l.b16 %v66
  %v131 = vunpack.c.l.b16 %v67
  %v132 = vpack.c.b16 %v117, %v116
  %v133 = vpack.c.b16 %v119, %v118
  %v134 = vpack.c.b16 %v121, %v120
  %v135 = vpack.c.b16 %v123, %v122
  %v136 = vpack.c.b16 %v125, %v124
  %v137 = vpack.c.b16 %v127, %v126
  %v138 = vpack.c.b16 %v129, %v128
  %v139 = vpack.c.b16 %v131, %v130
  %v180 = vunpack.c.l.b16 %v68
  %v181 = vunpack.c.h.b16 %v68
  %v182 = vunpack.c.l.b16 %v69
  %v183 = vunpack.c.h.b16 %v69
  %v184 = vunpack.c.l.b16 %v70
  %v185 = vunpack.c.h.b16 %v70
  %v186 = vunpack.c.l.b16 %v71
  %v187 = vunpack.c.h.b16 %v71
  %v188 = vunpack.c.l.b16 %v72
  %v189 = vunpack.c.h.b16 %v72
  %v190 = vunpack.c.l.b16 %v73
  %v191 = vunpack.c.h.b16 %v73
  %v192 = vunpack.c.l.b16 %v74
  %v193 = vunpack.c.h.b16 %v74
  %v194 = vunpack.c.l.b16 %v75
  %v195 = vunpack.c.h.b16 %v75
  %v196 = vunpack.c.l.b16 %v76
  %v197 = vunpack.c.h.b16 %v76
  %v198 = vunpack.c.l.b16 %v77
  %v199 = vunpack.c.h.b16 %v77
  %v200 = vunpack.c.l.b16 %v78
  %v201 = vunpack.c.h.b16 %v78
  %v202 = vunpack.c.l.b16 %v79
  %v203 = vunpack.c.h.b16 %v79
  %v204 = vunpack.c.l.b16 %v80
  %v205 = vunpack.c.h.b16 %v80
  %v206 = vunpack.c.l.b16 %v81
  %v207 = vunpack.c.h.b16 %v81
  %v208 = vunpack.c.l.b16 %v82
  %v209 = vunpack.c.h.b16 %v82
  %v210 = vunpack.c.l.b16 %v83
  %v211 = vunpack.c.h.b16 %v83
  %v212 = vunpack.c.l.b16 %v84
  %v213 = vunpack.c.h.b16 %v84
  %v214 = vunpack.c.l.b16 %v85
  %v215 = vunpack.c.h.b16 %v85
  %v216 = vunpack.c.l.b16 %v86
  %v217 = vunpack.c.h.b16 %v86
  %v218 = vunpack.c.l.b16 %v87
  %v219 = vunpack.c.h.b16 %v87
  %v220 = vunpack.c.l.b16 %v88
  %v221 = vunpack.c.h.b16 %v88
  %v222 = vunpack.c.l.b16 %v89
  %v223 = vunpack.c.h.b16 %v89
  %v224 = vunpack.c.l.b16 %v90
  %v225 = vunpack.c.h.b16 %v90
  %v226 = vunpack.c.l.b16 %v91
  %v227 = vunpack.c.h.b16 %v91
  %v228 = vunpack.c.l.b16 %v92
  %v229 = vunpack.c.h.b16 %v92
  %v230 = vunpack.c.l.b16 %v93
  %v231 = vunpack.c.h.b16 %v93
  %v232 = vunpack.c.l.b16 %v94
  %v233 = vunpack.c.h.b16 %v94
  %v234 = vunpack.c.l.b16 %v95
  %v235 = vunpack.c.h.b16 %v95
  %v236 = vunpack.c.l.b16 %v96
  %v237 = vunpack.c.h.b16 %v96
  %v238 = vunpack.c.l.b16 %v97
  %v239 = vunpack.c.h.b16 %v97
  %v240 = vunpack.c.l.b16 %v98
  %v241 = vunpack.c.h.b16 %v98
  %v242 = vunpack.c.l.b16 %v99
  %v243 = vunpack.c.h.b16 %v99
  %v244 = vpack.c.b16 %v184, %v180
  %v245 = vpack.c.b16 %v185, %v181
  %v246 = vpack.c.b16 %v186, %v182
  %v247 = vpack.c.b16 %v187, %v183
  %v248 = vpack.c.b16 %v192, %v188
  %v249 = vpack.c.b16 %v193, %v189
  %v250 = vpack.c.b16 %v194, %v190
  %v251 = vpack.c.b16 %v195, %v191
  %v252 = vpack.c.b16 %v200, %v196
  %v253 = vpack.c.b16 %v201, %v197
  %v254 = vpack.c.b16 %v202, %v198
  %v255 = vpack.c.b16 %v203, %v199
  %v256 = vpack.c.b16 %v208, %v204
  %v257 = vpack.c.b16 %v209, %v205
  %v258 = vpack.c.b16 %v210, %v206
  %v259 = vpack.c.b16 %v211, %v207
  %v260 = vpack.c.b16 %v216, %v212
  %v261 = vpack.c.b16 %v217, %v213
  %v262 = vpack.c.b16 %v218, %v214
  %v263 = vpack.c.b16 %v219, %v215
  %v264 = vpack.c.b16 %v224, %v220
  %v265 = vpack.c.b16 %v225, %v221
  %v266 = vpack.c.b16 %v226, %v222
  %v267 = vpack.c.b16 %v227, %v223
  %v268 = vpack.c.b16 %v232, %v228
  %v269 = vpack.c.b16 %v233, %v229
  %v270 = vpack.c.b16 %v234, %v230
  %v271 = vpack.c.b16 %v235, %v231
  %v272 = vpack.c.b16 %v240, %v236
  %v273 = vpack.c.b16 %v241, %v237
  %v274 = vpack.c.b16 %v242, %v238
  %v275 = vpack.c.b16 %v243, %v239
  %308 = vmatprep.subr.bf16.mxu0 %v273
  %309 = vmatpush1.bf16.msra.mxu0 %v272
  %310 = vmatprep.subr.bf16.mxu0 %v269
  %311 = vmatpush1.bf16.msra.mxu0 %v268
  %312 = vmatprep.subr.bf16.mxu0 %v265
  %313 = vmatpush1.bf16.msra.mxu0 %v264
  %314 = vmatprep.subr.bf16.mxu0 %v261
  %315 = vmatpush1.bf16.msra.mxu0 %v260
  %316 = vmatprep.subr.bf16.mxu0 %v257
  %317 = vmatpush1.bf16.msra.mxu0 %v256
  %318 = vmatprep.subr.bf16.mxu0 %v253
  %319 = vmatpush1.bf16.msra.mxu0 %v252
  %320 = vmatprep.subr.bf16.mxu0 %v249
  %321 = vmatpush1.bf16.msra.mxu0 %v248
  %322 = vmatprep.subr.bf16.mxu0 %v245
  %323 = vmatpush1.bf16.msra.mxu0 %v244
  %324 = vmatprep.subr.bf16.mxu0 0
  %325 = vmatpush2.bf16.msra.mxu0 0
  %326 = vmatprep.subr.bf16.mxu0 0
  %327 = vmatpush2.bf16.msra.mxu0 0
  %328 = vmatprep.subr.bf16.mxu0 0
  %329 = vmatpush2.bf16.msra.mxu0 0
  %330 = vmatprep.subr.bf16.mxu0 0
  %331 = vmatpush2.bf16.msra.mxu0 0
  %332 = vmatprep.subr.bf16.mxu0 0
  %333 = vmatpush2.bf16.msra.mxu0 0
  %334 = vmatprep.subr.bf16.mxu0 0
  %335 = vmatpush2.bf16.msra.mxu0 0
  %336 = vmatprep.subr.bf16.mxu0 0
  %337 = vmatpush2.bf16.msra.mxu0 0
  %338 = vmatprep.subr.bf16.mxu0 0
  %339 = vmatpush2.bf16.msra.mxu0 0
  %340 = vmatprep.mubr.bf16.mxu0 0
  %341 = vmatmul.mubr.bf16.gmra.mxu0 %v132
  %v342 = vpop.f32.mrf.mxu0
  %v343 = vadd.f32 0.0, %v342
  %v344 = vpop.f32.mrf.mxu0
  %v345 = vadd.f32 0.0, %v344
  %v346 = vpop.f32.mrf.mxu0
  %v347 = vadd.f32 0.0, %v346
  %v348 = vpop.f32.mrf.mxu0
  %v349 = vadd.f32 0.0, %v348
  %350 = vmatprep.mubr.bf16.mxu0 0
  %351 = vmatmul.mubr.bf16.gmra.mxu0 %v133
  %v352 = vpop.f32.mrf.mxu0
  %v353 = vadd.f32 0.0, %v352
  %v354 = vpop.f32.mrf.mxu0
  %v355 = vadd.f32 0.0, %v354
  %v356 = vpop.f32.mrf.mxu0
  %v357 = vadd.f32 0.0, %v356
  %v358 = vpop.f32.mrf.mxu0
  %v359 = vadd.f32 0.0, %v358
  %360 = vmatprep.mubr.bf16.mxu0 0
  %361 = vmatmul.mubr.bf16.gmra.mxu0 %v134
  %v362 = vpop.f32.mrf.mxu0
  %v363 = vadd.f32 0.0, %v362
  %v364 = vpop.f32.mrf.mxu0
  %v365 = vadd.f32 0.0, %v364
  %v366 = vpop.f32.mrf.mxu0
  %v367 = vadd.f32 0.0, %v366
  %v368 = vpop.f32.mrf.mxu0
  %v369 = vadd.f32 0.0, %v368
  %370 = vmatprep.mubr.bf16.mxu0 0
  %371 = vmatmul.mubr.bf16.gmra.mxu0 %v135
  %v372 = vpop.f32.mrf.mxu0
  %v373 = vadd.f32 0.0, %v372
  %v374 = vpop.f32.mrf.mxu0
  %v375 = vadd.f32 0.0, %v374
  %v376 = vpop.f32.mrf.mxu0
  %v377 = vadd.f32 0.0, %v376
  %v378 = vpop.f32.mrf.mxu0
  %v379 = vadd.f32 0.0, %v378
  %380 = vmatprep.mubr.bf16.mxu0 0
  %381 = vmatmul.mubr.bf16.gmra.mxu0 %v136
  %v382 = vpop.f32.mrf.mxu0
  %v383 = vadd.f32 0.0, %v382
  %v384 = vpop.f32.mrf.mxu0
  %v385 = vadd.f32 0.0, %v384
  %v386 = vpop.f32.mrf.mxu0
  %v387 = vadd.f32 0.0, %v386
  %v388 = vpop.f32.mrf.mxu0
  %v389 = vadd.f32 0.0, %v388
  %390 = vmatprep.mubr.bf16.mxu0 0
  %391 = vmatmul.mubr.bf16.gmra.mxu0 %v137
  %v392 = vpop.f32.mrf.mxu0
  %v393 = vadd.f32 0.0, %v392
  %v394 = vpop.f32.mrf.mxu0
  %v395 = vadd.f32 0.0, %v394
  %v396 = vpop.f32.mrf.mxu0
  %v397 = vadd.f32 0.0, %v396
  %v398 = vpop.f32.mrf.mxu0
  %v399 = vadd.f32 0.0, %v398
  %400 = vmatprep.mubr.bf16.mxu0 0
  %401 = vmatmul.mubr.bf16.gmra.mxu0 %v138
  %v402 = vpop.f32.mrf.mxu0
  %v403 = vadd.f32 0.0, %v402
  %v404 = vpop.f32.mrf.mxu0
  %v405 = vadd.f32 0.0, %v404
  %v406 = vpop.f32.mrf.mxu0
  %v407 = vadd.f32 0.0, %v406
  %v408 = vpop.f32.mrf.mxu0
  %v409 = vadd.f32 0.0, %v408
  %410 = vmatprep.mubr.bf16.mxu0 0
  %411 = vmatmul.mubr.bf16.gmra.mxu0 %v139
  %v412 = vpop.f32.mrf.mxu0
  %v413 = vadd.f32 0.0, %v412
  %v414 = vpop.f32.mrf.mxu0
  %v415 = vadd.f32 0.0, %v414
  %v416 = vpop.f32.mrf.mxu0
  %v417 = vadd.f32 0.0, %v416
  %v418 = vpop.f32.mrf.mxu0
  %v419 = vadd.f32 0.0, %v418
  %420 = vdwg.mxu0
  %421 = vmatprep.subr.bf16.mxu0 %v275
  %422 = vmatpush1.bf16.msra.mxu0 %v274
  %423 = vmatprep.subr.bf16.mxu0 %v271
  %424 = vmatpush1.bf16.msra.mxu0 %v270
  %425 = vmatprep.subr.bf16.mxu0 %v267
  %426 = vmatpush1.bf16.msra.mxu0 %v266
  %427 = vmatprep.subr.bf16.mxu0 %v263
  %428 = vmatpush1.bf16.msra.mxu0 %v262
  %429 = vmatprep.subr.bf16.mxu0 %v259
  %430 = vmatpush1.bf16.msra.mxu0 %v258
  %431 = vmatprep.subr.bf16.mxu0 %v255
  %432 = vmatpush1.bf16.msra.mxu0 %v254
  %433 = vmatprep.subr.bf16.mxu0 %v251
  %434 = vmatpush1.bf16.msra.mxu0 %v250
  %435 = vmatprep.subr.bf16.mxu0 %v247
  %436 = vmatpush1.bf16.msra.mxu0 %v246
  %437 = vmatprep.subr.bf16.mxu0 0
  %438 = vmatpush2.bf16.msra.mxu0 0
  %439 = vmatprep.subr.bf16.mxu0 0
  %440 = vmatpush2.bf16.msra.mxu0 0
  %441 = vmatprep.subr.bf16.mxu0 0
  %442 = vmatpush2.bf16.msra.mxu0 0
  %443 = vmatprep.subr.bf16.mxu0 0
  %444 = vmatpush2.bf16.msra.mxu0 0
  %445 = vmatprep.subr.bf16.mxu0 0
  %446 = vmatpush2.bf16.msra.mxu0 0
  %447 = vmatprep.subr.bf16.mxu0 0
  %448 = vmatpush2.bf16.msra.mxu0 0
  %449 = vmatprep.subr.bf16.mxu0 0
  %450 = vmatpush2.bf16.msra.mxu0 0
  %451 = vmatprep.subr.bf16.mxu0 0
  %452 = vmatpush2.bf16.msra.mxu0 0
  %453 = vmatprep.mubr.bf16.mxu0 0
  %454 = vmatmul.mubr.bf16.gmra.mxu0 %v132
  %v455 = vpop.f32.mrf.mxu0
  %v456 = vadd.f32 0.0, %v455
  %v457 = vpop.f32.mrf.mxu0
  %v458 = vadd.f32 0.0, %v457
  %v459 = vpop.f32.mrf.mxu0
  %v460 = vadd.f32 0.0, %v459
  %v461 = vpop.f32.mrf.mxu0
  %v462 = vadd.f32 0.0, %v461
  %463 = vmatprep.mubr.bf16.mxu0 0
  %464 = vmatmul.mubr.bf16.gmra.mxu0 %v133
  %v465 = vpop.f32.mrf.mxu0
  %v466 = vadd.f32 0.0, %v465
  %v467 = vpop.f32.mrf.mxu0
  %v468 = vadd.f32 0.0, %v467
  %v469 = vpop.f32.mrf.mxu0
  %v470 = vadd.f32 0.0, %v469
  %v471 = vpop.f32.mrf.mxu0
  %v472 = vadd.f32 0.0, %v471
  %473 = vmatprep.mubr.bf16.mxu0 0
  %474 = vmatmul.mubr.bf16.gmra.mxu0 %v134
  %v475 = vpop.f32.mrf.mxu0
  %v476 = vadd.f32 0.0, %v475
  %v477 = vpop.f32.mrf.mxu0
  %v478 = vadd.f32 0.0, %v477
  %v479 = vpop.f32.mrf.mxu0
  %v480 = vadd.f32 0.0, %v479
  %v481 = vpop.f32.mrf.mxu0
  %v482 = vadd.f32 0.0, %v481
  %483 = vmatprep.mubr.bf16.mxu0 0
  %484 = vmatmul.mubr.bf16.gmra.mxu0 %v135
  %v485 = vpop.f32.mrf.mxu0
  %v486 = vadd.f32 0.0, %v485
  %v487 = vpop.f32.mrf.mxu0
  %v488 = vadd.f32 0.0, %v487
  %v489 = vpop.f32.mrf.mxu0
  %v490 = vadd.f32 0.0, %v489
  %v491 = vpop.f32.mrf.mxu0
  %v492 = vadd.f32 0.0, %v491
  %493 = vmatprep.mubr.bf16.mxu0 0
  %494 = vmatmul.mubr.bf16.gmra.mxu0 %v136
  %v495 = vpop.f32.mrf.mxu0
  %v496 = vadd.f32 0.0, %v495
  %v497 = vpop.f32.mrf.mxu0
  %v498 = vadd.f32 0.0, %v497
  %v499 = vpop.f32.mrf.mxu0
  %v500 = vadd.f32 0.0, %v499
  %v501 = vpop.f32.mrf.mxu0
  %v502 = vadd.f32 0.0, %v501
  %503 = vmatprep.mubr.bf16.mxu0 0
  %504 = vmatmul.mubr.bf16.gmra.mxu0 %v137
  %v505 = vpop.f32.mrf.mxu0
  %v506 = vadd.f32 0.0, %v505
  %v507 = vpop.f32.mrf.mxu0
  %v508 = vadd.f32 0.0, %v507
  %v509 = vpop.f32.mrf.mxu0
  %v510 = vadd.f32 0.0, %v509
  %v511 = vpop.f32.mrf.mxu0
  %v512 = vadd.f32 0.0, %v511
  %513 = vmatprep.mubr.bf16.mxu0 0
  %514 = vmatmul.mubr.bf16.gmra.mxu0 %v138
  %v515 = vpop.f32.mrf.mxu0
  %v516 = vadd.f32 0.0, %v515
  %v517 = vpop.f32.mrf.mxu0
  %v518 = vadd.f32 0.0, %v517
  %v519 = vpop.f32.mrf.mxu0
  %v520 = vadd.f32 0.0, %v519
  %v521 = vpop.f32.mrf.mxu0
  %v522 = vadd.f32 0.0, %v521
  %523 = vmatprep.mubr.bf16.mxu0 0
  %524 = vmatmul.mubr.bf16.gmra.mxu0 %v139
  %v525 = vpop.f32.mrf.mxu0
  %v526 = vadd.f32 0.0, %v525
  %v527 = vpop.f32.mrf.mxu0
  %v528 = vadd.f32 0.0, %v527
  %v529 = vpop.f32.mrf.mxu0
  %v530 = vadd.f32 0.0, %v529
  %v531 = vpop.f32.mrf.mxu0
  %v532 = vadd.f32 0.0, %v531
  %533 = vdwg.mxu0
  %534 = vst [vmem:[#allocation4] sm:$0xff] %v343
  %535 = vst [vmem:[#allocation4 + $0x8] sm:$0xff] %v345
  %536 = vst [vmem:[#allocation4 + $0x10] sm:$0xff] %v456
  %537 = vst [vmem:[#allocation4 + $0x18] sm:$0xff] %v458
  %538 = vst [vmem:[#allocation4 + $0x20] sm:$0xff] %v347
  %539 = vst [vmem:[#allocation4 + $0x28] sm:$0xff] %v349
  %540 = vst [vmem:[#allocation4 + $0x30] sm:$0xff] %v460
  %541 = vst [vmem:[#allocation4 + $0x38] sm:$0xff] %v462
  %542 = vst [vmem:[#allocation4 + $0x40] sm:$0xff] %v353
  %543 = vst [vmem:[#allocation4 + $0x48] sm:$0xff] %v355
  %544 = vst [vmem:[#allocation4 + $0x50] sm:$0xff] %v466
  %545 = vst [vmem:[#allocation4 + $0x58] sm:$0xff] %v468
  %546 = vst [vmem:[#allocation4 + $0x60] sm:$0xff] %v357
  %547 = vst [vmem:[#allocation4 + $0x68] sm:$0xff] %v359
  %548 = vst [vmem:[#allocation4 + $0x70] sm:$0xff] %v470
  %549 = vst [vmem:[#allocation4 + $0x78] sm:$0xff] %v472
  %550 = vst [vmem:[#allocation4 + $0x80] sm:$0xff] %v363
  %551 = vst [vmem:[#allocation4 + $0x88] sm:$0xff] %v365
  %552 = vst [vmem:[#allocation4 + $0x90] sm:$0xff] %v476
  %553 = vst [vmem:[#allocation4 + $0x98] sm:$0xff] %v478
  %554 = vst [vmem:[#allocation4 + $0xa0] sm:$0xff] %v367
  %555 = vst [vmem:[#allocation4 + $0xa8] sm:$0xff] %v369
  %556 = vst [vmem:[#allocation4 + $0xb0] sm:$0xff] %v480
  %557 = vst [vmem:[#allocation4 + $0xb8] sm:$0xff] %v482
  %558 = vst [vmem:[#allocation4 + $0xc0] sm:$0xff] %v373
  %559 = vst [vmem:[#allocation4 + $0xc8] sm:$0xff] %v375
  %560 = vst [vmem:[#allocation4 + $0xd0] sm:$0xff] %v486
  %561 = vst [vmem:[#allocation4 + $0xd8] sm:$0xff] %v488
  %562 = vst [vmem:[#allocation4 + $0xe0] sm:$0xff] %v377
  %563 = vst [vmem:[#allocation4 + $0xe8] sm:$0xff] %v379
  %564 = vst [vmem:[#allocation4 + $0xf0] sm:$0xff] %v490
  %565 = vst [vmem:[#allocation4 + $0xf8] sm:$0xff] %v492
  %566 = vst [vmem:[#allocation4 + $0x100] sm:$0xff] %v383
  %567 = vst [vmem:[#allocation4 + $0x108] sm:$0xff] %v385
  %568 = vst [vmem:[#allocation4 + $0x110] sm:$0xff] %v496
  %569 = vst [vmem:[#allocation4 + $0x118] sm:$0xff] %v498
  %570 = vst [vmem:[#allocation4 + $0x120] sm:$0xff] %v387
  %571 = vst [vmem:[#allocation4 + $0x128] sm:$0xff] %v389
  %572 = vst [vmem:[#allocation4 + $0x130] sm:$0xff] %v500
  %573 = vst [vmem:[#allocation4 + $0x138] sm:$0xff] %v502
  %574 = vst [vmem:[#allocation4 + $0x140] sm:$0xff] %v393
  %575 = vst [vmem:[#allocation4 + $0x148] sm:$0xff] %v395
  %576 = vst [vmem:[#allocation4 + $0x150] sm:$0xff] %v506
  %577 = vst [vmem:[#allocation4 + $0x158] sm:$0xff] %v508
  %578 = vst [vmem:[#allocation4 + $0x160] sm:$0xff] %v397
  %579 = vst [vmem:[#allocation4 + $0x168] sm:$0xff] %v399
  %580 = vst [vmem:[#allocation4 + $0x170] sm:$0xff] %v510
  %581 = vst [vmem:[#allocation4 + $0x178] sm:$0xff] %v512
  %582 = vst [vmem:[#allocation4 + $0x180] sm:$0xff] %v403
  %583 = vst [vmem:[#allocation4 + $0x188] sm:$0xff] %v405
  %584 = vst [vmem:[#allocation4 + $0x190] sm:$0xff] %v516
  %585 = vst [vmem:[#allocation4 + $0x198] sm:$0xff] %v518
  %586 = vst [vmem:[#allocation4 + $0x1a0] sm:$0xff] %v407
  %587 = vst [vmem:[#allocation4 + $0x1a8] sm:$0xff] %v409
  %588 = vst [vmem:[#allocation4 + $0x1b0] sm:$0xff] %v520
  %589 = vst [vmem:[#allocation4 + $0x1b8] sm:$0xff] %v522
  %590 = vst [vmem:[#allocation4 + $0x1c0] sm:$0xff] %v413
  %591 = vst [vmem:[#allocation4 + $0x1c8] sm:$0xff] %v415
  %592 = vst [vmem:[#allocation4 + $0x1d0] sm:$0xff] %v526
  %593 = vst [vmem:[#allocation4 + $0x1d8] sm:$0xff] %v528
  %594 = vst [vmem:[#allocation4 + $0x1e0] sm:$0xff] %v417
  %595 = vst [vmem:[#allocation4 + $0x1e8] sm:$0xff] %v419
  %596 = vst [vmem:[#allocation4 + $0x1f0] sm:$0xff] %v530
  %597 = vst [vmem:[#allocation4 + $0x1f8] sm:$0xff] %v532
  %v598 = vld [vmem:[%s5] sm:$0xff]
  %v599 = vld [vmem:[%s5 + $0x8] sm:$0xff]
  %v600 = vld [vmem:[%s5 + $0x10] sm:$0xff]
  %v601 = vld [vmem:[%s5 + $0x18] sm:$0xff]
  %v602 = vld [vmem:[%s5 + $0x20] sm:$0xff]
  %v603 = vld [vmem:[%s5 + $0x28] sm:$0xff]
  %v604 = vld [vmem:[%s5 + $0x30] sm:$0xff]
  %v605 = vld [vmem:[%s5 + $0x38] sm:$0xff]
  %v606 = vld [vmem:[%s5 + $0x40] sm:$0xff]
  %v607 = vld [vmem:[%s5 + $0x48] sm:$0xff]
  %v608 = vld [vmem:[%s5 + $0x50] sm:$0xff]
  %v609 = vld [vmem:[%s5 + $0x58] sm:$0xff]
  %v610 = vld [vmem:[%s5 + $0x60] sm:$0xff]
  %v611 = vld [vmem:[%s5 + $0x68] sm:$0xff]
  %v612 = vld [vmem:[%s5 + $0x70] sm:$0xff]
  %v613 = vld [vmem:[%s5 + $0x78] sm:$0xff]
  %v614 = vld [vmem:[%s5 + $0x80] sm:$0xff]
  %v615 = vld [vmem:[%s5 + $0x88] sm:$0xff]
  %v616 = vld [vmem:[%s5 + $0x90] sm:$0xff]
  %v617 = vld [vmem:[%s5 + $0x98] sm:$0xff]
  %v618 = vld [vmem:[%s5 + $0xa0] sm:$0xff]
  %v619 = vld [vmem:[%s5 + $0xa8] sm:$0xff]
  %v620 = vld [vmem:[%s5 + $0xb0] sm:$0xff]
  %v621 = vld [vmem:[%s5 + $0xb8] sm:$0xff]
  %v622 = vld [vmem:[%s5 + $0xc0] sm:$0xff]
  %v623 = vld [vmem:[%s5 + $0xc8] sm:$0xff]
  %v624 = vld [vmem:[%s5 + $0xd0] sm:$0xff]
  %v625 = vld [vmem:[%s5 + $0xd8] sm:$0xff]
  %v626 = vld [vmem:[%s5 + $0xe0] sm:$0xff]
  %v627 = vld [vmem:[%s5 + $0xe8] sm:$0xff]
  %v628 = vld [vmem:[%s5 + $0xf0] sm:$0xff]
  %v629 = vld [vmem:[%s5 + $0xf8] sm:$0xff]
  %v630 = vld [vmem:[%s5 + $0x100] sm:$0xff]
  %v631 = vld [vmem:[%s5 + $0x108] sm:$0xff]
  %v632 = vld [vmem:[%s5 + $0x110] sm:$0xff]
  %v633 = vld [vmem:[%s5 + $0x118] sm:$0xff]
  %v634 = vld [vmem:[%s5 + $0x120] sm:$0xff]
  %v635 = vld [vmem:[%s5 + $0x128] sm:$0xff]
  %v636 = vld [vmem:[%s5 + $0x130] sm:$0xff]
  %v637 = vld [vmem:[%s5 + $0x138] sm:$0xff]
  %v638 = vld [vmem:[%s5 + $0x140] sm:$0xff]
  %v639 = vld [vmem:[%s5 + $0x148] sm:$0xff]
  %v640 = vld [vmem:[%s5 + $0x150] sm:$0xff]
  %v641 = vld [vmem:[%s5 + $0x158] sm:$0xff]
  %v642 = vld [vmem:[%s5 + $0x160] sm:$0xff]
  %v643 = vld [vmem:[%s5 + $0x168] sm:$0xff]
  %v644 = vld [vmem:[%s5 + $0x170] sm:$0xff]
  %v645 = vld [vmem:[%s5 + $0x178] sm:$0xff]
  %v646 = vld [vmem:[%s5 + $0x180] sm:$0xff]
  %v647 = vld [vmem:[%s5 + $0x188] sm:$0xff]
  %v648 = vld [vmem:[%s5 + $0x190] sm:$0xff]
  %v649 = vld [vmem:[%s5 + $0x198] sm:$0xff]
  %v650 = vld [vmem:[%s5 + $0x1a0] sm:$0xff]
  %v651 = vld [vmem:[%s5 + $0x1a8] sm:$0xff]
  %v652 = vld [vmem:[%s5 + $0x1b0] sm:$0xff]
  %v653 = vld [vmem:[%s5 + $0x1b8] sm:$0xff]
  %v654 = vld [vmem:[%s5 + $0x1c0] sm:$0xff]
  %v655 = vld [vmem:[%s5 + $0x1c8] sm:$0xff]
  %v656 = vld [vmem:[%s5 + $0x1d0] sm:$0xff]
  %v657 = vld [vmem:[%s5 + $0x1d8] sm:$0xff]
  %v658 = vld [vmem:[%s5 + $0x1e0] sm:$0xff]
  %v659 = vld [vmem:[%s5 + $0x1e8] sm:$0xff]
  %v660 = vld [vmem:[%s5 + $0x1f0] sm:$0xff]
  %v661 = vld [vmem:[%s5 + $0x1f8] sm:$0xff]
  %v662 = vld [vmem:[%s6] sm:$0xf]
  %v663 = vld [vmem:[%s7] sm:$0xf]
  %v664 = vld [vmem:[#allocation2] sm:$0xff]
  %v665 = vld [vmem:[#allocation2 + $0x8] sm:$0xff]
  %v666 = vld [vmem:[#allocation3] sm:$0xff]
  %v667 = vld [vmem:[#allocation3 + $0x8] sm:$0xff]
  %s668 = smul.u32 0, 8
  %v669 = vpack.c.bf16 %v665, %v664
  %v734 = vunpack.c.l.b16 %v598
  %v735 = vunpack.c.h.b16 %v598
  %v736 = vunpack.c.l.b16 %v599
  %v737 = vunpack.c.h.b16 %v599
  %v738 = vunpack.c.l.b16 %v600
  %v739 = vunpack.c.h.b16 %v600
  %v740 = vunpack.c.l.b16 %v601
  %v741 = vunpack.c.h.b16 %v601
  %v742 = vunpack.c.l.b16 %v602
  %v743 = vunpack.c.h.b16 %v602
  %v744 = vunpack.c.l.b16 %v603
  %v745 = vunpack.c.h.b16 %v603
  %v746 = vunpack.c.l.b16 %v604
  %v747 = vunpack.c.h.b16 %v604
  %v748 = vunpack.c.l.b16 %v605
  %v749 = vunpack.c.h.b16 %v605
  %v750 = vunpack.c.l.b16 %v606
  %v751 = vunpack.c.h.b16 %v606
  %v752 = vunpack.c.l.b16 %v607
  %v753 = vunpack.c.h.b16 %v607
  %v754 = vunpack.c.l.b16 %v608
  %v755 = vunpack.c.h.b16 %v608
  %v756 = vunpack.c.l.b16 %v609
  %v757 = vunpack.c.h.b16 %v609
  %v758 = vunpack.c.l.b16 %v610
  %v759 = vunpack.c.h.b16 %v610
  %v760 = vunpack.c.l.b16 %v611
  %v761 = vunpack.c.h.b16 %v611
  %v762 = vunpack.c.l.b16 %v612
  %v763 = vunpack.c.h.b16 %v612
  %v764 = vunpack.c.l.b16 %v613
  %v765 = vunpack.c.h.b16 %v613
  %v766 = vunpack.c.l.b16 %v614
  %v767 = vunpack.c.h.b16 %v614
  %v768 = vunpack.c.l.b16 %v615
  %v769 = vunpack.c.h.b16 %v615
  %v770 = vunpack.c.l.b16 %v616
  %v771 = vunpack.c.h.b16 %v616
  %v772 = vunpack.c.l.b16 %v617
  %v773 = vunpack.c.h.b16 %v617
  %v774 = vunpack.c.l.b16 %v618
  %v775 = vunpack.c.h.b16 %v618
  %v776 = vunpack.c.l.b16 %v619
  %v777 = vunpack.c.h.b16 %v619
  %v778 = vunpack.c.l.b16 %v620
  %v779 = vunpack.c.h.b16 %v620
  %v780 = vunpack.c.l.b16 %v621
  %v781 = vunpack.c.h.b16 %v621
  %v782 = vunpack.c.l.b16 %v622
  %v783 = vunpack.c.h.b16 %v622
  %v784 = vunpack.c.l.b16 %v623
  %v785 = vunpack.c.h.b16 %v623
  %v786 = vunpack.c.l.b16 %v624
  %v787 = vunpack.c.h.b16 %v624
  %v788 = vunpack.c.l.b16 %v625
  %v789 = vunpack.c.h.b16 %v625
  %v790 = vunpack.c.l.b16 %v626
  %v791 = vunpack.c.h.b16 %v626
  %v792 = vunpack.c.l.b16 %v627
  %v793 = vunpack.c.h.b16 %v627
  %v794 = vunpack.c.l.b16 %v628
  %v795 = vunpack.c.h.b16 %v628
  %v796 = vunpack.c.l.b16 %v629
  %v797 = vunpack.c.h.b16 %v629
  %v798 = vunpack.c.l.b16 %v630
  %v799 = vunpack.c.h.b16 %v630
  %v800 = vunpack.c.l.b16 %v631
  %v801 = vunpack.c.h.b16 %v631
  %v802 = vunpack.c.l.b16 %v632
  %v803 = vunpack.c.h.b16 %v632
  %v804 = vunpack.c.l.b16 %v633
  %v805 = vunpack.c.h.b16 %v633
  %v806 = vunpack.c.l.b16 %v634
  %v807 = vunpack.c.h.b16 %v634
  %v808 = vunpack.c.l.b16 %v635
  %v809 = vunpack.c.h.b16 %v635
  %v810 = vunpack.c.l.b16 %v636
  %v811 = vunpack.c.h.b16 %v636
  %v812 = vunpack.c.l.b16 %v637
  %v813 = vunpack.c.h.b16 %v637
  %v814 = vunpack.c.l.b16 %v638
  %v815 = vunpack.c.h.b16 %v638
  %v816 = vunpack.c.l.b16 %v639
  %v817 = vunpack.c.h.b16 %v639
  %v818 = vunpack.c.l.b16 %v640
  %v819 = vunpack.c.h.b16 %v640
  %v820 = vunpack.c.l.b16 %v641
  %v821 = vunpack.c.h.b16 %v641
  %v822 = vunpack.c.l.b16 %v642
  %v823 = vunpack.c.h.b16 %v642
  %v824 = vunpack.c.l.b16 %v643
  %v825 = vunpack.c.h.b16 %v643
  %v826 = vunpack.c.l.b16 %v644
  %v827 = vunpack.c.h.b16 %v644
  %v828 = vunpack.c.l.b16 %v645
  %v829 = vunpack.c.h.b16 %v645
  %v830 = vunpack.c.l.b16 %v646
  %v831 = vunpack.c.h.b16 %v646
  %v832 = vunpack.c.l.b16 %v647
  %v833 = vunpack.c.h.b16 %v647
  %v834 = vunpack.c.l.b16 %v648
  %v835 = vunpack.c.h.b16 %v648
  %v836 = vunpack.c.l.b16 %v649
  %v837 = vunpack.c.h.b16 %v649
  %v838 = vunpack.c.l.b16 %v650
  %v839 = vunpack.c.h.b16 %v650
  %v840 = vunpack.c.l.b16 %v651
  %v841 = vunpack.c.h.b16 %v651
  %v842 = vunpack.c.l.b16 %v652
  %v843 = vunpack.c.h.b16 %v652
  %v844 = vunpack.c.l.b16 %v653
  %v845 = vunpack.c.h.b16 %v653
  %v846 = vunpack.c.l.b16 %v654
  %v847 = vunpack.c.h.b16 %v654
  %v848 = vunpack.c.l.b16 %v655
  %v849 = vunpack.c.h.b16 %v655
  %v850 = vunpack.c.l.b16 %v656
  %v851 = vunpack.c.h.b16 %v656
  %v852 = vunpack.c.l.b16 %v657
  %v853 = vunpack.c.h.b16 %v657
  %v854 = vunpack.c.l.b16 %v658
  %v855 = vunpack.c.h.b16 %v658
  %v856 = vunpack.c.l.b16 %v659
  %v857 = vunpack.c.h.b16 %v659
  %v858 = vunpack.c.l.b16 %v660
  %v859 = vunpack.c.h.b16 %v660
  %v860 = vunpack.c.l.b16 %v661
  %v861 = vunpack.c.h.b16 %v661
  %v862 = vpack.c.b16 %v742, %v734
  %v863 = vpack.c.b16 %v743, %v735
  %v864 = vpack.c.b16 %v744, %v736
  %v865 = vpack.c.b16 %v745, %v737
  %v866 = vpack.c.b16 %v746, %v738
  %v867 = vpack.c.b16 %v747, %v739
  %v868 = vpack.c.b16 %v748, %v740
  %v869 = vpack.c.b16 %v749, %v741
  %v870 = vpack.c.b16 %v758, %v750
  %v871 = vpack.c.b16 %v759, %v751
  %v872 = vpack.c.b16 %v760, %v752
  %v873 = vpack.c.b16 %v761, %v753
  %v874 = vpack.c.b16 %v762, %v754
  %v875 = vpack.c.b16 %v763, %v755
  %v876 = vpack.c.b16 %v764, %v756
  %v877 = vpack.c.b16 %v765, %v757
  %v878 = vpack.c.b16 %v774, %v766
  %v879 = vpack.c.b16 %v775, %v767
  %v880 = vpack.c.b16 %v776, %v768
  %v881 = vpack.c.b16 %v777, %v769
  %v882 = vpack.c.b16 %v778, %v770
  %v883 = vpack.c.b16 %v779, %v771
  %v884 = vpack.c.b16 %v780, %v772
  %v885 = vpack.c.b16 %v781, %v773
  %v886 = vpack.c.b16 %v790, %v782
  %v887 = vpack.c.b16 %v791, %v783
  %v888 = vpack.c.b16 %v792, %v784
  %v889 = vpack.c.b16 %v793, %v785
  %v890 = vpack.c.b16 %v794, %v786
  %v891 = vpack.c.b16 %v795, %v787
  %v892 = vpack.c.b16 %v796, %v788
  %v893 = vpack.c.b16 %v797, %v789
  %v894 = vpack.c.b16 %v806, %v798
  %v895 = vpack.c.b16 %v807, %v799
  %v896 = vpack.c.b16 %v808, %v800
  %v897 = vpack.c.b16 %v809, %v801
  %v898 = vpack.c.b16 %v810, %v802
  %v899 = vpack.c.b16 %v811, %v803
  %v900 = vpack.c.b16 %v812, %v804
  %v901 = vpack.c.b16 %v813, %v805
  %v902 = vpack.c.b16 %v822, %v814
  %v903 = vpack.c.b16 %v823, %v815
  %v904 = vpack.c.b16 %v824, %v816
  %v905 = vpack.c.b16 %v825, %v817
  %v906 = vpack.c.b16 %v826, %v818
  %v907 = vpack.c.b16 %v827, %v819
  %v908 = vpack.c.b16 %v828, %v820
  %v909 = vpack.c.b16 %v829, %v821
  %v910 = vpack.c.b16 %v838, %v830
  %v911 = vpack.c.b16 %v839, %v831
  %v912 = vpack.c.b16 %v840, %v832
  %v913 = vpack.c.b16 %v841, %v833
  %v914 = vpack.c.b16 %v842, %v834
  %v915 = vpack.c.b16 %v843, %v835
  %v916 = vpack.c.b16 %v844, %v836
  %v917 = vpack.c.b16 %v845, %v837
  %v918 = vpack.c.b16 %v854, %v846
  %v919 = vpack.c.b16 %v855, %v847
  %v920 = vpack.c.b16 %v856, %v848
  %v921 = vpack.c.b16 %v857, %v849
  %v922 = vpack.c.b16 %v858, %v850
  %v923 = vpack.c.b16 %v859, %v851
  %v924 = vpack.c.b16 %v860, %v852
  %v925 = vpack.c.b16 %v861, %v853
  %990 = vmatprep.subr.bf16.mxu0 %v919
  %991 = vmatpush1.bf16.msra.mxu0 %v918
  %992 = vmatprep.subr.bf16.mxu0 %v911
  %993 = vmatpush1.bf16.msra.mxu0 %v910
  %994 = vmatprep.subr.bf16.mxu0 %v903
  %995 = vmatpush1.bf16.msra.mxu0 %v902
  %996 = vmatprep.subr.bf16.mxu0 %v895
  %997 = vmatpush1.bf16.msra.mxu0 %v894
  %998 = vmatprep.subr.bf16.mxu0 %v887
  %999 = vmatpush1.bf16.msra.mxu0 %v886
  %1000 = vmatprep.subr.bf16.mxu0 %v879
  %1001 = vmatpush1.bf16.msra.mxu0 %v878
  %1002 = vmatprep.subr.bf16.mxu0 %v871
  %1003 = vmatpush1.bf16.msra.mxu0 %v870
  %1004 = vmatprep.subr.bf16.mxu0 %v863
  %1005 = vmatpush1.bf16.msra.mxu0 %v862
  %1006 = vmatprep.subr.bf16.mxu0 0
  %1007 = vmatpush2.bf16.msra.mxu0 0
  %1008 = vmatprep.subr.bf16.mxu0 0
  %1009 = vmatpush2.bf16.msra.mxu0 0
  %1010 = vmatprep.subr.bf16.mxu0 0
  %1011 = vmatpush2.bf16.msra.mxu0 0
  %1012 = vmatprep.subr.bf16.mxu0 0
  %1013 = vmatpush2.bf16.msra.mxu0 0
  %1014 = vmatprep.subr.bf16.mxu0 0
  %1015 = vmatpush2.bf16.msra.mxu0 0
  %1016 = vmatprep.subr.bf16.mxu0 0
  %1017 = vmatpush2.bf16.msra.mxu0 0
  %1018 = vmatprep.subr.bf16.mxu0 0
  %1019 = vmatpush2.bf16.msra.mxu0 0
  %1020 = vmatprep.subr.bf16.mxu0 0
  %1021 = vmatpush2.bf16.msra.mxu0 0
  %1022 = vmatprep.mubr.bf16.mxu0 0
  %1023 = vmatmul.mubr.bf16.gmra.mxu0 %v669
  %v1024 = vpop.f32.mrf.mxu0
  %v1025 = vadd.f32 0.0, %v1024
  %v1026 = vpop.f32.mrf.mxu0
  %v1027 = vadd.f32 0.0, %v1026
  %v1028 = vpop.f32.mrf.mxu0
  %v1029 = vadd.f32 0.0, %v1028
  %v1030 = vpop.f32.mrf.mxu0
  %v1031 = vadd.f32 0.0, %v1030
  %1032 = vdwg.mxu0
  %1033 = vmatprep.subr.bf16.mxu0 %v921
  %1034 = vmatpush1.bf16.msra.mxu0 %v920
  %1035 = vmatprep.subr.bf16.mxu0 %v913
  %1036 = vmatpush1.bf16.msra.mxu0 %v912
  %1037 = vmatprep.subr.bf16.mxu0 %v905
  %1038 = vmatpush1.bf16.msra.mxu0 %v904
  %1039 = vmatprep.subr.bf16.mxu0 %v897
  %1040 = vmatpush1.bf16.msra.mxu0 %v896
  %1041 = vmatprep.subr.bf16.mxu0 %v889
  %1042 = vmatpush1.bf16.msra.mxu0 %v888
  %1043 = vmatprep.subr.bf16.mxu0 %v881
  %1044 = vmatpush1.bf16.msra.mxu0 %v880
  %1045 = vmatprep.subr.bf16.mxu0 %v873
  %1046 = vmatpush1.bf16.msra.mxu0 %v872
  %1047 = vmatprep.subr.bf16.mxu0 %v865
  %1048 = vmatpush1.bf16.msra.mxu0 %v864
  %1049 = vmatprep.subr.bf16.mxu0 0
  %1050 = vmatpush2.bf16.msra.mxu0 0
  %1051 = vmatprep.subr.bf16.mxu0 0
  %1052 = vmatpush2.bf16.msra.mxu0 0
  %1053 = vmatprep.subr.bf16.mxu0 0
  %1054 = vmatpush2.bf16.msra.mxu0 0
  %1055 = vmatprep.subr.bf16.mxu0 0
  %1056 = vmatpush2.bf16.msra.mxu0 0
  %1057 = vmatprep.subr.bf16.mxu0 0
  %1058 = vmatpush2.bf16.msra.mxu0 0
  %1059 = vmatprep.subr.bf16.mxu0 0
  %1060 = vmatpush2.bf16.msra.mxu0 0
  %1061 = vmatprep.subr.bf16.mxu0 0
  %1062 = vmatpush2.bf16.msra.mxu0 0
  %1063 = vmatprep.subr.bf16.mxu0 0
  %1064 = vmatpush2.bf16.msra.mxu0 0
  %1065 = vmatprep.mubr.bf16.mxu0 0
  %1066 = vmatmul.mubr.bf16.gmra.mxu0 %v669
  %v1067 = vpop.f32.mrf.mxu0
  %v1068 = vadd.f32 0.0, %v1067
  %v1069 = vpop.f32.mrf.mxu0
  %v1070 = vadd.f32 0.0, %v1069
  %v1071 = vpop.f32.mrf.mxu0
  %v1072 = vadd.f32 0.0, %v1071
  %v1073 = vpop.f32.mrf.mxu0
  %v1074 = vadd.f32 0.0, %v1073
  %1075 = vdwg.mxu0
  %1076 = vmatprep.subr.bf16.mxu0 %v923
  %1077 = vmatpush1.bf16.msra.mxu0 %v922
  %1078 = vmatprep.subr.bf16.mxu0 %v915
  %1079 = vmatpush1.bf16.msra.mxu0 %v914
  %1080 = vmatprep.subr.bf16.mxu0 %v907
  %1081 = vmatpush1.bf16.msra.mxu0 %v906
  %1082 = vmatprep.subr.bf16.mxu0 %v899
  %1083 = vmatpush1.bf16.msra.mxu0 %v898
  %1084 = vmatprep.subr.bf16.mxu0 %v891
  %1085 = vmatpush1.bf16.msra.mxu0 %v890
  %1086 = vmatprep.subr.bf16.mxu0 %v883
  %1087 = vmatpush1.bf16.msra.mxu0 %v882
  %1088 = vmatprep.subr.bf16.mxu0 %v875
  %1089 = vmatpush1.bf16.msra.mxu0 %v874
  %1090 = vmatprep.subr.bf16.mxu0 %v867
  %1091 = vmatpush1.bf16.msra.mxu0 %v866
  %1092 = vmatprep.subr.bf16.mxu0 0
  %1093 = vmatpush2.bf16.msra.mxu0 0
  %1094 = vmatprep.subr.bf16.mxu0 0
  %1095 = vmatpush2.bf16.msra.mxu0 0
  %1096 = vmatprep.subr.bf16.mxu0 0
  %1097 = vmatpush2.bf16.msra.mxu0 0
  %1098 = vmatprep.subr.bf16.mxu0 0
  %1099 = vmatpush2.bf16.msra.mxu0 0
  %1100 = vmatprep.subr.bf16.mxu0 0
  %1101 = vmatpush2.bf16.msra.mxu0 0
  %1102 = vmatprep.subr.bf16.mxu0 0
  %1103 = vmatpush2.bf16.msra.mxu0 0
  %1104 = vmatprep.subr.bf16.mxu0 0
  %1105 = vmatpush2.bf16.msra.mxu0 0
  %1106 = vmatprep.subr.bf16.mxu0 0
  %1107 = vmatpush2.bf16.msra.mxu0 0
  %1108 = vmatprep.mubr.bf16.mxu0 0
  %1109 = vmatmul.mubr.bf16.gmra.mxu0 %v669
  %v1110 = vpop.f32.mrf.mxu0
  %v1111 = vadd.f32 0.0, %v1110
  %v1112 = vpop.f32.mrf.mxu0
  %v1113 = vadd.f32 0.0, %v1112
  %v1114 = vpop.f32.mrf.mxu0
  %v1115 = vadd.f32 0.0, %v1114
  %v1116 = vpop.f32.mrf.mxu0
  %v1117 = vadd.f32 0.0, %v1116
  %1118 = vdwg.mxu0
  %1119 = vmatprep.subr.bf16.mxu0 %v925
  %1120 = vmatpush1.bf16.msra.mxu0 %v924
  %1121 = vmatprep.subr.bf16.mxu0 %v917
  %1122 = vmatpush1.bf16.msra.mxu0 %v916
  %1123 = vmatprep.subr.bf16.mxu0 %v909
  %1124 = vmatpush1.bf16.msra.mxu0 %v908
  %1125 = vmatprep.subr.bf16.mxu0 %v901
  %1126 = vmatpush1.bf16.msra.mxu0 %v900
  %1127 = vmatprep.subr.bf16.mxu0 %v893
  %1128 = vmatpush1.bf16.msra.mxu0 %v892
  %1129 = vmatprep.subr.bf16.mxu0 %v885
  %1130 = vmatpush1.bf16.msra.mxu0 %v884
  %1131 = vmatprep.subr.bf16.mxu0 %v877
  %1132 = vmatpush1.bf16.msra.mxu0 %v876
  %1133 = vmatprep.subr.bf16.mxu0 %v869
  %1134 = vmatpush1.bf16.msra.mxu0 %v868
  %1135 = vmatprep.subr.bf16.mxu0 0
  %1136 = vmatpush2.bf16.msra.mxu0 0
  %1137 = vmatprep.subr.bf16.mxu0 0
  %1138 = vmatpush2.bf16.msra.mxu0 0
  %1139 = vmatprep.subr.bf16.mxu0 0
  %1140 = vmatpush2.bf16.msra.mxu0 0
  %1141 = vmatprep.subr.bf16.mxu0 0
  %1142 = vmatpush2.bf16.msra.mxu0 0
  %1143 = vmatprep.subr.bf16.mxu0 0
  %1144 = vmatpush2.bf16.msra.mxu0 0
  %1145 = vmatprep.subr.bf16.mxu0 0
  %1146 = vmatpush2.bf16.msra.mxu0 0
  %1147 = vmatprep.subr.bf16.mxu0 0
  %1148 = vmatpush2.bf16.msra.mxu0 0
  %1149 = vmatprep.subr.bf16.mxu0 0
  %1150 = vmatpush2.bf16.msra.mxu0 0
  %1151 = vmatprep.mubr.bf16.mxu0 0
  %1152 = vmatmul.mubr.bf16.gmra.mxu0 %v669
  %v1153 = vpop.f32.mrf.mxu0
  %v1154 = vadd.f32 0.0, %v1153
  %v1155 = vpop.f32.mrf.mxu0
  %v1156 = vadd.f32 0.0, %v1155
  %v1157 = vpop.f32.mrf.mxu0
  %v1158 = vadd.f32 0.0, %v1157
  %v1159 = vpop.f32.mrf.mxu0
  %v1160 = vadd.f32 0.0, %v1159
  %1161 = vdwg.mxu0
  %s1162 = sld [smem:[#allocation7 + %s668]]
  %p1163 = scmp.gt.s32.totalorder %s1162, 0
  %v1164 = vld [vmem:[#allocation4] sm:$0xff]
  %v1165 = vld [vmem:[#allocation4 + $0x8] sm:$0xff]
  %v1166 = vld [vmem:[#allocation4 + $0x10] sm:$0xff]
  %v1167 = vld [vmem:[#allocation4 + $0x18] sm:$0xff]
  %v1168 = vld [vmem:[#allocation4 + $0x20] sm:$0xff]
  %v1169 = vld [vmem:[#allocation4 + $0x28] sm:$0xff]
  %v1170 = vld [vmem:[#allocation4 + $0x30] sm:$0xff]
  %v1171 = vld [vmem:[#allocation4 + $0x38] sm:$0xff]
  %v1172 = vadd.f32 %v1025, %v1164
  %v1173 = vadd.f32 %v1027, %v1165
  %v1174 = vadd.f32 %v1068, %v1166
  %v1175 = vadd.f32 %v1070, %v1167
  %v1176 = vadd.f32 %v1029, %v1168
  %v1177 = vadd.f32 %v1031, %v1169
  %v1178 = vadd.f32 %v1072, %v1170
  %v1179 = vadd.f32 %v1074, %v1171
  %v1181 = vlaneseq
  %v1182 = vshrl.u32 %v1181, 7
  %v1183 = vsub.s32 0, %v1182
  %v1184 = vrot.slane %v663, %v1183
  %v1185 = vlaneseq
  %v1186 = vshrl.u32 %v1185, 7
  %v1187 = vsub.s32 1, %v1186
  %v1188 = vrot.slane %v663, %v1187
  %v1189 = vlaneseq
  %v1190 = vshrl.u32 %v1189, 7
  %v1191 = vsub.s32 2, %v1190
  %v1192 = vrot.slane %v663, %v1191
  %v1193 = vlaneseq
  %v1194 = vshrl.u32 %v1193, 7
  %v1195 = vsub.s32 3, %v1194
  %v1196 = vrot.slane %v663, %v1195
  %v1201 = vadd.f32 %v1111, %v1184
  %v1202 = vadd.f32 %v1113, %v1188
  %v1203 = vadd.f32 %v1154, %v1192
  %v1204 = vadd.f32 %v1156, %v1196
  %v1205 = vadd.f32 %v1115, %v1184
  %v1206 = vadd.f32 %v1117, %v1188
  %v1207 = vadd.f32 %v1158, %v1192
  %v1208 = vadd.f32 %v1160, %v1196
  %s1209 = scalar_select %p1163, 1, 0
  %v1210 = vstv %s1209
  %vm1211 = vcmp.eq.s32.totalorder %v1210, 1
  %v1212 = vsel %vm1211, %v1172, %v1201
  %v1213 = vsel %vm1211, %v1173, %v1202
  %v1214 = vsel %vm1211, %v1174, %v1203
  %v1215 = vsel %vm1211, %v1175, %v1204
  %v1216 = vsel %vm1211, %v1176, %v1205
  %v1217 = vsel %vm1211, %v1177, %v1206
  %v1218 = vsel %vm1211, %v1178, %v1207
  %v1219 = vsel %vm1211, %v1179, %v1208
  %v1221 = vlaneseq
  %v1222 = vshrl.u32 %v1221, 7
  %v1223 = vsub.s32 0, %v1222
  %v1224 = vrot.slane %v662, %v1223
  %v1225 = vlaneseq
  %v1226 = vshrl.u32 %v1225, 7
  %v1227 = vsub.s32 1, %v1226
  %v1228 = vrot.slane %v662, %v1227
  %v1229 = vlaneseq
  %v1230 = vshrl.u32 %v1229, 7
  %v1231 = vsub.s32 2, %v1230
  %v1232 = vrot.slane %v662, %v1231
  %v1233 = vlaneseq
  %v1234 = vshrl.u32 %v1233, 7
  %v1235 = vsub.s32 3, %v1234
  %v1236 = vrot.slane %v662, %v1235
  %v1241 = vadd.f32 %v1212, %v1224
  %v1242 = vadd.f32 %v1213, %v1228
  %v1243 = vadd.f32 %v1214, %v1232
  %v1244 = vadd.f32 %v1215, %v1236
  %v1245 = vadd.f32 %v1216, %v1224
  %v1246 = vadd.f32 %v1217, %v1228
  %v1247 = vadd.f32 %v1218, %v1232
  %v1248 = vadd.f32 %v1219, %v1236
  %v1249 = vxor.u32 %v1241, 2147483648
  %v1250 = vxor.u32 %v1245, 2147483648
  %v1251 = vmul.f32 %v1249, 1.442695
  %v1252 = vpow.pop %v1251
  %v1253 = vmul.f32 %v1250, 1.442695
  %v1254 = vpow.pop %v1253
  %v1255 = vadd.f32 %v1252, 1.0
  %v1256 = vadd.f32 %v1254, 1.0
  %v1257 = vrcp.pop %v1255
  %v1258 = vmul.f32 1.0, %v1257
  %v1259 = vrcp.pop %v1256
  %v1260 = vmul.f32 1.0, %v1259
  %v1261 = vxor.u32 %v1242, 2147483648
  %v1262 = vxor.u32 %v1246, 2147483648
  %v1263 = vmul.f32 %v1261, 1.442695
  %v1264 = vpow.pop %v1263
  %v1265 = vmul.f32 %v1262, 1.442695
  %v1266 = vpow.pop %v1265
  %v1267 = vadd.f32 %v1264, 1.0
  %v1268 = vadd.f32 %v1266, 1.0
  %v1269 = vrcp.pop %v1267
  %v1270 = vmul.f32 1.0, %v1269
  %v1271 = vrcp.pop %v1268
  %v1272 = vmul.f32 1.0, %v1271
  %v1273 = vtanh.pop %v1243
  %v1274 = vtanh.pop %v1247
  %v1275 = vxor.u32 %v1244, 2147483648
  %v1276 = vxor.u32 %v1248, 2147483648
  %v1277 = vmul.f32 %v1275, 1.442695
  %v1278 = vpow.pop %v1277
  %v1279 = vmul.f32 %v1276, 1.442695
  %v1280 = vpow.pop %v1279
  %v1281 = vadd.f32 %v1278, 1.0
  %v1282 = vadd.f32 %v1280, 1.0
  %v1283 = vrcp.pop %v1281
  %v1284 = vmul.f32 1.0, %v1283
  %v1285 = vrcp.pop %v1282
  %v1286 = vmul.f32 1.0, %v1285
  %v1287 = vmul.f32 %v1270, %v666
  %v1288 = vmul.f32 %v1272, %v667
  %v1289 = vmul.f32 %v1258, %v1273
  %v1290 = vmul.f32 %v1260, %v1274
  %v1291 = vadd.f32 %v1287, %v1289
  %v1292 = vadd.f32 %v1288, %v1290
  %v1293 = vtanh.pop %v1291
  %v1294 = vtanh.pop %v1292
  %v1295 = vmul.f32 %v1284, %v1293
  %v1296 = vmul.f32 %v1286, %v1294
  %v1297 = vpack.c.bf16 %v1296, %v1295
  %v1299 = vunpack.c.l.b16 %v1297
  %v1300 = vunpack.c.h.b16 %v1297
  %v1301 = vpack.c.b16 %v1299, %v1299
  %v1302 = vpack.c.b16 %v1300, %v1300
  %1305 = vst [vmem:[#allocation5] sm:$0xf] %v1301
  %1306 = vst [vmem:[#allocation5 + $0x4] sm:$0xf] %v1302
  %s1307 = sadd.s32 %s668, 1
  %1308 = vmatprep.subr.bf16.mxu0 %v919
  %1309 = vmatpush1.bf16.msra.mxu0 %v918
  %1310 = vmatprep.subr.bf16.mxu0 %v911
  %1311 = vmatpush1.bf16.msra.mxu0 %v910
  %1312 = vmatprep.subr.bf16.mxu0 %v903
  %1313 = vmatpush1.bf16.msra.mxu0 %v902
  %1314 = vmatprep.subr.bf16.mxu0 %v895
  %1315 = vmatpush1.bf16.msra.mxu0 %v894
  %1316 = vmatprep.subr.bf16.mxu0 %v887
  %1317 = vmatpush1.bf16.msra.mxu0 %v886
  %1318 = vmatprep.subr.bf16.mxu0 %v879
  %1319 = vmatpush1.bf16.msra.mxu0 %v878
  %1320 = vmatprep.subr.bf16.mxu0 %v871
  %1321 = vmatpush1.bf16.msra.mxu0 %v870
  %1322 = vmatprep.subr.bf16.mxu0 %v863
  %1323 = vmatpush1.bf16.msra.mxu0 %v862
  %1324 = vmatprep.subr.bf16.mxu0 0
  %1325 = vmatpush2.bf16.msra.mxu0 0
  %1326 = vmatprep.subr.bf16.mxu0 0
  %1327 = vmatpush2.bf16.msra.mxu0 0
  %1328 = vmatprep.subr.bf16.mxu0 0
  %1329 = vmatpush2.bf16.msra.mxu0 0
  %1330 = vmatprep.subr.bf16.mxu0 0
  %1331 = vmatpush2.bf16.msra.mxu0 0
  %1332 = vmatprep.subr.bf16.mxu0 0
  %1333 = vmatpush2.bf16.msra.mxu0 0
  %1334 = vmatprep.subr.bf16.mxu0 0
  %1335 = vmatpush2.bf16.msra.mxu0 0
  %1336 = vmatprep.subr.bf16.mxu0 0
  %1337 = vmatpush2.bf16.msra.mxu0 0
  %1338 = vmatprep.subr.bf16.mxu0 0
  %1339 = vmatpush2.bf16.msra.mxu0 0
  %1340 = vmatprep.mubr.bf16.mxu0 0
  %1341 = vmatmul.mubr.bf16.gmra.mxu0 %v1297
  %v1342 = vpop.f32.mrf.mxu0
  %v1343 = vadd.f32 0.0, %v1342
  %v1344 = vpop.f32.mrf.mxu0
  %v1345 = vadd.f32 0.0, %v1344
  %v1346 = vpop.f32.mrf.mxu0
  %v1347 = vadd.f32 0.0, %v1346
  %v1348 = vpop.f32.mrf.mxu0
  %v1349 = vadd.f32 0.0, %v1348
  %1350 = vdwg.mxu0
  %1351 = vmatprep.subr.bf16.mxu0 %v921
  %1352 = vmatpush1.bf16.msra.mxu0 %v920
  %1353 = vmatprep.subr.bf16.mxu0 %v913
  %1354 = vmatpush1.bf16.msra.mxu0 %v912
  %1355 = vmatprep.subr.bf16.mxu0 %v905
  %1356 = vmatpush1.bf16.msra.mxu0 %v904
  %1357 = vmatprep.subr.bf16.mxu0 %v897
  %1358 = vmatpush1.bf16.msra.mxu0 %v896
  %1359 = vmatprep.subr.bf16.mxu0 %v889
  %1360 = vmatpush1.bf16.msra.mxu0 %v888
  %1361 = vmatprep.subr.bf16.mxu0 %v881
  %1362 = vmatpush1.bf16.msra.mxu0 %v880
  %1363 = vmatprep.subr.bf16.mxu0 %v873
  %1364 = vmatpush1.bf16.msra.mxu0 %v872
  %1365 = vmatprep.subr.bf16.mxu0 %v865
  %1366 = vmatpush1.bf16.msra.mxu0 %v864
  %1367 = vmatprep.subr.bf16.mxu0 0
  %1368 = vmatpush2.bf16.msra.mxu0 0
  %1369 = vmatprep.subr.bf16.mxu0 0
  %1370 = vmatpush2.bf16.msra.mxu0 0
  %1371 = vmatprep.subr.bf16.mxu0 0
  %1372 = vmatpush2.bf16.msra.mxu0 0
  %1373 = vmatprep.subr.bf16.mxu0 0
  %1374 = vmatpush2.bf16.msra.mxu0 0
  %1375 = vmatprep.subr.bf16.mxu0 0
  %1376 = vmatpush2.bf16.msra.mxu0 0
  %1377 = vmatprep.subr.bf16.mxu0 0
  %1378 = vmatpush2.bf16.msra.mxu0 0
  %1379 = vmatprep.subr.bf16.mxu0 0
  %1380 = vmatpush2.bf16.msra.mxu0 0
  %1381 = vmatprep.subr.bf16.mxu0 0
  %1382 = vmatpush2.bf16.msra.mxu0 0
  %1383 = vmatprep.mubr.bf16.mxu0 0
  %1384 = vmatmul.mubr.bf16.gmra.mxu0 %v1297
  %v1385 = vpop.f32.mrf.mxu0
  %v1386 = vadd.f32 0.0, %v1385
  %v1387 = vpop.f32.mrf.mxu0
  %v1388 = vadd.f32 0.0, %v1387
  %v1389 = vpop.f32.mrf.mxu0
  %v1390 = vadd.f32 0.0, %v1389
  %v1391 = vpop.f32.mrf.mxu0
  %v1392 = vadd.f32 0.0, %v1391
  %1393 = vdwg.mxu0
  %1394 = vmatprep.subr.bf16.mxu0 %v923
  %1395 = vmatpush1.bf16.msra.mxu0 %v922
  %1396 = vmatprep.subr.bf16.mxu0 %v915
  %1397 = vmatpush1.bf16.msra.mxu0 %v914
  %1398 = vmatprep.subr.bf16.mxu0 %v907
  %1399 = vmatpush1.bf16.msra.mxu0 %v906
  %1400 = vmatprep.subr.bf16.mxu0 %v899
  %1401 = vmatpush1.bf16.msra.mxu0 %v898
  %1402 = vmatprep.subr.bf16.mxu0 %v891
  %1403 = vmatpush1.bf16.msra.mxu0 %v890
  %1404 = vmatprep.subr.bf16.mxu0 %v883
  %1405 = vmatpush1.bf16.msra.mxu0 %v882
  %1406 = vmatprep.subr.bf16.mxu0 %v875
  %1407 = vmatpush1.bf16.msra.mxu0 %v874
  %1408 = vmatprep.subr.bf16.mxu0 %v867
  %1409 = vmatpush1.bf16.msra.mxu0 %v866
  %1410 = vmatprep.subr.bf16.mxu0 0
  %1411 = vmatpush2.bf16.msra.mxu0 0
  %1412 = vmatprep.subr.bf16.mxu0 0
  %1413 = vmatpush2.bf16.msra.mxu0 0
  %1414 = vmatprep.subr.bf16.mxu0 0
  %1415 = vmatpush2.bf16.msra.mxu0 0
  %1416 = vmatprep.subr.bf16.mxu0 0
  %1417 = vmatpush2.bf16.msra.mxu0 0
  %1418 = vmatprep.subr.bf16.mxu0 0
  %1419 = vmatpush2.bf16.msra.mxu0 0
  %1420 = vmatprep.subr.bf16.mxu0 0
  %1421 = vmatpush2.bf16.msra.mxu0 0
  %1422 = vmatprep.subr.bf16.mxu0 0
  %1423 = vmatpush2.bf16.msra.mxu0 0
  %1424 = vmatprep.subr.bf16.mxu0 0
  %1425 = vmatpush2.bf16.msra.mxu0 0
  %1426 = vmatprep.mubr.bf16.mxu0 0
  %1427 = vmatmul.mubr.bf16.gmra.mxu0 %v1297
  %v1428 = vpop.f32.mrf.mxu0
  %v1429 = vadd.f32 0.0, %v1428
  %v1430 = vpop.f32.mrf.mxu0
  %v1431 = vadd.f32 0.0, %v1430
  %v1432 = vpop.f32.mrf.mxu0
  %v1433 = vadd.f32 0.0, %v1432
  %v1434 = vpop.f32.mrf.mxu0
  %v1435 = vadd.f32 0.0, %v1434
  %1436 = vdwg.mxu0
  %1437 = vmatprep.subr.bf16.mxu0 %v925
  %1438 = vmatpush1.bf16.msra.mxu0 %v924
  %1439 = vmatprep.subr.bf16.mxu0 %v917
  %1440 = vmatpush1.bf16.msra.mxu0 %v916
  %1441 = vmatprep.subr.bf16.mxu0 %v909
  %1442 = vmatpush1.bf16.msra.mxu0 %v908
  %1443 = vmatprep.subr.bf16.mxu0 %v901
  %1444 = vmatpush1.bf16.msra.mxu0 %v900
  %1445 = vmatprep.subr.bf16.mxu0 %v893
  %1446 = vmatpush1.bf16.msra.mxu0 %v892
  %1447 = vmatprep.subr.bf16.mxu0 %v885
  %1448 = vmatpush1.bf16.msra.mxu0 %v884
  %1449 = vmatprep.subr.bf16.mxu0 %v877
  %1450 = vmatpush1.bf16.msra.mxu0 %v876
  %1451 = vmatprep.subr.bf16.mxu0 %v869
  %1452 = vmatpush1.bf16.msra.mxu0 %v868
  %1453 = vmatprep.subr.bf16.mxu0 0
  %1454 = vmatpush2.bf16.msra.mxu0 0
  %1455 = vmatprep.subr.bf16.mxu0 0
  %1456 = vmatpush2.bf16.msra.mxu0 0
  %1457 = vmatprep.subr.bf16.mxu0 0
  %1458 = vmatpush2.bf16.msra.mxu0 0
  %1459 = vmatprep.subr.bf16.mxu0 0
  %1460 = vmatpush2.bf16.msra.mxu0 0
  %1461 = vmatprep.subr.bf16.mxu0 0
  %1462 = vmatpush2.bf16.msra.mxu0 0
  %1463 = vmatprep.subr.bf16.mxu0 0
  %1464 = vmatpush2.bf16.msra.mxu0 0
  %1465 = vmatprep.subr.bf16.mxu0 0
  %1466 = vmatpush2.bf16.msra.mxu0 0
  %1467 = vmatprep.subr.bf16.mxu0 0
  %1468 = vmatpush2.bf16.msra.mxu0 0
  %1469 = vmatprep.mubr.bf16.mxu0 0
  %1470 = vmatmul.mubr.bf16.gmra.mxu0 %v1297
  %v1471 = vpop.f32.mrf.mxu0
  %v1472 = vadd.f32 0.0, %v1471
  %v1473 = vpop.f32.mrf.mxu0
  %v1474 = vadd.f32 0.0, %v1473
  %v1475 = vpop.f32.mrf.mxu0
  %v1476 = vadd.f32 0.0, %v1475
  %v1477 = vpop.f32.mrf.mxu0
  %v1478 = vadd.f32 0.0, %v1477
  %1479 = vdwg.mxu0
  %s1480 = sld [smem:[#allocation7 + %s1307]]
  %p1481 = scmp.gt.s32.totalorder %s1480, 0
  %s1482 = scalar_lea.vmem [#allocation4], 64
  %v1483 = vld [vmem:[%s1482] sm:$0xff]
  %v1484 = vld [vmem:[%s1482 + $0x8] sm:$0xff]
  %v1485 = vld [vmem:[%s1482 + $0x10] sm:$0xff]
  %v1486 = vld [vmem:[%s1482 + $0x18] sm:$0xff]
  %v1487 = vld [vmem:[%s1482 + $0x20] sm:$0xff]
  %v1488 = vld [vmem:[%s1482 + $0x28] sm:$0xff]
  %v1489 = vld [vmem:[%s1482 + $0x30] sm:$0xff]
  %v1490 = vld [vmem:[%s1482 + $0x38] sm:$0xff]
  %v1491 = vadd.f32 %v1343, %v1483
  %v1492 = vadd.f32 %v1345, %v1484
  %v1493 = vadd.f32 %v1386, %v1485
  %v1494 = vadd.f32 %v1388, %v1486
  %v1495 = vadd.f32 %v1347, %v1487
  %v1496 = vadd.f32 %v1349, %v1488
  %v1497 = vadd.f32 %v1390, %v1489
  %v1498 = vadd.f32 %v1392, %v1490
  %v1499 = vadd.f32 %v1429, %v1184
  %v1500 = vadd.f32 %v1431, %v1188
  %v1501 = vadd.f32 %v1472, %v1192
  %v1502 = vadd.f32 %v1474, %v1196
  %v1503 = vadd.f32 %v1433, %v1184
  %v1504 = vadd.f32 %v1435, %v1188
  %v1505 = vadd.f32 %v1476, %v1192
  %v1506 = vadd.f32 %v1478, %v1196
  %s1507 = scalar_select %p1481, 1, 0
  %v1508 = vstv %s1507
  %vm1509 = vcmp.eq.s32.totalorder %v1508, 1
  %v1510 = vsel %vm1509, %v1491, %v1499
  %v1511 = vsel %vm1509, %v1492, %v1500
  %v1512 = vsel %vm1509, %v1493, %v1501
  %v1513 = vsel %vm1509, %v1494, %v1502
  %v1514 = vsel %vm1509, %v1495, %v1503
  %v1515 = vsel %vm1509, %v1496, %v1504
  %v1516 = vsel %vm1509, %v1497, %v1505
  %v1517 = vsel %vm1509, %v1498, %v1506
  %v1518 = vadd.f32 %v1510, %v1224
  %v1519 = vadd.f32 %v1511, %v1228
  %v1520 = vadd.f32 %v1512, %v1232
  %v1521 = vadd.f32 %v1513, %v1236
  %v1522 = vadd.f32 %v1514, %v1224
  %v1523 = vadd.f32 %v1515, %v1228
  %v1524 = vadd.f32 %v1516, %v1232
  %v1525 = vadd.f32 %v1517, %v1236
  %v1526 = vxor.u32 %v1518, 2147483648
  %v1527 = vxor.u32 %v1522, 2147483648
  %v1528 = vmul.f32 %v1526, 1.442695
  %v1529 = vpow.pop %v1528
  %v1530 = vmul.f32 %v1527, 1.442695
  %v1531 = vpow.pop %v1530
  %v1532 = vadd.f32 %v1529, 1.0
  %v1533 = vadd.f32 %v1531, 1.0
  %v1534 = vrcp.pop %v1532
  %v1535 = vmul.f32 1.0, %v1534
  %v1536 = vrcp.pop %v1533
  %v1537 = vmul.f32 1.0, %v1536
  %v1538 = vxor.u32 %v1519, 2147483648
  %v1539 = vxor.u32 %v1523, 2147483648
  %v1540 = vmul.f32 %v1538, 1.442695
  %v1541 = vpow.pop %v1540
  %v1542 = vmul.f32 %v1539, 1.442695
  %v1543 = vpow.pop %v1542
  %v1544 = vadd.f32 %v1541, 1.0
  %v1545 = vadd.f32 %v1543, 1.0
  %v1546 = vrcp.pop %v1544
  %v1547 = vmul.f32 1.0, %v1546
  %v1548 = vrcp.pop %v1545
  %v1549 = vmul.f32 1.0, %v1548
  %v1550 = vtanh.pop %v1520
  %v1551 = vtanh.pop %v1524
  %v1552 = vxor.u32 %v1521, 2147483648
  %v1553 = vxor.u32 %v1525, 2147483648
  %v1554 = vmul.f32 %v1552, 1.442695
  %v1555 = vpow.pop %v1554
  %v1556 = vmul.f32 %v1553, 1.442695
  %v1557 = vpow.pop %v1556
  %v1558 = vadd.f32 %v1555, 1.0
  %v1559 = vadd.f32 %v1557, 1.0
  %v1560 = vrcp.pop %v1558
  %v1561 = vmul.f32 1.0, %v1560
  %v1562 = vrcp.pop %v1559
  %v1563 = vmul.f32 1.0, %v1562
  %v1564 = vmul.f32 %v1547, %v1291
  %v1565 = vmul.f32 %v1549, %v1292
  %v1566 = vmul.f32 %v1535, %v1550
  %v1567 = vmul.f32 %v1537, %v1551
  %v1568 = vadd.f32 %v1564, %v1566
  %v1569 = vadd.f32 %v1565, %v1567
  %v1570 = vtanh.pop %v1568
  %v1571 = vtanh.pop %v1569
  %v1572 = vmul.f32 %v1561, %v1570
  %v1573 = vmul.f32 %v1563, %v1571
  %v1574 = vpack.c.bf16 %v1573, %v1572
  %v1576 = vunpack.c.l.b16 %v1574
  %v1577 = vunpack.c.h.b16 %v1574
  %v1578 = vpack.c.b16 %v1576, %v1576
  %v1579 = vpack.c.b16 %v1577, %v1577
  %s1582 = scalar_lea.vmem [#allocation5], 8
  %1583 = vst [vmem:[%s1582] sm:$0xf] %v1578
  %1584 = vst [vmem:[%s1582 + $0x4] sm:$0xf] %v1579
  %s1585 = sadd.s32 %s668, 2
  %1586 = vmatprep.subr.bf16.mxu0 %v919
  %1587 = vmatpush1.bf16.msra.mxu0 %v918
  %1588 = vmatprep.subr.bf16.mxu0 %v911
  %1589 = vmatpush1.bf16.msra.mxu0 %v910
  %1590 = vmatprep.subr.bf16.mxu0 %v903
  %1591 = vmatpush1.bf16.msra.mxu0 %v902
  %1592 = vmatprep.subr.bf16.mxu0 %v895
  %1593 = vmatpush1.bf16.msra.mxu0 %v894
  %1594 = vmatprep.subr.bf16.mxu0 %v887
  %1595 = vmatpush1.bf16.msra.mxu0 %v886
  %1596 = vmatprep.subr.bf16.mxu0 %v879
  %1597 = vmatpush1.bf16.msra.mxu0 %v878
  %1598 = vmatprep.subr.bf16.mxu0 %v871
  %1599 = vmatpush1.bf16.msra.mxu0 %v870
  %1600 = vmatprep.subr.bf16.mxu0 %v863
  %1601 = vmatpush1.bf16.msra.mxu0 %v862
  %1602 = vmatprep.subr.bf16.mxu0 0
  %1603 = vmatpush2.bf16.msra.mxu0 0
  %1604 = vmatprep.subr.bf16.mxu0 0
  %1605 = vmatpush2.bf16.msra.mxu0 0
  %1606 = vmatprep.subr.bf16.mxu0 0
  %1607 = vmatpush2.bf16.msra.mxu0 0
  %1608 = vmatprep.subr.bf16.mxu0 0
  %1609 = vmatpush2.bf16.msra.mxu0 0
  %1610 = vmatprep.subr.bf16.mxu0 0
  %1611 = vmatpush2.bf16.msra.mxu0 0
  %1612 = vmatprep.subr.bf16.mxu0 0
  %1613 = vmatpush2.bf16.msra.mxu0 0
  %1614 = vmatprep.subr.bf16.mxu0 0
  %1615 = vmatpush2.bf16.msra.mxu0 0
  %1616 = vmatprep.subr.bf16.mxu0 0
  %1617 = vmatpush2.bf16.msra.mxu0 0
  %1618 = vmatprep.mubr.bf16.mxu0 0
  %1619 = vmatmul.mubr.bf16.gmra.mxu0 %v1574
  %v1620 = vpop.f32.mrf.mxu0
  %v1621 = vadd.f32 0.0, %v1620
  %v1622 = vpop.f32.mrf.mxu0
  %v1623 = vadd.f32 0.0, %v1622
  %v1624 = vpop.f32.mrf.mxu0
  %v1625 = vadd.f32 0.0, %v1624
  %v1626 = vpop.f32.mrf.mxu0
  %v1627 = vadd.f32 0.0, %v1626
  %1628 = vdwg.mxu0
  %1629 = vmatprep.subr.bf16.mxu0 %v921
  %1630 = vmatpush1.bf16.msra.mxu0 %v920
  %1631 = vmatprep.subr.bf16.mxu0 %v913
  %1632 = vmatpush1.bf16.msra.mxu0 %v912
  %1633 = vmatprep.subr.bf16.mxu0 %v905
  %1634 = vmatpush1.bf16.msra.mxu0 %v904
  %1635 = vmatprep.subr.bf16.mxu0 %v897
  %1636 = vmatpush1.bf16.msra.mxu0 %v896
  %1637 = vmatprep.subr.bf16.mxu0 %v889
  %1638 = vmatpush1.bf16.msra.mxu0 %v888
  %1639 = vmatprep.subr.bf16.mxu0 %v881
  %1640 = vmatpush1.bf16.msra.mxu0 %v880
  %1641 = vmatprep.subr.bf16.mxu0 %v873
  %1642 = vmatpush1.bf16.msra.mxu0 %v872
  %1643 = vmatprep.subr.bf16.mxu0 %v865
  %1644 = vmatpush1.bf16.msra.mxu0 %v864
  %1645 = vmatprep.subr.bf16.mxu0 0
  %1646 = vmatpush2.bf16.msra.mxu0 0
  %1647 = vmatprep.subr.bf16.mxu0 0
  %1648 = vmatpush2.bf16.msra.mxu0 0
  %1649 = vmatprep.subr.bf16.mxu0 0
  %1650 = vmatpush2.bf16.msra.mxu0 0
  %1651 = vmatprep.subr.bf16.mxu0 0
  %1652 = vmatpush2.bf16.msra.mxu0 0
  %1653 = vmatprep.subr.bf16.mxu0 0
  %1654 = vmatpush2.bf16.msra.mxu0 0
  %1655 = vmatprep.subr.bf16.mxu0 0
  %1656 = vmatpush2.bf16.msra.mxu0 0
  %1657 = vmatprep.subr.bf16.mxu0 0
  %1658 = vmatpush2.bf16.msra.mxu0 0
  %1659 = vmatprep.subr.bf16.mxu0 0
  %1660 = vmatpush2.bf16.msra.mxu0 0
  %1661 = vmatprep.mubr.bf16.mxu0 0
  %1662 = vmatmul.mubr.bf16.gmra.mxu0 %v1574
  %v1663 = vpop.f32.mrf.mxu0
  %v1664 = vadd.f32 0.0, %v1663
  %v1665 = vpop.f32.mrf.mxu0
  %v1666 = vadd.f32 0.0, %v1665
  %v1667 = vpop.f32.mrf.mxu0
  %v1668 = vadd.f32 0.0, %v1667
  %v1669 = vpop.f32.mrf.mxu0
  %v1670 = vadd.f32 0.0, %v1669
  %1671 = vdwg.mxu0
  %1672 = vmatprep.subr.bf16.mxu0 %v923
  %1673 = vmatpush1.bf16.msra.mxu0 %v922
  %1674 = vmatprep.subr.bf16.mxu0 %v915
  %1675 = vmatpush1.bf16.msra.mxu0 %v914
  %1676 = vmatprep.subr.bf16.mxu0 %v907
  %1677 = vmatpush1.bf16.msra.mxu0 %v906
  %1678 = vmatprep.subr.bf16.mxu0 %v899
  %1679 = vmatpush1.bf16.msra.mxu0 %v898
  %1680 = vmatprep.subr.bf16.mxu0 %v891
  %1681 = vmatpush1.bf16.msra.mxu0 %v890
  %1682 = vmatprep.subr.bf16.mxu0 %v883
  %1683 = vmatpush1.bf16.msra.mxu0 %v882
  %1684 = vmatprep.subr.bf16.mxu0 %v875
  %1685 = vmatpush1.bf16.msra.mxu0 %v874
  %1686 = vmatprep.subr.bf16.mxu0 %v867
  %1687 = vmatpush1.bf16.msra.mxu0 %v866
  %1688 = vmatprep.subr.bf16.mxu0 0
  %1689 = vmatpush2.bf16.msra.mxu0 0
  %1690 = vmatprep.subr.bf16.mxu0 0
  %1691 = vmatpush2.bf16.msra.mxu0 0
  %1692 = vmatprep.subr.bf16.mxu0 0
  %1693 = vmatpush2.bf16.msra.mxu0 0
  %1694 = vmatprep.subr.bf16.mxu0 0
  %1695 = vmatpush2.bf16.msra.mxu0 0
  %1696 = vmatprep.subr.bf16.mxu0 0
  %1697 = vmatpush2.bf16.msra.mxu0 0
  %1698 = vmatprep.subr.bf16.mxu0 0
  %1699 = vmatpush2.bf16.msra.mxu0 0
  %1700 = vmatprep.subr.bf16.mxu0 0
  %1701 = vmatpush2.bf16.msra.mxu0 0
  %1702 = vmatprep.subr.bf16.mxu0 0
  %1703 = vmatpush2.bf16.msra.mxu0 0
  %1704 = vmatprep.mubr.bf16.mxu0 0
  %1705 = vmatmul.mubr.bf16.gmra.mxu0 %v1574
  %v1706 = vpop.f32.mrf.mxu0
  %v1707 = vadd.f32 0.0, %v1706
  %v1708 = vpop.f32.mrf.mxu0
  %v1709 = vadd.f32 0.0, %v1708
  %v1710 = vpop.f32.mrf.mxu0
  %v1711 = vadd.f32 0.0, %v1710
  %v1712 = vpop.f32.mrf.mxu0
  %v1713 = vadd.f32 0.0, %v1712
  %1714 = vdwg.mxu0
  %1715 = vmatprep.subr.bf16.mxu0 %v925
  %1716 = vmatpush1.bf16.msra.mxu0 %v924
  %1717 = vmatprep.subr.bf16.mxu0 %v917
  %1718 = vmatpush1.bf16.msra.mxu0 %v916
  %1719 = vmatprep.subr.bf16.mxu0 %v909
  %1720 = vmatpush1.bf16.msra.mxu0 %v908
  %1721 = vmatprep.subr.bf16.mxu0 %v901
  %1722 = vmatpush1.bf16.msra.mxu0 %v900
  %1723 = vmatprep.subr.bf16.mxu0 %v893
  %1724 = vmatpush1.bf16.msra.mxu0 %v892
  %1725 = vmatprep.subr.bf16.mxu0 %v885
  %1726 = vmatpush1.bf16.msra.mxu0 %v884
  %1727 = vmatprep.subr.bf16.mxu0 %v877
  %1728 = vmatpush1.bf16.msra.mxu0 %v876
  %1729 = vmatprep.subr.bf16.mxu0 %v869
  %1730 = vmatpush1.bf16.msra.mxu0 %v868
  %1731 = vmatprep.subr.bf16.mxu0 0
  %1732 = vmatpush2.bf16.msra.mxu0 0
  %1733 = vmatprep.subr.bf16.mxu0 0
  %1734 = vmatpush2.bf16.msra.mxu0 0
  %1735 = vmatprep.subr.bf16.mxu0 0
  %1736 = vmatpush2.bf16.msra.mxu0 0
  %1737 = vmatprep.subr.bf16.mxu0 0
  %1738 = vmatpush2.bf16.msra.mxu0 0
  %1739 = vmatprep.subr.bf16.mxu0 0
  %1740 = vmatpush2.bf16.msra.mxu0 0
  %1741 = vmatprep.subr.bf16.mxu0 0
  %1742 = vmatpush2.bf16.msra.mxu0 0
  %1743 = vmatprep.subr.bf16.mxu0 0
  %1744 = vmatpush2.bf16.msra.mxu0 0
  %1745 = vmatprep.subr.bf16.mxu0 0
  %1746 = vmatpush2.bf16.msra.mxu0 0
  %1747 = vmatprep.mubr.bf16.mxu0 0
  %1748 = vmatmul.mubr.bf16.gmra.mxu0 %v1574
  %v1749 = vpop.f32.mrf.mxu0
  %v1750 = vadd.f32 0.0, %v1749
  %v1751 = vpop.f32.mrf.mxu0
  %v1752 = vadd.f32 0.0, %v1751
  %v1753 = vpop.f32.mrf.mxu0
  %v1754 = vadd.f32 0.0, %v1753
  %v1755 = vpop.f32.mrf.mxu0
  %v1756 = vadd.f32 0.0, %v1755
  %1757 = vdwg.mxu0
  %s1758 = sld [smem:[#allocation7 + %s1585]]
  %p1759 = scmp.gt.s32.totalorder %s1758, 0
  %s1760 = scalar_lea.vmem [#allocation4], 128
  %v1761 = vld [vmem:[%s1760] sm:$0xff]
  %v1762 = vld [vmem:[%s1760 + $0x8] sm:$0xff]
  %v1763 = vld [vmem:[%s1760 + $0x10] sm:$0xff]
  %v1764 = vld [vmem:[%s1760 + $0x18] sm:$0xff]
  %v1765 = vld [vmem:[%s1760 + $0x20] sm:$0xff]
  %v1766 = vld [vmem:[%s1760 + $0x28] sm:$0xff]
  %v1767 = vld [vmem:[%s1760 + $0x30] sm:$0xff]
  %v1768 = vld [vmem:[%s1760 + $0x38] sm:$0xff]
  %v1769 = vadd.f32 %v1621, %v1761
  %v1770 = vadd.f32 %v1623, %v1762
  %v1771 = vadd.f32 %v1664, %v1763
  %v1772 = vadd.f32 %v1666, %v1764
  %v1773 = vadd.f32 %v1625, %v1765
  %v1774 = vadd.f32 %v1627, %v1766
  %v1775 = vadd.f32 %v1668, %v1767
  %v1776 = vadd.f32 %v1670, %v1768
  %v1777 = vadd.f32 %v1707, %v1184
  %v1778 = vadd.f32 %v1709, %v1188
  %v1779 = vadd.f32 %v1750, %v1192
  %v1780 = vadd.f32 %v1752, %v1196
  %v1781 = vadd.f32 %v1711, %v1184
  %v1782 = vadd.f32 %v1713, %v1188
  %v1783 = vadd.f32 %v1754, %v1192
  %v1784 = vadd.f32 %v1756, %v1196
  %s1785 = scalar_select %p1759, 1, 0
  %v1786 = vstv %s1785
  %vm1787 = vcmp.eq.s32.totalorder %v1786, 1
  %v1788 = vsel %vm1787, %v1769, %v1777
  %v1789 = vsel %vm1787, %v1770, %v1778
  %v1790 = vsel %vm1787, %v1771, %v1779
  %v1791 = vsel %vm1787, %v1772, %v1780
  %v1792 = vsel %vm1787, %v1773, %v1781
  %v1793 = vsel %vm1787, %v1774, %v1782
  %v1794 = vsel %vm1787, %v1775, %v1783
  %v1795 = vsel %vm1787, %v1776, %v1784
  %v1796 = vadd.f32 %v1788, %v1224
  %v1797 = vadd.f32 %v1789, %v1228
  %v1798 = vadd.f32 %v1790, %v1232
  %v1799 = vadd.f32 %v1791, %v1236
  %v1800 = vadd.f32 %v1792, %v1224
  %v1801 = vadd.f32 %v1793, %v1228
  %v1802 = vadd.f32 %v1794, %v1232
  %v1803 = vadd.f32 %v1795, %v1236
  %v1804 = vxor.u32 %v1796, 2147483648
  %v1805 = vxor.u32 %v1800, 2147483648
  %v1806 = vmul.f32 %v1804, 1.442695
  %v1807 = vpow.pop %v1806
  %v1808 = vmul.f32 %v1805, 1.442695
  %v1809 = vpow.pop %v1808
  %v1810 = vadd.f32 %v1807, 1.0
  %v1811 = vadd.f32 %v1809, 1.0
  %v1812 = vrcp.pop %v1810
  %v1813 = vmul.f32 1.0, %v1812
  %v1814 = vrcp.pop %v1811
  %v1815 = vmul.f32 1.0, %v1814
  %v1816 = vxor.u32 %v1797, 2147483648
  %v1817 = vxor.u32 %v1801, 2147483648
  %v1818 = vmul.f32 %v1816, 1.442695
  %v1819 = vpow.pop %v1818
  %v1820 = vmul.f32 %v1817, 1.442695
  %v1821 = vpow.pop %v1820
  %v1822 = vadd.f32 %v1819, 1.0
  %v1823 = vadd.f32 %v1821, 1.0
  %v1824 = vrcp.pop %v1822
  %v1825 = vmul.f32 1.0, %v1824
  %v1826 = vrcp.pop %v1823
  %v1827 = vmul.f32 1.0, %v1826
  %v1828 = vtanh.pop %v1798
  %v1829 = vtanh.pop %v1802
  %v1830 = vxor.u32 %v1799, 2147483648
  %v1831 = vxor.u32 %v1803, 2147483648
  %v1832 = vmul.f32 %v1830, 1.442695
  %v1833 = vpow.pop %v1832
  %v1834 = vmul.f32 %v1831, 1.442695
  %v1835 = vpow.pop %v1834
  %v1836 = vadd.f32 %v1833, 1.0
  %v1837 = vadd.f32 %v1835, 1.0
  %v1838 = vrcp.pop %v1836
  %v1839 = vmul.f32 1.0, %v1838
  %v1840 = vrcp.pop %v1837
  %v1841 = vmul.f32 1.0, %v1840
  %v1842 = vmul.f32 %v1825, %v1568
  %v1843 = vmul.f32 %v1827, %v1569
  %v1844 = vmul.f32 %v1813, %v1828
  %v1845 = vmul.f32 %v1815, %v1829
  %v1846 = vadd.f32 %v1842, %v1844
  %v1847 = vadd.f32 %v1843, %v1845
  %v1848 = vtanh.pop %v1846
  %v1849 = vtanh.pop %v1847
  %v1850 = vmul.f32 %v1839, %v1848
  %v1851 = vmul.f32 %v1841, %v1849
  %v1852 = vpack.c.bf16 %v1851, %v1850
  %v1854 = vunpack.c.l.b16 %v1852
  %v1855 = vunpack.c.h.b16 %v1852
  %v1856 = vpack.c.b16 %v1854, %v1854
  %v1857 = vpack.c.b16 %v1855, %v1855
  %s1860 = scalar_lea.vmem [#allocation5], 16
  %1861 = vst [vmem:[%s1860] sm:$0xf] %v1856
  %1862 = vst [vmem:[%s1860 + $0x4] sm:$0xf] %v1857
  %s1863 = sadd.s32 %s668, 3
  %1864 = vmatprep.subr.bf16.mxu0 %v919
  %1865 = vmatpush1.bf16.msra.mxu0 %v918
  %1866 = vmatprep.subr.bf16.mxu0 %v911
  %1867 = vmatpush1.bf16.msra.mxu0 %v910
  %1868 = vmatprep.subr.bf16.mxu0 %v903
  %1869 = vmatpush1.bf16.msra.mxu0 %v902
  %1870 = vmatprep.subr.bf16.mxu0 %v895
  %1871 = vmatpush1.bf16.msra.mxu0 %v894
  %1872 = vmatprep.subr.bf16.mxu0 %v887
  %1873 = vmatpush1.bf16.msra.mxu0 %v886
  %1874 = vmatprep.subr.bf16.mxu0 %v879
  %1875 = vmatpush1.bf16.msra.mxu0 %v878
  %1876 = vmatprep.subr.bf16.mxu0 %v871
  %1877 = vmatpush1.bf16.msra.mxu0 %v870
  %1878 = vmatprep.subr.bf16.mxu0 %v863
  %1879 = vmatpush1.bf16.msra.mxu0 %v862
  %1880 = vmatprep.subr.bf16.mxu0 0
  %1881 = vmatpush2.bf16.msra.mxu0 0
  %1882 = vmatprep.subr.bf16.mxu0 0
  %1883 = vmatpush2.bf16.msra.mxu0 0
  %1884 = vmatprep.subr.bf16.mxu0 0
  %1885 = vmatpush2.bf16.msra.mxu0 0
  %1886 = vmatprep.subr.bf16.mxu0 0
  %1887 = vmatpush2.bf16.msra.mxu0 0
  %1888 = vmatprep.subr.bf16.mxu0 0
  %1889 = vmatpush2.bf16.msra.mxu0 0
  %1890 = vmatprep.subr.bf16.mxu0 0
  %1891 = vmatpush2.bf16.msra.mxu0 0
  %1892 = vmatprep.subr.bf16.mxu0 0
  %1893 = vmatpush2.bf16.msra.mxu0 0
  %1894 = vmatprep.subr.bf16.mxu0 0
  %1895 = vmatpush2.bf16.msra.mxu0 0
  %1896 = vmatprep.mubr.bf16.mxu0 0
  %1897 = vmatmul.mubr.bf16.gmra.mxu0 %v1852
  %v1898 = vpop.f32.mrf.mxu0
  %v1899 = vadd.f32 0.0, %v1898
  %v1900 = vpop.f32.mrf.mxu0
  %v1901 = vadd.f32 0.0, %v1900
  %v1902 = vpop.f32.mrf.mxu0
  %v1903 = vadd.f32 0.0, %v1902
  %v1904 = vpop.f32.mrf.mxu0
  %v1905 = vadd.f32 0.0, %v1904
  %1906 = vdwg.mxu0
  %1907 = vmatprep.subr.bf16.mxu0 %v921
  %1908 = vmatpush1.bf16.msra.mxu0 %v920
  %1909 = vmatprep.subr.bf16.mxu0 %v913
  %1910 = vmatpush1.bf16.msra.mxu0 %v912
  %1911 = vmatprep.subr.bf16.mxu0 %v905
  %1912 = vmatpush1.bf16.msra.mxu0 %v904
  %1913 = vmatprep.subr.bf16.mxu0 %v897
  %1914 = vmatpush1.bf16.msra.mxu0 %v896
  %1915 = vmatprep.subr.bf16.mxu0 %v889
  %1916 = vmatpush1.bf16.msra.mxu0 %v888
  %1917 = vmatprep.subr.bf16.mxu0 %v881
  %1918 = vmatpush1.bf16.msra.mxu0 %v880
  %1919 = vmatprep.subr.bf16.mxu0 %v873
  %1920 = vmatpush1.bf16.msra.mxu0 %v872
  %1921 = vmatprep.subr.bf16.mxu0 %v865
  %1922 = vmatpush1.bf16.msra.mxu0 %v864
  %1923 = vmatprep.subr.bf16.mxu0 0
  %1924 = vmatpush2.bf16.msra.mxu0 0
  %1925 = vmatprep.subr.bf16.mxu0 0
  %1926 = vmatpush2.bf16.msra.mxu0 0
  %1927 = vmatprep.subr.bf16.mxu0 0
  %1928 = vmatpush2.bf16.msra.mxu0 0
  %1929 = vmatprep.subr.bf16.mxu0 0
  %1930 = vmatpush2.bf16.msra.mxu0 0
  %1931 = vmatprep.subr.bf16.mxu0 0
  %1932 = vmatpush2.bf16.msra.mxu0 0
  %1933 = vmatprep.subr.bf16.mxu0 0
  %1934 = vmatpush2.bf16.msra.mxu0 0
  %1935 = vmatprep.subr.bf16.mxu0 0
  %1936 = vmatpush2.bf16.msra.mxu0 0
  %1937 = vmatprep.subr.bf16.mxu0 0
  %1938 = vmatpush2.bf16.msra.mxu0 0
  %1939 = vmatprep.mubr.bf16.mxu0 0
  %1940 = vmatmul.mubr.bf16.gmra.mxu0 %v1852
  %v1941 = vpop.f32.mrf.mxu0
  %v1942 = vadd.f32 0.0, %v1941
  %v1943 = vpop.f32.mrf.mxu0
  %v1944 = vadd.f32 0.0, %v1943
  %v1945 = vpop.f32.mrf.mxu0
  %v1946 = vadd.f32 0.0, %v1945
  %v1947 = vpop.f32.mrf.mxu0
  %v1948 = vadd.f32 0.0, %v1947
  %1949 = vdwg.mxu0
  %1950 = vmatprep.subr.bf16.mxu0 %v923
  %1951 = vmatpush1.bf16.msra.mxu0 %v922
  %1952 = vmatprep.subr.bf16.mxu0 %v915
  %1953 = vmatpush1.bf16.msra.mxu0 %v914
  %1954 = vmatprep.subr.bf16.mxu0 %v907
  %1955 = vmatpush1.bf16.msra.mxu0 %v906
  %1956 = vmatprep.subr.bf16.mxu0 %v899
  %1957 = vmatpush1.bf16.msra.mxu0 %v898
  %1958 = vmatprep.subr.bf16.mxu0 %v891
  %1959 = vmatpush1.bf16.msra.mxu0 %v890
  %1960 = vmatprep.subr.bf16.mxu0 %v883
  %1961 = vmatpush1.bf16.msra.mxu0 %v882
  %1962 = vmatprep.subr.bf16.mxu0 %v875
  %1963 = vmatpush1.bf16.msra.mxu0 %v874
  %1964 = vmatprep.subr.bf16.mxu0 %v867
  %1965 = vmatpush1.bf16.msra.mxu0 %v866
  %1966 = vmatprep.subr.bf16.mxu0 0
  %1967 = vmatpush2.bf16.msra.mxu0 0
  %1968 = vmatprep.subr.bf16.mxu0 0
  %1969 = vmatpush2.bf16.msra.mxu0 0
  %1970 = vmatprep.subr.bf16.mxu0 0
  %1971 = vmatpush2.bf16.msra.mxu0 0
  %1972 = vmatprep.subr.bf16.mxu0 0
  %1973 = vmatpush2.bf16.msra.mxu0 0
  %1974 = vmatprep.subr.bf16.mxu0 0
  %1975 = vmatpush2.bf16.msra.mxu0 0
  %1976 = vmatprep.subr.bf16.mxu0 0
  %1977 = vmatpush2.bf16.msra.mxu0 0
  %1978 = vmatprep.subr.bf16.mxu0 0
  %1979 = vmatpush2.bf16.msra.mxu0 0
  %1980 = vmatprep.subr.bf16.mxu0 0
  %1981 = vmatpush2.bf16.msra.mxu0 0
  %1982 = vmatprep.mubr.bf16.mxu0 0
  %1983 = vmatmul.mubr.bf16.gmra.mxu0 %v1852
  %v1984 = vpop.f32.mrf.mxu0
  %v1985 = vadd.f32 0.0, %v1984
  %v1986 = vpop.f32.mrf.mxu0
  %v1987 = vadd.f32 0.0, %v1986
  %v1988 = vpop.f32.mrf.mxu0
  %v1989 = vadd.f32 0.0, %v1988
  %v1990 = vpop.f32.mrf.mxu0
  %v1991 = vadd.f32 0.0, %v1990
  %1992 = vdwg.mxu0
  %1993 = vmatprep.subr.bf16.mxu0 %v925
  %1994 = vmatpush1.bf16.msra.mxu0 %v924
  %1995 = vmatprep.subr.bf16.mxu0 %v917
  %1996 = vmatpush1.bf16.msra.mxu0 %v916
  %1997 = vmatprep.subr.bf16.mxu0 %v909
  %1998 = vmatpush1.bf16.msra.mxu0 %v908
  %1999 = vmatprep.subr.bf16.mxu0 %v901
  %2000 = vmatpush1.bf16.msra.mxu0 %v900
  %2001 = vmatprep.subr.bf16.mxu0 %v893
  %2002 = vmatpush1.bf16.msra.mxu0 %v892
  %2003 = vmatprep.subr.bf16.mxu0 %v885
  %2004 = vmatpush1.bf16.msra.mxu0 %v884
  %2005 = vmatprep.subr.bf16.mxu0 %v877
  %2006 = vmatpush1.bf16.msra.mxu0 %v876
  %2007 = vmatprep.subr.bf16.mxu0 %v869
  %2008 = vmatpush1.bf16.msra.mxu0 %v868
  %2009 = vmatprep.subr.bf16.mxu0 0
  %2010 = vmatpush2.bf16.msra.mxu0 0
  %2011 = vmatprep.subr.bf16.mxu0 0
  %2012 = vmatpush2.bf16.msra.mxu0 0
  %2013 = vmatprep.subr.bf16.mxu0 0
  %2014 = vmatpush2.bf16.msra.mxu0 0
  %2015 = vmatprep.subr.bf16.mxu0 0
  %2016 = vmatpush2.bf16.msra.mxu0 0
  %2017 = vmatprep.subr.bf16.mxu0 0
  %2018 = vmatpush2.bf16.msra.mxu0 0
  %2019 = vmatprep.subr.bf16.mxu0 0
  %2020 = vmatpush2.bf16.msra.mxu0 0
  %2021 = vmatprep.subr.bf16.mxu0 0
  %2022 = vmatpush2.bf16.msra.mxu0 0
  %2023 = vmatprep.subr.bf16.mxu0 0
  %2024 = vmatpush2.bf16.msra.mxu0 0
  %2025 = vmatprep.mubr.bf16.mxu0 0
  %2026 = vmatmul.mubr.bf16.gmra.mxu0 %v1852
  %v2027 = vpop.f32.mrf.mxu0
  %v2028 = vadd.f32 0.0, %v2027
  %v2029 = vpop.f32.mrf.mxu0
  %v2030 = vadd.f32 0.0, %v2029
  %v2031 = vpop.f32.mrf.mxu0
  %v2032 = vadd.f32 0.0, %v2031
  %v2033 = vpop.f32.mrf.mxu0
  %v2034 = vadd.f32 0.0, %v2033
  %2035 = vdwg.mxu0
  %s2036 = sld [smem:[#allocation7 + %s1863]]
  %p2037 = scmp.gt.s32.totalorder %s2036, 0
  %s2038 = scalar_lea.vmem [#allocation4], 192
  %v2039 = vld [vmem:[%s2038] sm:$0xff]
  %v2040 = vld [vmem:[%s2038 + $0x8] sm:$0xff]
  %v2041 = vld [vmem:[%s2038 + $0x10] sm:$0xff]
  %v2042 = vld [vmem:[%s2038 + $0x18] sm:$0xff]
  %v2043 = vld [vmem:[%s2038 + $0x20] sm:$0xff]
  %v2044 = vld [vmem:[%s2038 + $0x28] sm:$0xff]
  %v2045 = vld [vmem:[%s2038 + $0x30] sm:$0xff]
  %v2046 = vld [vmem:[%s2038 + $0x38] sm:$0xff]
  %v2047 = vadd.f32 %v1899, %v2039
  %v2048 = vadd.f32 %v1901, %v2040
  %v2049 = vadd.f32 %v1942, %v2041
  %v2050 = vadd.f32 %v1944, %v2042
  %v2051 = vadd.f32 %v1903, %v2043
  %v2052 = vadd.f32 %v1905, %v2044
  %v2053 = vadd.f32 %v1946, %v2045
  %v2054 = vadd.f32 %v1948, %v2046
  %v2055 = vadd.f32 %v1985, %v1184
  %v2056 = vadd.f32 %v1987, %v1188
  %v2057 = vadd.f32 %v2028, %v1192
  %v2058 = vadd.f32 %v2030, %v1196
  %v2059 = vadd.f32 %v1989, %v1184
  %v2060 = vadd.f32 %v1991, %v1188
  %v2061 = vadd.f32 %v2032, %v1192
  %v2062 = vadd.f32 %v2034, %v1196
  %s2063 = scalar_select %p2037, 1, 0
  %v2064 = vstv %s2063
  %vm2065 = vcmp.eq.s32.totalorder %v2064, 1
  %v2066 = vsel %vm2065, %v2047, %v2055
  %v2067 = vsel %vm2065, %v2048, %v2056
  %v2068 = vsel %vm2065, %v2049, %v2057
  %v2069 = vsel %vm2065, %v2050, %v2058
  %v2070 = vsel %vm2065, %v2051, %v2059
  %v2071 = vsel %vm2065, %v2052, %v2060
  %v2072 = vsel %vm2065, %v2053, %v2061
  %v2073 = vsel %vm2065, %v2054, %v2062
  %v2074 = vadd.f32 %v2066, %v1224
  %v2075 = vadd.f32 %v2067, %v1228
  %v2076 = vadd.f32 %v2068, %v1232
  %v2077 = vadd.f32 %v2069, %v1236
  %v2078 = vadd.f32 %v2070, %v1224
  %v2079 = vadd.f32 %v2071, %v1228
  %v2080 = vadd.f32 %v2072, %v1232
  %v2081 = vadd.f32 %v2073, %v1236
  %v2082 = vxor.u32 %v2074, 2147483648
  %v2083 = vxor.u32 %v2078, 2147483648
  %v2084 = vmul.f32 %v2082, 1.442695
  %v2085 = vpow.pop %v2084
  %v2086 = vmul.f32 %v2083, 1.442695
  %v2087 = vpow.pop %v2086
  %v2088 = vadd.f32 %v2085, 1.0
  %v2089 = vadd.f32 %v2087, 1.0
  %v2090 = vrcp.pop %v2088
  %v2091 = vmul.f32 1.0, %v2090
  %v2092 = vrcp.pop %v2089
  %v2093 = vmul.f32 1.0, %v2092
  %v2094 = vxor.u32 %v2075, 2147483648
  %v2095 = vxor.u32 %v2079, 2147483648
  %v2096 = vmul.f32 %v2094, 1.442695
  %v2097 = vpow.pop %v2096
  %v2098 = vmul.f32 %v2095, 1.442695
  %v2099 = vpow.pop %v2098
  %v2100 = vadd.f32 %v2097, 1.0
  %v2101 = vadd.f32 %v2099, 1.0
  %v2102 = vrcp.pop %v2100
  %v2103 = vmul.f32 1.0, %v2102
  %v2104 = vrcp.pop %v2101
  %v2105 = vmul.f32 1.0, %v2104
  %v2106 = vtanh.pop %v2076
  %v2107 = vtanh.pop %v2080
  %v2108 = vxor.u32 %v2077, 2147483648
  %v2109 = vxor.u32 %v2081, 2147483648
  %v2110 = vmul.f32 %v2108, 1.442695
  %v2111 = vpow.pop %v2110
  %v2112 = vmul.f32 %v2109, 1.442695
  %v2113 = vpow.pop %v2112
  %v2114 = vadd.f32 %v2111, 1.0
  %v2115 = vadd.f32 %v2113, 1.0
  %v2116 = vrcp.pop %v2114
  %v2117 = vmul.f32 1.0, %v2116
  %v2118 = vrcp.pop %v2115
  %v2119 = vmul.f32 1.0, %v2118
  %v2120 = vmul.f32 %v2103, %v1846
  %v2121 = vmul.f32 %v2105, %v1847
  %v2122 = vmul.f32 %v2091, %v2106
  %v2123 = vmul.f32 %v2093, %v2107
  %v2124 = vadd.f32 %v2120, %v2122
  %v2125 = vadd.f32 %v2121, %v2123
  %v2126 = vtanh.pop %v2124
  %v2127 = vtanh.pop %v2125
  %v2128 = vmul.f32 %v2117, %v2126
  %v2129 = vmul.f32 %v2119, %v2127
  %v2130 = vpack.c.bf16 %v2129, %v2128
  %v2132 = vunpack.c.l.b16 %v2130
  %v2133 = vunpack.c.h.b16 %v2130
  %v2134 = vpack.c.b16 %v2132, %v2132
  %v2135 = vpack.c.b16 %v2133, %v2133
  %s2138 = scalar_lea.vmem [#allocation5], 24
  %2139 = vst [vmem:[%s2138] sm:$0xf] %v2134
  %2140 = vst [vmem:[%s2138 + $0x4] sm:$0xf] %v2135
  %s2141 = sadd.s32 %s668, 4
  %2142 = vmatprep.subr.bf16.mxu0 %v919
  %2143 = vmatpush1.bf16.msra.mxu0 %v918
  %2144 = vmatprep.subr.bf16.mxu0 %v911
  %2145 = vmatpush1.bf16.msra.mxu0 %v910
  %2146 = vmatprep.subr.bf16.mxu0 %v903
  %2147 = vmatpush1.bf16.msra.mxu0 %v902
  %2148 = vmatprep.subr.bf16.mxu0 %v895
  %2149 = vmatpush1.bf16.msra.mxu0 %v894
  %2150 = vmatprep.subr.bf16.mxu0 %v887
  %2151 = vmatpush1.bf16.msra.mxu0 %v886
  %2152 = vmatprep.subr.bf16.mxu0 %v879
  %2153 = vmatpush1.bf16.msra.mxu0 %v878
  %2154 = vmatprep.subr.bf16.mxu0 %v871
  %2155 = vmatpush1.bf16.msra.mxu0 %v870
  %2156 = vmatprep.subr.bf16.mxu0 %v863
  %2157 = vmatpush1.bf16.msra.mxu0 %v862
  %2158 = vmatprep.subr.bf16.mxu0 0
  %2159 = vmatpush2.bf16.msra.mxu0 0
  %2160 = vmatprep.subr.bf16.mxu0 0
  %2161 = vmatpush2.bf16.msra.mxu0 0
  %2162 = vmatprep.subr.bf16.mxu0 0
  %2163 = vmatpush2.bf16.msra.mxu0 0
  %2164 = vmatprep.subr.bf16.mxu0 0
  %2165 = vmatpush2.bf16.msra.mxu0 0
  %2166 = vmatprep.subr.bf16.mxu0 0
  %2167 = vmatpush2.bf16.msra.mxu0 0
  %2168 = vmatprep.subr.bf16.mxu0 0
  %2169 = vmatpush2.bf16.msra.mxu0 0
  %2170 = vmatprep.subr.bf16.mxu0 0
  %2171 = vmatpush2.bf16.msra.mxu0 0
  %2172 = vmatprep.subr.bf16.mxu0 0
  %2173 = vmatpush2.bf16.msra.mxu0 0
  %2174 = vmatprep.mubr.bf16.mxu0 0
  %2175 = vmatmul.mubr.bf16.gmra.mxu0 %v2130
  %v2176 = vpop.f32.mrf.mxu0
  %v2177 = vadd.f32 0.0, %v2176
  %v2178 = vpop.f32.mrf.mxu0
  %v2179 = vadd.f32 0.0, %v2178
  %v2180 = vpop.f32.mrf.mxu0
  %v2181 = vadd.f32 0.0, %v2180
  %v2182 = vpop.f32.mrf.mxu0
  %v2183 = vadd.f32 0.0, %v2182
  %2184 = vdwg.mxu0
  %2185 = vmatprep.subr.bf16.mxu0 %v921
  %2186 = vmatpush1.bf16.msra.mxu0 %v920
  %2187 = vmatprep.subr.bf16.mxu0 %v913
  %2188 = vmatpush1.bf16.msra.mxu0 %v912
  %2189 = vmatprep.subr.bf16.mxu0 %v905
  %2190 = vmatpush1.bf16.msra.mxu0 %v904
  %2191 = vmatprep.subr.bf16.mxu0 %v897
  %2192 = vmatpush1.bf16.msra.mxu0 %v896
  %2193 = vmatprep.subr.bf16.mxu0 %v889
  %2194 = vmatpush1.bf16.msra.mxu0 %v888
  %2195 = vmatprep.subr.bf16.mxu0 %v881
  %2196 = vmatpush1.bf16.msra.mxu0 %v880
  %2197 = vmatprep.subr.bf16.mxu0 %v873
  %2198 = vmatpush1.bf16.msra.mxu0 %v872
  %2199 = vmatprep.subr.bf16.mxu0 %v865
  %2200 = vmatpush1.bf16.msra.mxu0 %v864
  %2201 = vmatprep.subr.bf16.mxu0 0
  %2202 = vmatpush2.bf16.msra.mxu0 0
  %2203 = vmatprep.subr.bf16.mxu0 0
  %2204 = vmatpush2.bf16.msra.mxu0 0
  %2205 = vmatprep.subr.bf16.mxu0 0
  %2206 = vmatpush2.bf16.msra.mxu0 0
  %2207 = vmatprep.subr.bf16.mxu0 0
  %2208 = vmatpush2.bf16.msra.mxu0 0
  %2209 = vmatprep.subr.bf16.mxu0 0
  %2210 = vmatpush2.bf16.msra.mxu0 0
  %2211 = vmatprep.subr.bf16.mxu0 0
  %2212 = vmatpush2.bf16.msra.mxu0 0
  %2213 = vmatprep.subr.bf16.mxu0 0
  %2214 = vmatpush2.bf16.msra.mxu0 0
  %2215 = vmatprep.subr.bf16.mxu0 0
  %2216 = vmatpush2.bf16.msra.mxu0 0
  %2217 = vmatprep.mubr.bf16.mxu0 0
  %2218 = vmatmul.mubr.bf16.gmra.mxu0 %v2130
  %v2219 = vpop.f32.mrf.mxu0
  %v2220 = vadd.f32 0.0, %v2219
  %v2221 = vpop.f32.mrf.mxu0
  %v2222 = vadd.f32 0.0, %v2221
  %v2223 = vpop.f32.mrf.mxu0
  %v2224 = vadd.f32 0.0, %v2223
  %v2225 = vpop.f32.mrf.mxu0
  %v2226 = vadd.f32 0.0, %v2225
  %2227 = vdwg.mxu0
  %2228 = vmatprep.subr.bf16.mxu0 %v923
  %2229 = vmatpush1.bf16.msra.mxu0 %v922
  %2230 = vmatprep.subr.bf16.mxu0 %v915
  %2231 = vmatpush1.bf16.msra.mxu0 %v914
  %2232 = vmatprep.subr.bf16.mxu0 %v907
  %2233 = vmatpush1.bf16.msra.mxu0 %v906
  %2234 = vmatprep.subr.bf16.mxu0 %v899
  %2235 = vmatpush1.bf16.msra.mxu0 %v898
  %2236 = vmatprep.subr.bf16.mxu0 %v891
  %2237 = vmatpush1.bf16.msra.mxu0 %v890
  %2238 = vmatprep.subr.bf16.mxu0 %v883
  %2239 = vmatpush1.bf16.msra.mxu0 %v882
  %2240 = vmatprep.subr.bf16.mxu0 %v875
  %2241 = vmatpush1.bf16.msra.mxu0 %v874
  %2242 = vmatprep.subr.bf16.mxu0 %v867
  %2243 = vmatpush1.bf16.msra.mxu0 %v866
  %2244 = vmatprep.subr.bf16.mxu0 0
  %2245 = vmatpush2.bf16.msra.mxu0 0
  %2246 = vmatprep.subr.bf16.mxu0 0
  %2247 = vmatpush2.bf16.msra.mxu0 0
  %2248 = vmatprep.subr.bf16.mxu0 0
  %2249 = vmatpush2.bf16.msra.mxu0 0
  %2250 = vmatprep.subr.bf16.mxu0 0
  %2251 = vmatpush2.bf16.msra.mxu0 0
  %2252 = vmatprep.subr.bf16.mxu0 0
  %2253 = vmatpush2.bf16.msra.mxu0 0
  %2254 = vmatprep.subr.bf16.mxu0 0
  %2255 = vmatpush2.bf16.msra.mxu0 0
  %2256 = vmatprep.subr.bf16.mxu0 0
  %2257 = vmatpush2.bf16.msra.mxu0 0
  %2258 = vmatprep.subr.bf16.mxu0 0
  %2259 = vmatpush2.bf16.msra.mxu0 0
  %2260 = vmatprep.mubr.bf16.mxu0 0
  %2261 = vmatmul.mubr.bf16.gmra.mxu0 %v2130
  %v2262 = vpop.f32.mrf.mxu0
  %v2263 = vadd.f32 0.0, %v2262
  %v2264 = vpop.f32.mrf.mxu0
  %v2265 = vadd.f32 0.0, %v2264
  %v2266 = vpop.f32.mrf.mxu0
  %v2267 = vadd.f32 0.0, %v2266
  %v2268 = vpop.f32.mrf.mxu0
  %v2269 = vadd.f32 0.0, %v2268
  %2270 = vdwg.mxu0
  %2271 = vmatprep.subr.bf16.mxu0 %v925
  %2272 = vmatpush1.bf16.msra.mxu0 %v924
  %2273 = vmatprep.subr.bf16.mxu0 %v917
  %2274 = vmatpush1.bf16.msra.mxu0 %v916
  %2275 = vmatprep.subr.bf16.mxu0 %v909
  %2276 = vmatpush1.bf16.msra.mxu0 %v908
  %2277 = vmatprep.subr.bf16.mxu0 %v901
  %2278 = vmatpush1.bf16.msra.mxu0 %v900
  %2279 = vmatprep.subr.bf16.mxu0 %v893
  %2280 = vmatpush1.bf16.msra.mxu0 %v892
  %2281 = vmatprep.subr.bf16.mxu0 %v885
  %2282 = vmatpush1.bf16.msra.mxu0 %v884
  %2283 = vmatprep.subr.bf16.mxu0 %v877
  %2284 = vmatpush1.bf16.msra.mxu0 %v876
  %2285 = vmatprep.subr.bf16.mxu0 %v869
  %2286 = vmatpush1.bf16.msra.mxu0 %v868
  %2287 = vmatprep.subr.bf16.mxu0 0
  %2288 = vmatpush2.bf16.msra.mxu0 0
  %2289 = vmatprep.subr.bf16.mxu0 0
  %2290 = vmatpush2.bf16.msra.mxu0 0
  %2291 = vmatprep.subr.bf16.mxu0 0
  %2292 = vmatpush2.bf16.msra.mxu0 0
  %2293 = vmatprep.subr.bf16.mxu0 0
  %2294 = vmatpush2.bf16.msra.mxu0 0
  %2295 = vmatprep.subr.bf16.mxu0 0
  %2296 = vmatpush2.bf16.msra.mxu0 0
  %2297 = vmatprep.subr.bf16.mxu0 0
  %2298 = vmatpush2.bf16.msra.mxu0 0
  %2299 = vmatprep.subr.bf16.mxu0 0
  %2300 = vmatpush2.bf16.msra.mxu0 0
  %2301 = vmatprep.subr.bf16.mxu0 0
  %2302 = vmatpush2.bf16.msra.mxu0 0
  %2303 = vmatprep.mubr.bf16.mxu0 0
  %2304 = vmatmul.mubr.bf16.gmra.mxu0 %v2130
  %v2305 = vpop.f32.mrf.mxu0
  %v2306 = vadd.f32 0.0, %v2305
  %v2307 = vpop.f32.mrf.mxu0
  %v2308 = vadd.f32 0.0, %v2307
  %v2309 = vpop.f32.mrf.mxu0
  %v2310 = vadd.f32 0.0, %v2309
  %v2311 = vpop.f32.mrf.mxu0
  %v2312 = vadd.f32 0.0, %v2311
  %2313 = vdwg.mxu0
  %s2314 = sld [smem:[#allocation7 + %s2141]]
  %p2315 = scmp.gt.s32.totalorder %s2314, 0
  %s2316 = scalar_lea.vmem [#allocation4], 256
  %v2317 = vld [vmem:[%s2316] sm:$0xff]
  %v2318 = vld [vmem:[%s2316 + $0x8] sm:$0xff]
  %v2319 = vld [vmem:[%s2316 + $0x10] sm:$0xff]
  %v2320 = vld [vmem:[%s2316 + $0x18] sm:$0xff]
  %v2321 = vld [vmem:[%s2316 + $0x20] sm:$0xff]
  %v2322 = vld [vmem:[%s2316 + $0x28] sm:$0xff]
  %v2323 = vld [vmem:[%s2316 + $0x30] sm:$0xff]
  %v2324 = vld [vmem:[%s2316 + $0x38] sm:$0xff]
  %v2325 = vadd.f32 %v2177, %v2317
  %v2326 = vadd.f32 %v2179, %v2318
  %v2327 = vadd.f32 %v2220, %v2319
  %v2328 = vadd.f32 %v2222, %v2320
  %v2329 = vadd.f32 %v2181, %v2321
  %v2330 = vadd.f32 %v2183, %v2322
  %v2331 = vadd.f32 %v2224, %v2323
  %v2332 = vadd.f32 %v2226, %v2324
  %v2333 = vadd.f32 %v2263, %v1184
  %v2334 = vadd.f32 %v2265, %v1188
  %v2335 = vadd.f32 %v2306, %v1192
  %v2336 = vadd.f32 %v2308, %v1196
  %v2337 = vadd.f32 %v2267, %v1184
  %v2338 = vadd.f32 %v2269, %v1188
  %v2339 = vadd.f32 %v2310, %v1192
  %v2340 = vadd.f32 %v2312, %v1196
  %s2341 = scalar_select %p2315, 1, 0
  %v2342 = vstv %s2341
  %vm2343 = vcmp.eq.s32.totalorder %v2342, 1
  %v2344 = vsel %vm2343, %v2325, %v2333
  %v2345 = vsel %vm2343, %v2326, %v2334
  %v2346 = vsel %vm2343, %v2327, %v2335
  %v2347 = vsel %vm2343, %v2328, %v2336
  %v2348 = vsel %vm2343, %v2329, %v2337
  %v2349 = vsel %vm2343, %v2330, %v2338
  %v2350 = vsel %vm2343, %v2331, %v2339
  %v2351 = vsel %vm2343, %v2332, %v2340
  %v2352 = vadd.f32 %v2344, %v1224
  %v2353 = vadd.f32 %v2345, %v1228
  %v2354 = vadd.f32 %v2346, %v1232
  %v2355 = vadd.f32 %v2347, %v1236
  %v2356 = vadd.f32 %v2348, %v1224
  %v2357 = vadd.f32 %v2349, %v1228
  %v2358 = vadd.f32 %v2350, %v1232
  %v2359 = vadd.f32 %v2351, %v1236
  %v2360 = vxor.u32 %v2352, 2147483648
  %v2361 = vxor.u32 %v2356, 2147483648
  %v2362 = vmul.f32 %v2360, 1.442695
  %v2363 = vpow.pop %v2362
  %v2364 = vmul.f32 %v2361, 1.442695
  %v2365 = vpow.pop %v2364
  %v2366 = vadd.f32 %v2363, 1.0
  %v2367 = vadd.f32 %v2365, 1.0
  %v2368 = vrcp.pop %v2366
  %v2369 = vmul.f32 1.0, %v2368
  %v2370 = vrcp.pop %v2367
  %v2371 = vmul.f32 1.0, %v2370
  %v2372 = vxor.u32 %v2353, 2147483648
  %v2373 = vxor.u32 %v2357, 2147483648
  %v2374 = vmul.f32 %v2372, 1.442695
  %v2375 = vpow.pop %v2374
  %v2376 = vmul.f32 %v2373, 1.442695
  %v2377 = vpow.pop %v2376
  %v2378 = vadd.f32 %v2375, 1.0
  %v2379 = vadd.f32 %v2377, 1.0
  %v2380 = vrcp.pop %v2378
  %v2381 = vmul.f32 1.0, %v2380
  %v2382 = vrcp.pop %v2379
  %v2383 = vmul.f32 1.0, %v2382
  %v2384 = vtanh.pop %v2354
  %v2385 = vtanh.pop %v2358
  %v2386 = vxor.u32 %v2355, 2147483648
  %v2387 = vxor.u32 %v2359, 2147483648
  %v2388 = vmul.f32 %v2386, 1.442695
  %v2389 = vpow.pop %v2388
  %v2390 = vmul.f32 %v2387, 1.442695
  %v2391 = vpow.pop %v2390
  %v2392 = vadd.f32 %v2389, 1.0
  %v2393 = vadd.f32 %v2391, 1.0
  %v2394 = vrcp.pop %v2392
  %v2395 = vmul.f32 1.0, %v2394
  %v2396 = vrcp.pop %v2393
  %v2397 = vmul.f32 1.0, %v2396
  %v2398 = vmul.f32 %v2381, %v2124
  %v2399 = vmul.f32 %v2383, %v2125
  %v2400 = vmul.f32 %v2369, %v2384
  %v2401 = vmul.f32 %v2371, %v2385
  %v2402 = vadd.f32 %v2398, %v2400
  %v2403 = vadd.f32 %v2399, %v2401
  %v2404 = vtanh.pop %v2402
  %v2405 = vtanh.pop %v2403
  %v2406 = vmul.f32 %v2395, %v2404
  %v2407 = vmul.f32 %v2397, %v2405
  %v2408 = vpack.c.bf16 %v2407, %v2406
  %v2410 = vunpack.c.l.b16 %v2408
  %v2411 = vunpack.c.h.b16 %v2408
  %v2412 = vpack.c.b16 %v2410, %v2410
  %v2413 = vpack.c.b16 %v2411, %v2411
  %s2416 = scalar_lea.vmem [#allocation5], 32
  %2417 = vst [vmem:[%s2416] sm:$0xf] %v2412
  %2418 = vst [vmem:[%s2416 + $0x4] sm:$0xf] %v2413
  %s2419 = sadd.s32 %s668, 5
  %2420 = vmatprep.subr.bf16.mxu0 %v919
  %2421 = vmatpush1.bf16.msra.mxu0 %v918
  %2422 = vmatprep.subr.bf16.mxu0 %v911
  %2423 = vmatpush1.bf16.msra.mxu0 %v910
  %2424 = vmatprep.subr.bf16.mxu0 %v903
  %2425 = vmatpush1.bf16.msra.mxu0 %v902
  %2426 = vmatprep.subr.bf16.mxu0 %v895
  %2427 = vmatpush1.bf16.msra.mxu0 %v894
  %2428 = vmatprep.subr.bf16.mxu0 %v887
  %2429 = vmatpush1.bf16.msra.mxu0 %v886
  %2430 = vmatprep.subr.bf16.mxu0 %v879
  %2431 = vmatpush1.bf16.msra.mxu0 %v878
  %2432 = vmatprep.subr.bf16.mxu0 %v871
  %2433 = vmatpush1.bf16.msra.mxu0 %v870
  %2434 = vmatprep.subr.bf16.mxu0 %v863
  %2435 = vmatpush1.bf16.msra.mxu0 %v862
  %2436 = vmatprep.subr.bf16.mxu0 0
  %2437 = vmatpush2.bf16.msra.mxu0 0
  %2438 = vmatprep.subr.bf16.mxu0 0
  %2439 = vmatpush2.bf16.msra.mxu0 0
  %2440 = vmatprep.subr.bf16.mxu0 0
  %2441 = vmatpush2.bf16.msra.mxu0 0
  %2442 = vmatprep.subr.bf16.mxu0 0
  %2443 = vmatpush2.bf16.msra.mxu0 0
  %2444 = vmatprep.subr.bf16.mxu0 0
  %2445 = vmatpush2.bf16.msra.mxu0 0
  %2446 = vmatprep.subr.bf16.mxu0 0
  %2447 = vmatpush2.bf16.msra.mxu0 0
  %2448 = vmatprep.subr.bf16.mxu0 0
  %2449 = vmatpush2.bf16.msra.mxu0 0
  %2450 = vmatprep.subr.bf16.mxu0 0
  %2451 = vmatpush2.bf16.msra.mxu0 0
  %2452 = vmatprep.mubr.bf16.mxu0 0
  %2453 = vmatmul.mubr.bf16.gmra.mxu0 %v2408
  %v2454 = vpop.f32.mrf.mxu0
  %v2455 = vadd.f32 0.0, %v2454
  %v2456 = vpop.f32.mrf.mxu0
  %v2457 = vadd.f32 0.0, %v2456
  %v2458 = vpop.f32.mrf.mxu0
  %v2459 = vadd.f32 0.0, %v2458
  %v2460 = vpop.f32.mrf.mxu0
  %v2461 = vadd.f32 0.0, %v2460
  %2462 = vdwg.mxu0
  %2463 = vmatprep.subr.bf16.mxu0 %v921
  %2464 = vmatpush1.bf16.msra.mxu0 %v920
  %2465 = vmatprep.subr.bf16.mxu0 %v913
  %2466 = vmatpush1.bf16.msra.mxu0 %v912
  %2467 = vmatprep.subr.bf16.mxu0 %v905
  %2468 = vmatpush1.bf16.msra.mxu0 %v904
  %2469 = vmatprep.subr.bf16.mxu0 %v897
  %2470 = vmatpush1.bf16.msra.mxu0 %v896
  %2471 = vmatprep.subr.bf16.mxu0 %v889
  %2472 = vmatpush1.bf16.msra.mxu0 %v888
  %2473 = vmatprep.subr.bf16.mxu0 %v881
  %2474 = vmatpush1.bf16.msra.mxu0 %v880
  %2475 = vmatprep.subr.bf16.mxu0 %v873
  %2476 = vmatpush1.bf16.msra.mxu0 %v872
  %2477 = vmatprep.subr.bf16.mxu0 %v865
  %2478 = vmatpush1.bf16.msra.mxu0 %v864
  %2479 = vmatprep.subr.bf16.mxu0 0
  %2480 = vmatpush2.bf16.msra.mxu0 0
  %2481 = vmatprep.subr.bf16.mxu0 0
  %2482 = vmatpush2.bf16.msra.mxu0 0
  %2483 = vmatprep.subr.bf16.mxu0 0
  %2484 = vmatpush2.bf16.msra.mxu0 0
  %2485 = vmatprep.subr.bf16.mxu0 0
  %2486 = vmatpush2.bf16.msra.mxu0 0
  %2487 = vmatprep.subr.bf16.mxu0 0
  %2488 = vmatpush2.bf16.msra.mxu0 0
  %2489 = vmatprep.subr.bf16.mxu0 0
  %2490 = vmatpush2.bf16.msra.mxu0 0
  %2491 = vmatprep.subr.bf16.mxu0 0
  %2492 = vmatpush2.bf16.msra.mxu0 0
  %2493 = vmatprep.subr.bf16.mxu0 0
  %2494 = vmatpush2.bf16.msra.mxu0 0
  %2495 = vmatprep.mubr.bf16.mxu0 0
  %2496 = vmatmul.mubr.bf16.gmra.mxu0 %v2408
  %v2497 = vpop.f32.mrf.mxu0
  %v2498 = vadd.f32 0.0, %v2497
  %v2499 = vpop.f32.mrf.mxu0
  %v2500 = vadd.f32 0.0, %v2499
  %v2501 = vpop.f32.mrf.mxu0
  %v2502 = vadd.f32 0.0, %v2501
  %v2503 = vpop.f32.mrf.mxu0
  %v2504 = vadd.f32 0.0, %v2503
  %2505 = vdwg.mxu0
  %2506 = vmatprep.subr.bf16.mxu0 %v923
  %2507 = vmatpush1.bf16.msra.mxu0 %v922
  %2508 = vmatprep.subr.bf16.mxu0 %v915
  %2509 = vmatpush1.bf16.msra.mxu0 %v914
  %2510 = vmatprep.subr.bf16.mxu0 %v907
  %2511 = vmatpush1.bf16.msra.mxu0 %v906
  %2512 = vmatprep.subr.bf16.mxu0 %v899
  %2513 = vmatpush1.bf16.msra.mxu0 %v898
  %2514 = vmatprep.subr.bf16.mxu0 %v891
  %2515 = vmatpush1.bf16.msra.mxu0 %v890
  %2516 = vmatprep.subr.bf16.mxu0 %v883
  %2517 = vmatpush1.bf16.msra.mxu0 %v882
  %2518 = vmatprep.subr.bf16.mxu0 %v875
  %2519 = vmatpush1.bf16.msra.mxu0 %v874
  %2520 = vmatprep.subr.bf16.mxu0 %v867
  %2521 = vmatpush1.bf16.msra.mxu0 %v866
  %2522 = vmatprep.subr.bf16.mxu0 0
  %2523 = vmatpush2.bf16.msra.mxu0 0
  %2524 = vmatprep.subr.bf16.mxu0 0
  %2525 = vmatpush2.bf16.msra.mxu0 0
  %2526 = vmatprep.subr.bf16.mxu0 0
  %2527 = vmatpush2.bf16.msra.mxu0 0
  %2528 = vmatprep.subr.bf16.mxu0 0
  %2529 = vmatpush2.bf16.msra.mxu0 0
  %2530 = vmatprep.subr.bf16.mxu0 0
  %2531 = vmatpush2.bf16.msra.mxu0 0
  %2532 = vmatprep.subr.bf16.mxu0 0
  %2533 = vmatpush2.bf16.msra.mxu0 0
  %2534 = vmatprep.subr.bf16.mxu0 0
  %2535 = vmatpush2.bf16.msra.mxu0 0
  %2536 = vmatprep.subr.bf16.mxu0 0
  %2537 = vmatpush2.bf16.msra.mxu0 0
  %2538 = vmatprep.mubr.bf16.mxu0 0
  %2539 = vmatmul.mubr.bf16.gmra.mxu0 %v2408
  %v2540 = vpop.f32.mrf.mxu0
  %v2541 = vadd.f32 0.0, %v2540
  %v2542 = vpop.f32.mrf.mxu0
  %v2543 = vadd.f32 0.0, %v2542
  %v2544 = vpop.f32.mrf.mxu0
  %v2545 = vadd.f32 0.0, %v2544
  %v2546 = vpop.f32.mrf.mxu0
  %v2547 = vadd.f32 0.0, %v2546
  %2548 = vdwg.mxu0
  %2549 = vmatprep.subr.bf16.mxu0 %v925
  %2550 = vmatpush1.bf16.msra.mxu0 %v924
  %2551 = vmatprep.subr.bf16.mxu0 %v917
  %2552 = vmatpush1.bf16.msra.mxu0 %v916
  %2553 = vmatprep.subr.bf16.mxu0 %v909
  %2554 = vmatpush1.bf16.msra.mxu0 %v908
  %2555 = vmatprep.subr.bf16.mxu0 %v901
  %2556 = vmatpush1.bf16.msra.mxu0 %v900
  %2557 = vmatprep.subr.bf16.mxu0 %v893
  %2558 = vmatpush1.bf16.msra.mxu0 %v892
  %2559 = vmatprep.subr.bf16.mxu0 %v885
  %2560 = vmatpush1.bf16.msra.mxu0 %v884
  %2561 = vmatprep.subr.bf16.mxu0 %v877
  %2562 = vmatpush1.bf16.msra.mxu0 %v876
  %2563 = vmatprep.subr.bf16.mxu0 %v869
  %2564 = vmatpush1.bf16.msra.mxu0 %v868
  %2565 = vmatprep.subr.bf16.mxu0 0
  %2566 = vmatpush2.bf16.msra.mxu0 0
  %2567 = vmatprep.subr.bf16.mxu0 0
  %2568 = vmatpush2.bf16.msra.mxu0 0
  %2569 = vmatprep.subr.bf16.mxu0 0
  %2570 = vmatpush2.bf16.msra.mxu0 0
  %2571 = vmatprep.subr.bf16.mxu0 0
  %2572 = vmatpush2.bf16.msra.mxu0 0
  %2573 = vmatprep.subr.bf16.mxu0 0
  %2574 = vmatpush2.bf16.msra.mxu0 0
  %2575 = vmatprep.subr.bf16.mxu0 0
  %2576 = vmatpush2.bf16.msra.mxu0 0
  %2577 = vmatprep.subr.bf16.mxu0 0
  %2578 = vmatpush2.bf16.msra.mxu0 0
  %2579 = vmatprep.subr.bf16.mxu0 0
  %2580 = vmatpush2.bf16.msra.mxu0 0
  %2581 = vmatprep.mubr.bf16.mxu0 0
  %2582 = vmatmul.mubr.bf16.gmra.mxu0 %v2408
  %v2583 = vpop.f32.mrf.mxu0
  %v2584 = vadd.f32 0.0, %v2583
  %v2585 = vpop.f32.mrf.mxu0
  %v2586 = vadd.f32 0.0, %v2585
  %v2587 = vpop.f32.mrf.mxu0
  %v2588 = vadd.f32 0.0, %v2587
  %v2589 = vpop.f32.mrf.mxu0
  %v2590 = vadd.f32 0.0, %v2589
  %2591 = vdwg.mxu0
  %s2592 = sld [smem:[#allocation7 + %s2419]]
  %p2593 = scmp.gt.s32.totalorder %s2592, 0
  %s2594 = scalar_lea.vmem [#allocation4], 320
  %v2595 = vld [vmem:[%s2594] sm:$0xff]
  %v2596 = vld [vmem:[%s2594 + $0x8] sm:$0xff]
  %v2597 = vld [vmem:[%s2594 + $0x10] sm:$0xff]
  %v2598 = vld [vmem:[%s2594 + $0x18] sm:$0xff]
  %v2599 = vld [vmem:[%s2594 + $0x20] sm:$0xff]
  %v2600 = vld [vmem:[%s2594 + $0x28] sm:$0xff]
  %v2601 = vld [vmem:[%s2594 + $0x30] sm:$0xff]
  %v2602 = vld [vmem:[%s2594 + $0x38] sm:$0xff]
  %v2603 = vadd.f32 %v2455, %v2595
  %v2604 = vadd.f32 %v2457, %v2596
  %v2605 = vadd.f32 %v2498, %v2597
  %v2606 = vadd.f32 %v2500, %v2598
  %v2607 = vadd.f32 %v2459, %v2599
  %v2608 = vadd.f32 %v2461, %v2600
  %v2609 = vadd.f32 %v2502, %v2601
  %v2610 = vadd.f32 %v2504, %v2602
  %v2611 = vadd.f32 %v2541, %v1184
  %v2612 = vadd.f32 %v2543, %v1188
  %v2613 = vadd.f32 %v2584, %v1192
  %v2614 = vadd.f32 %v2586, %v1196
  %v2615 = vadd.f32 %v2545, %v1184
  %v2616 = vadd.f32 %v2547, %v1188
  %v2617 = vadd.f32 %v2588, %v1192
  %v2618 = vadd.f32 %v2590, %v1196
  %s2619 = scalar_select %p2593, 1, 0
  %v2620 = vstv %s2619
  %vm2621 = vcmp.eq.s32.totalorder %v2620, 1
  %v2622 = vsel %vm2621, %v2603, %v2611
  %v2623 = vsel %vm2621, %v2604, %v2612
  %v2624 = vsel %vm2621, %v2605, %v2613
  %v2625 = vsel %vm2621, %v2606, %v2614
  %v2626 = vsel %vm2621, %v2607, %v2615
  %v2627 = vsel %vm2621, %v2608, %v2616
  %v2628 = vsel %vm2621, %v2609, %v2617
  %v2629 = vsel %vm2621, %v2610, %v2618
  %v2630 = vadd.f32 %v2622, %v1224
  %v2631 = vadd.f32 %v2623, %v1228
  %v2632 = vadd.f32 %v2624, %v1232
  %v2633 = vadd.f32 %v2625, %v1236
  %v2634 = vadd.f32 %v2626, %v1224
  %v2635 = vadd.f32 %v2627, %v1228
  %v2636 = vadd.f32 %v2628, %v1232
  %v2637 = vadd.f32 %v2629, %v1236
  %v2638 = vxor.u32 %v2630, 2147483648
  %v2639 = vxor.u32 %v2634, 2147483648
  %v2640 = vmul.f32 %v2638, 1.442695
  %v2641 = vpow.pop %v2640
  %v2642 = vmul.f32 %v2639, 1.442695
  %v2643 = vpow.pop %v2642
  %v2644 = vadd.f32 %v2641, 1.0
  %v2645 = vadd.f32 %v2643, 1.0
  %v2646 = vrcp.pop %v2644
  %v2647 = vmul.f32 1.0, %v2646
  %v2648 = vrcp.pop %v2645
  %v2649 = vmul.f32 1.0, %v2648
  %v2650 = vxor.u32 %v2631, 2147483648
  %v2651 = vxor.u32 %v2635, 2147483648
  %v2652 = vmul.f32 %v2650, 1.442695
  %v2653 = vpow.pop %v2652
  %v2654 = vmul.f32 %v2651, 1.442695
  %v2655 = vpow.pop %v2654
  %v2656 = vadd.f32 %v2653, 1.0
  %v2657 = vadd.f32 %v2655, 1.0
  %v2658 = vrcp.pop %v2656
  %v2659 = vmul.f32 1.0, %v2658
  %v2660 = vrcp.pop %v2657
  %v2661 = vmul.f32 1.0, %v2660
  %v2662 = vtanh.pop %v2632
  %v2663 = vtanh.pop %v2636
  %v2664 = vxor.u32 %v2633, 2147483648
  %v2665 = vxor.u32 %v2637, 2147483648
  %v2666 = vmul.f32 %v2664, 1.442695
  %v2667 = vpow.pop %v2666
  %v2668 = vmul.f32 %v2665, 1.442695
  %v2669 = vpow.pop %v2668
  %v2670 = vadd.f32 %v2667, 1.0
  %v2671 = vadd.f32 %v2669, 1.0
  %v2672 = vrcp.pop %v2670
  %v2673 = vmul.f32 1.0, %v2672
  %v2674 = vrcp.pop %v2671
  %v2675 = vmul.f32 1.0, %v2674
  %v2676 = vmul.f32 %v2659, %v2402
  %v2677 = vmul.f32 %v2661, %v2403
  %v2678 = vmul.f32 %v2647, %v2662
  %v2679 = vmul.f32 %v2649, %v2663
  %v2680 = vadd.f32 %v2676, %v2678
  %v2681 = vadd.f32 %v2677, %v2679
  %v2682 = vtanh.pop %v2680
  %v2683 = vtanh.pop %v2681
  %v2684 = vmul.f32 %v2673, %v2682
  %v2685 = vmul.f32 %v2675, %v2683
  %v2686 = vpack.c.bf16 %v2685, %v2684
  %v2688 = vunpack.c.l.b16 %v2686
  %v2689 = vunpack.c.h.b16 %v2686
  %v2690 = vpack.c.b16 %v2688, %v2688
  %v2691 = vpack.c.b16 %v2689, %v2689
  %s2694 = scalar_lea.vmem [#allocation5], 40
  %2695 = vst [vmem:[%s2694] sm:$0xf] %v2690
  %2696 = vst [vmem:[%s2694 + $0x4] sm:$0xf] %v2691
  %s2697 = sadd.s32 %s668, 6
  %2698 = vmatprep.subr.bf16.mxu0 %v919
  %2699 = vmatpush1.bf16.msra.mxu0 %v918
  %2700 = vmatprep.subr.bf16.mxu0 %v911
  %2701 = vmatpush1.bf16.msra.mxu0 %v910
  %2702 = vmatprep.subr.bf16.mxu0 %v903
  %2703 = vmatpush1.bf16.msra.mxu0 %v902
  %2704 = vmatprep.subr.bf16.mxu0 %v895
  %2705 = vmatpush1.bf16.msra.mxu0 %v894
  %2706 = vmatprep.subr.bf16.mxu0 %v887
  %2707 = vmatpush1.bf16.msra.mxu0 %v886
  %2708 = vmatprep.subr.bf16.mxu0 %v879
  %2709 = vmatpush1.bf16.msra.mxu0 %v878
  %2710 = vmatprep.subr.bf16.mxu0 %v871
  %2711 = vmatpush1.bf16.msra.mxu0 %v870
  %2712 = vmatprep.subr.bf16.mxu0 %v863
  %2713 = vmatpush1.bf16.msra.mxu0 %v862
  %2714 = vmatprep.subr.bf16.mxu0 0
  %2715 = vmatpush2.bf16.msra.mxu0 0
  %2716 = vmatprep.subr.bf16.mxu0 0
  %2717 = vmatpush2.bf16.msra.mxu0 0
  %2718 = vmatprep.subr.bf16.mxu0 0
  %2719 = vmatpush2.bf16.msra.mxu0 0
  %2720 = vmatprep.subr.bf16.mxu0 0
  %2721 = vmatpush2.bf16.msra.mxu0 0
  %2722 = vmatprep.subr.bf16.mxu0 0
  %2723 = vmatpush2.bf16.msra.mxu0 0
  %2724 = vmatprep.subr.bf16.mxu0 0
  %2725 = vmatpush2.bf16.msra.mxu0 0
  %2726 = vmatprep.subr.bf16.mxu0 0
  %2727 = vmatpush2.bf16.msra.mxu0 0
  %2728 = vmatprep.subr.bf16.mxu0 0
  %2729 = vmatpush2.bf16.msra.mxu0 0
  %2730 = vmatprep.mubr.bf16.mxu0 0
  %2731 = vmatmul.mubr.bf16.gmra.mxu0 %v2686
  %v2732 = vpop.f32.mrf.mxu0
  %v2733 = vadd.f32 0.0, %v2732
  %v2734 = vpop.f32.mrf.mxu0
  %v2735 = vadd.f32 0.0, %v2734
  %v2736 = vpop.f32.mrf.mxu0
  %v2737 = vadd.f32 0.0, %v2736
  %v2738 = vpop.f32.mrf.mxu0
  %v2739 = vadd.f32 0.0, %v2738
  %2740 = vdwg.mxu0
  %2741 = vmatprep.subr.bf16.mxu0 %v921
  %2742 = vmatpush1.bf16.msra.mxu0 %v920
  %2743 = vmatprep.subr.bf16.mxu0 %v913
  %2744 = vmatpush1.bf16.msra.mxu0 %v912
  %2745 = vmatprep.subr.bf16.mxu0 %v905
  %2746 = vmatpush1.bf16.msra.mxu0 %v904
  %2747 = vmatprep.subr.bf16.mxu0 %v897
  %2748 = vmatpush1.bf16.msra.mxu0 %v896
  %2749 = vmatprep.subr.bf16.mxu0 %v889
  %2750 = vmatpush1.bf16.msra.mxu0 %v888
  %2751 = vmatprep.subr.bf16.mxu0 %v881
  %2752 = vmatpush1.bf16.msra.mxu0 %v880
  %2753 = vmatprep.subr.bf16.mxu0 %v873
  %2754 = vmatpush1.bf16.msra.mxu0 %v872
  %2755 = vmatprep.subr.bf16.mxu0 %v865
  %2756 = vmatpush1.bf16.msra.mxu0 %v864
  %2757 = vmatprep.subr.bf16.mxu0 0
  %2758 = vmatpush2.bf16.msra.mxu0 0
  %2759 = vmatprep.subr.bf16.mxu0 0
  %2760 = vmatpush2.bf16.msra.mxu0 0
  %2761 = vmatprep.subr.bf16.mxu0 0
  %2762 = vmatpush2.bf16.msra.mxu0 0
  %2763 = vmatprep.subr.bf16.mxu0 0
  %2764 = vmatpush2.bf16.msra.mxu0 0
  %2765 = vmatprep.subr.bf16.mxu0 0
  %2766 = vmatpush2.bf16.msra.mxu0 0
  %2767 = vmatprep.subr.bf16.mxu0 0
  %2768 = vmatpush2.bf16.msra.mxu0 0
  %2769 = vmatprep.subr.bf16.mxu0 0
  %2770 = vmatpush2.bf16.msra.mxu0 0
  %2771 = vmatprep.subr.bf16.mxu0 0
  %2772 = vmatpush2.bf16.msra.mxu0 0
  %2773 = vmatprep.mubr.bf16.mxu0 0
  %2774 = vmatmul.mubr.bf16.gmra.mxu0 %v2686
  %v2775 = vpop.f32.mrf.mxu0
  %v2776 = vadd.f32 0.0, %v2775
  %v2777 = vpop.f32.mrf.mxu0
  %v2778 = vadd.f32 0.0, %v2777
  %v2779 = vpop.f32.mrf.mxu0
  %v2780 = vadd.f32 0.0, %v2779
  %v2781 = vpop.f32.mrf.mxu0
  %v2782 = vadd.f32 0.0, %v2781
  %2783 = vdwg.mxu0
  %2784 = vmatprep.subr.bf16.mxu0 %v923
  %2785 = vmatpush1.bf16.msra.mxu0 %v922
  %2786 = vmatprep.subr.bf16.mxu0 %v915
  %2787 = vmatpush1.bf16.msra.mxu0 %v914
  %2788 = vmatprep.subr.bf16.mxu0 %v907
  %2789 = vmatpush1.bf16.msra.mxu0 %v906
  %2790 = vmatprep.subr.bf16.mxu0 %v899
  %2791 = vmatpush1.bf16.msra.mxu0 %v898
  %2792 = vmatprep.subr.bf16.mxu0 %v891
  %2793 = vmatpush1.bf16.msra.mxu0 %v890
  %2794 = vmatprep.subr.bf16.mxu0 %v883
  %2795 = vmatpush1.bf16.msra.mxu0 %v882
  %2796 = vmatprep.subr.bf16.mxu0 %v875
  %2797 = vmatpush1.bf16.msra.mxu0 %v874
  %2798 = vmatprep.subr.bf16.mxu0 %v867
  %2799 = vmatpush1.bf16.msra.mxu0 %v866
  %2800 = vmatprep.subr.bf16.mxu0 0
  %2801 = vmatpush2.bf16.msra.mxu0 0
  %2802 = vmatprep.subr.bf16.mxu0 0
  %2803 = vmatpush2.bf16.msra.mxu0 0
  %2804 = vmatprep.subr.bf16.mxu0 0
  %2805 = vmatpush2.bf16.msra.mxu0 0
  %2806 = vmatprep.subr.bf16.mxu0 0
  %2807 = vmatpush2.bf16.msra.mxu0 0
  %2808 = vmatprep.subr.bf16.mxu0 0
  %2809 = vmatpush2.bf16.msra.mxu0 0
  %2810 = vmatprep.subr.bf16.mxu0 0
  %2811 = vmatpush2.bf16.msra.mxu0 0
  %2812 = vmatprep.subr.bf16.mxu0 0
  %2813 = vmatpush2.bf16.msra.mxu0 0
  %2814 = vmatprep.subr.bf16.mxu0 0
  %2815 = vmatpush2.bf16.msra.mxu0 0
  %2816 = vmatprep.mubr.bf16.mxu0 0
  %2817 = vmatmul.mubr.bf16.gmra.mxu0 %v2686
  %v2818 = vpop.f32.mrf.mxu0
  %v2819 = vadd.f32 0.0, %v2818
  %v2820 = vpop.f32.mrf.mxu0
  %v2821 = vadd.f32 0.0, %v2820
  %v2822 = vpop.f32.mrf.mxu0
  %v2823 = vadd.f32 0.0, %v2822
  %v2824 = vpop.f32.mrf.mxu0
  %v2825 = vadd.f32 0.0, %v2824
  %2826 = vdwg.mxu0
  %2827 = vmatprep.subr.bf16.mxu0 %v925
  %2828 = vmatpush1.bf16.msra.mxu0 %v924
  %2829 = vmatprep.subr.bf16.mxu0 %v917
  %2830 = vmatpush1.bf16.msra.mxu0 %v916
  %2831 = vmatprep.subr.bf16.mxu0 %v909
  %2832 = vmatpush1.bf16.msra.mxu0 %v908
  %2833 = vmatprep.subr.bf16.mxu0 %v901
  %2834 = vmatpush1.bf16.msra.mxu0 %v900
  %2835 = vmatprep.subr.bf16.mxu0 %v893
  %2836 = vmatpush1.bf16.msra.mxu0 %v892
  %2837 = vmatprep.subr.bf16.mxu0 %v885
  %2838 = vmatpush1.bf16.msra.mxu0 %v884
  %2839 = vmatprep.subr.bf16.mxu0 %v877
  %2840 = vmatpush1.bf16.msra.mxu0 %v876
  %2841 = vmatprep.subr.bf16.mxu0 %v869
  %2842 = vmatpush1.bf16.msra.mxu0 %v868
  %2843 = vmatprep.subr.bf16.mxu0 0
  %2844 = vmatpush2.bf16.msra.mxu0 0
  %2845 = vmatprep.subr.bf16.mxu0 0
  %2846 = vmatpush2.bf16.msra.mxu0 0
  %2847 = vmatprep.subr.bf16.mxu0 0
  %2848 = vmatpush2.bf16.msra.mxu0 0
  %2849 = vmatprep.subr.bf16.mxu0 0
  %2850 = vmatpush2.bf16.msra.mxu0 0
  %2851 = vmatprep.subr.bf16.mxu0 0
  %2852 = vmatpush2.bf16.msra.mxu0 0
  %2853 = vmatprep.subr.bf16.mxu0 0
  %2854 = vmatpush2.bf16.msra.mxu0 0
  %2855 = vmatprep.subr.bf16.mxu0 0
  %2856 = vmatpush2.bf16.msra.mxu0 0
  %2857 = vmatprep.subr.bf16.mxu0 0
  %2858 = vmatpush2.bf16.msra.mxu0 0
  %2859 = vmatprep.mubr.bf16.mxu0 0
  %2860 = vmatmul.mubr.bf16.gmra.mxu0 %v2686
  %v2861 = vpop.f32.mrf.mxu0
  %v2862 = vadd.f32 0.0, %v2861
  %v2863 = vpop.f32.mrf.mxu0
  %v2864 = vadd.f32 0.0, %v2863
  %v2865 = vpop.f32.mrf.mxu0
  %v2866 = vadd.f32 0.0, %v2865
  %v2867 = vpop.f32.mrf.mxu0
  %v2868 = vadd.f32 0.0, %v2867
  %2869 = vdwg.mxu0
  %s2870 = sld [smem:[#allocation7 + %s2697]]
  %p2871 = scmp.gt.s32.totalorder %s2870, 0
  %s2872 = scalar_lea.vmem [#allocation4], 384
  %v2873 = vld [vmem:[%s2872] sm:$0xff]
  %v2874 = vld [vmem:[%s2872 + $0x8] sm:$0xff]
  %v2875 = vld [vmem:[%s2872 + $0x10] sm:$0xff]
  %v2876 = vld [vmem:[%s2872 + $0x18] sm:$0xff]
  %v2877 = vld [vmem:[%s2872 + $0x20] sm:$0xff]
  %v2878 = vld [vmem:[%s2872 + $0x28] sm:$0xff]
  %v2879 = vld [vmem:[%s2872 + $0x30] sm:$0xff]
  %v2880 = vld [vmem:[%s2872 + $0x38] sm:$0xff]
  %v2881 = vadd.f32 %v2733, %v2873
  %v2882 = vadd.f32 %v2735, %v2874
  %v2883 = vadd.f32 %v2776, %v2875
  %v2884 = vadd.f32 %v2778, %v2876
  %v2885 = vadd.f32 %v2737, %v2877
  %v2886 = vadd.f32 %v2739, %v2878
  %v2887 = vadd.f32 %v2780, %v2879
  %v2888 = vadd.f32 %v2782, %v2880
  %v2889 = vadd.f32 %v2819, %v1184
  %v2890 = vadd.f32 %v2821, %v1188
  %v2891 = vadd.f32 %v2862, %v1192
  %v2892 = vadd.f32 %v2864, %v1196
  %v2893 = vadd.f32 %v2823, %v1184
  %v2894 = vadd.f32 %v2825, %v1188
  %v2895 = vadd.f32 %v2866, %v1192
  %v2896 = vadd.f32 %v2868, %v1196
  %s2897 = scalar_select %p2871, 1, 0
  %v2898 = vstv %s2897
  %vm2899 = vcmp.eq.s32.totalorder %v2898, 1
  %v2900 = vsel %vm2899, %v2881, %v2889
  %v2901 = vsel %vm2899, %v2882, %v2890
  %v2902 = vsel %vm2899, %v2883, %v2891
  %v2903 = vsel %vm2899, %v2884, %v2892
  %v2904 = vsel %vm2899, %v2885, %v2893
  %v2905 = vsel %vm2899, %v2886, %v2894
  %v2906 = vsel %vm2899, %v2887, %v2895
  %v2907 = vsel %vm2899, %v2888, %v2896
  %v2908 = vadd.f32 %v2900, %v1224
  %v2909 = vadd.f32 %v2901, %v1228
  %v2910 = vadd.f32 %v2902, %v1232
  %v2911 = vadd.f32 %v2903, %v1236
  %v2912 = vadd.f32 %v2904, %v1224
  %v2913 = vadd.f32 %v2905, %v1228
  %v2914 = vadd.f32 %v2906, %v1232
  %v2915 = vadd.f32 %v2907, %v1236
  %v2916 = vxor.u32 %v2908, 2147483648
  %v2917 = vxor.u32 %v2912, 2147483648
  %v2918 = vmul.f32 %v2916, 1.442695
  %v2919 = vpow.pop %v2918
  %v2920 = vmul.f32 %v2917, 1.442695
  %v2921 = vpow.pop %v2920
  %v2922 = vadd.f32 %v2919, 1.0
  %v2923 = vadd.f32 %v2921, 1.0
  %v2924 = vrcp.pop %v2922
  %v2925 = vmul.f32 1.0, %v2924
  %v2926 = vrcp.pop %v2923
  %v2927 = vmul.f32 1.0, %v2926
  %v2928 = vxor.u32 %v2909, 2147483648
  %v2929 = vxor.u32 %v2913, 2147483648
  %v2930 = vmul.f32 %v2928, 1.442695
  %v2931 = vpow.pop %v2930
  %v2932 = vmul.f32 %v2929, 1.442695
  %v2933 = vpow.pop %v2932
  %v2934 = vadd.f32 %v2931, 1.0
  %v2935 = vadd.f32 %v2933, 1.0
  %v2936 = vrcp.pop %v2934
  %v2937 = vmul.f32 1.0, %v2936
  %v2938 = vrcp.pop %v2935
  %v2939 = vmul.f32 1.0, %v2938
  %v2940 = vtanh.pop %v2910
  %v2941 = vtanh.pop %v2914
  %v2942 = vxor.u32 %v2911, 2147483648
  %v2943 = vxor.u32 %v2915, 2147483648
  %v2944 = vmul.f32 %v2942, 1.442695
  %v2945 = vpow.pop %v2944
  %v2946 = vmul.f32 %v2943, 1.442695
  %v2947 = vpow.pop %v2946
  %v2948 = vadd.f32 %v2945, 1.0
  %v2949 = vadd.f32 %v2947, 1.0
  %v2950 = vrcp.pop %v2948
  %v2951 = vmul.f32 1.0, %v2950
  %v2952 = vrcp.pop %v2949
  %v2953 = vmul.f32 1.0, %v2952
  %v2954 = vmul.f32 %v2937, %v2680
  %v2955 = vmul.f32 %v2939, %v2681
  %v2956 = vmul.f32 %v2925, %v2940
  %v2957 = vmul.f32 %v2927, %v2941
  %v2958 = vadd.f32 %v2954, %v2956
  %v2959 = vadd.f32 %v2955, %v2957
  %v2960 = vtanh.pop %v2958
  %v2961 = vtanh.pop %v2959
  %v2962 = vmul.f32 %v2951, %v2960
  %v2963 = vmul.f32 %v2953, %v2961
  %v2964 = vpack.c.bf16 %v2963, %v2962
  %v2966 = vunpack.c.l.b16 %v2964
  %v2967 = vunpack.c.h.b16 %v2964
  %v2968 = vpack.c.b16 %v2966, %v2966
  %v2969 = vpack.c.b16 %v2967, %v2967
  %s2972 = scalar_lea.vmem [#allocation5], 48
  %2973 = vst [vmem:[%s2972] sm:$0xf] %v2968
  %2974 = vst [vmem:[%s2972 + $0x4] sm:$0xf] %v2969
  %s2975 = sadd.s32 %s668, 7
  %2976 = vmatprep.subr.bf16.mxu0 %v919
  %2977 = vmatpush1.bf16.msra.mxu0 %v918
  %2978 = vmatprep.subr.bf16.mxu0 %v911
  %2979 = vmatpush1.bf16.msra.mxu0 %v910
  %2980 = vmatprep.subr.bf16.mxu0 %v903
  %2981 = vmatpush1.bf16.msra.mxu0 %v902
  %2982 = vmatprep.subr.bf16.mxu0 %v895
  %2983 = vmatpush1.bf16.msra.mxu0 %v894
  %2984 = vmatprep.subr.bf16.mxu0 %v887
  %2985 = vmatpush1.bf16.msra.mxu0 %v886
  %2986 = vmatprep.subr.bf16.mxu0 %v879
  %2987 = vmatpush1.bf16.msra.mxu0 %v878
  %2988 = vmatprep.subr.bf16.mxu0 %v871
  %2989 = vmatpush1.bf16.msra.mxu0 %v870
  %2990 = vmatprep.subr.bf16.mxu0 %v863
  %2991 = vmatpush1.bf16.msra.mxu0 %v862
  %2992 = vmatprep.subr.bf16.mxu0 0
  %2993 = vmatpush2.bf16.msra.mxu0 0
  %2994 = vmatprep.subr.bf16.mxu0 0
  %2995 = vmatpush2.bf16.msra.mxu0 0
  %2996 = vmatprep.subr.bf16.mxu0 0
  %2997 = vmatpush2.bf16.msra.mxu0 0
  %2998 = vmatprep.subr.bf16.mxu0 0
  %2999 = vmatpush2.bf16.msra.mxu0 0
  %3000 = vmatprep.subr.bf16.mxu0 0
  %3001 = vmatpush2.bf16.msra.mxu0 0
  %3002 = vmatprep.subr.bf16.mxu0 0
  %3003 = vmatpush2.bf16.msra.mxu0 0
  %3004 = vmatprep.subr.bf16.mxu0 0
  %3005 = vmatpush2.bf16.msra.mxu0 0
  %3006 = vmatprep.subr.bf16.mxu0 0
  %3007 = vmatpush2.bf16.msra.mxu0 0
  %3008 = vmatprep.mubr.bf16.mxu0 0
  %3009 = vmatmul.mubr.bf16.gmra.mxu0 %v2964
  %v3010 = vpop.f32.mrf.mxu0
  %v3011 = vadd.f32 0.0, %v3010
  %v3012 = vpop.f32.mrf.mxu0
  %v3013 = vadd.f32 0.0, %v3012
  %v3014 = vpop.f32.mrf.mxu0
  %v3015 = vadd.f32 0.0, %v3014
  %v3016 = vpop.f32.mrf.mxu0
  %v3017 = vadd.f32 0.0, %v3016
  %3018 = vdwg.mxu0
  %3019 = vmatprep.subr.bf16.mxu0 %v921
  %3020 = vmatpush1.bf16.msra.mxu0 %v920
  %3021 = vmatprep.subr.bf16.mxu0 %v913
  %3022 = vmatpush1.bf16.msra.mxu0 %v912
  %3023 = vmatprep.subr.bf16.mxu0 %v905
  %3024 = vmatpush1.bf16.msra.mxu0 %v904
  %3025 = vmatprep.subr.bf16.mxu0 %v897
  %3026 = vmatpush1.bf16.msra.mxu0 %v896
  %3027 = vmatprep.subr.bf16.mxu0 %v889
  %3028 = vmatpush1.bf16.msra.mxu0 %v888
  %3029 = vmatprep.subr.bf16.mxu0 %v881
  %3030 = vmatpush1.bf16.msra.mxu0 %v880
  %3031 = vmatprep.subr.bf16.mxu0 %v873
  %3032 = vmatpush1.bf16.msra.mxu0 %v872
  %3033 = vmatprep.subr.bf16.mxu0 %v865
  %3034 = vmatpush1.bf16.msra.mxu0 %v864
  %3035 = vmatprep.subr.bf16.mxu0 0
  %3036 = vmatpush2.bf16.msra.mxu0 0
  %3037 = vmatprep.subr.bf16.mxu0 0
  %3038 = vmatpush2.bf16.msra.mxu0 0
  %3039 = vmatprep.subr.bf16.mxu0 0
  %3040 = vmatpush2.bf16.msra.mxu0 0
  %3041 = vmatprep.subr.bf16.mxu0 0
  %3042 = vmatpush2.bf16.msra.mxu0 0
  %3043 = vmatprep.subr.bf16.mxu0 0
  %3044 = vmatpush2.bf16.msra.mxu0 0
  %3045 = vmatprep.subr.bf16.mxu0 0
  %3046 = vmatpush2.bf16.msra.mxu0 0
  %3047 = vmatprep.subr.bf16.mxu0 0
  %3048 = vmatpush2.bf16.msra.mxu0 0
  %3049 = vmatprep.subr.bf16.mxu0 0
  %3050 = vmatpush2.bf16.msra.mxu0 0
  %3051 = vmatprep.mubr.bf16.mxu0 0
  %3052 = vmatmul.mubr.bf16.gmra.mxu0 %v2964
  %v3053 = vpop.f32.mrf.mxu0
  %v3054 = vadd.f32 0.0, %v3053
  %v3055 = vpop.f32.mrf.mxu0
  %v3056 = vadd.f32 0.0, %v3055
  %v3057 = vpop.f32.mrf.mxu0
  %v3058 = vadd.f32 0.0, %v3057
  %v3059 = vpop.f32.mrf.mxu0
  %v3060 = vadd.f32 0.0, %v3059
  %3061 = vdwg.mxu0
  %3062 = vmatprep.subr.bf16.mxu0 %v923
  %3063 = vmatpush1.bf16.msra.mxu0 %v922
  %3064 = vmatprep.subr.bf16.mxu0 %v915
  %3065 = vmatpush1.bf16.msra.mxu0 %v914
  %3066 = vmatprep.subr.bf16.mxu0 %v907
  %3067 = vmatpush1.bf16.msra.mxu0 %v906
  %3068 = vmatprep.subr.bf16.mxu0 %v899
  %3069 = vmatpush1.bf16.msra.mxu0 %v898
  %3070 = vmatprep.subr.bf16.mxu0 %v891
  %3071 = vmatpush1.bf16.msra.mxu0 %v890
  %3072 = vmatprep.subr.bf16.mxu0 %v883
  %3073 = vmatpush1.bf16.msra.mxu0 %v882
  %3074 = vmatprep.subr.bf16.mxu0 %v875
  %3075 = vmatpush1.bf16.msra.mxu0 %v874
  %3076 = vmatprep.subr.bf16.mxu0 %v867
  %3077 = vmatpush1.bf16.msra.mxu0 %v866
  %3078 = vmatprep.subr.bf16.mxu0 0
  %3079 = vmatpush2.bf16.msra.mxu0 0
  %3080 = vmatprep.subr.bf16.mxu0 0
  %3081 = vmatpush2.bf16.msra.mxu0 0
  %3082 = vmatprep.subr.bf16.mxu0 0
  %3083 = vmatpush2.bf16.msra.mxu0 0
  %3084 = vmatprep.subr.bf16.mxu0 0
  %3085 = vmatpush2.bf16.msra.mxu0 0
  %3086 = vmatprep.subr.bf16.mxu0 0
  %3087 = vmatpush2.bf16.msra.mxu0 0
  %3088 = vmatprep.subr.bf16.mxu0 0
  %3089 = vmatpush2.bf16.msra.mxu0 0
  %3090 = vmatprep.subr.bf16.mxu0 0
  %3091 = vmatpush2.bf16.msra.mxu0 0
  %3092 = vmatprep.subr.bf16.mxu0 0
  %3093 = vmatpush2.bf16.msra.mxu0 0
  %3094 = vmatprep.mubr.bf16.mxu0 0
  %3095 = vmatmul.mubr.bf16.gmra.mxu0 %v2964
  %v3096 = vpop.f32.mrf.mxu0
  %v3097 = vadd.f32 0.0, %v3096
  %v3098 = vpop.f32.mrf.mxu0
  %v3099 = vadd.f32 0.0, %v3098
  %v3100 = vpop.f32.mrf.mxu0
  %v3101 = vadd.f32 0.0, %v3100
  %v3102 = vpop.f32.mrf.mxu0
  %v3103 = vadd.f32 0.0, %v3102
  %3104 = vdwg.mxu0
  %3105 = vmatprep.subr.bf16.mxu0 %v925
  %3106 = vmatpush1.bf16.msra.mxu0 %v924
  %3107 = vmatprep.subr.bf16.mxu0 %v917
  %3108 = vmatpush1.bf16.msra.mxu0 %v916
  %3109 = vmatprep.subr.bf16.mxu0 %v909
  %3110 = vmatpush1.bf16.msra.mxu0 %v908
  %3111 = vmatprep.subr.bf16.mxu0 %v901
  %3112 = vmatpush1.bf16.msra.mxu0 %v900
  %3113 = vmatprep.subr.bf16.mxu0 %v893
  %3114 = vmatpush1.bf16.msra.mxu0 %v892
  %3115 = vmatprep.subr.bf16.mxu0 %v885
  %3116 = vmatpush1.bf16.msra.mxu0 %v884
  %3117 = vmatprep.subr.bf16.mxu0 %v877
  %3118 = vmatpush1.bf16.msra.mxu0 %v876
  %3119 = vmatprep.subr.bf16.mxu0 %v869
  %3120 = vmatpush1.bf16.msra.mxu0 %v868
  %3121 = vmatprep.subr.bf16.mxu0 0
  %3122 = vmatpush2.bf16.msra.mxu0 0
  %3123 = vmatprep.subr.bf16.mxu0 0
  %3124 = vmatpush2.bf16.msra.mxu0 0
  %3125 = vmatprep.subr.bf16.mxu0 0
  %3126 = vmatpush2.bf16.msra.mxu0 0
  %3127 = vmatprep.subr.bf16.mxu0 0
  %3128 = vmatpush2.bf16.msra.mxu0 0
  %3129 = vmatprep.subr.bf16.mxu0 0
  %3130 = vmatpush2.bf16.msra.mxu0 0
  %3131 = vmatprep.subr.bf16.mxu0 0
  %3132 = vmatpush2.bf16.msra.mxu0 0
  %3133 = vmatprep.subr.bf16.mxu0 0
  %3134 = vmatpush2.bf16.msra.mxu0 0
  %3135 = vmatprep.subr.bf16.mxu0 0
  %3136 = vmatpush2.bf16.msra.mxu0 0
  %3137 = vmatprep.mubr.bf16.mxu0 0
  %3138 = vmatmul.mubr.bf16.gmra.mxu0 %v2964
  %v3139 = vpop.f32.mrf.mxu0
  %v3140 = vadd.f32 0.0, %v3139
  %v3141 = vpop.f32.mrf.mxu0
  %v3142 = vadd.f32 0.0, %v3141
  %v3143 = vpop.f32.mrf.mxu0
  %v3144 = vadd.f32 0.0, %v3143
  %v3145 = vpop.f32.mrf.mxu0
  %v3146 = vadd.f32 0.0, %v3145
  %3147 = vdwg.mxu0
  %s3148 = sld [smem:[#allocation7 + %s2975]]
  %p3149 = scmp.gt.s32.totalorder %s3148, 0
  %s3150 = scalar_lea.vmem [#allocation4], 448
  %v3151 = vld [vmem:[%s3150] sm:$0xff]
  %v3152 = vld [vmem:[%s3150 + $0x8] sm:$0xff]
  %v3153 = vld [vmem:[%s3150 + $0x10] sm:$0xff]
  %v3154 = vld [vmem:[%s3150 + $0x18] sm:$0xff]
  %v3155 = vld [vmem:[%s3150 + $0x20] sm:$0xff]
  %v3156 = vld [vmem:[%s3150 + $0x28] sm:$0xff]
  %v3157 = vld [vmem:[%s3150 + $0x30] sm:$0xff]
  %v3158 = vld [vmem:[%s3150 + $0x38] sm:$0xff]
  %v3159 = vadd.f32 %v3011, %v3151
  %v3160 = vadd.f32 %v3013, %v3152
  %v3161 = vadd.f32 %v3054, %v3153
  %v3162 = vadd.f32 %v3056, %v3154
  %v3163 = vadd.f32 %v3015, %v3155
  %v3164 = vadd.f32 %v3017, %v3156
  %v3165 = vadd.f32 %v3058, %v3157
  %v3166 = vadd.f32 %v3060, %v3158
  %v3167 = vadd.f32 %v3097, %v1184
  %v3168 = vadd.f32 %v3099, %v1188
  %v3169 = vadd.f32 %v3140, %v1192
  %v3170 = vadd.f32 %v3142, %v1196
  %v3171 = vadd.f32 %v3101, %v1184
  %v3172 = vadd.f32 %v3103, %v1188
  %v3173 = vadd.f32 %v3144, %v1192
  %v3174 = vadd.f32 %v3146, %v1196
  %s3175 = scalar_select %p3149, 1, 0
  %v3176 = vstv %s3175
  %vm3177 = vcmp.eq.s32.totalorder %v3176, 1
  %v3178 = vsel %vm3177, %v3159, %v3167
  %v3179 = vsel %vm3177, %v3160, %v3168
  %v3180 = vsel %vm3177, %v3161, %v3169
  %v3181 = vsel %vm3177, %v3162, %v3170
  %v3182 = vsel %vm3177, %v3163, %v3171
  %v3183 = vsel %vm3177, %v3164, %v3172
  %v3184 = vsel %vm3177, %v3165, %v3173
  %v3185 = vsel %vm3177, %v3166, %v3174
  %v3186 = vadd.f32 %v3178, %v1224
  %v3187 = vadd.f32 %v3179, %v1228
  %v3188 = vadd.f32 %v3180, %v1232
  %v3189 = vadd.f32 %v3181, %v1236
  %v3190 = vadd.f32 %v3182, %v1224
  %v3191 = vadd.f32 %v3183, %v1228
  %v3192 = vadd.f32 %v3184, %v1232
  %v3193 = vadd.f32 %v3185, %v1236
  %v3194 = vxor.u32 %v3186, 2147483648
  %v3195 = vxor.u32 %v3190, 2147483648
  %v3196 = vmul.f32 %v3194, 1.442695
  %v3197 = vpow.pop %v3196
  %v3198 = vmul.f32 %v3195, 1.442695
  %v3199 = vpow.pop %v3198
  %v3200 = vadd.f32 %v3197, 1.0
  %v3201 = vadd.f32 %v3199, 1.0
  %v3202 = vrcp.pop %v3200
  %v3203 = vmul.f32 1.0, %v3202
  %v3204 = vrcp.pop %v3201
  %v3205 = vmul.f32 1.0, %v3204
  %v3206 = vxor.u32 %v3187, 2147483648
  %v3207 = vxor.u32 %v3191, 2147483648
  %v3208 = vmul.f32 %v3206, 1.442695
  %v3209 = vpow.pop %v3208
  %v3210 = vmul.f32 %v3207, 1.442695
  %v3211 = vpow.pop %v3210
  %v3212 = vadd.f32 %v3209, 1.0
  %v3213 = vadd.f32 %v3211, 1.0
  %v3214 = vrcp.pop %v3212
  %v3215 = vmul.f32 1.0, %v3214
  %v3216 = vrcp.pop %v3213
  %v3217 = vmul.f32 1.0, %v3216
  %v3218 = vtanh.pop %v3188
  %v3219 = vtanh.pop %v3192
  %v3220 = vxor.u32 %v3189, 2147483648
  %v3221 = vxor.u32 %v3193, 2147483648
  %v3222 = vmul.f32 %v3220, 1.442695
  %v3223 = vpow.pop %v3222
  %v3224 = vmul.f32 %v3221, 1.442695
  %v3225 = vpow.pop %v3224
  %v3226 = vadd.f32 %v3223, 1.0
  %v3227 = vadd.f32 %v3225, 1.0
  %v3228 = vrcp.pop %v3226
  %v3229 = vmul.f32 1.0, %v3228
  %v3230 = vrcp.pop %v3227
  %v3231 = vmul.f32 1.0, %v3230
  %v3232 = vmul.f32 %v3215, %v2958
  %v3233 = vmul.f32 %v3217, %v2959
  %v3234 = vmul.f32 %v3203, %v3218
  %v3235 = vmul.f32 %v3205, %v3219
  %v3236 = vadd.f32 %v3232, %v3234
  %v3237 = vadd.f32 %v3233, %v3235
  %v3238 = vtanh.pop %v3236
  %v3239 = vtanh.pop %v3237
  %v3240 = vmul.f32 %v3229, %v3238
  %v3241 = vmul.f32 %v3231, %v3239
  %v3242 = vpack.c.bf16 %v3241, %v3240
  %v3244 = vunpack.c.l.b16 %v3242
  %v3245 = vunpack.c.h.b16 %v3242
  %v3246 = vpack.c.b16 %v3244, %v3244
  %v3247 = vpack.c.b16 %v3245, %v3245
  %s3250 = scalar_lea.vmem [#allocation5], 56
  %3251 = vst [vmem:[%s3250] sm:$0xf] %v3246
  %3252 = vst [vmem:[%s3250 + $0x4] sm:$0xf] %v3247
  %3253 = vst [vmem:[#allocation2] sm:$0xff] %v3240
  %3254 = vst [vmem:[#allocation2 + $0x8] sm:$0xff] %v3241
  %3255 = vst [vmem:[#allocation3] sm:$0xff] %v3236
  %3256 = vst [vmem:[#allocation3 + $0x8] sm:$0xff] %v3237
  %v3257 = vld [vmem:[#allocation5] sm:$0xf]
  %v3258 = vld [vmem:[#allocation5 + $0x4] sm:$0xf]
  %v3259 = vld [vmem:[#allocation5 + $0x8] sm:$0xf]
  %v3260 = vld [vmem:[#allocation5 + $0xc] sm:$0xf]
  %v3261 = vld [vmem:[#allocation5 + $0x10] sm:$0xf]
  %v3262 = vld [vmem:[#allocation5 + $0x14] sm:$0xf]
  %v3263 = vld [vmem:[#allocation5 + $0x18] sm:$0xf]
  %v3264 = vld [vmem:[#allocation5 + $0x1c] sm:$0xf]
  %v3265 = vld [vmem:[#allocation5 + $0x20] sm:$0xf]
  %v3266 = vld [vmem:[#allocation5 + $0x24] sm:$0xf]
  %v3267 = vld [vmem:[#allocation5 + $0x28] sm:$0xf]
  %v3268 = vld [vmem:[#allocation5 + $0x2c] sm:$0xf]
  %v3269 = vld [vmem:[#allocation5 + $0x30] sm:$0xf]
  %v3270 = vld [vmem:[#allocation5 + $0x34] sm:$0xf]
  %v3271 = vld [vmem:[#allocation5 + $0x38] sm:$0xf]
  %v3272 = vld [vmem:[#allocation5 + $0x3c] sm:$0xf]
  %v3273 = vld [vmem:[%s8] sm:$0xf]
  %v3274 = vld [vmem:[%s8 + $0x4] sm:$0xf]
  %v3275 = vld [vmem:[%s8 + $0x8] sm:$0xf]
  %v3276 = vld [vmem:[%s8 + $0xc] sm:$0xf]
  %v3277 = vld [vmem:[%s8 + $0x10] sm:$0xf]
  %v3278 = vld [vmem:[%s8 + $0x14] sm:$0xf]
  %v3279 = vld [vmem:[%s8 + $0x18] sm:$0xf]
  %v3280 = vld [vmem:[%s8 + $0x1c] sm:$0xf]
  %v3281 = vld [vmem:[%s8 + $0x20] sm:$0xf]
  %v3282 = vld [vmem:[%s8 + $0x24] sm:$0xf]
  %v3283 = vld [vmem:[%s8 + $0x28] sm:$0xf]
  %v3284 = vld [vmem:[%s8 + $0x2c] sm:$0xf]
  %v3285 = vld [vmem:[%s8 + $0x30] sm:$0xf]
  %v3286 = vld [vmem:[%s8 + $0x34] sm:$0xf]
  %v3287 = vld [vmem:[%s8 + $0x38] sm:$0xf]
  %v3288 = vld [vmem:[%s8 + $0x3c] sm:$0xf]
  %v3289 = vld [vmem:[%s9] sm:$0x1]
  %v3291 = vlaneseq
  %v3292 = vshrl.u32 %v3291, 7
  %v3293 = vsub.s32 0, %v3292
  %v3294 = vrot.slane %v3289, %v3293
  %v3312 = vunpack.c.l.b16 %v3257
  %v3313 = vunpack.c.l.b16 %v3258
  %v3314 = vunpack.c.l.b16 %v3259
  %v3315 = vunpack.c.l.b16 %v3260
  %v3316 = vunpack.c.l.b16 %v3261
  %v3317 = vunpack.c.l.b16 %v3262
  %v3318 = vunpack.c.l.b16 %v3263
  %v3319 = vunpack.c.l.b16 %v3264
  %v3320 = vunpack.c.l.b16 %v3265
  %v3321 = vunpack.c.l.b16 %v3266
  %v3322 = vunpack.c.l.b16 %v3267
  %v3323 = vunpack.c.l.b16 %v3268
  %v3324 = vunpack.c.l.b16 %v3269
  %v3325 = vunpack.c.l.b16 %v3270
  %v3326 = vunpack.c.l.b16 %v3271
  %v3327 = vunpack.c.l.b16 %v3272
  %v3328 = vpack.c.b16 %v3313, %v3312
  %v3329 = vpack.c.b16 %v3315, %v3314
  %v3330 = vpack.c.b16 %v3317, %v3316
  %v3331 = vpack.c.b16 %v3319, %v3318
  %v3332 = vpack.c.b16 %v3321, %v3320
  %v3333 = vpack.c.b16 %v3323, %v3322
  %v3334 = vpack.c.b16 %v3325, %v3324
  %v3335 = vpack.c.b16 %v3327, %v3326
  %v3360 = vunpack.c.l.b16 %v3273
  %v3361 = vunpack.c.l.b16 %v3274
  %v3362 = vunpack.c.l.b16 %v3275
  %v3363 = vunpack.c.l.b16 %v3276
  %v3364 = vunpack.c.l.b16 %v3277
  %v3365 = vunpack.c.l.b16 %v3278
  %v3366 = vunpack.c.l.b16 %v3279
  %v3367 = vunpack.c.l.b16 %v3280
  %v3368 = vunpack.c.l.b16 %v3281
  %v3369 = vunpack.c.l.b16 %v3282
  %v3370 = vunpack.c.l.b16 %v3283
  %v3371 = vunpack.c.l.b16 %v3284
  %v3372 = vunpack.c.l.b16 %v3285
  %v3373 = vunpack.c.l.b16 %v3286
  %v3374 = vunpack.c.l.b16 %v3287
  %v3375 = vunpack.c.l.b16 %v3288
  %v3376 = vpack.c.b16 %v3361, %v3360
  %v3377 = vpack.c.b16 %v3363, %v3362
  %v3378 = vpack.c.b16 %v3365, %v3364
  %v3379 = vpack.c.b16 %v3367, %v3366
  %v3380 = vpack.c.b16 %v3369, %v3368
  %v3381 = vpack.c.b16 %v3371, %v3370
  %v3382 = vpack.c.b16 %v3373, %v3372
  %v3383 = vpack.c.b16 %v3375, %v3374
  %3392 = vmatprep.subr.bf16.mxu0 0
  %3393 = vmatpush1.bf16.msra.mxu0 %v3383
  %3394 = vmatprep.subr.bf16.mxu0 0
  %3395 = vmatpush1.bf16.msra.mxu0 %v3382
  %3396 = vmatprep.subr.bf16.mxu0 0
  %3397 = vmatpush1.bf16.msra.mxu0 %v3381
  %3398 = vmatprep.subr.bf16.mxu0 0
  %3399 = vmatpush1.bf16.msra.mxu0 %v3380
  %3400 = vmatprep.subr.bf16.mxu0 0
  %3401 = vmatpush1.bf16.msra.mxu0 %v3379
  %3402 = vmatprep.subr.bf16.mxu0 0
  %3403 = vmatpush1.bf16.msra.mxu0 %v3378
  %3404 = vmatprep.subr.bf16.mxu0 0
  %3405 = vmatpush1.bf16.msra.mxu0 %v3377
  %3406 = vmatprep.subr.bf16.mxu0 0
  %3407 = vmatpush1.bf16.msra.mxu0 %v3376
  %3408 = vmatprep.subr.bf16.mxu0 0
  %3409 = vmatpush2.bf16.msra.mxu0 0
  %3410 = vmatprep.subr.bf16.mxu0 0
  %3411 = vmatpush2.bf16.msra.mxu0 0
  %3412 = vmatprep.subr.bf16.mxu0 0
  %3413 = vmatpush2.bf16.msra.mxu0 0
  %3414 = vmatprep.subr.bf16.mxu0 0
  %3415 = vmatpush2.bf16.msra.mxu0 0
  %3416 = vmatprep.subr.bf16.mxu0 0
  %3417 = vmatpush2.bf16.msra.mxu0 0
  %3418 = vmatprep.subr.bf16.mxu0 0
  %3419 = vmatpush2.bf16.msra.mxu0 0
  %3420 = vmatprep.subr.bf16.mxu0 0
  %3421 = vmatpush2.bf16.msra.mxu0 0
  %3422 = vmatprep.subr.bf16.mxu0 0
  %3423 = vmatpush2.bf16.msra.mxu0 0
  %3424 = vmatprep.mubr.bf16.mxu0 0
  %3425 = vmatmul.mubr.bf16.gmra.mxu0 %v3328
  %v3426 = vpop.f32.mrf.mxu0
  %v3427 = vadd.f32 %v3294, %v3426
  %v3428 = vpop.f32.mrf.mxu0
  %v3429 = vpop.f32.mrf.mxu0
  %v3430 = vadd.f32 %v3294, %v3429
  %v3431 = vpop.f32.mrf.mxu0
  %3432 = vmatprep.mubr.bf16.mxu0 0
  %3433 = vmatmul.mubr.bf16.gmra.mxu0 %v3329
  %v3434 = vpop.f32.mrf.mxu0
  %v3435 = vadd.f32 %v3294, %v3434
  %v3436 = vpop.f32.mrf.mxu0
  %v3437 = vpop.f32.mrf.mxu0
  %v3438 = vadd.f32 %v3294, %v3437
  %v3439 = vpop.f32.mrf.mxu0
  %3440 = vmatprep.mubr.bf16.mxu0 0
  %3441 = vmatmul.mubr.bf16.gmra.mxu0 %v3330
  %v3442 = vpop.f32.mrf.mxu0
  %v3443 = vadd.f32 %v3294, %v3442
  %v3444 = vpop.f32.mrf.mxu0
  %v3445 = vpop.f32.mrf.mxu0
  %v3446 = vadd.f32 %v3294, %v3445
  %v3447 = vpop.f32.mrf.mxu0
  %3448 = vmatprep.mubr.bf16.mxu0 0
  %3449 = vmatmul.mubr.bf16.gmra.mxu0 %v3331
  %v3450 = vpop.f32.mrf.mxu0
  %v3451 = vadd.f32 %v3294, %v3450
  %v3452 = vpop.f32.mrf.mxu0
  %v3453 = vpop.f32.mrf.mxu0
  %v3454 = vadd.f32 %v3294, %v3453
  %v3455 = vpop.f32.mrf.mxu0
  %3456 = vmatprep.mubr.bf16.mxu0 0
  %3457 = vmatmul.mubr.bf16.gmra.mxu0 %v3332
  %v3458 = vpop.f32.mrf.mxu0
  %v3459 = vadd.f32 %v3294, %v3458
  %v3460 = vpop.f32.mrf.mxu0
  %v3461 = vpop.f32.mrf.mxu0
  %v3462 = vadd.f32 %v3294, %v3461
  %v3463 = vpop.f32.mrf.mxu0
  %3464 = vmatprep.mubr.bf16.mxu0 0
  %3465 = vmatmul.mubr.bf16.gmra.mxu0 %v3333
  %v3466 = vpop.f32.mrf.mxu0
  %v3467 = vadd.f32 %v3294, %v3466
  %v3468 = vpop.f32.mrf.mxu0
  %v3469 = vpop.f32.mrf.mxu0
  %v3470 = vadd.f32 %v3294, %v3469
  %v3471 = vpop.f32.mrf.mxu0
  %3472 = vmatprep.mubr.bf16.mxu0 0
  %3473 = vmatmul.mubr.bf16.gmra.mxu0 %v3334
  %v3474 = vpop.f32.mrf.mxu0
  %v3475 = vadd.f32 %v3294, %v3474
  %v3476 = vpop.f32.mrf.mxu0
  %v3477 = vpop.f32.mrf.mxu0
  %v3478 = vadd.f32 %v3294, %v3477
  %v3479 = vpop.f32.mrf.mxu0
  %3480 = vmatprep.mubr.bf16.mxu0 0
  %3481 = vmatmul.mubr.bf16.gmra.mxu0 %v3335
  %v3482 = vpop.f32.mrf.mxu0
  %v3483 = vadd.f32 %v3294, %v3482
  %v3484 = vpop.f32.mrf.mxu0
  %v3485 = vpop.f32.mrf.mxu0
  %v3486 = vadd.f32 %v3294, %v3485
  %v3487 = vpop.f32.mrf.mxu0
  %3488 = vdwg.mxu0
  %3489 = vst [vmem:[%s10] sm:$0xff] %v3427
  %3490 = vst [vmem:[%s10 + $0x8] sm:$0xff] %v3430
  %3491 = vst [vmem:[%s10 + $0x10] sm:$0xff] %v3435
  %3492 = vst [vmem:[%s10 + $0x18] sm:$0xff] %v3438
  %3493 = vst [vmem:[%s10 + $0x20] sm:$0xff] %v3443
  %3494 = vst [vmem:[%s10 + $0x28] sm:$0xff] %v3446
  %3495 = vst [vmem:[%s10 + $0x30] sm:$0xff] %v3451
  %3496 = vst [vmem:[%s10 + $0x38] sm:$0xff] %v3454
  %3497 = vst [vmem:[%s10 + $0x40] sm:$0xff] %v3459
  %3498 = vst [vmem:[%s10 + $0x48] sm:$0xff] %v3462
  %3499 = vst [vmem:[%s10 + $0x50] sm:$0xff] %v3467
  %3500 = vst [vmem:[%s10 + $0x58] sm:$0xff] %v3470
  %3501 = vst [vmem:[%s10 + $0x60] sm:$0xff] %v3475
  %3502 = vst [vmem:[%s10 + $0x68] sm:$0xff] %v3478
  %3503 = vst [vmem:[%s10 + $0x70] sm:$0xff] %v3483
  %3504 = vst [vmem:[%s10 + $0x78] sm:$0xff] %v3486
  // Predicated region
  $region42: #{rnnae_forward.3} parent=0 // pred_check
    _
  $region43: #{rnnae_forward.3} parent=0 // pred_check_branch
    %3506 = sbr.rel (0) target = $region45
  $region44: #{rnnae_forward.3} parent=0 // pred_region
    _
  $region45: #{rnnae_forward.3} parent=0 // pred_fallthru
    _
  // Predicated region
  $region46: #{rnnae_forward.3} parent=0 // pred_check
    _
  $region47: #{rnnae_forward.3} parent=0 // pred_check_branch
    %3508 = sbr.rel (0) target = $region49
  $region48: #{rnnae_forward.3} parent=0 // pred_region
    _
  $region49: #{rnnae_forward.3} parent=0 // pred_fallthru
    _

</llo_original>
